<compile_context>
chip_gen: v5e
topology: v5e:2x2
jax: 0.10.0
libtpu: 0.0.40
codegen_flags: <defaults>
</compile_context>

<pallas_src>
import numpy as np

import jax
import jax.numpy as jnp
from jax.experimental import pallas as pl
from jax.experimental.pallas import tpu as pltpu

PRIMITIVES = ['none', 'avg_pool_3x3', 'max_pool_3x3', 'skip_connect',
              'sep_conv_3x3', 'sep_conv_5x5', 'sep_conv_7x7',
              'dil_conv_3x3', 'dil_conv_5x5']

BN_EPS = 1e-5
SEP_KS = (3, 5, 7)
DIL_KS = (3, 5)


# ---------------------------------------------------------------------------
# Fused kernel builder (static shapes via closure).
def _make_kernel(N, H, W, C):
    NH, WC = N * H, W * C
    inv_M = 1.0 / float(N * H * W)
    NEG = float('-inf')

    # -- shifted views of the packed (NH, WC) activation ---------------------
    def _row_shift(v, t, fill):
        # out[n*H + h, :] = v[n*H + h + t, :] for 0 <= h+t < H, else `fill`.
        if t == 0:
            return v
        fb = jnp.full((abs(t), WC), fill, jnp.float32)
        pieces = []
        for n in range(N):
            blk = v[n * H:(n + 1) * H, :]
            if t > 0:
                pieces += [blk[t:, :], fb]
            else:
                pieces += [fb, blk[:H + t, :]]
        return jnp.concatenate(pieces, axis=0)

    def _lane_shift_fill(v, s, fill):
        # out[:, w*C+c] = v[:, (w+s)*C+c] for 0 <= w+s < W, else `fill`.
        if s == 0:
            return v
        d = abs(s) * C
        fb = jnp.full((NH, d), fill, jnp.float32)
        if s > 0:
            return jnp.concatenate([v[:, d:], fb], axis=1)
        return jnp.concatenate([fb, v[:, :WC - d]], axis=1)

    def _lane_roll(v, s):
        # Cyclic lane shift so out[:, l] = v[:, l + s*C]; wrapped lanes are
        # cancelled by the zero boundary masks folded into the packed weights.
        return v if s == 0 else pltpu.roll(v, shift=(-s * C) % WC, axis=1)

    # -- fused building blocks ------------------------------------------------
    def _dw_conv(xa, wl_ref, k, dil):
        # Depthwise k x k conv, stride 1, zero padding, on the packed layout.
        # wl_ref: (k*k, W*C) lane-replicated, boundary-masked per-tap weights.
        pad = dil * (k - 1) // 2
        acc = None
        for ki in range(k):
            xr = _row_shift(xa, ki * dil - pad, 0.0)        # hoisted per row
            for kj in range(k):
                tap = ki * k + kj
                v = _lane_roll(xr, kj * dil - pad) * wl_ref[pl.ds(tap, 1), :]
                acc = v if acc is None else acc + v
        return acc

    def _pw(v, pw_ref):
        # 1x1 conv in the packed layout: block-diagonal kron(I_W, W_pw) matmul.
        return jnp.dot(v, pw_ref[...], preferred_element_type=jnp.float32)

    def _bn(v, S):
        # BatchNorm2d(C, affine=False), training-mode batch stats, biased var.
        # S = kron(ones(W,W), eye(C)) sums over W and broadcasts per-channel
        # stats back onto the packed lanes.
        mean = jnp.sum(jnp.dot(v, S, preferred_element_type=jnp.float32),
                       axis=0, keepdims=True) * inv_M
        d = v - mean
        var = jnp.sum(jnp.dot(d * d, S, preferred_element_type=jnp.float32),
                      axis=0, keepdims=True) * inv_M
        return d * jax.lax.rsqrt(var + BN_EPS)

    def _sep_conv(xa, dw1, pw1, dw2, pw2, k, S):
        # ReLU(x) already applied by caller (shared across branches).
        y = _bn(_pw(_dw_conv(xa, dw1, k, 1), pw1), S)
        y = _bn(_pw(_dw_conv(jnp.maximum(y, 0.0), dw2, k, 1), pw2), S)
        return y

    def _dil_conv(xa, dw, pw, k, S):
        return _bn(_pw(_dw_conv(xa, dw, k, 2), pw), S)

    def _avg_pool3(x, avgw_ref, invcnt_ref):
        # 3x3 avg pool, stride 1, pad 1, count_include_pad=False:
        # same tap machinery with all-ones (masked) weights, then 1/count.
        return _dw_conv(x, avgw_ref, 3, 1) * invcnt_ref[...]

    def _max_pool3(x):
        # 3x3 max pool, stride 1, pad 1 (implicit -inf padding).
        acc = x                                         # center tap, always valid
        for ki in range(3):
            t = ki - 1
            xr = x if t == 0 else _row_shift(x, t, NEG)
            for kj in range(3):
                s = kj - 1
                if t == 0 and s == 0:
                    continue
                acc = jnp.maximum(acc, _lane_shift_fill(xr, s, NEG))
        return acc

    # -- the fused MixedOp kernel ---------------------------------------------
    def kernel(x_ref, aw_ref,
               dw3a, dw3b, dw5a, dw5b, dw7a, dw7b, dwd3, dwd5,
               pw3a, pw3b, pw5a, pw5b, pw7a, pw7b, pwd3, pwd5,
               s_ref, avgw_ref, invcnt_ref, o_ref):
        x = x_ref[...].astype(jnp.float32)              # (NH, WC)
        S = s_ref[...]                                  # (WC, WC)
        xa = jnp.maximum(x, 0.0)                        # shared leading ReLU

        def w(i):                                       # arch weight i, (1, WC)
            return aw_ref[pl.ds(i, 1), :]

        # PRIMITIVES[0] == 'none' contributes w[0] * 0 and is skipped.
        acc = w(3) * x                                                   # skip_connect
        acc = acc + w(1) * _bn(_avg_pool3(x, avgw_ref, invcnt_ref), S)   # avg_pool + BN
        acc = acc + w(2) * _bn(_max_pool3(x), S)                         # max_pool + BN
        acc = acc + w(4) * _sep_conv(xa, dw3a, pw3a, dw3b, pw3b, 3, S)
        acc = acc + w(5) * _sep_conv(xa, dw5a, pw5a, dw5b, pw5b, 5, S)
        acc = acc + w(6) * _sep_conv(xa, dw7a, pw7a, dw7b, pw7b, 7, S)
        acc = acc + w(7) * _dil_conv(xa, dwd3, pwd3, 3, S)
        acc = acc + w(8) * _dil_conv(xa, dwd5, pwd5, 5, S)
        o_ref[...] = acc.astype(o_ref.dtype)

    return kernel


# ---------------------------------------------------------------------------
# Synthetic parameters (all BNs are affine=False -> no BN params).
def init_params(key, C):
    params = {}

    def nxt():
        nonlocal key
        key, sub = jax.random.split(key)
        return sub

    for k in SEP_KS:
        params[f'sep_{k}'] = dict(
            dw1=0.1 * jax.random.normal(nxt(), (k * k, C), jnp.float32),
            pw1=0.1 * jax.random.normal(nxt(), (C, C), jnp.float32),
            dw2=0.1 * jax.random.normal(nxt(), (k * k, C), jnp.float32),
            pw2=0.1 * jax.random.normal(nxt(), (C, C), jnp.float32),
        )
    for k in DIL_KS:
        params[f'dil_{k}'] = dict(
            dw=0.1 * jax.random.normal(nxt(), (k * k, C), jnp.float32),
            pw=0.1 * jax.random.normal(nxt(), (C, C), jnp.float32),
        )
    return params


# ---------------------------------------------------------------------------
# MixedOp.forward(x, weights), stride=1, NCHW in / NCHW out.
def mixed_op_forward(x_nchw, arch_weights, params):
    N, C, H, W = x_nchw.shape
    NH, WC = N * H, W * C
    # TODO(synk): generalize packing for W*C that is not a multiple of 128.
    assert WC % 128 == 0, "lane-dense packing expects W*C to be a multiple of 128"

    f32 = jnp.float32
    # NCHW -> lane-dense (N*H, W*C); channel is the fastest-varying lane index.
    x2d = jnp.transpose(x_nchw, (0, 2, 3, 1)).reshape(NH, WC).astype(f32)

    # ---- host-side packing of weights / masks (tiny, folds under jit) -------
    def lane_mask_np(s):
        wl = np.arange(WC) // C
        return ((wl + s >= 0) & (wl + s < W)).astype(np.float32)

    def pack_dw(w, k, dil):
        # (k*k, C) depthwise taps -> (k*k, W*C), lane-replicated + boundary-masked.
        pad = dil * (k - 1) // 2
        m = np.stack([lane_mask_np(kj * dil - pad)
                      for ki in range(k) for kj in range(k)])
        return jnp.tile(w.astype(f32), (1, W)) * jnp.asarray(m)

    eye_w = jnp.eye(W, dtype=f32)

    def pack_pw(w):
        # 1x1 conv on packed lanes == block-diagonal matmul: kron(I_W, W_pw).
        return jnp.kron(eye_w, w.astype(f32))

    dw_in, pw_in = [], []
    for k in SEP_KS:
        p = params[f'sep_{k}']
        dw_in += [pack_dw(p['dw1'], k, 1), pack_dw(p['dw2'], k, 1)]
        pw_in += [pack_pw(p['pw1']), pack_pw(p['pw2'])]
    for k in DIL_KS:
        p = params[f'dil_{k}']
        dw_in.append(pack_dw(p['dw'], k, 2))
        pw_in.append(pack_pw(p['pw']))

    # BN channel-sum / broadcast matrix.
    S = jnp.kron(jnp.ones((W, W), f32), jnp.eye(C, dtype=f32))          # (WC, WC)

    # avg-pool "weights": all-ones taps with the same boundary lane masks.
    avgw = pack_dw(jnp.ones((9, C), f32), 3, 1)
    # reciprocal of valid-tap counts (count_include_pad=False).
    h = np.arange(NH) % H
    wl = np.arange(WC) // C
    rc = sum(((h + t >= 0) & (h + t < H)).astype(np.float32) for t in (-1, 0, 1))
    cc = sum(((wl + s >= 0) & (wl + s < W)).astype(np.float32) for s in (-1, 0, 1))
    invcnt = jnp.asarray((1.0 / (rc[:, None] * cc[None, :])).astype(np.float32))

    # Architecture weights, lane-broadcast so no scalar extraction is needed.
    aw_b = jnp.tile(arch_weights.astype(f32).reshape(-1, 1), (1, WC))   # (9, WC)

    kernel = _make_kernel(N, H, W, C)
    vmem = pl.BlockSpec(memory_space=pltpu.MemorySpace.VMEM)
    n_in = 2 + len(dw_in) + len(pw_in) + 3

    out2d = pl.pallas_call(
        kernel,
        out_shape=jax.ShapeDtypeStruct((NH, WC), jnp.float32),
        in_specs=[vmem] * n_in,
        out_specs=vmem,
    )(x2d, aw_b, *dw_in, *pw_in, S, avgw, invcnt)

    y = out2d.reshape(N, H, W, C).astype(x_nchw.dtype)
    return jnp.transpose(y, (0, 3, 1, 2))               # back to NCHW


if __name__ == "__main__":
    N, C, H, W = 2, 8, 16, 16        # MixedOp(C=8, stride=1); W*C = 128 lanes
    key = jax.random.PRNGKey(0)
    kx, kw, kp = jax.random.split(key, 3)
    x = jax.random.normal(kx, (N, C, H, W), jnp.float32)
    arch_weights = jax.nn.softmax(
        jax.random.normal(kw, (len(PRIMITIVES),), jnp.float32))
    params = init_params(kp, C)

    fwd = jax.jit(mixed_op_forward)
    y = fwd(x, arch_weights, params)
    jax.block_until_ready(y)
    assert y.shape == (N, C, H, W) and y.dtype == jnp.float32
    print("KERNEL_OK")
</pallas_src>

<mosaic_0001>
module attributes {stable_mosaic.version = 11 : i64} {
  func.func @kernel(%arg0: memref<32x128xf32, #tpu.memory_space<vmem>>, %arg1: memref<9x128xf32, #tpu.memory_space<vmem>>, %arg2: memref<9x128xf32, #tpu.memory_space<vmem>>, %arg3: memref<9x128xf32, #tpu.memory_space<vmem>>, %arg4: memref<25x128xf32, #tpu.memory_space<vmem>>, %arg5: memref<25x128xf32, #tpu.memory_space<vmem>>, %arg6: memref<49x128xf32, #tpu.memory_space<vmem>>, %arg7: memref<49x128xf32, #tpu.memory_space<vmem>>, %arg8: memref<9x128xf32, #tpu.memory_space<vmem>>, %arg9: memref<25x128xf32, #tpu.memory_space<vmem>>, %arg10: memref<128x128xf32, #tpu.memory_space<vmem>>, %arg11: memref<128x128xf32, #tpu.memory_space<vmem>>, %arg12: memref<128x128xf32, #tpu.memory_space<vmem>>, %arg13: memref<128x128xf32, #tpu.memory_space<vmem>>, %arg14: memref<128x128xf32, #tpu.memory_space<vmem>>, %arg15: memref<128x128xf32, #tpu.memory_space<vmem>>, %arg16: memref<128x128xf32, #tpu.memory_space<vmem>>, %arg17: memref<128x128xf32, #tpu.memory_space<vmem>>, %arg18: memref<128x128xf32, #tpu.memory_space<vmem>>, %arg19: memref<9x128xf32, #tpu.memory_space<vmem>>, %arg20: memref<32x128xf32, #tpu.memory_space<vmem>>, %arg21: memref<32x128xf32, #tpu.memory_space<vmem>>) attributes {dimension_semantics = [], scalar_prefetch = 0 : i64, scratch_operands = 0 : i64, tpu.core_type = #tpu.core_type<tc>} {
    %c0 = arith.constant 0 : index
    %c0_0 = arith.constant 0 : index
    %0 = vector.load %arg0[%c0, %c0_0] : memref<32x128xf32, #tpu.memory_space<vmem>>, vector<32x128xf32>
    %c0_1 = arith.constant 0 : index
    %c0_2 = arith.constant 0 : index
    %1 = vector.load %arg18[%c0_1, %c0_2] : memref<128x128xf32, #tpu.memory_space<vmem>>, vector<128x128xf32>
    %cst = arith.constant 0.000000e+00 : f32
    %2 = vector.broadcast %cst : f32 to vector<32x128xf32>
    %3 = arith.maximumf %0, %2 : vector<32x128xf32>
    %c3 = arith.constant 3 : index
    %c0_3 = arith.constant 0 : index
    %4 = vector.load %arg1[%c3, %c0_3] : memref<9x128xf32, #tpu.memory_space<vmem>>, vector<1x128xf32>
    %5 = vector.broadcast %4 : vector<1x128xf32> to vector<32x128xf32>
    %6 = arith.mulf %5, %0 : vector<32x128xf32>
    %c1 = arith.constant 1 : index
    %c0_4 = arith.constant 0 : index
    %7 = vector.load %arg1[%c1, %c0_4] : memref<9x128xf32, #tpu.memory_space<vmem>>, vector<1x128xf32>
    %cst_5 = arith.constant 0.000000e+00 : f32
    %8 = vector.broadcast %cst_5 : f32 to vector<1x128xf32>
    %9 = vector.extract_strided_slice %0 {offsets = [0, 0], sizes = [16, 128], strides = [1, 1]} : vector<32x128xf32> to vector<16x128xf32>
    %10 = vector.extract_strided_slice %9 {offsets = [0, 0], sizes = [15, 128], strides = [1, 1]} : vector<16x128xf32> to vector<15x128xf32>
    %11 = vector.extract_strided_slice %0 {offsets = [16, 0], sizes = [16, 128], strides = [1, 1]} : vector<32x128xf32> to vector<16x128xf32>
    %12 = vector.extract_strided_slice %11 {offsets = [0, 0], sizes = [15, 128], strides = [1, 1]} : vector<16x128xf32> to vector<15x128xf32>
    %13 = tpu.concatenate %8, %10, %8, %12 in 0 : vector<1x128xf32>, vector<15x128xf32>, vector<1x128xf32>, vector<15x128xf32> -> vector<32x128xf32>
    %c8_i32 = arith.constant 8 : i32
    %14 = tpu.dynamic_rotate %13 by %c8_i32 dim 1 : vector<32x128xf32>, i32 -> vector<32x128xf32>
    %c0_6 = arith.constant 0 : index
    %c0_7 = arith.constant 0 : index
    %15 = vector.load %arg19[%c0_6, %c0_7] : memref<9x128xf32, #tpu.memory_space<vmem>>, vector<1x128xf32>
    %16 = vector.broadcast %15 : vector<1x128xf32> to vector<32x128xf32>
    %17 = arith.mulf %14, %16 : vector<32x128xf32>
    %c1_8 = arith.constant 1 : index
    %c0_9 = arith.constant 0 : index
    %18 = vector.load %arg19[%c1_8, %c0_9] : memref<9x128xf32, #tpu.memory_space<vmem>>, vector<1x128xf32>
    %19 = vector.broadcast %18 : vector<1x128xf32> to vector<32x128xf32>
    %20 = arith.mulf %13, %19 : vector<32x128xf32>
    %21 = arith.addf %17, %20 : vector<32x128xf32>
    %c120_i32 = arith.constant 120 : i32
    %22 = tpu.dynamic_rotate %13 by %c120_i32 dim 1 : vector<32x128xf32>, i32 -> vector<32x128xf32>
    %c2 = arith.constant 2 : index
    %c0_10 = arith.constant 0 : index
    %23 = vector.load %arg19[%c2, %c0_10] : memref<9x128xf32, #tpu.memory_space<vmem>>, vector<1x128xf32>
    %24 = vector.broadcast %23 : vector<1x128xf32> to vector<32x128xf32>
    %25 = arith.mulf %22, %24 : vector<32x128xf32>
    %26 = arith.addf %21, %25 : vector<32x128xf32>
    %c8_i32_11 = arith.constant 8 : i32
    %27 = tpu.dynamic_rotate %0 by %c8_i32_11 dim 1 : vector<32x128xf32>, i32 -> vector<32x128xf32>
    %c3_12 = arith.constant 3 : index
    %c0_13 = arith.constant 0 : index
    %28 = vector.load %arg19[%c3_12, %c0_13] : memref<9x128xf32, #tpu.memory_space<vmem>>, vector<1x128xf32>
    %29 = vector.broadcast %28 : vector<1x128xf32> to vector<32x128xf32>
    %30 = arith.mulf %27, %29 : vector<32x128xf32>
    %31 = arith.addf %26, %30 : vector<32x128xf32>
    %c4 = arith.constant 4 : index
    %c0_14 = arith.constant 0 : index
    %32 = vector.load %arg19[%c4, %c0_14] : memref<9x128xf32, #tpu.memory_space<vmem>>, vector<1x128xf32>
    %33 = vector.broadcast %32 : vector<1x128xf32> to vector<32x128xf32>
    %34 = arith.mulf %0, %33 : vector<32x128xf32>
    %35 = arith.addf %31, %34 : vector<32x128xf32>
    %c120_i32_15 = arith.constant 120 : i32
    %36 = tpu.dynamic_rotate %0 by %c120_i32_15 dim 1 : vector<32x128xf32>, i32 -> vector<32x128xf32>
    %c5 = arith.constant 5 : index
    %c0_16 = arith.constant 0 : index
    %37 = vector.load %arg19[%c5, %c0_16] : memref<9x128xf32, #tpu.memory_space<vmem>>, vector<1x128xf32>
    %38 = vector.broadcast %37 : vector<1x128xf32> to vector<32x128xf32>
    %39 = arith.mulf %36, %38 : vector<32x128xf32>
    %40 = arith.addf %35, %39 : vector<32x128xf32>
    %cst_17 = arith.constant 0.000000e+00 : f32
    %41 = vector.broadcast %cst_17 : f32 to vector<1x128xf32>
    %42 = vector.extract_strided_slice %0 {offsets = [0, 0], sizes = [16, 128], strides = [1, 1]} : vector<32x128xf32> to vector<16x128xf32>
    %43 = vector.extract_strided_slice %42 {offsets = [1, 0], sizes = [15, 128], strides = [1, 1]} : vector<16x128xf32> to vector<15x128xf32>
    %44 = vector.extract_strided_slice %0 {offsets = [16, 0], sizes = [16, 128], strides = [1, 1]} : vector<32x128xf32> to vector<16x128xf32>
    %45 = vector.extract_strided_slice %44 {offsets = [1, 0], sizes = [15, 128], strides = [1, 1]} : vector<16x128xf32> to vector<15x128xf32>
    %46 = tpu.concatenate %43, %41, %45, %41 in 0 : vector<15x128xf32>, vector<1x128xf32>, vector<15x128xf32>, vector<1x128xf32> -> vector<32x128xf32>
    %c8_i32_18 = arith.constant 8 : i32
    %47 = tpu.dynamic_rotate %46 by %c8_i32_18 dim 1 : vector<32x128xf32>, i32 -> vector<32x128xf32>
    %c6 = arith.constant 6 : index
    %c0_19 = arith.constant 0 : index
    %48 = vector.load %arg19[%c6, %c0_19] : memref<9x128xf32, #tpu.memory_space<vmem>>, vector<1x128xf32>
    %49 = vector.broadcast %48 : vector<1x128xf32> to vector<32x128xf32>
    %50 = arith.mulf %47, %49 : vector<32x128xf32>
    %51 = arith.addf %40, %50 : vector<32x128xf32>
    %c7 = arith.constant 7 : index
    %c0_20 = arith.constant 0 : index
    %52 = vector.load %arg19[%c7, %c0_20] : memref<9x128xf32, #tpu.memory_space<vmem>>, vector<1x128xf32>
    %53 = vector.broadcast %52 : vector<1x128xf32> to vector<32x128xf32>
    %54 = arith.mulf %46, %53 : vector<32x128xf32>
    %55 = arith.addf %51, %54 : vector<32x128xf32>
    %c120_i32_21 = arith.constant 120 : i32
    %56 = tpu.dynamic_rotate %46 by %c120_i32_21 dim 1 : vector<32x128xf32>, i32 -> vector<32x128xf32>
    %c8 = arith.constant 8 : index
    %c0_22 = arith.constant 0 : index
    %57 = vector.load %arg19[%c8, %c0_22] : memref<9x128xf32, #tpu.memory_space<vmem>>, vector<1x128xf32>
    %58 = vector.broadcast %57 : vector<1x128xf32> to vector<32x128xf32>
    %59 = arith.mulf %56, %58 : vector<32x128xf32>
    %60 = arith.addf %55, %59 : vector<32x128xf32>
    %c0_23 = arith.constant 0 : index
    %c0_24 = arith.constant 0 : index
    %61 = vector.load %arg20[%c0_23, %c0_24] : memref<32x128xf32, #tpu.memory_space<vmem>>, vector<32x128xf32>
    %62 = arith.mulf %60, %61 : vector<32x128xf32>
    %cst_25 = arith.constant dense<0.000000e+00> : vector<32x128xf32>
    %63 = tpu.matmul %62, %1, %cst_25 {dimension_numbers = #tpu.dot_dimension_numbers<[1], [0], [0], [1], [0, 0, 1, 1], [], []>} : vector<32x128xf32>, vector<128x128xf32>, vector<32x128xf32> -> vector<32x128xf32>
    %cst_26 = arith.constant dense<0.000000e+00> : vector<128xf32>
    %64 = vector.multi_reduction <add>, %63, %cst_26 [0] : vector<32x128xf32> to vector<128xf32>
    %65 = vector.shape_cast %64 : vector<128xf32> to vector<1x128xf32>
    %cst_27 = arith.constant 0.001953125 : f32
    %66 = vector.broadcast %cst_27 : f32 to vector<1x128xf32>
    %67 = arith.mulf %65, %66 : vector<1x128xf32>
    %68 = vector.broadcast %67 : vector<1x128xf32> to vector<32x128xf32>
    %69 = arith.subf %62, %68 : vector<32x128xf32>
    %70 = arith.mulf %69, %69 : vector<32x128xf32>
    %cst_28 = arith.constant dense<0.000000e+00> : vector<32x128xf32>
    %71 = tpu.matmul %70, %1, %cst_28 {dimension_numbers = #tpu.dot_dimension_numbers<[1], [0], [0], [1], [0, 0, 1, 1], [], []>} : vector<32x128xf32>, vector<128x128xf32>, vector<32x128xf32> -> vector<32x128xf32>
    %cst_29 = arith.constant dense<0.000000e+00> : vector<128xf32>
    %72 = vector.multi_reduction <add>, %71, %cst_29 [0] : vector<32x128xf32> to vector<128xf32>
    %73 = vector.shape_cast %72 : vector<128xf32> to vector<1x128xf32>
    %cst_30 = arith.constant 0.001953125 : f32
    %74 = vector.broadcast %cst_30 : f32 to vector<1x128xf32>
    %75 = arith.mulf %73, %74 : vector<1x128xf32>
    %cst_31 = arith.constant 9.99999974E-6 : f32
    %76 = vector.broadcast %cst_31 : f32 to vector<1x128xf32>
    %77 = arith.addf %75, %76 : vector<1x128xf32>
    %78 = math.rsqrt %77 : vector<1x128xf32>
    %79 = vector.broadcast %78 : vector<1x128xf32> to vector<32x128xf32>
    %80 = arith.mulf %69, %79 : vector<32x128xf32>
    %81 = vector.broadcast %7 : vector<1x128xf32> to vector<32x128xf32>
    %82 = arith.mulf %81, %80 : vector<32x128xf32>
    %83 = arith.addf %6, %82 : vector<32x128xf32>
    %c2_32 = arith.constant 2 : index
    %c0_33 = arith.constant 0 : index
    %84 = vector.load %arg1[%c2_32, %c0_33] : memref<9x128xf32, #tpu.memory_space<vmem>>, vector<1x128xf32>
    %cst_34 = arith.constant 0xFF800000 : f32
    %85 = vector.broadcast %cst_34 : f32 to vector<1x128xf32>
    %86 = vector.extract_strided_slice %0 {offsets = [0, 0], sizes = [16, 128], strides = [1, 1]} : vector<32x128xf32> to vector<16x128xf32>
    %87 = vector.extract_strided_slice %86 {offsets = [0, 0], sizes = [15, 128], strides = [1, 1]} : vector<16x128xf32> to vector<15x128xf32>
    %88 = vector.extract_strided_slice %0 {offsets = [16, 0], sizes = [16, 128], strides = [1, 1]} : vector<32x128xf32> to vector<16x128xf32>
    %89 = vector.extract_strided_slice %88 {offsets = [0, 0], sizes = [15, 128], strides = [1, 1]} : vector<16x128xf32> to vector<15x128xf32>
    %90 = tpu.concatenate %85, %87, %85, %89 in 0 : vector<1x128xf32>, vector<15x128xf32>, vector<1x128xf32>, vector<15x128xf32> -> vector<32x128xf32>
    %cst_35 = arith.constant 0xFF800000 : f32
    %91 = vector.broadcast %cst_35 : f32 to vector<32x8xf32>
    %92 = vector.extract_strided_slice %90 {offsets = [0, 0], sizes = [32, 120], strides = [1, 1]} : vector<32x128xf32> to vector<32x120xf32>
    %93 = tpu.concatenate %91, %92 in 1 : vector<32x8xf32>, vector<32x120xf32> -> vector<32x128xf32>
    %94 = arith.maximumf %0, %93 : vector<32x128xf32>
    %95 = arith.maximumf %94, %90 : vector<32x128xf32>
    %cst_36 = arith.constant 0xFF800000 : f32
    %96 = vector.broadcast %cst_36 : f32 to vector<32x8xf32>
    %97 = vector.extract_strided_slice %90 {offsets = [0, 8], sizes = [32, 120], strides = [1, 1]} : vector<32x128xf32> to vector<32x120xf32>
    %98 = tpu.concatenate %97, %96 in 1 : vector<32x120xf32>, vector<32x8xf32> -> vector<32x128xf32>
    %99 = arith.maximumf %95, %98 : vector<32x128xf32>
    %cst_37 = arith.constant 0xFF800000 : f32
    %100 = vector.broadcast %cst_37 : f32 to vector<32x8xf32>
    %101 = vector.extract_strided_slice %0 {offsets = [0, 0], sizes = [32, 120], strides = [1, 1]} : vector<32x128xf32> to vector<32x120xf32>
    %102 = tpu.concatenate %100, %101 in 1 : vector<32x8xf32>, vector<32x120xf32> -> vector<32x128xf32>
    %103 = arith.maximumf %99, %102 : vector<32x128xf32>
    %cst_38 = arith.constant 0xFF800000 : f32
    %104 = vector.broadcast %cst_38 : f32 to vector<32x8xf32>
    %105 = vector.extract_strided_slice %0 {offsets = [0, 8], sizes = [32, 120], strides = [1, 1]} : vector<32x128xf32> to vector<32x120xf32>
    %106 = tpu.concatenate %105, %104 in 1 : vector<32x120xf32>, vector<32x8xf32> -> vector<32x128xf32>
    %107 = arith.maximumf %103, %106 : vector<32x128xf32>
    %cst_39 = arith.constant 0xFF800000 : f32
    %108 = vector.broadcast %cst_39 : f32 to vector<1x128xf32>
    %109 = vector.extract_strided_slice %0 {offsets = [0, 0], sizes = [16, 128], strides = [1, 1]} : vector<32x128xf32> to vector<16x128xf32>
    %110 = vector.extract_strided_slice %109 {offsets = [1, 0], sizes = [15, 128], strides = [1, 1]} : vector<16x128xf32> to vector<15x128xf32>
    %111 = vector.extract_strided_slice %0 {offsets = [16, 0], sizes = [16, 128], strides = [1, 1]} : vector<32x128xf32> to vector<16x128xf32>
    %112 = vector.extract_strided_slice %111 {offsets = [1, 0], sizes = [15, 128], strides = [1, 1]} : vector<16x128xf32> to vector<15x128xf32>
    %113 = tpu.concatenate %110, %108, %112, %108 in 0 : vector<15x128xf32>, vector<1x128xf32>, vector<15x128xf32>, vector<1x128xf32> -> vector<32x128xf32>
    %cst_40 = arith.constant 0xFF800000 : f32
    %114 = vector.broadcast %cst_40 : f32 to vector<32x8xf32>
    %115 = vector.extract_strided_slice %113 {offsets = [0, 0], sizes = [32, 120], strides = [1, 1]} : vector<32x128xf32> to vector<32x120xf32>
    %116 = tpu.concatenate %114, %115 in 1 : vector<32x8xf32>, vector<32x120xf32> -> vector<32x128xf32>
    %117 = arith.maximumf %107, %116 : vector<32x128xf32>
    %118 = arith.maximumf %117, %113 : vector<32x128xf32>
    %cst_41 = arith.constant 0xFF800000 : f32
    %119 = vector.broadcast %cst_41 : f32 to vector<32x8xf32>
    %120 = vector.extract_strided_slice %113 {offsets = [0, 8], sizes = [32, 120], strides = [1, 1]} : vector<32x128xf32> to vector<32x120xf32>
    %121 = tpu.concatenate %120, %119 in 1 : vector<32x120xf32>, vector<32x8xf32> -> vector<32x128xf32>
    %122 = arith.maximumf %118, %121 : vector<32x128xf32>
    %cst_42 = arith.constant dense<0.000000e+00> : vector<32x128xf32>
    %123 = tpu.matmul %122, %1, %cst_42 {dimension_numbers = #tpu.dot_dimension_numbers<[1], [0], [0], [1], [0, 0, 1, 1], [], []>} : vector<32x128xf32>, vector<128x128xf32>, vector<32x128xf32> -> vector<32x128xf32>
    %cst_43 = arith.constant dense<0.000000e+00> : vector<128xf32>
    %124 = vector.multi_reduction <add>, %123, %cst_43 [0] : vector<32x128xf32> to vector<128xf32>
    %125 = vector.shape_cast %124 : vector<128xf32> to vector<1x128xf32>
    %cst_44 = arith.constant 0.001953125 : f32
    %126 = vector.broadcast %cst_44 : f32 to vector<1x128xf32>
    %127 = arith.mulf %125, %126 : vector<1x128xf32>
    %128 = vector.broadcast %127 : vector<1x128xf32> to vector<32x128xf32>
    %129 = arith.subf %122, %128 : vector<32x128xf32>
    %130 = arith.mulf %129, %129 : vector<32x128xf32>
    %cst_45 = arith.constant dense<0.000000e+00> : vector<32x128xf32>
    %131 = tpu.matmul %130, %1, %cst_45 {dimension_numbers = #tpu.dot_dimension_numbers<[1], [0], [0], [1], [0, 0, 1, 1], [], []>} : vector<32x128xf32>, vector<128x128xf32>, vector<32x128xf32> -> vector<32x128xf32>
    %cst_46 = arith.constant dense<0.000000e+00> : vector<128xf32>
    %132 = vector.multi_reduction <add>, %131, %cst_46 [0] : vector<32x128xf32> to vector<128xf32>
    %133 = vector.shape_cast %132 : vector<128xf32> to vector<1x128xf32>
    %cst_47 = arith.constant 0.001953125 : f32
    %134 = vector.broadcast %cst_47 : f32 to vector<1x128xf32>
    %135 = arith.mulf %133, %134 : vector<1x128xf32>
    %cst_48 = arith.constant 9.99999974E-6 : f32
    %136 = vector.broadcast %cst_48 : f32 to vector<1x128xf32>
    %137 = arith.addf %135, %136 : vector<1x128xf32>
    %138 = math.rsqrt %137 : vector<1x128xf32>
    %139 = vector.broadcast %138 : vector<1x128xf32> to vector<32x128xf32>
    %140 = arith.mulf %129, %139 : vector<32x128xf32>
    %141 = vector.broadcast %84 : vector<1x128xf32> to vector<32x128xf32>
    %142 = arith.mulf %141, %140 : vector<32x128xf32>
    %143 = arith.addf %83, %142 : vector<32x128xf32>
    %c4_49 = arith.constant 4 : index
    %c0_50 = arith.constant 0 : index
    %144 = vector.load %arg1[%c4_49, %c0_50] : memref<9x128xf32, #tpu.memory_space<vmem>>, vector<1x128xf32>
    %cst_51 = arith.constant 0.000000e+00 : f32
    %145 = vector.broadcast %cst_51 : f32 to vector<1x128xf32>
    %146 = vector.extract_strided_slice %3 {offsets = [0, 0], sizes = [16, 128], strides = [1, 1]} : vector<32x128xf32> to vector<16x128xf32>
    %147 = vector.extract_strided_slice %146 {offsets = [0, 0], sizes = [15, 128], strides = [1, 1]} : vector<16x128xf32> to vector<15x128xf32>
    %148 = vector.extract_strided_slice %3 {offsets = [16, 0], sizes = [16, 128], strides = [1, 1]} : vector<32x128xf32> to vector<16x128xf32>
    %149 = vector.extract_strided_slice %148 {offsets = [0, 0], sizes = [15, 128], strides = [1, 1]} : vector<16x128xf32> to vector<15x128xf32>
    %150 = tpu.concatenate %145, %147, %145, %149 in 0 : vector<1x128xf32>, vector<15x128xf32>, vector<1x128xf32>, vector<15x128xf32> -> vector<32x128xf32>
    %c8_i32_52 = arith.constant 8 : i32
    %151 = tpu.dynamic_rotate %150 by %c8_i32_52 dim 1 : vector<32x128xf32>, i32 -> vector<32x128xf32>
    %c0_53 = arith.constant 0 : index
    %c0_54 = arith.constant 0 : index
    %152 = vector.load %arg2[%c0_53, %c0_54] : memref<9x128xf32, #tpu.memory_space<vmem>>, vector<1x128xf32>
    %153 = vector.broadcast %152 : vector<1x128xf32> to vector<32x128xf32>
    %154 = arith.mulf %151, %153 : vector<32x128xf32>
    %c1_55 = arith.constant 1 : index
    %c0_56 = arith.constant 0 : index
    %155 = vector.load %arg2[%c1_55, %c0_56] : memref<9x128xf32, #tpu.memory_space<vmem>>, vector<1x128xf32>
    %156 = vector.broadcast %155 : vector<1x128xf32> to vector<32x128xf32>
    %157 = arith.mulf %150, %156 : vector<32x128xf32>
    %158 = arith.addf %154, %157 : vector<32x128xf32>
    %c120_i32_57 = arith.constant 120 : i32
    %159 = tpu.dynamic_rotate %150 by %c120_i32_57 dim 1 : vector<32x128xf32>, i32 -> vector<32x128xf32>
    %c2_58 = arith.constant 2 : index
    %c0_59 = arith.constant 0 : index
    %160 = vector.load %arg2[%c2_58, %c0_59] : memref<9x128xf32, #tpu.memory_space<vmem>>, vector<1x128xf32>
    %161 = vector.broadcast %160 : vector<1x128xf32> to vector<32x128xf32>
    %162 = arith.mulf %159, %161 : vector<32x128xf32>
    %163 = arith.addf %158, %162 : vector<32x128xf32>
    %c8_i32_60 = arith.constant 8 : i32
    %164 = tpu.dynamic_rotate %3 by %c8_i32_60 dim 1 : vector<32x128xf32>, i32 -> vector<32x128xf32>
    %c3_61 = arith.constant 3 : index
    %c0_62 = arith.constant 0 : index
    %165 = vector.load %arg2[%c3_61, %c0_62] : memref<9x128xf32, #tpu.memory_space<vmem>>, vector<1x128xf32>
    %166 = vector.broadcast %165 : vector<1x128xf32> to vector<32x128xf32>
    %167 = arith.mulf %164, %166 : vector<32x128xf32>
    %168 = arith.addf %163, %167 : vector<32x128xf32>
    %c4_63 = arith.constant 4 : index
    %c0_64 = arith.constant 0 : index
    %169 = vector.load %arg2[%c4_63, %c0_64] : memref<9x128xf32, #tpu.memory_space<vmem>>, vector<1x128xf32>
    %170 = vector.broadcast %169 : vector<1x128xf32> to vector<32x128xf32>
    %171 = arith.mulf %3, %170 : vector<32x128xf32>
    %172 = arith.addf %168, %171 : vector<32x128xf32>
    %c120_i32_65 = arith.constant 120 : i32
    %173 = tpu.dynamic_rotate %3 by %c120_i32_65 dim 1 : vector<32x128xf32>, i32 -> vector<32x128xf32>
    %c5_66 = arith.constant 5 : index
    %c0_67 = arith.constant 0 : index
    %174 = vector.load %arg2[%c5_66, %c0_67] : memref<9x128xf32, #tpu.memory_space<vmem>>, vector<1x128xf32>
    %175 = vector.broadcast %174 : vector<1x128xf32> to vector<32x128xf32>
    %176 = arith.mulf %173, %175 : vector<32x128xf32>
    %177 = arith.addf %172, %176 : vector<32x128xf32>
    %cst_68 = arith.constant 0.000000e+00 : f32
    %178 = vector.broadcast %cst_68 : f32 to vector<1x128xf32>
    %179 = vector.extract_strided_slice %3 {offsets = [0, 0], sizes = [16, 128], strides = [1, 1]} : vector<32x128xf32> to vector<16x128xf32>
    %180 = vector.extract_strided_slice %179 {offsets = [1, 0], sizes = [15, 128], strides = [1, 1]} : vector<16x128xf32> to vector<15x128xf32>
    %181 = vector.extract_strided_slice %3 {offsets = [16, 0], sizes = [16, 128], strides = [1, 1]} : vector<32x128xf32> to vector<16x128xf32>
    %182 = vector.extract_strided_slice %181 {offsets = [1, 0], sizes = [15, 128], strides = [1, 1]} : vector<16x128xf32> to vector<15x128xf32>
    %183 = tpu.concatenate %180, %178, %182, %178 in 0 : vector<15x128xf32>, vector<1x128xf32>, vector<15x128xf32>, vector<1x128xf32> -> vector<32x128xf32>
    %c8_i32_69 = arith.constant 8 : i32
    %184 = tpu.dynamic_rotate %183 by %c8_i32_69 dim 1 : vector<32x128xf32>, i32 -> vector<32x128xf32>
    %c6_70 = arith.constant 6 : index
    %c0_71 = arith.constant 0 : index
    %185 = vector.load %arg2[%c6_70, %c0_71] : memref<9x128xf32, #tpu.memory_space<vmem>>, vector<1x128xf32>
    %186 = vector.broadcast %185 : vector<1x128xf32> to vector<32x128xf32>
    %187 = arith.mulf %184, %186 : vector<32x128xf32>
    %188 = arith.addf %177, %187 : vector<32x128xf32>
    %c7_72 = arith.constant 7 : index
    %c0_73 = arith.constant 0 : index
    %189 = vector.load %arg2[%c7_72, %c0_73] : memref<9x128xf32, #tpu.memory_space<vmem>>, vector<1x128xf32>
    %190 = vector.broadcast %189 : vector<1x128xf32> to vector<32x128xf32>
    %191 = arith.mulf %183, %190 : vector<32x128xf32>
    %192 = arith.addf %188, %191 : vector<32x128xf32>
    %c120_i32_74 = arith.constant 120 : i32
    %193 = tpu.dynamic_rotate %183 by %c120_i32_74 dim 1 : vector<32x128xf32>, i32 -> vector<32x128xf32>
    %c8_75 = arith.constant 8 : index
    %c0_76 = arith.constant 0 : index
    %194 = vector.load %arg2[%c8_75, %c0_76] : memref<9x128xf32, #tpu.memory_space<vmem>>, vector<1x128xf32>
    %195 = vector.broadcast %194 : vector<1x128xf32> to vector<32x128xf32>
    %196 = arith.mulf %193, %195 : vector<32x128xf32>
    %197 = arith.addf %192, %196 : vector<32x128xf32>
    %c0_77 = arith.constant 0 : index
    %c0_78 = arith.constant 0 : index
    %198 = vector.load %arg10[%c0_77, %c0_78] : memref<128x128xf32, #tpu.memory_space<vmem>>, vector<128x128xf32>
    %cst_79 = arith.constant dense<0.000000e+00> : vector<32x128xf32>
    %199 = tpu.matmul %197, %198, %cst_79 {dimension_numbers = #tpu.dot_dimension_numbers<[1], [0], [0], [1], [0, 0, 1, 1], [], []>} : vector<32x128xf32>, vector<128x128xf32>, vector<32x128xf32> -> vector<32x128xf32>
    %cst_80 = arith.constant dense<0.000000e+00> : vector<32x128xf32>
    %200 = tpu.matmul %199, %1, %cst_80 {dimension_numbers = #tpu.dot_dimension_numbers<[1], [0], [0], [1], [0, 0, 1, 1], [], []>} : vector<32x128xf32>, vector<128x128xf32>, vector<32x128xf32> -> vector<32x128xf32>
    %cst_81 = arith.constant dense<0.000000e+00> : vector<128xf32>
    %201 = vector.multi_reduction <add>, %200, %cst_81 [0] : vector<32x128xf32> to vector<128xf32>
    %202 = vector.shape_cast %201 : vector<128xf32> to vector<1x128xf32>
    %cst_82 = arith.constant 0.001953125 : f32
    %203 = vector.broadcast %cst_82 : f32 to vector<1x128xf32>
    %204 = arith.mulf %202, %203 : vector<1x128xf32>
    %205 = vector.broadcast %204 : vector<1x128xf32> to vector<32x128xf32>
    %206 = arith.subf %199, %205 : vector<32x128xf32>
    %207 = arith.mulf %206, %206 : vector<32x128xf32>
    %cst_83 = arith.constant dense<0.000000e+00> : vector<32x128xf32>
    %208 = tpu.matmul %207, %1, %cst_83 {dimension_numbers = #tpu.dot_dimension_numbers<[1], [0], [0], [1], [0, 0, 1, 1], [], []>} : vector<32x128xf32>, vector<128x128xf32>, vector<32x128xf32> -> vector<32x128xf32>
    %cst_84 = arith.constant dense<0.000000e+00> : vector<128xf32>
    %209 = vector.multi_reduction <add>, %208, %cst_84 [0] : vector<32x128xf32> to vector<128xf32>
    %210 = vector.shape_cast %209 : vector<128xf32> to vector<1x128xf32>
    %cst_85 = arith.constant 0.001953125 : f32
    %211 = vector.broadcast %cst_85 : f32 to vector<1x128xf32>
    %212 = arith.mulf %210, %211 : vector<1x128xf32>
    %cst_86 = arith.constant 9.99999974E-6 : f32
    %213 = vector.broadcast %cst_86 : f32 to vector<1x128xf32>
    %214 = arith.addf %212, %213 : vector<1x128xf32>
    %215 = math.rsqrt %214 : vector<1x128xf32>
    %216 = vector.broadcast %215 : vector<1x128xf32> to vector<32x128xf32>
    %217 = arith.mulf %206, %216 : vector<32x128xf32>
    %cst_87 = arith.constant 0.000000e+00 : f32
    %218 = vector.broadcast %cst_87 : f32 to vector<32x128xf32>
    %219 = arith.maximumf %217, %218 : vector<32x128xf32>
    %cst_88 = arith.constant 0.000000e+00 : f32
    %220 = vector.broadcast %cst_88 : f32 to vector<1x128xf32>
    %221 = vector.extract_strided_slice %219 {offsets = [0, 0], sizes = [16, 128], strides = [1, 1]} : vector<32x128xf32> to vector<16x128xf32>
    %222 = vector.extract_strided_slice %221 {offsets = [0, 0], sizes = [15, 128], strides = [1, 1]} : vector<16x128xf32> to vector<15x128xf32>
    %223 = vector.extract_strided_slice %219 {offsets = [16, 0], sizes = [16, 128], strides = [1, 1]} : vector<32x128xf32> to vector<16x128xf32>
    %224 = vector.extract_strided_slice %223 {offsets = [0, 0], sizes = [15, 128], strides = [1, 1]} : vector<16x128xf32> to vector<15x128xf32>
    %225 = tpu.concatenate %220, %222, %220, %224 in 0 : vector<1x128xf32>, vector<15x128xf32>, vector<1x128xf32>, vector<15x128xf32> -> vector<32x128xf32>
    %c8_i32_89 = arith.constant 8 : i32
    %226 = tpu.dynamic_rotate %225 by %c8_i32_89 dim 1 : vector<32x128xf32>, i32 -> vector<32x128xf32>
    %c0_90 = arith.constant 0 : index
    %c0_91 = arith.constant 0 : index
    %227 = vector.load %arg3[%c0_90, %c0_91] : memref<9x128xf32, #tpu.memory_space<vmem>>, vector<1x128xf32>
    %228 = vector.broadcast %227 : vector<1x128xf32> to vector<32x128xf32>
    %229 = arith.mulf %226, %228 : vector<32x128xf32>
    %c1_92 = arith.constant 1 : index
    %c0_93 = arith.constant 0 : index
    %230 = vector.load %arg3[%c1_92, %c0_93] : memref<9x128xf32, #tpu.memory_space<vmem>>, vector<1x128xf32>
    %231 = vector.broadcast %230 : vector<1x128xf32> to vector<32x128xf32>
    %232 = arith.mulf %225, %231 : vector<32x128xf32>
    %233 = arith.addf %229, %232 : vector<32x128xf32>
    %c120_i32_94 = arith.constant 120 : i32
    %234 = tpu.dynamic_rotate %225 by %c120_i32_94 dim 1 : vector<32x128xf32>, i32 -> vector<32x128xf32>
    %c2_95 = arith.constant 2 : index
    %c0_96 = arith.constant 0 : index
    %235 = vector.load %arg3[%c2_95, %c0_96] : memref<9x128xf32, #tpu.memory_space<vmem>>, vector<1x128xf32>
    %236 = vector.broadcast %235 : vector<1x128xf32> to vector<32x128xf32>
    %237 = arith.mulf %234, %236 : vector<32x128xf32>
    %238 = arith.addf %233, %237 : vector<32x128xf32>
    %c8_i32_97 = arith.constant 8 : i32
    %239 = tpu.dynamic_rotate %219 by %c8_i32_97 dim 1 : vector<32x128xf32>, i32 -> vector<32x128xf32>
    %c3_98 = arith.constant 3 : index
    %c0_99 = arith.constant 0 : index
    %240 = vector.load %arg3[%c3_98, %c0_99] : memref<9x128xf32, #tpu.memory_space<vmem>>, vector<1x128xf32>
    %241 = vector.broadcast %240 : vector<1x128xf32> to vector<32x128xf32>
    %242 = arith.mulf %239, %241 : vector<32x128xf32>
    %243 = arith.addf %238, %242 : vector<32x128xf32>
    %c4_100 = arith.constant 4 : index
    %c0_101 = arith.constant 0 : index
    %244 = vector.load %arg3[%c4_100, %c0_101] : memref<9x128xf32, #tpu.memory_space<vmem>>, vector<1x128xf32>
    %245 = vector.broadcast %244 : vector<1x128xf32> to vector<32x128xf32>
    %246 = arith.mulf %219, %245 : vector<32x128xf32>
    %247 = arith.addf %243, %246 : vector<32x128xf32>
    %c120_i32_102 = arith.constant 120 : i32
    %248 = tpu.dynamic_rotate %219 by %c120_i32_102 dim 1 : vector<32x128xf32>, i32 -> vector<32x128xf32>
    %c5_103 = arith.constant 5 : index
    %c0_104 = arith.constant 0 : index
    %249 = vector.load %arg3[%c5_103, %c0_104] : memref<9x128xf32, #tpu.memory_space<vmem>>, vector<1x128xf32>
    %250 = vector.broadcast %249 : vector<1x128xf32> to vector<32x128xf32>
    %251 = arith.mulf %248, %250 : vector<32x128xf32>
    %252 = arith.addf %247, %251 : vector<32x128xf32>
    %cst_105 = arith.constant 0.000000e+00 : f32
    %253 = vector.broadcast %cst_105 : f32 to vector<1x128xf32>
    %254 = vector.extract_strided_slice %219 {offsets = [0, 0], sizes = [16, 128], strides = [1, 1]} : vector<32x128xf32> to vector<16x128xf32>
    %255 = vector.extract_strided_slice %254 {offsets = [1, 0], sizes = [15, 128], strides = [1, 1]} : vector<16x128xf32> to vector<15x128xf32>
    %256 = vector.extract_strided_slice %219 {offsets = [16, 0], sizes = [16, 128], strides = [1, 1]} : vector<32x128xf32> to vector<16x128xf32>
    %257 = vector.extract_strided_slice %256 {offsets = [1, 0], sizes = [15, 128], strides = [1, 1]} : vector<16x128xf32> to vector<15x128xf32>
    %258 = tpu.concatenate %255, %253, %257, %253 in 0 : vector<15x128xf32>, vector<1x128xf32>, vector<15x128xf32>, vector<1x128xf32> -> vector<32x128xf32>
    %c8_i32_106 = arith.constant 8 : i32
    %259 = tpu.dynamic_rotate %258 by %c8_i32_106 dim 1 : vector<32x128xf32>, i32 -> vector<32x128xf32>
    %c6_107 = arith.constant 6 : index
    %c0_108 = arith.constant 0 : index
    %260 = vector.load %arg3[%c6_107, %c0_108] : memref<9x128xf32, #tpu.memory_space<vmem>>, vector<1x128xf32>
    %261 = vector.broadcast %260 : vector<1x128xf32> to vector<32x128xf32>
    %262 = arith.mulf %259, %261 : vector<32x128xf32>
    %263 = arith.addf %252, %262 : vector<32x128xf32>
    %c7_109 = arith.constant 7 : index
    %c0_110 = arith.constant 0 : index
    %264 = vector.load %arg3[%c7_109, %c0_110] : memref<9x128xf32, #tpu.memory_space<vmem>>, vector<1x128xf32>
    %265 = vector.broadcast %264 : vector<1x128xf32> to vector<32x128xf32>
    %266 = arith.mulf %258, %265 : vector<32x128xf32>
    %267 = arith.addf %263, %266 : vector<32x128xf32>
    %c120_i32_111 = arith.constant 120 : i32
    %268 = tpu.dynamic_rotate %258 by %c120_i32_111 dim 1 : vector<32x128xf32>, i32 -> vector<32x128xf32>
    %c8_112 = arith.constant 8 : index
    %c0_113 = arith.constant 0 : index
    %269 = vector.load %arg3[%c8_112, %c0_113] : memref<9x128xf32, #tpu.memory_space<vmem>>, vector<1x128xf32>
    %270 = vector.broadcast %269 : vector<1x128xf32> to vector<32x128xf32>
    %271 = arith.mulf %268, %270 : vector<32x128xf32>
    %272 = arith.addf %267, %271 : vector<32x128xf32>
    %c0_114 = arith.constant 0 : index
    %c0_115 = arith.constant 0 : index
    %273 = vector.load %arg11[%c0_114, %c0_115] : memref<128x128xf32, #tpu.memory_space<vmem>>, vector<128x128xf32>
    %cst_116 = arith.constant dense<0.000000e+00> : vector<32x128xf32>
    %274 = tpu.matmul %272, %273, %cst_116 {dimension_numbers = #tpu.dot_dimension_numbers<[1], [0], [0], [1], [0, 0, 1, 1], [], []>} : vector<32x128xf32>, vector<128x128xf32>, vector<32x128xf32> -> vector<32x128xf32>
    %cst_117 = arith.constant dense<0.000000e+00> : vector<32x128xf32>
    %275 = tpu.matmul %274, %1, %cst_117 {dimension_numbers = #tpu.dot_dimension_numbers<[1], [0], [0], [1], [0, 0, 1, 1], [], []>} : vector<32x128xf32>, vector<128x128xf32>, vector<32x128xf32> -> vector<32x128xf32>
    %cst_118 = arith.constant dense<0.000000e+00> : vector<128xf32>
    %276 = vector.multi_reduction <add>, %275, %cst_118 [0] : vector<32x128xf32> to vector<128xf32>
    %277 = vector.shape_cast %276 : vector<128xf32> to vector<1x128xf32>
    %cst_119 = arith.constant 0.001953125 : f32
    %278 = vector.broadcast %cst_119 : f32 to vector<1x128xf32>
    %279 = arith.mulf %277, %278 : vector<1x128xf32>
    %280 = vector.broadcast %279 : vector<1x128xf32> to vector<32x128xf32>
    %281 = arith.subf %274, %280 : vector<32x128xf32>
    %282 = arith.mulf %281, %281 : vector<32x128xf32>
    %cst_120 = arith.constant dense<0.000000e+00> : vector<32x128xf32>
    %283 = tpu.matmul %282, %1, %cst_120 {dimension_numbers = #tpu.dot_dimension_numbers<[1], [0], [0], [1], [0, 0, 1, 1], [], []>} : vector<32x128xf32>, vector<128x128xf32>, vector<32x128xf32> -> vector<32x128xf32>
    %cst_121 = arith.constant dense<0.000000e+00> : vector<128xf32>
    %284 = vector.multi_reduction <add>, %283, %cst_121 [0] : vector<32x128xf32> to vector<128xf32>
    %285 = vector.shape_cast %284 : vector<128xf32> to vector<1x128xf32>
    %cst_122 = arith.constant 0.001953125 : f32
    %286 = vector.broadcast %cst_122 : f32 to vector<1x128xf32>
    %287 = arith.mulf %285, %286 : vector<1x128xf32>
    %cst_123 = arith.constant 9.99999974E-6 : f32
    %288 = vector.broadcast %cst_123 : f32 to vector<1x128xf32>
    %289 = arith.addf %287, %288 : vector<1x128xf32>
    %290 = math.rsqrt %289 : vector<1x128xf32>
    %291 = vector.broadcast %290 : vector<1x128xf32> to vector<32x128xf32>
    %292 = arith.mulf %281, %291 : vector<32x128xf32>
    %293 = vector.broadcast %144 : vector<1x128xf32> to vector<32x128xf32>
    %294 = arith.mulf %293, %292 : vector<32x128xf32>
    %295 = arith.addf %143, %294 : vector<32x128xf32>
    %c5_124 = arith.constant 5 : index
    %c0_125 = arith.constant 0 : index
    %296 = vector.load %arg1[%c5_124, %c0_125] : memref<9x128xf32, #tpu.memory_space<vmem>>, vector<1x128xf32>
    %cst_126 = arith.constant 0.000000e+00 : f32
    %297 = vector.broadcast %cst_126 : f32 to vector<2x128xf32>
    %298 = vector.extract_strided_slice %3 {offsets = [0, 0], sizes = [16, 128], strides = [1, 1]} : vector<32x128xf32> to vector<16x128xf32>
    %299 = vector.extract_strided_slice %298 {offsets = [0, 0], sizes = [14, 128], strides = [1, 1]} : vector<16x128xf32> to vector<14x128xf32>
    %300 = vector.extract_strided_slice %3 {offsets = [16, 0], sizes = [16, 128], strides = [1, 1]} : vector<32x128xf32> to vector<16x128xf32>
    %301 = vector.extract_strided_slice %300 {offsets = [0, 0], sizes = [14, 128], strides = [1, 1]} : vector<16x128xf32> to vector<14x128xf32>
    %302 = tpu.concatenate %297, %299, %297, %301 in 0 : vector<2x128xf32>, vector<14x128xf32>, vector<2x128xf32>, vector<14x128xf32> -> vector<32x128xf32>
    %c16_i32 = arith.constant 16 : i32
    %303 = tpu.dynamic_rotate %302 by %c16_i32 dim 1 : vector<32x128xf32>, i32 -> vector<32x128xf32>
    %c0_127 = arith.constant 0 : index
    %c0_128 = arith.constant 0 : index
    %304 = vector.load %arg4[%c0_127, %c0_128] : memref<25x128xf32, #tpu.memory_space<vmem>>, vector<1x128xf32>
    %305 = vector.broadcast %304 : vector<1x128xf32> to vector<32x128xf32>
    %306 = arith.mulf %303, %305 : vector<32x128xf32>
    %c8_i32_129 = arith.constant 8 : i32
    %307 = tpu.dynamic_rotate %302 by %c8_i32_129 dim 1 : vector<32x128xf32>, i32 -> vector<32x128xf32>
    %c1_130 = arith.constant 1 : index
    %c0_131 = arith.constant 0 : index
    %308 = vector.load %arg4[%c1_130, %c0_131] : memref<25x128xf32, #tpu.memory_space<vmem>>, vector<1x128xf32>
    %309 = vector.broadcast %308 : vector<1x128xf32> to vector<32x128xf32>
    %310 = arith.mulf %307, %309 : vector<32x128xf32>
    %311 = arith.addf %306, %310 : vector<32x128xf32>
    %c2_132 = arith.constant 2 : index
    %c0_133 = arith.constant 0 : index
    %312 = vector.load %arg4[%c2_132, %c0_133] : memref<25x128xf32, #tpu.memory_space<vmem>>, vector<1x128xf32>
    %313 = vector.broadcast %312 : vector<1x128xf32> to vector<32x128xf32>
    %314 = arith.mulf %302, %313 : vector<32x128xf32>
    %315 = arith.addf %311, %314 : vector<32x128xf32>
    %c120_i32_134 = arith.constant 120 : i32
    %316 = tpu.dynamic_rotate %302 by %c120_i32_134 dim 1 : vector<32x128xf32>, i32 -> vector<32x128xf32>
    %c3_135 = arith.constant 3 : index
    %c0_136 = arith.constant 0 : index
    %317 = vector.load %arg4[%c3_135, %c0_136] : memref<25x128xf32, #tpu.memory_space<vmem>>, vector<1x128xf32>
    %318 = vector.broadcast %317 : vector<1x128xf32> to vector<32x128xf32>
    %319 = arith.mulf %316, %318 : vector<32x128xf32>
    %320 = arith.addf %315, %319 : vector<32x128xf32>
    %c112_i32 = arith.constant 112 : i32
    %321 = tpu.dynamic_rotate %302 by %c112_i32 dim 1 : vector<32x128xf32>, i32 -> vector<32x128xf32>
    %c4_137 = arith.constant 4 : index
    %c0_138 = arith.constant 0 : index
    %322 = vector.load %arg4[%c4_137, %c0_138] : memref<25x128xf32, #tpu.memory_space<vmem>>, vector<1x128xf32>
    %323 = vector.broadcast %322 : vector<1x128xf32> to vector<32x128xf32>
    %324 = arith.mulf %321, %323 : vector<32x128xf32>
    %325 = arith.addf %320, %324 : vector<32x128xf32>
    %cst_139 = arith.constant 0.000000e+00 : f32
    %326 = vector.broadcast %cst_139 : f32 to vector<1x128xf32>
    %327 = vector.extract_strided_slice %3 {offsets = [0, 0], sizes = [16, 128], strides = [1, 1]} : vector<32x128xf32> to vector<16x128xf32>
    %328 = vector.extract_strided_slice %327 {offsets = [0, 0], sizes = [15, 128], strides = [1, 1]} : vector<16x128xf32> to vector<15x128xf32>
    %329 = vector.extract_strided_slice %3 {offsets = [16, 0], sizes = [16, 128], strides = [1, 1]} : vector<32x128xf32> to vector<16x128xf32>
    %330 = vector.extract_strided_slice %329 {offsets = [0, 0], sizes = [15, 128], strides = [1, 1]} : vector<16x128xf32> to vector<15x128xf32>
    %331 = tpu.concatenate %326, %328, %326, %330 in 0 : vector<1x128xf32>, vector<15x128xf32>, vector<1x128xf32>, vector<15x128xf32> -> vector<32x128xf32>
    %c16_i32_140 = arith.constant 16 : i32
    %332 = tpu.dynamic_rotate %331 by %c16_i32_140 dim 1 : vector<32x128xf32>, i32 -> vector<32x128xf32>
    %c5_141 = arith.constant 5 : index
    %c0_142 = arith.constant 0 : index
    %333 = vector.load %arg4[%c5_141, %c0_142] : memref<25x128xf32, #tpu.memory_space<vmem>>, vector<1x128xf32>
    %334 = vector.broadcast %333 : vector<1x128xf32> to vector<32x128xf32>
    %335 = arith.mulf %332, %334 : vector<32x128xf32>
    %336 = arith.addf %325, %335 : vector<32x128xf32>
    %c8_i32_143 = arith.constant 8 : i32
    %337 = tpu.dynamic_rotate %331 by %c8_i32_143 dim 1 : vector<32x128xf32>, i32 -> vector<32x128xf32>
    %c6_144 = arith.constant 6 : index
    %c0_145 = arith.constant 0 : index
    %338 = vector.load %arg4[%c6_144, %c0_145] : memref<25x128xf32, #tpu.memory_space<vmem>>, vector<1x128xf32>
    %339 = vector.broadcast %338 : vector<1x128xf32> to vector<32x128xf32>
    %340 = arith.mulf %337, %339 : vector<32x128xf32>
    %341 = arith.addf %336, %340 : vector<32x128xf32>
    %c7_146 = arith.constant 7 : index
    %c0_147 = arith.constant 0 : index
    %342 = vector.load %arg4[%c7_146, %c0_147] : memref<25x128xf32, #tpu.memory_space<vmem>>, vector<1x128xf32>
    %343 = vector.broadcast %342 : vector<1x128xf32> to vector<32x128xf32>
    %344 = arith.mulf %331, %343 : vector<32x128xf32>
    %345 = arith.addf %341, %344 : vector<32x128xf32>
    %c120_i32_148 = arith.constant 120 : i32
    %346 = tpu.dynamic_rotate %331 by %c120_i32_148 dim 1 : vector<32x128xf32>, i32 -> vector<32x128xf32>
    %c8_149 = arith.constant 8 : index
    %c0_150 = arith.constant 0 : index
    %347 = vector.load %arg4[%c8_149, %c0_150] : memref<25x128xf32, #tpu.memory_space<vmem>>, vector<1x128xf32>
    %348 = vector.broadcast %347 : vector<1x128xf32> to vector<32x128xf32>
    %349 = arith.mulf %346, %348 : vector<32x128xf32>
    %350 = arith.addf %345, %349 : vector<32x128xf32>
    %c112_i32_151 = arith.constant 112 : i32
    %351 = tpu.dynamic_rotate %331 by %c112_i32_151 dim 1 : vector<32x128xf32>, i32 -> vector<32x128xf32>
    %c9 = arith.constant 9 : index
    %c0_152 = arith.constant 0 : index
    %352 = vector.load %arg4[%c9, %c0_152] : memref<25x128xf32, #tpu.memory_space<vmem>>, vector<1x128xf32>
    %353 = vector.broadcast %352 : vector<1x128xf32> to vector<32x128xf32>
    %354 = arith.mulf %351, %353 : vector<32x128xf32>
    %355 = arith.addf %350, %354 : vector<32x128xf32>
    %c16_i32_153 = arith.constant 16 : i32
    %356 = tpu.dynamic_rotate %3 by %c16_i32_153 dim 1 : vector<32x128xf32>, i32 -> vector<32x128xf32>
    %c10 = arith.constant 10 : index
    %c0_154 = arith.constant 0 : index
    %357 = vector.load %arg4[%c10, %c0_154] : memref<25x128xf32, #tpu.memory_space<vmem>>, vector<1x128xf32>
    %358 = vector.broadcast %357 : vector<1x128xf32> to vector<32x128xf32>
    %359 = arith.mulf %356, %358 : vector<32x128xf32>
    %360 = arith.addf %355, %359 : vector<32x128xf32>
    %c8_i32_155 = arith.constant 8 : i32
    %361 = tpu.dynamic_rotate %3 by %c8_i32_155 dim 1 : vector<32x128xf32>, i32 -> vector<32x128xf32>
    %c11 = arith.constant 11 : index
    %c0_156 = arith.constant 0 : index
    %362 = vector.load %arg4[%c11, %c0_156] : memref<25x128xf32, #tpu.memory_space<vmem>>, vector<1x128xf32>
    %363 = vector.broadcast %362 : vector<1x128xf32> to vector<32x128xf32>
    %364 = arith.mulf %361, %363 : vector<32x128xf32>
    %365 = arith.addf %360, %364 : vector<32x128xf32>
    %c12 = arith.constant 12 : index
    %c0_157 = arith.constant 0 : index
    %366 = vector.load %arg4[%c12, %c0_157] : memref<25x128xf32, #tpu.memory_space<vmem>>, vector<1x128xf32>
    %367 = vector.broadcast %366 : vector<1x128xf32> to vector<32x128xf32>
    %368 = arith.mulf %3, %367 : vector<32x128xf32>
    %369 = arith.addf %365, %368 : vector<32x128xf32>
    %c120_i32_158 = arith.constant 120 : i32
    %370 = tpu.dynamic_rotate %3 by %c120_i32_158 dim 1 : vector<32x128xf32>, i32 -> vector<32x128xf32>
    %c13 = arith.constant 13 : index
    %c0_159 = arith.constant 0 : index
    %371 = vector.load %arg4[%c13, %c0_159] : memref<25x128xf32, #tpu.memory_space<vmem>>, vector<1x128xf32>
    %372 = vector.broadcast %371 : vector<1x128xf32> to vector<32x128xf32>
    %373 = arith.mulf %370, %372 : vector<32x128xf32>
    %374 = arith.addf %369, %373 : vector<32x128xf32>
    %c112_i32_160 = arith.constant 112 : i32
    %375 = tpu.dynamic_rotate %3 by %c112_i32_160 dim 1 : vector<32x128xf32>, i32 -> vector<32x128xf32>
    %c14 = arith.constant 14 : index
    %c0_161 = arith.constant 0 : index
    %376 = vector.load %arg4[%c14, %c0_161] : memref<25x128xf32, #tpu.memory_space<vmem>>, vector<1x128xf32>
    %377 = vector.broadcast %376 : vector<1x128xf32> to vector<32x128xf32>
    %378 = arith.mulf %375, %377 : vector<32x128xf32>
    %379 = arith.addf %374, %378 : vector<32x128xf32>
    %cst_162 = arith.constant 0.000000e+00 : f32
    %380 = vector.broadcast %cst_162 : f32 to vector<1x128xf32>
    %381 = vector.extract_strided_slice %3 {offsets = [0, 0], sizes = [16, 128], strides = [1, 1]} : vector<32x128xf32> to vector<16x128xf32>
    %382 = vector.extract_strided_slice %381 {offsets = [1, 0], sizes = [15, 128], strides = [1, 1]} : vector<16x128xf32> to vector<15x128xf32>
    %383 = vector.extract_strided_slice %3 {offsets = [16, 0], sizes = [16, 128], strides = [1, 1]} : vector<32x128xf32> to vector<16x128xf32>
    %384 = vector.extract_strided_slice %383 {offsets = [1, 0], sizes = [15, 128], strides = [1, 1]} : vector<16x128xf32> to vector<15x128xf32>
    %385 = tpu.concatenate %382, %380, %384, %380 in 0 : vector<15x128xf32>, vector<1x128xf32>, vector<15x128xf32>, vector<1x128xf32> -> vector<32x128xf32>
    %c16_i32_163 = arith.constant 16 : i32
    %386 = tpu.dynamic_rotate %385 by %c16_i32_163 dim 1 : vector<32x128xf32>, i32 -> vector<32x128xf32>
    %c15 = arith.constant 15 : index
    %c0_164 = arith.constant 0 : index
    %387 = vector.load %arg4[%c15, %c0_164] : memref<25x128xf32, #tpu.memory_space<vmem>>, vector<1x128xf32>
    %388 = vector.broadcast %387 : vector<1x128xf32> to vector<32x128xf32>
    %389 = arith.mulf %386, %388 : vector<32x128xf32>
    %390 = arith.addf %379, %389 : vector<32x128xf32>
    %c8_i32_165 = arith.constant 8 : i32
    %391 = tpu.dynamic_rotate %385 by %c8_i32_165 dim 1 : vector<32x128xf32>, i32 -> vector<32x128xf32>
    %c16 = arith.constant 16 : index
    %c0_166 = arith.constant 0 : index
    %392 = vector.load %arg4[%c16, %c0_166] : memref<25x128xf32, #tpu.memory_space<vmem>>, vector<1x128xf32>
    %393 = vector.broadcast %392 : vector<1x128xf32> to vector<32x128xf32>
    %394 = arith.mulf %391, %393 : vector<32x128xf32>
    %395 = arith.addf %390, %394 : vector<32x128xf32>
    %c17 = arith.constant 17 : index
    %c0_167 = arith.constant 0 : index
    %396 = vector.load %arg4[%c17, %c0_167] : memref<25x128xf32, #tpu.memory_space<vmem>>, vector<1x128xf32>
    %397 = vector.broadcast %396 : vector<1x128xf32> to vector<32x128xf32>
    %398 = arith.mulf %385, %397 : vector<32x128xf32>
    %399 = arith.addf %395, %398 : vector<32x128xf32>
    %c120_i32_168 = arith.constant 120 : i32
    %400 = tpu.dynamic_rotate %385 by %c120_i32_168 dim 1 : vector<32x128xf32>, i32 -> vector<32x128xf32>
    %c18 = arith.constant 18 : index
    %c0_169 = arith.constant 0 : index
    %401 = vector.load %arg4[%c18, %c0_169] : memref<25x128xf32, #tpu.memory_space<vmem>>, vector<1x128xf32>
    %402 = vector.broadcast %401 : vector<1x128xf32> to vector<32x128xf32>
    %403 = arith.mulf %400, %402 : vector<32x128xf32>
    %404 = arith.addf %399, %403 : vector<32x128xf32>
    %c112_i32_170 = arith.constant 112 : i32
    %405 = tpu.dynamic_rotate %385 by %c112_i32_170 dim 1 : vector<32x128xf32>, i32 -> vector<32x128xf32>
    %c19 = arith.constant 19 : index
    %c0_171 = arith.constant 0 : index
    %406 = vector.load %arg4[%c19, %c0_171] : memref<25x128xf32, #tpu.memory_space<vmem>>, vector<1x128xf32>
    %407 = vector.broadcast %406 : vector<1x128xf32> to vector<32x128xf32>
    %408 = arith.mulf %405, %407 : vector<32x128xf32>
    %409 = arith.addf %404, %408 : vector<32x128xf32>
    %cst_172 = arith.constant 0.000000e+00 : f32
    %410 = vector.broadcast %cst_172 : f32 to vector<2x128xf32>
    %411 = vector.extract_strided_slice %3 {offsets = [0, 0], sizes = [16, 128], strides = [1, 1]} : vector<32x128xf32> to vector<16x128xf32>
    %412 = vector.extract_strided_slice %411 {offsets = [2, 0], sizes = [14, 128], strides = [1, 1]} : vector<16x128xf32> to vector<14x128xf32>
    %413 = vector.extract_strided_slice %3 {offsets = [16, 0], sizes = [16, 128], strides = [1, 1]} : vector<32x128xf32> to vector<16x128xf32>
    %414 = vector.extract_strided_slice %413 {offsets = [2, 0], sizes = [14, 128], strides = [1, 1]} : vector<16x128xf32> to vector<14x128xf32>
    %415 = tpu.concatenate %412, %410, %414, %410 in 0 : vector<14x128xf32>, vector<2x128xf32>, vector<14x128xf32>, vector<2x128xf32> -> vector<32x128xf32>
    %c16_i32_173 = arith.constant 16 : i32
    %416 = tpu.dynamic_rotate %415 by %c16_i32_173 dim 1 : vector<32x128xf32>, i32 -> vector<32x128xf32>
    %c20 = arith.constant 20 : index
    %c0_174 = arith.constant 0 : index
    %417 = vector.load %arg4[%c20, %c0_174] : memref<25x128xf32, #tpu.memory_space<vmem>>, vector<1x128xf32>
    %418 = vector.broadcast %417 : vector<1x128xf32> to vector<32x128xf32>
    %419 = arith.mulf %416, %418 : vector<32x128xf32>
    %420 = arith.addf %409, %419 : vector<32x128xf32>
    %c8_i32_175 = arith.constant 8 : i32
    %421 = tpu.dynamic_rotate %415 by %c8_i32_175 dim 1 : vector<32x128xf32>, i32 -> vector<32x128xf32>
    %c21 = arith.constant 21 : index
    %c0_176 = arith.constant 0 : index
    %422 = vector.load %arg4[%c21, %c0_176] : memref<25x128xf32, #tpu.memory_space<vmem>>, vector<1x128xf32>
    %423 = vector.broadcast %422 : vector<1x128xf32> to vector<32x128xf32>
    %424 = arith.mulf %421, %423 : vector<32x128xf32>
    %425 = arith.addf %420, %424 : vector<32x128xf32>
    %c22 = arith.constant 22 : index
    %c0_177 = arith.constant 0 : index
    %426 = vector.load %arg4[%c22, %c0_177] : memref<25x128xf32, #tpu.memory_space<vmem>>, vector<1x128xf32>
    %427 = vector.broadcast %426 : vector<1x128xf32> to vector<32x128xf32>
    %428 = arith.mulf %415, %427 : vector<32x128xf32>
    %429 = arith.addf %425, %428 : vector<32x128xf32>
    %c120_i32_178 = arith.constant 120 : i32
    %430 = tpu.dynamic_rotate %415 by %c120_i32_178 dim 1 : vector<32x128xf32>, i32 -> vector<32x128xf32>
    %c23 = arith.constant 23 : index
    %c0_179 = arith.constant 0 : index
    %431 = vector.load %arg4[%c23, %c0_179] : memref<25x128xf32, #tpu.memory_space<vmem>>, vector<1x128xf32>
    %432 = vector.broadcast %431 : vector<1x128xf32> to vector<32x128xf32>
    %433 = arith.mulf %430, %432 : vector<32x128xf32>
    %434 = arith.addf %429, %433 : vector<32x128xf32>
    %c112_i32_180 = arith.constant 112 : i32
    %435 = tpu.dynamic_rotate %415 by %c112_i32_180 dim 1 : vector<32x128xf32>, i32 -> vector<32x128xf32>
    %c24 = arith.constant 24 : index
    %c0_181 = arith.constant 0 : index
    %436 = vector.load %arg4[%c24, %c0_181] : memref<25x128xf32, #tpu.memory_space<vmem>>, vector<1x128xf32>
    %437 = vector.broadcast %436 : vector<1x128xf32> to vector<32x128xf32>
    %438 = arith.mulf %435, %437 : vector<32x128xf32>
    %439 = arith.addf %434, %438 : vector<32x128xf32>
    %c0_182 = arith.constant 0 : index
    %c0_183 = arith.constant 0 : index
    %440 = vector.load %arg12[%c0_182, %c0_183] : memref<128x128xf32, #tpu.memory_space<vmem>>, vector<128x128xf32>
    %cst_184 = arith.constant dense<0.000000e+00> : vector<32x128xf32>
    %441 = tpu.matmul %439, %440, %cst_184 {dimension_numbers = #tpu.dot_dimension_numbers<[1], [0], [0], [1], [0, 0, 1, 1], [], []>} : vector<32x128xf32>, vector<128x128xf32>, vector<32x128xf32> -> vector<32x128xf32>
    %cst_185 = arith.constant dense<0.000000e+00> : vector<32x128xf32>
    %442 = tpu.matmul %441, %1, %cst_185 {dimension_numbers = #tpu.dot_dimension_numbers<[1], [0], [0], [1], [0, 0, 1, 1], [], []>} : vector<32x128xf32>, vector<128x128xf32>, vector<32x128xf32> -> vector<32x128xf32>
    %cst_186 = arith.constant dense<0.000000e+00> : vector<128xf32>
    %443 = vector.multi_reduction <add>, %442, %cst_186 [0] : vector<32x128xf32> to vector<128xf32>
    %444 = vector.shape_cast %443 : vector<128xf32> to vector<1x128xf32>
    %cst_187 = arith.constant 0.001953125 : f32
    %445 = vector.broadcast %cst_187 : f32 to vector<1x128xf32>
    %446 = arith.mulf %444, %445 : vector<1x128xf32>
    %447 = vector.broadcast %446 : vector<1x128xf32> to vector<32x128xf32>
    %448 = arith.subf %441, %447 : vector<32x128xf32>
    %449 = arith.mulf %448, %448 : vector<32x128xf32>
    %cst_188 = arith.constant dense<0.000000e+00> : vector<32x128xf32>
    %450 = tpu.matmul %449, %1, %cst_188 {dimension_numbers = #tpu.dot_dimension_numbers<[1], [0], [0], [1], [0, 0, 1, 1], [], []>} : vector<32x128xf32>, vector<128x128xf32>, vector<32x128xf32> -> vector<32x128xf32>
    %cst_189 = arith.constant dense<0.000000e+00> : vector<128xf32>
    %451 = vector.multi_reduction <add>, %450, %cst_189 [0] : vector<32x128xf32> to vector<128xf32>
    %452 = vector.shape_cast %451 : vector<128xf32> to vector<1x128xf32>
    %cst_190 = arith.constant 0.001953125 : f32
    %453 = vector.broadcast %cst_190 : f32 to vector<1x128xf32>
    %454 = arith.mulf %452, %453 : vector<1x128xf32>
    %cst_191 = arith.constant 9.99999974E-6 : f32
    %455 = vector.broadcast %cst_191 : f32 to vector<1x128xf32>
    %456 = arith.addf %454, %455 : vector<1x128xf32>
    %457 = math.rsqrt %456 : vector<1x128xf32>
    %458 = vector.broadcast %457 : vector<1x128xf32> to vector<32x128xf32>
    %459 = arith.mulf %448, %458 : vector<32x128xf32>
    %cst_192 = arith.constant 0.000000e+00 : f32
    %460 = vector.broadcast %cst_192 : f32 to vector<32x128xf32>
    %461 = arith.maximumf %459, %460 : vector<32x128xf32>
    %cst_193 = arith.constant 0.000000e+00 : f32
    %462 = vector.broadcast %cst_193 : f32 to vector<2x128xf32>
    %463 = vector.extract_strided_slice %461 {offsets = [0, 0], sizes = [16, 128], strides = [1, 1]} : vector<32x128xf32> to vector<16x128xf32>
    %464 = vector.extract_strided_slice %463 {offsets = [0, 0], sizes = [14, 128], strides = [1, 1]} : vector<16x128xf32> to vector<14x128xf32>
    %465 = vector.extract_strided_slice %461 {offsets = [16, 0], sizes = [16, 128], strides = [1, 1]} : vector<32x128xf32> to vector<16x128xf32>
    %466 = vector.extract_strided_slice %465 {offsets = [0, 0], sizes = [14, 128], strides = [1, 1]} : vector<16x128xf32> to vector<14x128xf32>
    %467 = tpu.concatenate %462, %464, %462, %466 in 0 : vector<2x128xf32>, vector<14x128xf32>, vector<2x128xf32>, vector<14x128xf32> -> vector<32x128xf32>
    %c16_i32_194 = arith.constant 16 : i32
    %468 = tpu.dynamic_rotate %467 by %c16_i32_194 dim 1 : vector<32x128xf32>, i32 -> vector<32x128xf32>
    %c0_195 = arith.constant 0 : index
    %c0_196 = arith.constant 0 : index
    %469 = vector.load %arg5[%c0_195, %c0_196] : memref<25x128xf32, #tpu.memory_space<vmem>>, vector<1x128xf32>
    %470 = vector.broadcast %469 : vector<1x128xf32> to vector<32x128xf32>
    %471 = arith.mulf %468, %470 : vector<32x128xf32>
    %c8_i32_197 = arith.constant 8 : i32
    %472 = tpu.dynamic_rotate %467 by %c8_i32_197 dim 1 : vector<32x128xf32>, i32 -> vector<32x128xf32>
    %c1_198 = arith.constant 1 : index
    %c0_199 = arith.constant 0 : index
    %473 = vector.load %arg5[%c1_198, %c0_199] : memref<25x128xf32, #tpu.memory_space<vmem>>, vector<1x128xf32>
    %474 = vector.broadcast %473 : vector<1x128xf32> to vector<32x128xf32>
    %475 = arith.mulf %472, %474 : vector<32x128xf32>
    %476 = arith.addf %471, %475 : vector<32x128xf32>
    %c2_200 = arith.constant 2 : index
    %c0_201 = arith.constant 0 : index
    %477 = vector.load %arg5[%c2_200, %c0_201] : memref<25x128xf32, #tpu.memory_space<vmem>>, vector<1x128xf32>
    %478 = vector.broadcast %477 : vector<1x128xf32> to vector<32x128xf32>
    %479 = arith.mulf %467, %478 : vector<32x128xf32>
    %480 = arith.addf %476, %479 : vector<32x128xf32>
    %c120_i32_202 = arith.constant 120 : i32
    %481 = tpu.dynamic_rotate %467 by %c120_i32_202 dim 1 : vector<32x128xf32>, i32 -> vector<32x128xf32>
    %c3_203 = arith.constant 3 : index
    %c0_204 = arith.constant 0 : index
    %482 = vector.load %arg5[%c3_203, %c0_204] : memref<25x128xf32, #tpu.memory_space<vmem>>, vector<1x128xf32>
    %483 = vector.broadcast %482 : vector<1x128xf32> to vector<32x128xf32>
    %484 = arith.mulf %481, %483 : vector<32x128xf32>
    %485 = arith.addf %480, %484 : vector<32x128xf32>
    %c112_i32_205 = arith.constant 112 : i32
    %486 = tpu.dynamic_rotate %467 by %c112_i32_205 dim 1 : vector<32x128xf32>, i32 -> vector<32x128xf32>
    %c4_206 = arith.constant 4 : index
    %c0_207 = arith.constant 0 : index
    %487 = vector.load %arg5[%c4_206, %c0_207] : memref<25x128xf32, #tpu.memory_space<vmem>>, vector<1x128xf32>
    %488 = vector.broadcast %487 : vector<1x128xf32> to vector<32x128xf32>
    %489 = arith.mulf %486, %488 : vector<32x128xf32>
    %490 = arith.addf %485, %489 : vector<32x128xf32>
    %cst_208 = arith.constant 0.000000e+00 : f32
    %491 = vector.broadcast %cst_208 : f32 to vector<1x128xf32>
    %492 = vector.extract_strided_slice %461 {offsets = [0, 0], sizes = [16, 128], strides = [1, 1]} : vector<32x128xf32> to vector<16x128xf32>
    %493 = vector.extract_strided_slice %492 {offsets = [0, 0], sizes = [15, 128], strides = [1, 1]} : vector<16x128xf32> to vector<15x128xf32>
    %494 = vector.extract_strided_slice %461 {offsets = [16, 0], sizes = [16, 128], strides = [1, 1]} : vector<32x128xf32> to vector<16x128xf32>
    %495 = vector.extract_strided_slice %494 {offsets = [0, 0], sizes = [15, 128], strides = [1, 1]} : vector<16x128xf32> to vector<15x128xf32>
    %496 = tpu.concatenate %491, %493, %491, %495 in 0 : vector<1x128xf32>, vector<15x128xf32>, vector<1x128xf32>, vector<15x128xf32> -> vector<32x128xf32>
    %c16_i32_209 = arith.constant 16 : i32
    %497 = tpu.dynamic_rotate %496 by %c16_i32_209 dim 1 : vector<32x128xf32>, i32 -> vector<32x128xf32>
    %c5_210 = arith.constant 5 : index
    %c0_211 = arith.constant 0 : index
    %498 = vector.load %arg5[%c5_210, %c0_211] : memref<25x128xf32, #tpu.memory_space<vmem>>, vector<1x128xf32>
    %499 = vector.broadcast %498 : vector<1x128xf32> to vector<32x128xf32>
    %500 = arith.mulf %497, %499 : vector<32x128xf32>
    %501 = arith.addf %490, %500 : vector<32x128xf32>
    %c8_i32_212 = arith.constant 8 : i32
    %502 = tpu.dynamic_rotate %496 by %c8_i32_212 dim 1 : vector<32x128xf32>, i32 -> vector<32x128xf32>
    %c6_213 = arith.constant 6 : index
    %c0_214 = arith.constant 0 : index
    %503 = vector.load %arg5[%c6_213, %c0_214] : memref<25x128xf32, #tpu.memory_space<vmem>>, vector<1x128xf32>
    %504 = vector.broadcast %503 : vector<1x128xf32> to vector<32x128xf32>
    %505 = arith.mulf %502, %504 : vector<32x128xf32>
    %506 = arith.addf %501, %505 : vector<32x128xf32>
    %c7_215 = arith.constant 7 : index
    %c0_216 = arith.constant 0 : index
    %507 = vector.load %arg5[%c7_215, %c0_216] : memref<25x128xf32, #tpu.memory_space<vmem>>, vector<1x128xf32>
    %508 = vector.broadcast %507 : vector<1x128xf32> to vector<32x128xf32>
    %509 = arith.mulf %496, %508 : vector<32x128xf32>
    %510 = arith.addf %506, %509 : vector<32x128xf32>
    %c120_i32_217 = arith.constant 120 : i32
    %511 = tpu.dynamic_rotate %496 by %c120_i32_217 dim 1 : vector<32x128xf32>, i32 -> vector<32x128xf32>
    %c8_218 = arith.constant 8 : index
    %c0_219 = arith.constant 0 : index
    %512 = vector.load %arg5[%c8_218, %c0_219] : memref<25x128xf32, #tpu.memory_space<vmem>>, vector<1x128xf32>
    %513 = vector.broadcast %512 : vector<1x128xf32> to vector<32x128xf32>
    %514 = arith.mulf %511, %513 : vector<32x128xf32>
    %515 = arith.addf %510, %514 : vector<32x128xf32>
    %c112_i32_220 = arith.constant 112 : i32
    %516 = tpu.dynamic_rotate %496 by %c112_i32_220 dim 1 : vector<32x128xf32>, i32 -> vector<32x128xf32>
    %c9_221 = arith.constant 9 : index
    %c0_222 = arith.constant 0 : index
    %517 = vector.load %arg5[%c9_221, %c0_222] : memref<25x128xf32, #tpu.memory_space<vmem>>, vector<1x128xf32>
    %518 = vector.broadcast %517 : vector<1x128xf32> to vector<32x128xf32>
    %519 = arith.mulf %516, %518 : vector<32x128xf32>
    %520 = arith.addf %515, %519 : vector<32x128xf32>
    %c16_i32_223 = arith.constant 16 : i32
    %521 = tpu.dynamic_rotate %461 by %c16_i32_223 dim 1 : vector<32x128xf32>, i32 -> vector<32x128xf32>
    %c10_224 = arith.constant 10 : index
    %c0_225 = arith.constant 0 : index
    %522 = vector.load %arg5[%c10_224, %c0_225] : memref<25x128xf32, #tpu.memory_space<vmem>>, vector<1x128xf32>
    %523 = vector.broadcast %522 : vector<1x128xf32> to vector<32x128xf32>
    %524 = arith.mulf %521, %523 : vector<32x128xf32>
    %525 = arith.addf %520, %524 : vector<32x128xf32>
    %c8_i32_226 = arith.constant 8 : i32
    %526 = tpu.dynamic_rotate %461 by %c8_i32_226 dim 1 : vector<32x128xf32>, i32 -> vector<32x128xf32>
    %c11_227 = arith.constant 11 : index
    %c0_228 = arith.constant 0 : index
    %527 = vector.load %arg5[%c11_227, %c0_228] : memref<25x128xf32, #tpu.memory_space<vmem>>, vector<1x128xf32>
    %528 = vector.broadcast %527 : vector<1x128xf32> to vector<32x128xf32>
    %529 = arith.mulf %526, %528 : vector<32x128xf32>
    %530 = arith.addf %525, %529 : vector<32x128xf32>
    %c12_229 = arith.constant 12 : index
    %c0_230 = arith.constant 0 : index
    %531 = vector.load %arg5[%c12_229, %c0_230] : memref<25x128xf32, #tpu.memory_space<vmem>>, vector<1x128xf32>
    %532 = vector.broadcast %531 : vector<1x128xf32> to vector<32x128xf32>
    %533 = arith.mulf %461, %532 : vector<32x128xf32>
    %534 = arith.addf %530, %533 : vector<32x128xf32>
    %c120_i32_231 = arith.constant 120 : i32
    %535 = tpu.dynamic_rotate %461 by %c120_i32_231 dim 1 : vector<32x128xf32>, i32 -> vector<32x128xf32>
    %c13_232 = arith.constant 13 : index
    %c0_233 = arith.constant 0 : index
    %536 = vector.load %arg5[%c13_232, %c0_233] : memref<25x128xf32, #tpu.memory_space<vmem>>, vector<1x128xf32>
    %537 = vector.broadcast %536 : vector<1x128xf32> to vector<32x128xf32>
    %538 = arith.mulf %535, %537 : vector<32x128xf32>
    %539 = arith.addf %534, %538 : vector<32x128xf32>
    %c112_i32_234 = arith.constant 112 : i32
    %540 = tpu.dynamic_rotate %461 by %c112_i32_234 dim 1 : vector<32x128xf32>, i32 -> vector<32x128xf32>
    %c14_235 = arith.constant 14 : index
    %c0_236 = arith.constant 0 : index
    %541 = vector.load %arg5[%c14_235, %c0_236] : memref<25x128xf32, #tpu.memory_space<vmem>>, vector<1x128xf32>
    %542 = vector.broadcast %541 : vector<1x128xf32> to vector<32x128xf32>
    %543 = arith.mulf %540, %542 : vector<32x128xf32>
    %544 = arith.addf %539, %543 : vector<32x128xf32>
    %cst_237 = arith.constant 0.000000e+00 : f32
    %545 = vector.broadcast %cst_237 : f32 to vector<1x128xf32>
    %546 = vector.extract_strided_slice %461 {offsets = [0, 0], sizes = [16, 128], strides = [1, 1]} : vector<32x128xf32> to vector<16x128xf32>
    %547 = vector.extract_strided_slice %546 {offsets = [1, 0], sizes = [15, 128], strides = [1, 1]} : vector<16x128xf32> to vector<15x128xf32>
    %548 = vector.extract_strided_slice %461 {offsets = [16, 0], sizes = [16, 128], strides = [1, 1]} : vector<32x128xf32> to vector<16x128xf32>
    %549 = vector.extract_strided_slice %548 {offsets = [1, 0], sizes = [15, 128], strides = [1, 1]} : vector<16x128xf32> to vector<15x128xf32>
    %550 = tpu.concatenate %547, %545, %549, %545 in 0 : vector<15x128xf32>, vector<1x128xf32>, vector<15x128xf32>, vector<1x128xf32> -> vector<32x128xf32>
    %c16_i32_238 = arith.constant 16 : i32
    %551 = tpu.dynamic_rotate %550 by %c16_i32_238 dim 1 : vector<32x128xf32>, i32 -> vector<32x128xf32>
    %c15_239 = arith.constant 15 : index
    %c0_240 = arith.constant 0 : index
    %552 = vector.load %arg5[%c15_239, %c0_240] : memref<25x128xf32, #tpu.memory_space<vmem>>, vector<1x128xf32>
    %553 = vector.broadcast %552 : vector<1x128xf32> to vector<32x128xf32>
    %554 = arith.mulf %551, %553 : vector<32x128xf32>
    %555 = arith.addf %544, %554 : vector<32x128xf32>
    %c8_i32_241 = arith.constant 8 : i32
    %556 = tpu.dynamic_rotate %550 by %c8_i32_241 dim 1 : vector<32x128xf32>, i32 -> vector<32x128xf32>
    %c16_242 = arith.constant 16 : index
    %c0_243 = arith.constant 0 : index
    %557 = vector.load %arg5[%c16_242, %c0_243] : memref<25x128xf32, #tpu.memory_space<vmem>>, vector<1x128xf32>
    %558 = vector.broadcast %557 : vector<1x128xf32> to vector<32x128xf32>
    %559 = arith.mulf %556, %558 : vector<32x128xf32>
    %560 = arith.addf %555, %559 : vector<32x128xf32>
    %c17_244 = arith.constant 17 : index
    %c0_245 = arith.constant 0 : index
    %561 = vector.load %arg5[%c17_244, %c0_245] : memref<25x128xf32, #tpu.memory_space<vmem>>, vector<1x128xf32>
    %562 = vector.broadcast %561 : vector<1x128xf32> to vector<32x128xf32>
    %563 = arith.mulf %550, %562 : vector<32x128xf32>
    %564 = arith.addf %560, %563 : vector<32x128xf32>
    %c120_i32_246 = arith.constant 120 : i32
    %565 = tpu.dynamic_rotate %550 by %c120_i32_246 dim 1 : vector<32x128xf32>, i32 -> vector<32x128xf32>
    %c18_247 = arith.constant 18 : index
    %c0_248 = arith.constant 0 : index
    %566 = vector.load %arg5[%c18_247, %c0_248] : memref<25x128xf32, #tpu.memory_space<vmem>>, vector<1x128xf32>
    %567 = vector.broadcast %566 : vector<1x128xf32> to vector<32x128xf32>
    %568 = arith.mulf %565, %567 : vector<32x128xf32>
    %569 = arith.addf %564, %568 : vector<32x128xf32>
    %c112_i32_249 = arith.constant 112 : i32
    %570 = tpu.dynamic_rotate %550 by %c112_i32_249 dim 1 : vector<32x128xf32>, i32 -> vector<32x128xf32>
    %c19_250 = arith.constant 19 : index
    %c0_251 = arith.constant 0 : index
    %571 = vector.load %arg5[%c19_250, %c0_251] : memref<25x128xf32, #tpu.memory_space<vmem>>, vector<1x128xf32>
    %572 = vector.broadcast %571 : vector<1x128xf32> to vector<32x128xf32>
    %573 = arith.mulf %570, %572 : vector<32x128xf32>
    %574 = arith.addf %569, %573 : vector<32x128xf32>
    %cst_252 = arith.constant 0.000000e+00 : f32
    %575 = vector.broadcast %cst_252 : f32 to vector<2x128xf32>
    %576 = vector.extract_strided_slice %461 {offsets = [0, 0], sizes = [16, 128], strides = [1, 1]} : vector<32x128xf32> to vector<16x128xf32>
    %577 = vector.extract_strided_slice %576 {offsets = [2, 0], sizes = [14, 128], strides = [1, 1]} : vector<16x128xf32> to vector<14x128xf32>
    %578 = vector.extract_strided_slice %461 {offsets = [16, 0], sizes = [16, 128], strides = [1, 1]} : vector<32x128xf32> to vector<16x128xf32>
    %579 = vector.extract_strided_slice %578 {offsets = [2, 0], sizes = [14, 128], strides = [1, 1]} : vector<16x128xf32> to vector<14x128xf32>
    %580 = tpu.concatenate %577, %575, %579, %575 in 0 : vector<14x128xf32>, vector<2x128xf32>, vector<14x128xf32>, vector<2x128xf32> -> vector<32x128xf32>
    %c16_i32_253 = arith.constant 16 : i32
    %581 = tpu.dynamic_rotate %580 by %c16_i32_253 dim 1 : vector<32x128xf32>, i32 -> vector<32x128xf32>
    %c20_254 = arith.constant 20 : index
    %c0_255 = arith.constant 0 : index
    %582 = vector.load %arg5[%c20_254, %c0_255] : memref<25x128xf32, #tpu.memory_space<vmem>>, vector<1x128xf32>
    %583 = vector.broadcast %582 : vector<1x128xf32> to vector<32x128xf32>
    %584 = arith.mulf %581, %583 : vector<32x128xf32>
    %585 = arith.addf %574, %584 : vector<32x128xf32>
    %c8_i32_256 = arith.constant 8 : i32
    %586 = tpu.dynamic_rotate %580 by %c8_i32_256 dim 1 : vector<32x128xf32>, i32 -> vector<32x128xf32>
    %c21_257 = arith.constant 21 : index
    %c0_258 = arith.constant 0 : index
    %587 = vector.load %arg5[%c21_257, %c0_258] : memref<25x128xf32, #tpu.memory_space<vmem>>, vector<1x128xf32>
    %588 = vector.broadcast %587 : vector<1x128xf32> to vector<32x128xf32>
    %589 = arith.mulf %586, %588 : vector<32x128xf32>
    %590 = arith.addf %585, %589 : vector<32x128xf32>
    %c22_259 = arith.constant 22 : index
    %c0_260 = arith.constant 0 : index
    %591 = vector.load %arg5[%c22_259, %c0_260] : memref<25x128xf32, #tpu.memory_space<vmem>>, vector<1x128xf32>
    %592 = vector.broadcast %591 : vector<1x128xf32> to vector<32x128xf32>
    %593 = arith.mulf %580, %592 : vector<32x128xf32>
    %594 = arith.addf %590, %593 : vector<32x128xf32>
    %c120_i32_261 = arith.constant 120 : i32
    %595 = tpu.dynamic_rotate %580 by %c120_i32_261 dim 1 : vector<32x128xf32>, i32 -> vector<32x128xf32>
    %c23_262 = arith.constant 23 : index
    %c0_263 = arith.constant 0 : index
    %596 = vector.load %arg5[%c23_262, %c0_263] : memref<25x128xf32, #tpu.memory_space<vmem>>, vector<1x128xf32>
    %597 = vector.broadcast %596 : vector<1x128xf32> to vector<32x128xf32>
    %598 = arith.mulf %595, %597 : vector<32x128xf32>
    %599 = arith.addf %594, %598 : vector<32x128xf32>
    %c112_i32_264 = arith.constant 112 : i32
    %600 = tpu.dynamic_rotate %580 by %c112_i32_264 dim 1 : vector<32x128xf32>, i32 -> vector<32x128xf32>
    %c24_265 = arith.constant 24 : index
    %c0_266 = arith.constant 0 : index
    %601 = vector.load %arg5[%c24_265, %c0_266] : memref<25x128xf32, #tpu.memory_space<vmem>>, vector<1x128xf32>
    %602 = vector.broadcast %601 : vector<1x128xf32> to vector<32x128xf32>
    %603 = arith.mulf %600, %602 : vector<32x128xf32>
    %604 = arith.addf %599, %603 : vector<32x128xf32>
    %c0_267 = arith.constant 0 : index
    %c0_268 = arith.constant 0 : index
    %605 = vector.load %arg13[%c0_267, %c0_268] : memref<128x128xf32, #tpu.memory_space<vmem>>, vector<128x128xf32>
    %cst_269 = arith.constant dense<0.000000e+00> : vector<32x128xf32>
    %606 = tpu.matmul %604, %605, %cst_269 {dimension_numbers = #tpu.dot_dimension_numbers<[1], [0], [0], [1], [0, 0, 1, 1], [], []>} : vector<32x128xf32>, vector<128x128xf32>, vector<32x128xf32> -> vector<32x128xf32>
    %cst_270 = arith.constant dense<0.000000e+00> : vector<32x128xf32>
    %607 = tpu.matmul %606, %1, %cst_270 {dimension_numbers = #tpu.dot_dimension_numbers<[1], [0], [0], [1], [0, 0, 1, 1], [], []>} : vector<32x128xf32>, vector<128x128xf32>, vector<32x128xf32> -> vector<32x128xf32>
    %cst_271 = arith.constant dense<0.000000e+00> : vector<128xf32>
    %608 = vector.multi_reduction <add>, %607, %cst_271 [0] : vector<32x128xf32> to vector<128xf32>
    %609 = vector.shape_cast %608 : vector<128xf32> to vector<1x128xf32>
    %cst_272 = arith.constant 0.001953125 : f32
    %610 = vector.broadcast %cst_272 : f32 to vector<1x128xf32>
    %611 = arith.mulf %609, %610 : vector<1x128xf32>
    %612 = vector.broadcast %611 : vector<1x128xf32> to vector<32x128xf32>
    %613 = arith.subf %606, %612 : vector<32x128xf32>
    %614 = arith.mulf %613, %613 : vector<32x128xf32>
    %cst_273 = arith.constant dense<0.000000e+00> : vector<32x128xf32>
    %615 = tpu.matmul %614, %1, %cst_273 {dimension_numbers = #tpu.dot_dimension_numbers<[1], [0], [0], [1], [0, 0, 1, 1], [], []>} : vector<32x128xf32>, vector<128x128xf32>, vector<32x128xf32> -> vector<32x128xf32>
    %cst_274 = arith.constant dense<0.000000e+00> : vector<128xf32>
    %616 = vector.multi_reduction <add>, %615, %cst_274 [0] : vector<32x128xf32> to vector<128xf32>
    %617 = vector.shape_cast %616 : vector<128xf32> to vector<1x128xf32>
    %cst_275 = arith.constant 0.001953125 : f32
    %618 = vector.broadcast %cst_275 : f32 to vector<1x128xf32>
    %619 = arith.mulf %617, %618 : vector<1x128xf32>
    %cst_276 = arith.constant 9.99999974E-6 : f32
    %620 = vector.broadcast %cst_276 : f32 to vector<1x128xf32>
    %621 = arith.addf %619, %620 : vector<1x128xf32>
    %622 = math.rsqrt %621 : vector<1x128xf32>
    %623 = vector.broadcast %622 : vector<1x128xf32> to vector<32x128xf32>
    %624 = arith.mulf %613, %623 : vector<32x128xf32>
    %625 = vector.broadcast %296 : vector<1x128xf32> to vector<32x128xf32>
    %626 = arith.mulf %625, %624 : vector<32x128xf32>
    %627 = arith.addf %295, %626 : vector<32x128xf32>
    %c6_277 = arith.constant 6 : index
    %c0_278 = arith.constant 0 : index
    %628 = vector.load %arg1[%c6_277, %c0_278] : memref<9x128xf32, #tpu.memory_space<vmem>>, vector<1x128xf32>
    %cst_279 = arith.constant 0.000000e+00 : f32
    %629 = vector.broadcast %cst_279 : f32 to vector<3x128xf32>
    %630 = vector.extract_strided_slice %3 {offsets = [0, 0], sizes = [16, 128], strides = [1, 1]} : vector<32x128xf32> to vector<16x128xf32>
    %631 = vector.extract_strided_slice %630 {offsets = [0, 0], sizes = [13, 128], strides = [1, 1]} : vector<16x128xf32> to vector<13x128xf32>
    %632 = vector.extract_strided_slice %3 {offsets = [16, 0], sizes = [16, 128], strides = [1, 1]} : vector<32x128xf32> to vector<16x128xf32>
    %633 = vector.extract_strided_slice %632 {offsets = [0, 0], sizes = [13, 128], strides = [1, 1]} : vector<16x128xf32> to vector<13x128xf32>
    %634 = tpu.concatenate %629, %631, %629, %633 in 0 : vector<3x128xf32>, vector<13x128xf32>, vector<3x128xf32>, vector<13x128xf32> -> vector<32x128xf32>
    %c24_i32 = arith.constant 24 : i32
    %635 = tpu.dynamic_rotate %634 by %c24_i32 dim 1 : vector<32x128xf32>, i32 -> vector<32x128xf32>
    %c0_280 = arith.constant 0 : index
    %c0_281 = arith.constant 0 : index
    %636 = vector.load %arg6[%c0_280, %c0_281] : memref<49x128xf32, #tpu.memory_space<vmem>>, vector<1x128xf32>
    %637 = vector.broadcast %636 : vector<1x128xf32> to vector<32x128xf32>
    %638 = arith.mulf %635, %637 : vector<32x128xf32>
    %c16_i32_282 = arith.constant 16 : i32
    %639 = tpu.dynamic_rotate %634 by %c16_i32_282 dim 1 : vector<32x128xf32>, i32 -> vector<32x128xf32>
    %c1_283 = arith.constant 1 : index
    %c0_284 = arith.constant 0 : index
    %640 = vector.load %arg6[%c1_283, %c0_284] : memref<49x128xf32, #tpu.memory_space<vmem>>, vector<1x128xf32>
    %641 = vector.broadcast %640 : vector<1x128xf32> to vector<32x128xf32>
    %642 = arith.mulf %639, %641 : vector<32x128xf32>
    %643 = arith.addf %638, %642 : vector<32x128xf32>
    %c8_i32_285 = arith.constant 8 : i32
    %644 = tpu.dynamic_rotate %634 by %c8_i32_285 dim 1 : vector<32x128xf32>, i32 -> vector<32x128xf32>
    %c2_286 = arith.constant 2 : index
    %c0_287 = arith.constant 0 : index
    %645 = vector.load %arg6[%c2_286, %c0_287] : memref<49x128xf32, #tpu.memory_space<vmem>>, vector<1x128xf32>
    %646 = vector.broadcast %645 : vector<1x128xf32> to vector<32x128xf32>
    %647 = arith.mulf %644, %646 : vector<32x128xf32>
    %648 = arith.addf %643, %647 : vector<32x128xf32>
    %c3_288 = arith.constant 3 : index
    %c0_289 = arith.constant 0 : index
    %649 = vector.load %arg6[%c3_288, %c0_289] : memref<49x128xf32, #tpu.memory_space<vmem>>, vector<1x128xf32>
    %650 = vector.broadcast %649 : vector<1x128xf32> to vector<32x128xf32>
    %651 = arith.mulf %634, %650 : vector<32x128xf32>
    %652 = arith.addf %648, %651 : vector<32x128xf32>
    %c120_i32_290 = arith.constant 120 : i32
    %653 = tpu.dynamic_rotate %634 by %c120_i32_290 dim 1 : vector<32x128xf32>, i32 -> vector<32x128xf32>
    %c4_291 = arith.constant 4 : index
    %c0_292 = arith.constant 0 : index
    %654 = vector.load %arg6[%c4_291, %c0_292] : memref<49x128xf32, #tpu.memory_space<vmem>>, vector<1x128xf32>
    %655 = vector.broadcast %654 : vector<1x128xf32> to vector<32x128xf32>
    %656 = arith.mulf %653, %655 : vector<32x128xf32>
    %657 = arith.addf %652, %656 : vector<32x128xf32>
    %c112_i32_293 = arith.constant 112 : i32
    %658 = tpu.dynamic_rotate %634 by %c112_i32_293 dim 1 : vector<32x128xf32>, i32 -> vector<32x128xf32>
    %c5_294 = arith.constant 5 : index
    %c0_295 = arith.constant 0 : index
    %659 = vector.load %arg6[%c5_294, %c0_295] : memref<49x128xf32, #tpu.memory_space<vmem>>, vector<1x128xf32>
    %660 = vector.broadcast %659 : vector<1x128xf32> to vector<32x128xf32>
    %661 = arith.mulf %658, %660 : vector<32x128xf32>
    %662 = arith.addf %657, %661 : vector<32x128xf32>
    %c104_i32 = arith.constant 104 : i32
    %663 = tpu.dynamic_rotate %634 by %c104_i32 dim 1 : vector<32x128xf32>, i32 -> vector<32x128xf32>
    %c6_296 = arith.constant 6 : index
    %c0_297 = arith.constant 0 : index
    %664 = vector.load %arg6[%c6_296, %c0_297] : memref<49x128xf32, #tpu.memory_space<vmem>>, vector<1x128xf32>
    %665 = vector.broadcast %664 : vector<1x128xf32> to vector<32x128xf32>
    %666 = arith.mulf %663, %665 : vector<32x128xf32>
    %667 = arith.addf %662, %666 : vector<32x128xf32>
    %cst_298 = arith.constant 0.000000e+00 : f32
    %668 = vector.broadcast %cst_298 : f32 to vector<2x128xf32>
    %669 = vector.extract_strided_slice %3 {offsets = [0, 0], sizes = [16, 128], strides = [1, 1]} : vector<32x128xf32> to vector<16x128xf32>
    %670 = vector.extract_strided_slice %669 {offsets = [0, 0], sizes = [14, 128], strides = [1, 1]} : vector<16x128xf32> to vector<14x128xf32>
    %671 = vector.extract_strided_slice %3 {offsets = [16, 0], sizes = [16, 128], strides = [1, 1]} : vector<32x128xf32> to vector<16x128xf32>
    %672 = vector.extract_strided_slice %671 {offsets = [0, 0], sizes = [14, 128], strides = [1, 1]} : vector<16x128xf32> to vector<14x128xf32>
    %673 = tpu.concatenate %668, %670, %668, %672 in 0 : vector<2x128xf32>, vector<14x128xf32>, vector<2x128xf32>, vector<14x128xf32> -> vector<32x128xf32>
    %c24_i32_299 = arith.constant 24 : i32
    %674 = tpu.dynamic_rotate %673 by %c24_i32_299 dim 1 : vector<32x128xf32>, i32 -> vector<32x128xf32>
    %c7_300 = arith.constant 7 : index
    %c0_301 = arith.constant 0 : index
    %675 = vector.load %arg6[%c7_300, %c0_301] : memref<49x128xf32, #tpu.memory_space<vmem>>, vector<1x128xf32>
    %676 = vector.broadcast %675 : vector<1x128xf32> to vector<32x128xf32>
    %677 = arith.mulf %674, %676 : vector<32x128xf32>
    %678 = arith.addf %667, %677 : vector<32x128xf32>
    %c16_i32_302 = arith.constant 16 : i32
    %679 = tpu.dynamic_rotate %673 by %c16_i32_302 dim 1 : vector<32x128xf32>, i32 -> vector<32x128xf32>
    %c8_303 = arith.constant 8 : index
    %c0_304 = arith.constant 0 : index
    %680 = vector.load %arg6[%c8_303, %c0_304] : memref<49x128xf32, #tpu.memory_space<vmem>>, vector<1x128xf32>
    %681 = vector.broadcast %680 : vector<1x128xf32> to vector<32x128xf32>
    %682 = arith.mulf %679, %681 : vector<32x128xf32>
    %683 = arith.addf %678, %682 : vector<32x128xf32>
    %c8_i32_305 = arith.constant 8 : i32
    %684 = tpu.dynamic_rotate %673 by %c8_i32_305 dim 1 : vector<32x128xf32>, i32 -> vector<32x128xf32>
    %c9_306 = arith.constant 9 : index
    %c0_307 = arith.constant 0 : index
    %685 = vector.load %arg6[%c9_306, %c0_307] : memref<49x128xf32, #tpu.memory_space<vmem>>, vector<1x128xf32>
    %686 = vector.broadcast %685 : vector<1x128xf32> to vector<32x128xf32>
    %687 = arith.mulf %684, %686 : vector<32x128xf32>
    %688 = arith.addf %683, %687 : vector<32x128xf32>
    %c10_308 = arith.constant 10 : index
    %c0_309 = arith.constant 0 : index
    %689 = vector.load %arg6[%c10_308, %c0_309] : memref<49x128xf32, #tpu.memory_space<vmem>>, vector<1x128xf32>
    %690 = vector.broadcast %689 : vector<1x128xf32> to vector<32x128xf32>
    %691 = arith.mulf %673, %690 : vector<32x128xf32>
    %692 = arith.addf %688, %691 : vector<32x128xf32>
    %c120_i32_310 = arith.constant 120 : i32
    %693 = tpu.dynamic_rotate %673 by %c120_i32_310 dim 1 : vector<32x128xf32>, i32 -> vector<32x128xf32>
    %c11_311 = arith.constant 11 : index
    %c0_312 = arith.constant 0 : index
    %694 = vector.load %arg6[%c11_311, %c0_312] : memref<49x128xf32, #tpu.memory_space<vmem>>, vector<1x128xf32>
    %695 = vector.broadcast %694 : vector<1x128xf32> to vector<32x128xf32>
    %696 = arith.mulf %693, %695 : vector<32x128xf32>
    %697 = arith.addf %692, %696 : vector<32x128xf32>
    %c112_i32_313 = arith.constant 112 : i32
    %698 = tpu.dynamic_rotate %673 by %c112_i32_313 dim 1 : vector<32x128xf32>, i32 -> vector<32x128xf32>
    %c12_314 = arith.constant 12 : index
    %c0_315 = arith.constant 0 : index
    %699 = vector.load %arg6[%c12_314, %c0_315] : memref<49x128xf32, #tpu.memory_space<vmem>>, vector<1x128xf32>
    %700 = vector.broadcast %699 : vector<1x128xf32> to vector<32x128xf32>
    %701 = arith.mulf %698, %700 : vector<32x128xf32>
    %702 = arith.addf %697, %701 : vector<32x128xf32>
    %c104_i32_316 = arith.constant 104 : i32
    %703 = tpu.dynamic_rotate %673 by %c104_i32_316 dim 1 : vector<32x128xf32>, i32 -> vector<32x128xf32>
    %c13_317 = arith.constant 13 : index
    %c0_318 = arith.constant 0 : index
    %704 = vector.load %arg6[%c13_317, %c0_318] : memref<49x128xf32, #tpu.memory_space<vmem>>, vector<1x128xf32>
    %705 = vector.broadcast %704 : vector<1x128xf32> to vector<32x128xf32>
    %706 = arith.mulf %703, %705 : vector<32x128xf32>
    %707 = arith.addf %702, %706 : vector<32x128xf32>
    %cst_319 = arith.constant 0.000000e+00 : f32
    %708 = vector.broadcast %cst_319 : f32 to vector<1x128xf32>
    %709 = vector.extract_strided_slice %3 {offsets = [0, 0], sizes = [16, 128], strides = [1, 1]} : vector<32x128xf32> to vector<16x128xf32>
    %710 = vector.extract_strided_slice %709 {offsets = [0, 0], sizes = [15, 128], strides = [1, 1]} : vector<16x128xf32> to vector<15x128xf32>
    %711 = vector.extract_strided_slice %3 {offsets = [16, 0], sizes = [16, 128], strides = [1, 1]} : vector<32x128xf32> to vector<16x128xf32>
    %712 = vector.extract_strided_slice %711 {offsets = [0, 0], sizes = [15, 128], strides = [1, 1]} : vector<16x128xf32> to vector<15x128xf32>
    %713 = tpu.concatenate %708, %710, %708, %712 in 0 : vector<1x128xf32>, vector<15x128xf32>, vector<1x128xf32>, vector<15x128xf32> -> vector<32x128xf32>
    %c24_i32_320 = arith.constant 24 : i32
    %714 = tpu.dynamic_rotate %713 by %c24_i32_320 dim 1 : vector<32x128xf32>, i32 -> vector<32x128xf32>
    %c14_321 = arith.constant 14 : index
    %c0_322 = arith.constant 0 : index
    %715 = vector.load %arg6[%c14_321, %c0_322] : memref<49x128xf32, #tpu.memory_space<vmem>>, vector<1x128xf32>
    %716 = vector.broadcast %715 : vector<1x128xf32> to vector<32x128xf32>
    %717 = arith.mulf %714, %716 : vector<32x128xf32>
    %718 = arith.addf %707, %717 : vector<32x128xf32>
    %c16_i32_323 = arith.constant 16 : i32
    %719 = tpu.dynamic_rotate %713 by %c16_i32_323 dim 1 : vector<32x128xf32>, i32 -> vector<32x128xf32>
    %c15_324 = arith.constant 15 : index
    %c0_325 = arith.constant 0 : index
    %720 = vector.load %arg6[%c15_324, %c0_325] : memref<49x128xf32, #tpu.memory_space<vmem>>, vector<1x128xf32>
    %721 = vector.broadcast %720 : vector<1x128xf32> to vector<32x128xf32>
    %722 = arith.mulf %719, %721 : vector<32x128xf32>
    %723 = arith.addf %718, %722 : vector<32x128xf32>
    %c8_i32_326 = arith.constant 8 : i32
    %724 = tpu.dynamic_rotate %713 by %c8_i32_326 dim 1 : vector<32x128xf32>, i32 -> vector<32x128xf32>
    %c16_327 = arith.constant 16 : index
    %c0_328 = arith.constant 0 : index
    %725 = vector.load %arg6[%c16_327, %c0_328] : memref<49x128xf32, #tpu.memory_space<vmem>>, vector<1x128xf32>
    %726 = vector.broadcast %725 : vector<1x128xf32> to vector<32x128xf32>
    %727 = arith.mulf %724, %726 : vector<32x128xf32>
    %728 = arith.addf %723, %727 : vector<32x128xf32>
    %c17_329 = arith.constant 17 : index
    %c0_330 = arith.constant 0 : index
    %729 = vector.load %arg6[%c17_329, %c0_330] : memref<49x128xf32, #tpu.memory_space<vmem>>, vector<1x128xf32>
    %730 = vector.broadcast %729 : vector<1x128xf32> to vector<32x128xf32>
    %731 = arith.mulf %713, %730 : vector<32x128xf32>
    %732 = arith.addf %728, %731 : vector<32x128xf32>
    %c120_i32_331 = arith.constant 120 : i32
    %733 = tpu.dynamic_rotate %713 by %c120_i32_331 dim 1 : vector<32x128xf32>, i32 -> vector<32x128xf32>
    %c18_332 = arith.constant 18 : index
    %c0_333 = arith.constant 0 : index
    %734 = vector.load %arg6[%c18_332, %c0_333] : memref<49x128xf32, #tpu.memory_space<vmem>>, vector<1x128xf32>
    %735 = vector.broadcast %734 : vector<1x128xf32> to vector<32x128xf32>
    %736 = arith.mulf %733, %735 : vector<32x128xf32>
    %737 = arith.addf %732, %736 : vector<32x128xf32>
    %c112_i32_334 = arith.constant 112 : i32
    %738 = tpu.dynamic_rotate %713 by %c112_i32_334 dim 1 : vector<32x128xf32>, i32 -> vector<32x128xf32>
    %c19_335 = arith.constant 19 : index
    %c0_336 = arith.constant 0 : index
    %739 = vector.load %arg6[%c19_335, %c0_336] : memref<49x128xf32, #tpu.memory_space<vmem>>, vector<1x128xf32>
    %740 = vector.broadcast %739 : vector<1x128xf32> to vector<32x128xf32>
    %741 = arith.mulf %738, %740 : vector<32x128xf32>
    %742 = arith.addf %737, %741 : vector<32x128xf32>
    %c104_i32_337 = arith.constant 104 : i32
    %743 = tpu.dynamic_rotate %713 by %c104_i32_337 dim 1 : vector<32x128xf32>, i32 -> vector<32x128xf32>
    %c20_338 = arith.constant 20 : index
    %c0_339 = arith.constant 0 : index
    %744 = vector.load %arg6[%c20_338, %c0_339] : memref<49x128xf32, #tpu.memory_space<vmem>>, vector<1x128xf32>
    %745 = vector.broadcast %744 : vector<1x128xf32> to vector<32x128xf32>
    %746 = arith.mulf %743, %745 : vector<32x128xf32>
    %747 = arith.addf %742, %746 : vector<32x128xf32>
    %c24_i32_340 = arith.constant 24 : i32
    %748 = tpu.dynamic_rotate %3 by %c24_i32_340 dim 1 : vector<32x128xf32>, i32 -> vector<32x128xf32>
    %c21_341 = arith.constant 21 : index
    %c0_342 = arith.constant 0 : index
    %749 = vector.load %arg6[%c21_341, %c0_342] : memref<49x128xf32, #tpu.memory_space<vmem>>, vector<1x128xf32>
    %750 = vector.broadcast %749 : vector<1x128xf32> to vector<32x128xf32>
    %751 = arith.mulf %748, %750 : vector<32x128xf32>
    %752 = arith.addf %747, %751 : vector<32x128xf32>
    %c16_i32_343 = arith.constant 16 : i32
    %753 = tpu.dynamic_rotate %3 by %c16_i32_343 dim 1 : vector<32x128xf32>, i32 -> vector<32x128xf32>
    %c22_344 = arith.constant 22 : index
    %c0_345 = arith.constant 0 : index
    %754 = vector.load %arg6[%c22_344, %c0_345] : memref<49x128xf32, #tpu.memory_space<vmem>>, vector<1x128xf32>
    %755 = vector.broadcast %754 : vector<1x128xf32> to vector<32x128xf32>
    %756 = arith.mulf %753, %755 : vector<32x128xf32>
    %757 = arith.addf %752, %756 : vector<32x128xf32>
    %c8_i32_346 = arith.constant 8 : i32
    %758 = tpu.dynamic_rotate %3 by %c8_i32_346 dim 1 : vector<32x128xf32>, i32 -> vector<32x128xf32>
    %c23_347 = arith.constant 23 : index
    %c0_348 = arith.constant 0 : index
    %759 = vector.load %arg6[%c23_347, %c0_348] : memref<49x128xf32, #tpu.memory_space<vmem>>, vector<1x128xf32>
    %760 = vector.broadcast %759 : vector<1x128xf32> to vector<32x128xf32>
    %761 = arith.mulf %758, %760 : vector<32x128xf32>
    %762 = arith.addf %757, %761 : vector<32x128xf32>
    %c24_349 = arith.constant 24 : index
    %c0_350 = arith.constant 0 : index
    %763 = vector.load %arg6[%c24_349, %c0_350] : memref<49x128xf32, #tpu.memory_space<vmem>>, vector<1x128xf32>
    %764 = vector.broadcast %763 : vector<1x128xf32> to vector<32x128xf32>
    %765 = arith.mulf %3, %764 : vector<32x128xf32>
    %766 = arith.addf %762, %765 : vector<32x128xf32>
    %c120_i32_351 = arith.constant 120 : i32
    %767 = tpu.dynamic_rotate %3 by %c120_i32_351 dim 1 : vector<32x128xf32>, i32 -> vector<32x128xf32>
    %c25 = arith.constant 25 : index
    %c0_352 = arith.constant 0 : index
    %768 = vector.load %arg6[%c25, %c0_352] : memref<49x128xf32, #tpu.memory_space<vmem>>, vector<1x128xf32>
    %769 = vector.broadcast %768 : vector<1x128xf32> to vector<32x128xf32>
    %770 = arith.mulf %767, %769 : vector<32x128xf32>
    %771 = arith.addf %766, %770 : vector<32x128xf32>
    %c112_i32_353 = arith.constant 112 : i32
    %772 = tpu.dynamic_rotate %3 by %c112_i32_353 dim 1 : vector<32x128xf32>, i32 -> vector<32x128xf32>
    %c26 = arith.constant 26 : index
    %c0_354 = arith.constant 0 : index
    %773 = vector.load %arg6[%c26, %c0_354] : memref<49x128xf32, #tpu.memory_space<vmem>>, vector<1x128xf32>
    %774 = vector.broadcast %773 : vector<1x128xf32> to vector<32x128xf32>
    %775 = arith.mulf %772, %774 : vector<32x128xf32>
    %776 = arith.addf %771, %775 : vector<32x128xf32>
    %c104_i32_355 = arith.constant 104 : i32
    %777 = tpu.dynamic_rotate %3 by %c104_i32_355 dim 1 : vector<32x128xf32>, i32 -> vector<32x128xf32>
    %c27 = arith.constant 27 : index
    %c0_356 = arith.constant 0 : index
    %778 = vector.load %arg6[%c27, %c0_356] : memref<49x128xf32, #tpu.memory_space<vmem>>, vector<1x128xf32>
    %779 = vector.broadcast %778 : vector<1x128xf32> to vector<32x128xf32>
    %780 = arith.mulf %777, %779 : vector<32x128xf32>
    %781 = arith.addf %776, %780 : vector<32x128xf32>
    %cst_357 = arith.constant 0.000000e+00 : f32
    %782 = vector.broadcast %cst_357 : f32 to vector<1x128xf32>
    %783 = vector.extract_strided_slice %3 {offsets = [0, 0], sizes = [16, 128], strides = [1, 1]} : vector<32x128xf32> to vector<16x128xf32>
    %784 = vector.extract_strided_slice %783 {offsets = [1, 0], sizes = [15, 128], strides = [1, 1]} : vector<16x128xf32> to vector<15x128xf32>
    %785 = vector.extract_strided_slice %3 {offsets = [16, 0], sizes = [16, 128], strides = [1, 1]} : vector<32x128xf32> to vector<16x128xf32>
    %786 = vector.extract_strided_slice %785 {offsets = [1, 0], sizes = [15, 128], strides = [1, 1]} : vector<16x128xf32> to vector<15x128xf32>
    %787 = tpu.concatenate %784, %782, %786, %782 in 0 : vector<15x128xf32>, vector<1x128xf32>, vector<15x128xf32>, vector<1x128xf32> -> vector<32x128xf32>
    %c24_i32_358 = arith.constant 24 : i32
    %788 = tpu.dynamic_rotate %787 by %c24_i32_358 dim 1 : vector<32x128xf32>, i32 -> vector<32x128xf32>
    %c28 = arith.constant 28 : index
    %c0_359 = arith.constant 0 : index
    %789 = vector.load %arg6[%c28, %c0_359] : memref<49x128xf32, #tpu.memory_space<vmem>>, vector<1x128xf32>
    %790 = vector.broadcast %789 : vector<1x128xf32> to vector<32x128xf32>
    %791 = arith.mulf %788, %790 : vector<32x128xf32>
    %792 = arith.addf %781, %791 : vector<32x128xf32>
    %c16_i32_360 = arith.constant 16 : i32
    %793 = tpu.dynamic_rotate %787 by %c16_i32_360 dim 1 : vector<32x128xf32>, i32 -> vector<32x128xf32>
    %c29 = arith.constant 29 : index
    %c0_361 = arith.constant 0 : index
    %794 = vector.load %arg6[%c29, %c0_361] : memref<49x128xf32, #tpu.memory_space<vmem>>, vector<1x128xf32>
    %795 = vector.broadcast %794 : vector<1x128xf32> to vector<32x128xf32>
    %796 = arith.mulf %793, %795 : vector<32x128xf32>
    %797 = arith.addf %792, %796 : vector<32x128xf32>
    %c8_i32_362 = arith.constant 8 : i32
    %798 = tpu.dynamic_rotate %787 by %c8_i32_362 dim 1 : vector<32x128xf32>, i32 -> vector<32x128xf32>
    %c30 = arith.constant 30 : index
    %c0_363 = arith.constant 0 : index
    %799 = vector.load %arg6[%c30, %c0_363] : memref<49x128xf32, #tpu.memory_space<vmem>>, vector<1x128xf32>
    %800 = vector.broadcast %799 : vector<1x128xf32> to vector<32x128xf32>
    %801 = arith.mulf %798, %800 : vector<32x128xf32>
    %802 = arith.addf %797, %801 : vector<32x128xf32>
    %c31 = arith.constant 31 : index
    %c0_364 = arith.constant 0 : index
    %803 = vector.load %arg6[%c31, %c0_364] : memref<49x128xf32, #tpu.memory_space<vmem>>, vector<1x128xf32>
    %804 = vector.broadcast %803 : vector<1x128xf32> to vector<32x128xf32>
    %805 = arith.mulf %787, %804 : vector<32x128xf32>
    %806 = arith.addf %802, %805 : vector<32x128xf32>
    %c120_i32_365 = arith.constant 120 : i32
    %807 = tpu.dynamic_rotate %787 by %c120_i32_365 dim 1 : vector<32x128xf32>, i32 -> vector<32x128xf32>
    %c32 = arith.constant 32 : index
    %c0_366 = arith.constant 0 : index
    %808 = vector.load %arg6[%c32, %c0_366] : memref<49x128xf32, #tpu.memory_space<vmem>>, vector<1x128xf32>
    %809 = vector.broadcast %808 : vector<1x128xf32> to vector<32x128xf32>
    %810 = arith.mulf %807, %809 : vector<32x128xf32>
    %811 = arith.addf %806, %810 : vector<32x128xf32>
    %c112_i32_367 = arith.constant 112 : i32
    %812 = tpu.dynamic_rotate %787 by %c112_i32_367 dim 1 : vector<32x128xf32>, i32 -> vector<32x128xf32>
    %c33 = arith.constant 33 : index
    %c0_368 = arith.constant 0 : index
    %813 = vector.load %arg6[%c33, %c0_368] : memref<49x128xf32, #tpu.memory_space<vmem>>, vector<1x128xf32>
    %814 = vector.broadcast %813 : vector<1x128xf32> to vector<32x128xf32>
    %815 = arith.mulf %812, %814 : vector<32x128xf32>
    %816 = arith.addf %811, %815 : vector<32x128xf32>
    %c104_i32_369 = arith.constant 104 : i32
    %817 = tpu.dynamic_rotate %787 by %c104_i32_369 dim 1 : vector<32x128xf32>, i32 -> vector<32x128xf32>
    %c34 = arith.constant 34 : index
    %c0_370 = arith.constant 0 : index
    %818 = vector.load %arg6[%c34, %c0_370] : memref<49x128xf32, #tpu.memory_space<vmem>>, vector<1x128xf32>
    %819 = vector.broadcast %818 : vector<1x128xf32> to vector<32x128xf32>
    %820 = arith.mulf %817, %819 : vector<32x128xf32>
    %821 = arith.addf %816, %820 : vector<32x128xf32>
    %cst_371 = arith.constant 0.000000e+00 : f32
    %822 = vector.broadcast %cst_371 : f32 to vector<2x128xf32>
    %823 = vector.extract_strided_slice %3 {offsets = [0, 0], sizes = [16, 128], strides = [1, 1]} : vector<32x128xf32> to vector<16x128xf32>
    %824 = vector.extract_strided_slice %823 {offsets = [2, 0], sizes = [14, 128], strides = [1, 1]} : vector<16x128xf32> to vector<14x128xf32>
    %825 = vector.extract_strided_slice %3 {offsets = [16, 0], sizes = [16, 128], strides = [1, 1]} : vector<32x128xf32> to vector<16x128xf32>
    %826 = vector.extract_strided_slice %825 {offsets = [2, 0], sizes = [14, 128], strides = [1, 1]} : vector<16x128xf32> to vector<14x128xf32>
    %827 = tpu.concatenate %824, %822, %826, %822 in 0 : vector<14x128xf32>, vector<2x128xf32>, vector<14x128xf32>, vector<2x128xf32> -> vector<32x128xf32>
    %c24_i32_372 = arith.constant 24 : i32
    %828 = tpu.dynamic_rotate %827 by %c24_i32_372 dim 1 : vector<32x128xf32>, i32 -> vector<32x128xf32>
    %c35 = arith.constant 35 : index
    %c0_373 = arith.constant 0 : index
    %829 = vector.load %arg6[%c35, %c0_373] : memref<49x128xf32, #tpu.memory_space<vmem>>, vector<1x128xf32>
    %830 = vector.broadcast %829 : vector<1x128xf32> to vector<32x128xf32>
    %831 = arith.mulf %828, %830 : vector<32x128xf32>
    %832 = arith.addf %821, %831 : vector<32x128xf32>
    %c16_i32_374 = arith.constant 16 : i32
    %833 = tpu.dynamic_rotate %827 by %c16_i32_374 dim 1 : vector<32x128xf32>, i32 -> vector<32x128xf32>
    %c36 = arith.constant 36 : index
    %c0_375 = arith.constant 0 : index
    %834 = vector.load %arg6[%c36, %c0_375] : memref<49x128xf32, #tpu.memory_space<vmem>>, vector<1x128xf32>
    %835 = vector.broadcast %834 : vector<1x128xf32> to vector<32x128xf32>
    %836 = arith.mulf %833, %835 : vector<32x128xf32>
    %837 = arith.addf %832, %836 : vector<32x128xf32>
    %c8_i32_376 = arith.constant 8 : i32
    %838 = tpu.dynamic_rotate %827 by %c8_i32_376 dim 1 : vector<32x128xf32>, i32 -> vector<32x128xf32>
    %c37 = arith.constant 37 : index
    %c0_377 = arith.constant 0 : index
    %839 = vector.load %arg6[%c37, %c0_377] : memref<49x128xf32, #tpu.memory_space<vmem>>, vector<1x128xf32>
    %840 = vector.broadcast %839 : vector<1x128xf32> to vector<32x128xf32>
    %841 = arith.mulf %838, %840 : vector<32x128xf32>
    %842 = arith.addf %837, %841 : vector<32x128xf32>
    %c38 = arith.constant 38 : index
    %c0_378 = arith.constant 0 : index
    %843 = vector.load %arg6[%c38, %c0_378] : memref<49x128xf32, #tpu.memory_space<vmem>>, vector<1x128xf32>
    %844 = vector.broadcast %843 : vector<1x128xf32> to vector<32x128xf32>
    %845 = arith.mulf %827, %844 : vector<32x128xf32>
    %846 = arith.addf %842, %845 : vector<32x128xf32>
    %c120_i32_379 = arith.constant 120 : i32
    %847 = tpu.dynamic_rotate %827 by %c120_i32_379 dim 1 : vector<32x128xf32>, i32 -> vector<32x128xf32>
    %c39 = arith.constant 39 : index
    %c0_380 = arith.constant 0 : index
    %848 = vector.load %arg6[%c39, %c0_380] : memref<49x128xf32, #tpu.memory_space<vmem>>, vector<1x128xf32>
    %849 = vector.broadcast %848 : vector<1x128xf32> to vector<32x128xf32>
    %850 = arith.mulf %847, %849 : vector<32x128xf32>
    %851 = arith.addf %846, %850 : vector<32x128xf32>
    %c112_i32_381 = arith.constant 112 : i32
    %852 = tpu.dynamic_rotate %827 by %c112_i32_381 dim 1 : vector<32x128xf32>, i32 -> vector<32x128xf32>
    %c40 = arith.constant 40 : index
    %c0_382 = arith.constant 0 : index
    %853 = vector.load %arg6[%c40, %c0_382] : memref<49x128xf32, #tpu.memory_space<vmem>>, vector<1x128xf32>
    %854 = vector.broadcast %853 : vector<1x128xf32> to vector<32x128xf32>
    %855 = arith.mulf %852, %854 : vector<32x128xf32>
    %856 = arith.addf %851, %855 : vector<32x128xf32>
    %c104_i32_383 = arith.constant 104 : i32
    %857 = tpu.dynamic_rotate %827 by %c104_i32_383 dim 1 : vector<32x128xf32>, i32 -> vector<32x128xf32>
    %c41 = arith.constant 41 : index
    %c0_384 = arith.constant 0 : index
    %858 = vector.load %arg6[%c41, %c0_384] : memref<49x128xf32, #tpu.memory_space<vmem>>, vector<1x128xf32>
    %859 = vector.broadcast %858 : vector<1x128xf32> to vector<32x128xf32>
    %860 = arith.mulf %857, %859 : vector<32x128xf32>
    %861 = arith.addf %856, %860 : vector<32x128xf32>
    %cst_385 = arith.constant 0.000000e+00 : f32
    %862 = vector.broadcast %cst_385 : f32 to vector<3x128xf32>
    %863 = vector.extract_strided_slice %3 {offsets = [0, 0], sizes = [16, 128], strides = [1, 1]} : vector<32x128xf32> to vector<16x128xf32>
    %864 = vector.extract_strided_slice %863 {offsets = [3, 0], sizes = [13, 128], strides = [1, 1]} : vector<16x128xf32> to vector<13x128xf32>
    %865 = vector.extract_strided_slice %3 {offsets = [16, 0], sizes = [16, 128], strides = [1, 1]} : vector<32x128xf32> to vector<16x128xf32>
    %866 = vector.extract_strided_slice %865 {offsets = [3, 0], sizes = [13, 128], strides = [1, 1]} : vector<16x128xf32> to vector<13x128xf32>
    %867 = tpu.concatenate %864, %862, %866, %862 in 0 : vector<13x128xf32>, vector<3x128xf32>, vector<13x128xf32>, vector<3x128xf32> -> vector<32x128xf32>
    %c24_i32_386 = arith.constant 24 : i32
    %868 = tpu.dynamic_rotate %867 by %c24_i32_386 dim 1 : vector<32x128xf32>, i32 -> vector<32x128xf32>
    %c42 = arith.constant 42 : index
    %c0_387 = arith.constant 0 : index
    %869 = vector.load %arg6[%c42, %c0_387] : memref<49x128xf32, #tpu.memory_space<vmem>>, vector<1x128xf32>
    %870 = vector.broadcast %869 : vector<1x128xf32> to vector<32x128xf32>
    %871 = arith.mulf %868, %870 : vector<32x128xf32>
    %872 = arith.addf %861, %871 : vector<32x128xf32>
    %c16_i32_388 = arith.constant 16 : i32
    %873 = tpu.dynamic_rotate %867 by %c16_i32_388 dim 1 : vector<32x128xf32>, i32 -> vector<32x128xf32>
    %c43 = arith.constant 43 : index
    %c0_389 = arith.constant 0 : index
    %874 = vector.load %arg6[%c43, %c0_389] : memref<49x128xf32, #tpu.memory_space<vmem>>, vector<1x128xf32>
    %875 = vector.broadcast %874 : vector<1x128xf32> to vector<32x128xf32>
    %876 = arith.mulf %873, %875 : vector<32x128xf32>
    %877 = arith.addf %872, %876 : vector<32x128xf32>
    %c8_i32_390 = arith.constant 8 : i32
    %878 = tpu.dynamic_rotate %867 by %c8_i32_390 dim 1 : vector<32x128xf32>, i32 -> vector<32x128xf32>
    %c44 = arith.constant 44 : index
    %c0_391 = arith.constant 0 : index
    %879 = vector.load %arg6[%c44, %c0_391] : memref<49x128xf32, #tpu.memory_space<vmem>>, vector<1x128xf32>
    %880 = vector.broadcast %879 : vector<1x128xf32> to vector<32x128xf32>
    %881 = arith.mulf %878, %880 : vector<32x128xf32>
    %882 = arith.addf %877, %881 : vector<32x128xf32>
    %c45 = arith.constant 45 : index
    %c0_392 = arith.constant 0 : index
    %883 = vector.load %arg6[%c45, %c0_392] : memref<49x128xf32, #tpu.memory_space<vmem>>, vector<1x128xf32>
    %884 = vector.broadcast %883 : vector<1x128xf32> to vector<32x128xf32>
    %885 = arith.mulf %867, %884 : vector<32x128xf32>
    %886 = arith.addf %882, %885 : vector<32x128xf32>
    %c120_i32_393 = arith.constant 120 : i32
    %887 = tpu.dynamic_rotate %867 by %c120_i32_393 dim 1 : vector<32x128xf32>, i32 -> vector<32x128xf32>
    %c46 = arith.constant 46 : index
    %c0_394 = arith.constant 0 : index
    %888 = vector.load %arg6[%c46, %c0_394] : memref<49x128xf32, #tpu.memory_space<vmem>>, vector<1x128xf32>
    %889 = vector.broadcast %888 : vector<1x128xf32> to vector<32x128xf32>
    %890 = arith.mulf %887, %889 : vector<32x128xf32>
    %891 = arith.addf %886, %890 : vector<32x128xf32>
    %c112_i32_395 = arith.constant 112 : i32
    %892 = tpu.dynamic_rotate %867 by %c112_i32_395 dim 1 : vector<32x128xf32>, i32 -> vector<32x128xf32>
    %c47 = arith.constant 47 : index
    %c0_396 = arith.constant 0 : index
    %893 = vector.load %arg6[%c47, %c0_396] : memref<49x128xf32, #tpu.memory_space<vmem>>, vector<1x128xf32>
    %894 = vector.broadcast %893 : vector<1x128xf32> to vector<32x128xf32>
    %895 = arith.mulf %892, %894 : vector<32x128xf32>
    %896 = arith.addf %891, %895 : vector<32x128xf32>
    %c104_i32_397 = arith.constant 104 : i32
    %897 = tpu.dynamic_rotate %867 by %c104_i32_397 dim 1 : vector<32x128xf32>, i32 -> vector<32x128xf32>
    %c48 = arith.constant 48 : index
    %c0_398 = arith.constant 0 : index
    %898 = vector.load %arg6[%c48, %c0_398] : memref<49x128xf32, #tpu.memory_space<vmem>>, vector<1x128xf32>
    %899 = vector.broadcast %898 : vector<1x128xf32> to vector<32x128xf32>
    %900 = arith.mulf %897, %899 : vector<32x128xf32>
    %901 = arith.addf %896, %900 : vector<32x128xf32>
    %c0_399 = arith.constant 0 : index
    %c0_400 = arith.constant 0 : index
    %902 = vector.load %arg14[%c0_399, %c0_400] : memref<128x128xf32, #tpu.memory_space<vmem>>, vector<128x128xf32>
    %cst_401 = arith.constant dense<0.000000e+00> : vector<32x128xf32>
    %903 = tpu.matmul %901, %902, %cst_401 {dimension_numbers = #tpu.dot_dimension_numbers<[1], [0], [0], [1], [0, 0, 1, 1], [], []>} : vector<32x128xf32>, vector<128x128xf32>, vector<32x128xf32> -> vector<32x128xf32>
    %cst_402 = arith.constant dense<0.000000e+00> : vector<32x128xf32>
    %904 = tpu.matmul %903, %1, %cst_402 {dimension_numbers = #tpu.dot_dimension_numbers<[1], [0], [0], [1], [0, 0, 1, 1], [], []>} : vector<32x128xf32>, vector<128x128xf32>, vector<32x128xf32> -> vector<32x128xf32>
    %cst_403 = arith.constant dense<0.000000e+00> : vector<128xf32>
    %905 = vector.multi_reduction <add>, %904, %cst_403 [0] : vector<32x128xf32> to vector<128xf32>
    %906 = vector.shape_cast %905 : vector<128xf32> to vector<1x128xf32>
    %cst_404 = arith.constant 0.001953125 : f32
    %907 = vector.broadcast %cst_404 : f32 to vector<1x128xf32>
    %908 = arith.mulf %906, %907 : vector<1x128xf32>
    %909 = vector.broadcast %908 : vector<1x128xf32> to vector<32x128xf32>
    %910 = arith.subf %903, %909 : vector<32x128xf32>
    %911 = arith.mulf %910, %910 : vector<32x128xf32>
    %cst_405 = arith.constant dense<0.000000e+00> : vector<32x128xf32>
    %912 = tpu.matmul %911, %1, %cst_405 {dimension_numbers = #tpu.dot_dimension_numbers<[1], [0], [0], [1], [0, 0, 1, 1], [], []>} : vector<32x128xf32>, vector<128x128xf32>, vector<32x128xf32> -> vector<32x128xf32>
    %cst_406 = arith.constant dense<0.000000e+00> : vector<128xf32>
    %913 = vector.multi_reduction <add>, %912, %cst_406 [0] : vector<32x128xf32> to vector<128xf32>
    %914 = vector.shape_cast %913 : vector<128xf32> to vector<1x128xf32>
    %cst_407 = arith.constant 0.001953125 : f32
    %915 = vector.broadcast %cst_407 : f32 to vector<1x128xf32>
    %916 = arith.mulf %914, %915 : vector<1x128xf32>
    %cst_408 = arith.constant 9.99999974E-6 : f32
    %917 = vector.broadcast %cst_408 : f32 to vector<1x128xf32>
    %918 = arith.addf %916, %917 : vector<1x128xf32>
    %919 = math.rsqrt %918 : vector<1x128xf32>
    %920 = vector.broadcast %919 : vector<1x128xf32> to vector<32x128xf32>
    %921 = arith.mulf %910, %920 : vector<32x128xf32>
    %cst_409 = arith.constant 0.000000e+00 : f32
    %922 = vector.broadcast %cst_409 : f32 to vector<32x128xf32>
    %923 = arith.maximumf %921, %922 : vector<32x128xf32>
    %cst_410 = arith.constant 0.000000e+00 : f32
    %924 = vector.broadcast %cst_410 : f32 to vector<3x128xf32>
    %925 = vector.extract_strided_slice %923 {offsets = [0, 0], sizes = [16, 128], strides = [1, 1]} : vector<32x128xf32> to vector<16x128xf32>
    %926 = vector.extract_strided_slice %925 {offsets = [0, 0], sizes = [13, 128], strides = [1, 1]} : vector<16x128xf32> to vector<13x128xf32>
    %927 = vector.extract_strided_slice %923 {offsets = [16, 0], sizes = [16, 128], strides = [1, 1]} : vector<32x128xf32> to vector<16x128xf32>
    %928 = vector.extract_strided_slice %927 {offsets = [0, 0], sizes = [13, 128], strides = [1, 1]} : vector<16x128xf32> to vector<13x128xf32>
    %929 = tpu.concatenate %924, %926, %924, %928 in 0 : vector<3x128xf32>, vector<13x128xf32>, vector<3x128xf32>, vector<13x128xf32> -> vector<32x128xf32>
    %c24_i32_411 = arith.constant 24 : i32
    %930 = tpu.dynamic_rotate %929 by %c24_i32_411 dim 1 : vector<32x128xf32>, i32 -> vector<32x128xf32>
    %c0_412 = arith.constant 0 : index
    %c0_413 = arith.constant 0 : index
    %931 = vector.load %arg7[%c0_412, %c0_413] : memref<49x128xf32, #tpu.memory_space<vmem>>, vector<1x128xf32>
    %932 = vector.broadcast %931 : vector<1x128xf32> to vector<32x128xf32>
    %933 = arith.mulf %930, %932 : vector<32x128xf32>
    %c16_i32_414 = arith.constant 16 : i32
    %934 = tpu.dynamic_rotate %929 by %c16_i32_414 dim 1 : vector<32x128xf32>, i32 -> vector<32x128xf32>
    %c1_415 = arith.constant 1 : index
    %c0_416 = arith.constant 0 : index
    %935 = vector.load %arg7[%c1_415, %c0_416] : memref<49x128xf32, #tpu.memory_space<vmem>>, vector<1x128xf32>
    %936 = vector.broadcast %935 : vector<1x128xf32> to vector<32x128xf32>
    %937 = arith.mulf %934, %936 : vector<32x128xf32>
    %938 = arith.addf %933, %937 : vector<32x128xf32>
    %c8_i32_417 = arith.constant 8 : i32
    %939 = tpu.dynamic_rotate %929 by %c8_i32_417 dim 1 : vector<32x128xf32>, i32 -> vector<32x128xf32>
    %c2_418 = arith.constant 2 : index
    %c0_419 = arith.constant 0 : index
    %940 = vector.load %arg7[%c2_418, %c0_419] : memref<49x128xf32, #tpu.memory_space<vmem>>, vector<1x128xf32>
    %941 = vector.broadcast %940 : vector<1x128xf32> to vector<32x128xf32>
    %942 = arith.mulf %939, %941 : vector<32x128xf32>
    %943 = arith.addf %938, %942 : vector<32x128xf32>
    %c3_420 = arith.constant 3 : index
    %c0_421 = arith.constant 0 : index
    %944 = vector.load %arg7[%c3_420, %c0_421] : memref<49x128xf32, #tpu.memory_space<vmem>>, vector<1x128xf32>
    %945 = vector.broadcast %944 : vector<1x128xf32> to vector<32x128xf32>
    %946 = arith.mulf %929, %945 : vector<32x128xf32>
    %947 = arith.addf %943, %946 : vector<32x128xf32>
    %c120_i32_422 = arith.constant 120 : i32
    %948 = tpu.dynamic_rotate %929 by %c120_i32_422 dim 1 : vector<32x128xf32>, i32 -> vector<32x128xf32>
    %c4_423 = arith.constant 4 : index
    %c0_424 = arith.constant 0 : index
    %949 = vector.load %arg7[%c4_423, %c0_424] : memref<49x128xf32, #tpu.memory_space<vmem>>, vector<1x128xf32>
    %950 = vector.broadcast %949 : vector<1x128xf32> to vector<32x128xf32>
    %951 = arith.mulf %948, %950 : vector<32x128xf32>
    %952 = arith.addf %947, %951 : vector<32x128xf32>
    %c112_i32_425 = arith.constant 112 : i32
    %953 = tpu.dynamic_rotate %929 by %c112_i32_425 dim 1 : vector<32x128xf32>, i32 -> vector<32x128xf32>
    %c5_426 = arith.constant 5 : index
    %c0_427 = arith.constant 0 : index
    %954 = vector.load %arg7[%c5_426, %c0_427] : memref<49x128xf32, #tpu.memory_space<vmem>>, vector<1x128xf32>
    %955 = vector.broadcast %954 : vector<1x128xf32> to vector<32x128xf32>
    %956 = arith.mulf %953, %955 : vector<32x128xf32>
    %957 = arith.addf %952, %956 : vector<32x128xf32>
    %c104_i32_428 = arith.constant 104 : i32
    %958 = tpu.dynamic_rotate %929 by %c104_i32_428 dim 1 : vector<32x128xf32>, i32 -> vector<32x128xf32>
    %c6_429 = arith.constant 6 : index
    %c0_430 = arith.constant 0 : index
    %959 = vector.load %arg7[%c6_429, %c0_430] : memref<49x128xf32, #tpu.memory_space<vmem>>, vector<1x128xf32>
    %960 = vector.broadcast %959 : vector<1x128xf32> to vector<32x128xf32>
    %961 = arith.mulf %958, %960 : vector<32x128xf32>
    %962 = arith.addf %957, %961 : vector<32x128xf32>
    %cst_431 = arith.constant 0.000000e+00 : f32
    %963 = vector.broadcast %cst_431 : f32 to vector<2x128xf32>
    %964 = vector.extract_strided_slice %923 {offsets = [0, 0], sizes = [16, 128], strides = [1, 1]} : vector<32x128xf32> to vector<16x128xf32>
    %965 = vector.extract_strided_slice %964 {offsets = [0, 0], sizes = [14, 128], strides = [1, 1]} : vector<16x128xf32> to vector<14x128xf32>
    %966 = vector.extract_strided_slice %923 {offsets = [16, 0], sizes = [16, 128], strides = [1, 1]} : vector<32x128xf32> to vector<16x128xf32>
    %967 = vector.extract_strided_slice %966 {offsets = [0, 0], sizes = [14, 128], strides = [1, 1]} : vector<16x128xf32> to vector<14x128xf32>
    %968 = tpu.concatenate %963, %965, %963, %967 in 0 : vector<2x128xf32>, vector<14x128xf32>, vector<2x128xf32>, vector<14x128xf32> -> vector<32x128xf32>
    %c24_i32_432 = arith.constant 24 : i32
    %969 = tpu.dynamic_rotate %968 by %c24_i32_432 dim 1 : vector<32x128xf32>, i32 -> vector<32x128xf32>
    %c7_433 = arith.constant 7 : index
    %c0_434 = arith.constant 0 : index
    %970 = vector.load %arg7[%c7_433, %c0_434] : memref<49x128xf32, #tpu.memory_space<vmem>>, vector<1x128xf32>
    %971 = vector.broadcast %970 : vector<1x128xf32> to vector<32x128xf32>
    %972 = arith.mulf %969, %971 : vector<32x128xf32>
    %973 = arith.addf %962, %972 : vector<32x128xf32>
    %c16_i32_435 = arith.constant 16 : i32
    %974 = tpu.dynamic_rotate %968 by %c16_i32_435 dim 1 : vector<32x128xf32>, i32 -> vector<32x128xf32>
    %c8_436 = arith.constant 8 : index
    %c0_437 = arith.constant 0 : index
    %975 = vector.load %arg7[%c8_436, %c0_437] : memref<49x128xf32, #tpu.memory_space<vmem>>, vector<1x128xf32>
    %976 = vector.broadcast %975 : vector<1x128xf32> to vector<32x128xf32>
    %977 = arith.mulf %974, %976 : vector<32x128xf32>
    %978 = arith.addf %973, %977 : vector<32x128xf32>
    %c8_i32_438 = arith.constant 8 : i32
    %979 = tpu.dynamic_rotate %968 by %c8_i32_438 dim 1 : vector<32x128xf32>, i32 -> vector<32x128xf32>
    %c9_439 = arith.constant 9 : index
    %c0_440 = arith.constant 0 : index
    %980 = vector.load %arg7[%c9_439, %c0_440] : memref<49x128xf32, #tpu.memory_space<vmem>>, vector<1x128xf32>
    %981 = vector.broadcast %980 : vector<1x128xf32> to vector<32x128xf32>
    %982 = arith.mulf %979, %981 : vector<32x128xf32>
    %983 = arith.addf %978, %982 : vector<32x128xf32>
    %c10_441 = arith.constant 10 : index
    %c0_442 = arith.constant 0 : index
    %984 = vector.load %arg7[%c10_441, %c0_442] : memref<49x128xf32, #tpu.memory_space<vmem>>, vector<1x128xf32>
    %985 = vector.broadcast %984 : vector<1x128xf32> to vector<32x128xf32>
    %986 = arith.mulf %968, %985 : vector<32x128xf32>
    %987 = arith.addf %983, %986 : vector<32x128xf32>
    %c120_i32_443 = arith.constant 120 : i32
    %988 = tpu.dynamic_rotate %968 by %c120_i32_443 dim 1 : vector<32x128xf32>, i32 -> vector<32x128xf32>
    %c11_444 = arith.constant 11 : index
    %c0_445 = arith.constant 0 : index
    %989 = vector.load %arg7[%c11_444, %c0_445] : memref<49x128xf32, #tpu.memory_space<vmem>>, vector<1x128xf32>
    %990 = vector.broadcast %989 : vector<1x128xf32> to vector<32x128xf32>
    %991 = arith.mulf %988, %990 : vector<32x128xf32>
    %992 = arith.addf %987, %991 : vector<32x128xf32>
    %c112_i32_446 = arith.constant 112 : i32
    %993 = tpu.dynamic_rotate %968 by %c112_i32_446 dim 1 : vector<32x128xf32>, i32 -> vector<32x128xf32>
    %c12_447 = arith.constant 12 : index
    %c0_448 = arith.constant 0 : index
    %994 = vector.load %arg7[%c12_447, %c0_448] : memref<49x128xf32, #tpu.memory_space<vmem>>, vector<1x128xf32>
    %995 = vector.broadcast %994 : vector<1x128xf32> to vector<32x128xf32>
    %996 = arith.mulf %993, %995 : vector<32x128xf32>
    %997 = arith.addf %992, %996 : vector<32x128xf32>
    %c104_i32_449 = arith.constant 104 : i32
    %998 = tpu.dynamic_rotate %968 by %c104_i32_449 dim 1 : vector<32x128xf32>, i32 -> vector<32x128xf32>
    %c13_450 = arith.constant 13 : index
    %c0_451 = arith.constant 0 : index
    %999 = vector.load %arg7[%c13_450, %c0_451] : memref<49x128xf32, #tpu.memory_space<vmem>>, vector<1x128xf32>
    %1000 = vector.broadcast %999 : vector<1x128xf32> to vector<32x128xf32>
    %1001 = arith.mulf %998, %1000 : vector<32x128xf32>
    %1002 = arith.addf %997, %1001 : vector<32x128xf32>
    %cst_452 = arith.constant 0.000000e+00 : f32
    %1003 = vector.broadcast %cst_452 : f32 to vector<1x128xf32>
    %1004 = vector.extract_strided_slice %923 {offsets = [0, 0], sizes = [16, 128], strides = [1, 1]} : vector<32x128xf32> to vector<16x128xf32>
    %1005 = vector.extract_strided_slice %1004 {offsets = [0, 0], sizes = [15, 128], strides = [1, 1]} : vector<16x128xf32> to vector<15x128xf32>
    %1006 = vector.extract_strided_slice %923 {offsets = [16, 0], sizes = [16, 128], strides = [1, 1]} : vector<32x128xf32> to vector<16x128xf32>
    %1007 = vector.extract_strided_slice %1006 {offsets = [0, 0], sizes = [15, 128], strides = [1, 1]} : vector<16x128xf32> to vector<15x128xf32>
    %1008 = tpu.concatenate %1003, %1005, %1003, %1007 in 0 : vector<1x128xf32>, vector<15x128xf32>, vector<1x128xf32>, vector<15x128xf32> -> vector<32x128xf32>
    %c24_i32_453 = arith.constant 24 : i32
    %1009 = tpu.dynamic_rotate %1008 by %c24_i32_453 dim 1 : vector<32x128xf32>, i32 -> vector<32x128xf32>
    %c14_454 = arith.constant 14 : index
    %c0_455 = arith.constant 0 : index
    %1010 = vector.load %arg7[%c14_454, %c0_455] : memref<49x128xf32, #tpu.memory_space<vmem>>, vector<1x128xf32>
    %1011 = vector.broadcast %1010 : vector<1x128xf32> to vector<32x128xf32>
    %1012 = arith.mulf %1009, %1011 : vector<32x128xf32>
    %1013 = arith.addf %1002, %1012 : vector<32x128xf32>
    %c16_i32_456 = arith.constant 16 : i32
    %1014 = tpu.dynamic_rotate %1008 by %c16_i32_456 dim 1 : vector<32x128xf32>, i32 -> vector<32x128xf32>
    %c15_457 = arith.constant 15 : index
    %c0_458 = arith.constant 0 : index
    %1015 = vector.load %arg7[%c15_457, %c0_458] : memref<49x128xf32, #tpu.memory_space<vmem>>, vector<1x128xf32>
    %1016 = vector.broadcast %1015 : vector<1x128xf32> to vector<32x128xf32>
    %1017 = arith.mulf %1014, %1016 : vector<32x128xf32>
    %1018 = arith.addf %1013, %1017 : vector<32x128xf32>
    %c8_i32_459 = arith.constant 8 : i32
    %1019 = tpu.dynamic_rotate %1008 by %c8_i32_459 dim 1 : vector<32x128xf32>, i32 -> vector<32x128xf32>
    %c16_460 = arith.constant 16 : index
    %c0_461 = arith.constant 0 : index
    %1020 = vector.load %arg7[%c16_460, %c0_461] : memref<49x128xf32, #tpu.memory_space<vmem>>, vector<1x128xf32>
    %1021 = vector.broadcast %1020 : vector<1x128xf32> to vector<32x128xf32>
    %1022 = arith.mulf %1019, %1021 : vector<32x128xf32>
    %1023 = arith.addf %1018, %1022 : vector<32x128xf32>
    %c17_462 = arith.constant 17 : index
    %c0_463 = arith.constant 0 : index
    %1024 = vector.load %arg7[%c17_462, %c0_463] : memref<49x128xf32, #tpu.memory_space<vmem>>, vector<1x128xf32>
    %1025 = vector.broadcast %1024 : vector<1x128xf32> to vector<32x128xf32>
    %1026 = arith.mulf %1008, %1025 : vector<32x128xf32>
    %1027 = arith.addf %1023, %1026 : vector<32x128xf32>
    %c120_i32_464 = arith.constant 120 : i32
    %1028 = tpu.dynamic_rotate %1008 by %c120_i32_464 dim 1 : vector<32x128xf32>, i32 -> vector<32x128xf32>
    %c18_465 = arith.constant 18 : index
    %c0_466 = arith.constant 0 : index
    %1029 = vector.load %arg7[%c18_465, %c0_466] : memref<49x128xf32, #tpu.memory_space<vmem>>, vector<1x128xf32>
    %1030 = vector.broadcast %1029 : vector<1x128xf32> to vector<32x128xf32>
    %1031 = arith.mulf %1028, %1030 : vector<32x128xf32>
    %1032 = arith.addf %1027, %1031 : vector<32x128xf32>
    %c112_i32_467 = arith.constant 112 : i32
    %1033 = tpu.dynamic_rotate %1008 by %c112_i32_467 dim 1 : vector<32x128xf32>, i32 -> vector<32x128xf32>
    %c19_468 = arith.constant 19 : index
    %c0_469 = arith.constant 0 : index
    %1034 = vector.load %arg7[%c19_468, %c0_469] : memref<49x128xf32, #tpu.memory_space<vmem>>, vector<1x128xf32>
    %1035 = vector.broadcast %1034 : vector<1x128xf32> to vector<32x128xf32>
    %1036 = arith.mulf %1033, %1035 : vector<32x128xf32>
    %1037 = arith.addf %1032, %1036 : vector<32x128xf32>
    %c104_i32_470 = arith.constant 104 : i32
    %1038 = tpu.dynamic_rotate %1008 by %c104_i32_470 dim 1 : vector<32x128xf32>, i32 -> vector<32x128xf32>
    %c20_471 = arith.constant 20 : index
    %c0_472 = arith.constant 0 : index
    %1039 = vector.load %arg7[%c20_471, %c0_472] : memref<49x128xf32, #tpu.memory_space<vmem>>, vector<1x128xf32>
    %1040 = vector.broadcast %1039 : vector<1x128xf32> to vector<32x128xf32>
    %1041 = arith.mulf %1038, %1040 : vector<32x128xf32>
    %1042 = arith.addf %1037, %1041 : vector<32x128xf32>
    %c24_i32_473 = arith.constant 24 : i32
    %1043 = tpu.dynamic_rotate %923 by %c24_i32_473 dim 1 : vector<32x128xf32>, i32 -> vector<32x128xf32>
    %c21_474 = arith.constant 21 : index
    %c0_475 = arith.constant 0 : index
    %1044 = vector.load %arg7[%c21_474, %c0_475] : memref<49x128xf32, #tpu.memory_space<vmem>>, vector<1x128xf32>
    %1045 = vector.broadcast %1044 : vector<1x128xf32> to vector<32x128xf32>
    %1046 = arith.mulf %1043, %1045 : vector<32x128xf32>
    %1047 = arith.addf %1042, %1046 : vector<32x128xf32>
    %c16_i32_476 = arith.constant 16 : i32
    %1048 = tpu.dynamic_rotate %923 by %c16_i32_476 dim 1 : vector<32x128xf32>, i32 -> vector<32x128xf32>
    %c22_477 = arith.constant 22 : index
    %c0_478 = arith.constant 0 : index
    %1049 = vector.load %arg7[%c22_477, %c0_478] : memref<49x128xf32, #tpu.memory_space<vmem>>, vector<1x128xf32>
    %1050 = vector.broadcast %1049 : vector<1x128xf32> to vector<32x128xf32>
    %1051 = arith.mulf %1048, %1050 : vector<32x128xf32>
    %1052 = arith.addf %1047, %1051 : vector<32x128xf32>
    %c8_i32_479 = arith.constant 8 : i32
    %1053 = tpu.dynamic_rotate %923 by %c8_i32_479 dim 1 : vector<32x128xf32>, i32 -> vector<32x128xf32>
    %c23_480 = arith.constant 23 : index
    %c0_481 = arith.constant 0 : index
    %1054 = vector.load %arg7[%c23_480, %c0_481] : memref<49x128xf32, #tpu.memory_space<vmem>>, vector<1x128xf32>
    %1055 = vector.broadcast %1054 : vector<1x128xf32> to vector<32x128xf32>
    %1056 = arith.mulf %1053, %1055 : vector<32x128xf32>
    %1057 = arith.addf %1052, %1056 : vector<32x128xf32>
    %c24_482 = arith.constant 24 : index
    %c0_483 = arith.constant 0 : index
    %1058 = vector.load %arg7[%c24_482, %c0_483] : memref<49x128xf32, #tpu.memory_space<vmem>>, vector<1x128xf32>
    %1059 = vector.broadcast %1058 : vector<1x128xf32> to vector<32x128xf32>
    %1060 = arith.mulf %923, %1059 : vector<32x128xf32>
    %1061 = arith.addf %1057, %1060 : vector<32x128xf32>
    %c120_i32_484 = arith.constant 120 : i32
    %1062 = tpu.dynamic_rotate %923 by %c120_i32_484 dim 1 : vector<32x128xf32>, i32 -> vector<32x128xf32>
    %c25_485 = arith.constant 25 : index
    %c0_486 = arith.constant 0 : index
    %1063 = vector.load %arg7[%c25_485, %c0_486] : memref<49x128xf32, #tpu.memory_space<vmem>>, vector<1x128xf32>
    %1064 = vector.broadcast %1063 : vector<1x128xf32> to vector<32x128xf32>
    %1065 = arith.mulf %1062, %1064 : vector<32x128xf32>
    %1066 = arith.addf %1061, %1065 : vector<32x128xf32>
    %c112_i32_487 = arith.constant 112 : i32
    %1067 = tpu.dynamic_rotate %923 by %c112_i32_487 dim 1 : vector<32x128xf32>, i32 -> vector<32x128xf32>
    %c26_488 = arith.constant 26 : index
    %c0_489 = arith.constant 0 : index
    %1068 = vector.load %arg7[%c26_488, %c0_489] : memref<49x128xf32, #tpu.memory_space<vmem>>, vector<1x128xf32>
    %1069 = vector.broadcast %1068 : vector<1x128xf32> to vector<32x128xf32>
    %1070 = arith.mulf %1067, %1069 : vector<32x128xf32>
    %1071 = arith.addf %1066, %1070 : vector<32x128xf32>
    %c104_i32_490 = arith.constant 104 : i32
    %1072 = tpu.dynamic_rotate %923 by %c104_i32_490 dim 1 : vector<32x128xf32>, i32 -> vector<32x128xf32>
    %c27_491 = arith.constant 27 : index
    %c0_492 = arith.constant 0 : index
    %1073 = vector.load %arg7[%c27_491, %c0_492] : memref<49x128xf32, #tpu.memory_space<vmem>>, vector<1x128xf32>
    %1074 = vector.broadcast %1073 : vector<1x128xf32> to vector<32x128xf32>
    %1075 = arith.mulf %1072, %1074 : vector<32x128xf32>
    %1076 = arith.addf %1071, %1075 : vector<32x128xf32>
    %cst_493 = arith.constant 0.000000e+00 : f32
    %1077 = vector.broadcast %cst_493 : f32 to vector<1x128xf32>
    %1078 = vector.extract_strided_slice %923 {offsets = [0, 0], sizes = [16, 128], strides = [1, 1]} : vector<32x128xf32> to vector<16x128xf32>
    %1079 = vector.extract_strided_slice %1078 {offsets = [1, 0], sizes = [15, 128], strides = [1, 1]} : vector<16x128xf32> to vector<15x128xf32>
    %1080 = vector.extract_strided_slice %923 {offsets = [16, 0], sizes = [16, 128], strides = [1, 1]} : vector<32x128xf32> to vector<16x128xf32>
    %1081 = vector.extract_strided_slice %1080 {offsets = [1, 0], sizes = [15, 128], strides = [1, 1]} : vector<16x128xf32> to vector<15x128xf32>
    %1082 = tpu.concatenate %1079, %1077, %1081, %1077 in 0 : vector<15x128xf32>, vector<1x128xf32>, vector<15x128xf32>, vector<1x128xf32> -> vector<32x128xf32>
    %c24_i32_494 = arith.constant 24 : i32
    %1083 = tpu.dynamic_rotate %1082 by %c24_i32_494 dim 1 : vector<32x128xf32>, i32 -> vector<32x128xf32>
    %c28_495 = arith.constant 28 : index
    %c0_496 = arith.constant 0 : index
    %1084 = vector.load %arg7[%c28_495, %c0_496] : memref<49x128xf32, #tpu.memory_space<vmem>>, vector<1x128xf32>
    %1085 = vector.broadcast %1084 : vector<1x128xf32> to vector<32x128xf32>
    %1086 = arith.mulf %1083, %1085 : vector<32x128xf32>
    %1087 = arith.addf %1076, %1086 : vector<32x128xf32>
    %c16_i32_497 = arith.constant 16 : i32
    %1088 = tpu.dynamic_rotate %1082 by %c16_i32_497 dim 1 : vector<32x128xf32>, i32 -> vector<32x128xf32>
    %c29_498 = arith.constant 29 : index
    %c0_499 = arith.constant 0 : index
    %1089 = vector.load %arg7[%c29_498, %c0_499] : memref<49x128xf32, #tpu.memory_space<vmem>>, vector<1x128xf32>
    %1090 = vector.broadcast %1089 : vector<1x128xf32> to vector<32x128xf32>
    %1091 = arith.mulf %1088, %1090 : vector<32x128xf32>
    %1092 = arith.addf %1087, %1091 : vector<32x128xf32>
    %c8_i32_500 = arith.constant 8 : i32
    %1093 = tpu.dynamic_rotate %1082 by %c8_i32_500 dim 1 : vector<32x128xf32>, i32 -> vector<32x128xf32>
    %c30_501 = arith.constant 30 : index
    %c0_502 = arith.constant 0 : index
    %1094 = vector.load %arg7[%c30_501, %c0_502] : memref<49x128xf32, #tpu.memory_space<vmem>>, vector<1x128xf32>
    %1095 = vector.broadcast %1094 : vector<1x128xf32> to vector<32x128xf32>
    %1096 = arith.mulf %1093, %1095 : vector<32x128xf32>
    %1097 = arith.addf %1092, %1096 : vector<32x128xf32>
    %c31_503 = arith.constant 31 : index
    %c0_504 = arith.constant 0 : index
    %1098 = vector.load %arg7[%c31_503, %c0_504] : memref<49x128xf32, #tpu.memory_space<vmem>>, vector<1x128xf32>
    %1099 = vector.broadcast %1098 : vector<1x128xf32> to vector<32x128xf32>
    %1100 = arith.mulf %1082, %1099 : vector<32x128xf32>
    %1101 = arith.addf %1097, %1100 : vector<32x128xf32>
    %c120_i32_505 = arith.constant 120 : i32
    %1102 = tpu.dynamic_rotate %1082 by %c120_i32_505 dim 1 : vector<32x128xf32>, i32 -> vector<32x128xf32>
    %c32_506 = arith.constant 32 : index
    %c0_507 = arith.constant 0 : index
    %1103 = vector.load %arg7[%c32_506, %c0_507] : memref<49x128xf32, #tpu.memory_space<vmem>>, vector<1x128xf32>
    %1104 = vector.broadcast %1103 : vector<1x128xf32> to vector<32x128xf32>
    %1105 = arith.mulf %1102, %1104 : vector<32x128xf32>
    %1106 = arith.addf %1101, %1105 : vector<32x128xf32>
    %c112_i32_508 = arith.constant 112 : i32
    %1107 = tpu.dynamic_rotate %1082 by %c112_i32_508 dim 1 : vector<32x128xf32>, i32 -> vector<32x128xf32>
    %c33_509 = arith.constant 33 : index
    %c0_510 = arith.constant 0 : index
    %1108 = vector.load %arg7[%c33_509, %c0_510] : memref<49x128xf32, #tpu.memory_space<vmem>>, vector<1x128xf32>
    %1109 = vector.broadcast %1108 : vector<1x128xf32> to vector<32x128xf32>
    %1110 = arith.mulf %1107, %1109 : vector<32x128xf32>
    %1111 = arith.addf %1106, %1110 : vector<32x128xf32>
    %c104_i32_511 = arith.constant 104 : i32
    %1112 = tpu.dynamic_rotate %1082 by %c104_i32_511 dim 1 : vector<32x128xf32>, i32 -> vector<32x128xf32>
    %c34_512 = arith.constant 34 : index
    %c0_513 = arith.constant 0 : index
    %1113 = vector.load %arg7[%c34_512, %c0_513] : memref<49x128xf32, #tpu.memory_space<vmem>>, vector<1x128xf32>
    %1114 = vector.broadcast %1113 : vector<1x128xf32> to vector<32x128xf32>
    %1115 = arith.mulf %1112, %1114 : vector<32x128xf32>
    %1116 = arith.addf %1111, %1115 : vector<32x128xf32>
    %cst_514 = arith.constant 0.000000e+00 : f32
    %1117 = vector.broadcast %cst_514 : f32 to vector<2x128xf32>
    %1118 = vector.extract_strided_slice %923 {offsets = [0, 0], sizes = [16, 128], strides = [1, 1]} : vector<32x128xf32> to vector<16x128xf32>
    %1119 = vector.extract_strided_slice %1118 {offsets = [2, 0], sizes = [14, 128], strides = [1, 1]} : vector<16x128xf32> to vector<14x128xf32>
    %1120 = vector.extract_strided_slice %923 {offsets = [16, 0], sizes = [16, 128], strides = [1, 1]} : vector<32x128xf32> to vector<16x128xf32>
    %1121 = vector.extract_strided_slice %1120 {offsets = [2, 0], sizes = [14, 128], strides = [1, 1]} : vector<16x128xf32> to vector<14x128xf32>
    %1122 = tpu.concatenate %1119, %1117, %1121, %1117 in 0 : vector<14x128xf32>, vector<2x128xf32>, vector<14x128xf32>, vector<2x128xf32> -> vector<32x128xf32>
    %c24_i32_515 = arith.constant 24 : i32
    %1123 = tpu.dynamic_rotate %1122 by %c24_i32_515 dim 1 : vector<32x128xf32>, i32 -> vector<32x128xf32>
    %c35_516 = arith.constant 35 : index
    %c0_517 = arith.constant 0 : index
    %1124 = vector.load %arg7[%c35_516, %c0_517] : memref<49x128xf32, #tpu.memory_space<vmem>>, vector<1x128xf32>
    %1125 = vector.broadcast %1124 : vector<1x128xf32> to vector<32x128xf32>
    %1126 = arith.mulf %1123, %1125 : vector<32x128xf32>
    %1127 = arith.addf %1116, %1126 : vector<32x128xf32>
    %c16_i32_518 = arith.constant 16 : i32
    %1128 = tpu.dynamic_rotate %1122 by %c16_i32_518 dim 1 : vector<32x128xf32>, i32 -> vector<32x128xf32>
    %c36_519 = arith.constant 36 : index
    %c0_520 = arith.constant 0 : index
    %1129 = vector.load %arg7[%c36_519, %c0_520] : memref<49x128xf32, #tpu.memory_space<vmem>>, vector<1x128xf32>
    %1130 = vector.broadcast %1129 : vector<1x128xf32> to vector<32x128xf32>
    %1131 = arith.mulf %1128, %1130 : vector<32x128xf32>
    %1132 = arith.addf %1127, %1131 : vector<32x128xf32>
    %c8_i32_521 = arith.constant 8 : i32
    %1133 = tpu.dynamic_rotate %1122 by %c8_i32_521 dim 1 : vector<32x128xf32>, i32 -> vector<32x128xf32>
    %c37_522 = arith.constant 37 : index
    %c0_523 = arith.constant 0 : index
    %1134 = vector.load %arg7[%c37_522, %c0_523] : memref<49x128xf32, #tpu.memory_space<vmem>>, vector<1x128xf32>
    %1135 = vector.broadcast %1134 : vector<1x128xf32> to vector<32x128xf32>
    %1136 = arith.mulf %1133, %1135 : vector<32x128xf32>
    %1137 = arith.addf %1132, %1136 : vector<32x128xf32>
    %c38_524 = arith.constant 38 : index
    %c0_525 = arith.constant 0 : index
    %1138 = vector.load %arg7[%c38_524, %c0_525] : memref<49x128xf32, #tpu.memory_space<vmem>>, vector<1x128xf32>
    %1139 = vector.broadcast %1138 : vector<1x128xf32> to vector<32x128xf32>
    %1140 = arith.mulf %1122, %1139 : vector<32x128xf32>
    %1141 = arith.addf %1137, %1140 : vector<32x128xf32>
    %c120_i32_526 = arith.constant 120 : i32
    %1142 = tpu.dynamic_rotate %1122 by %c120_i32_526 dim 1 : vector<32x128xf32>, i32 -> vector<32x128xf32>
    %c39_527 = arith.constant 39 : index
    %c0_528 = arith.constant 0 : index
    %1143 = vector.load %arg7[%c39_527, %c0_528] : memref<49x128xf32, #tpu.memory_space<vmem>>, vector<1x128xf32>
    %1144 = vector.broadcast %1143 : vector<1x128xf32> to vector<32x128xf32>
    %1145 = arith.mulf %1142, %1144 : vector<32x128xf32>
    %1146 = arith.addf %1141, %1145 : vector<32x128xf32>
    %c112_i32_529 = arith.constant 112 : i32
    %1147 = tpu.dynamic_rotate %1122 by %c112_i32_529 dim 1 : vector<32x128xf32>, i32 -> vector<32x128xf32>
    %c40_530 = arith.constant 40 : index
    %c0_531 = arith.constant 0 : index
    %1148 = vector.load %arg7[%c40_530, %c0_531] : memref<49x128xf32, #tpu.memory_space<vmem>>, vector<1x128xf32>
    %1149 = vector.broadcast %1148 : vector<1x128xf32> to vector<32x128xf32>
    %1150 = arith.mulf %1147, %1149 : vector<32x128xf32>
    %1151 = arith.addf %1146, %1150 : vector<32x128xf32>
    %c104_i32_532 = arith.constant 104 : i32
    %1152 = tpu.dynamic_rotate %1122 by %c104_i32_532 dim 1 : vector<32x128xf32>, i32 -> vector<32x128xf32>
    %c41_533 = arith.constant 41 : index
    %c0_534 = arith.constant 0 : index
    %1153 = vector.load %arg7[%c41_533, %c0_534] : memref<49x128xf32, #tpu.memory_space<vmem>>, vector<1x128xf32>
    %1154 = vector.broadcast %1153 : vector<1x128xf32> to vector<32x128xf32>
    %1155 = arith.mulf %1152, %1154 : vector<32x128xf32>
    %1156 = arith.addf %1151, %1155 : vector<32x128xf32>
    %cst_535 = arith.constant 0.000000e+00 : f32
    %1157 = vector.broadcast %cst_535 : f32 to vector<3x128xf32>
    %1158 = vector.extract_strided_slice %923 {offsets = [0, 0], sizes = [16, 128], strides = [1, 1]} : vector<32x128xf32> to vector<16x128xf32>
    %1159 = vector.extract_strided_slice %1158 {offsets = [3, 0], sizes = [13, 128], strides = [1, 1]} : vector<16x128xf32> to vector<13x128xf32>
    %1160 = vector.extract_strided_slice %923 {offsets = [16, 0], sizes = [16, 128], strides = [1, 1]} : vector<32x128xf32> to vector<16x128xf32>
    %1161 = vector.extract_strided_slice %1160 {offsets = [3, 0], sizes = [13, 128], strides = [1, 1]} : vector<16x128xf32> to vector<13x128xf32>
    %1162 = tpu.concatenate %1159, %1157, %1161, %1157 in 0 : vector<13x128xf32>, vector<3x128xf32>, vector<13x128xf32>, vector<3x128xf32> -> vector<32x128xf32>
    %c24_i32_536 = arith.constant 24 : i32
    %1163 = tpu.dynamic_rotate %1162 by %c24_i32_536 dim 1 : vector<32x128xf32>, i32 -> vector<32x128xf32>
    %c42_537 = arith.constant 42 : index
    %c0_538 = arith.constant 0 : index
    %1164 = vector.load %arg7[%c42_537, %c0_538] : memref<49x128xf32, #tpu.memory_space<vmem>>, vector<1x128xf32>
    %1165 = vector.broadcast %1164 : vector<1x128xf32> to vector<32x128xf32>
    %1166 = arith.mulf %1163, %1165 : vector<32x128xf32>
    %1167 = arith.addf %1156, %1166 : vector<32x128xf32>
    %c16_i32_539 = arith.constant 16 : i32
    %1168 = tpu.dynamic_rotate %1162 by %c16_i32_539 dim 1 : vector<32x128xf32>, i32 -> vector<32x128xf32>
    %c43_540 = arith.constant 43 : index
    %c0_541 = arith.constant 0 : index
    %1169 = vector.load %arg7[%c43_540, %c0_541] : memref<49x128xf32, #tpu.memory_space<vmem>>, vector<1x128xf32>
    %1170 = vector.broadcast %1169 : vector<1x128xf32> to vector<32x128xf32>
    %1171 = arith.mulf %1168, %1170 : vector<32x128xf32>
    %1172 = arith.addf %1167, %1171 : vector<32x128xf32>
    %c8_i32_542 = arith.constant 8 : i32
    %1173 = tpu.dynamic_rotate %1162 by %c8_i32_542 dim 1 : vector<32x128xf32>, i32 -> vector<32x128xf32>
    %c44_543 = arith.constant 44 : index
    %c0_544 = arith.constant 0 : index
    %1174 = vector.load %arg7[%c44_543, %c0_544] : memref<49x128xf32, #tpu.memory_space<vmem>>, vector<1x128xf32>
    %1175 = vector.broadcast %1174 : vector<1x128xf32> to vector<32x128xf32>
    %1176 = arith.mulf %1173, %1175 : vector<32x128xf32>
    %1177 = arith.addf %1172, %1176 : vector<32x128xf32>
    %c45_545 = arith.constant 45 : index
    %c0_546 = arith.constant 0 : index
    %1178 = vector.load %arg7[%c45_545, %c0_546] : memref<49x128xf32, #tpu.memory_space<vmem>>, vector<1x128xf32>
    %1179 = vector.broadcast %1178 : vector<1x128xf32> to vector<32x128xf32>
    %1180 = arith.mulf %1162, %1179 : vector<32x128xf32>
    %1181 = arith.addf %1177, %1180 : vector<32x128xf32>
    %c120_i32_547 = arith.constant 120 : i32
    %1182 = tpu.dynamic_rotate %1162 by %c120_i32_547 dim 1 : vector<32x128xf32>, i32 -> vector<32x128xf32>
    %c46_548 = arith.constant 46 : index
    %c0_549 = arith.constant 0 : index
    %1183 = vector.load %arg7[%c46_548, %c0_549] : memref<49x128xf32, #tpu.memory_space<vmem>>, vector<1x128xf32>
    %1184 = vector.broadcast %1183 : vector<1x128xf32> to vector<32x128xf32>
    %1185 = arith.mulf %1182, %1184 : vector<32x128xf32>
    %1186 = arith.addf %1181, %1185 : vector<32x128xf32>
    %c112_i32_550 = arith.constant 112 : i32
    %1187 = tpu.dynamic_rotate %1162 by %c112_i32_550 dim 1 : vector<32x128xf32>, i32 -> vector<32x128xf32>
    %c47_551 = arith.constant 47 : index
    %c0_552 = arith.constant 0 : index
    %1188 = vector.load %arg7[%c47_551, %c0_552] : memref<49x128xf32, #tpu.memory_space<vmem>>, vector<1x128xf32>
    %1189 = vector.broadcast %1188 : vector<1x128xf32> to vector<32x128xf32>
    %1190 = arith.mulf %1187, %1189 : vector<32x128xf32>
    %1191 = arith.addf %1186, %1190 : vector<32x128xf32>
    %c104_i32_553 = arith.constant 104 : i32
    %1192 = tpu.dynamic_rotate %1162 by %c104_i32_553 dim 1 : vector<32x128xf32>, i32 -> vector<32x128xf32>
    %c48_554 = arith.constant 48 : index
    %c0_555 = arith.constant 0 : index
    %1193 = vector.load %arg7[%c48_554, %c0_555] : memref<49x128xf32, #tpu.memory_space<vmem>>, vector<1x128xf32>
    %1194 = vector.broadcast %1193 : vector<1x128xf32> to vector<32x128xf32>
    %1195 = arith.mulf %1192, %1194 : vector<32x128xf32>
    %1196 = arith.addf %1191, %1195 : vector<32x128xf32>
    %c0_556 = arith.constant 0 : index
    %c0_557 = arith.constant 0 : index
    %1197 = vector.load %arg15[%c0_556, %c0_557] : memref<128x128xf32, #tpu.memory_space<vmem>>, vector<128x128xf32>
    %cst_558 = arith.constant dense<0.000000e+00> : vector<32x128xf32>
    %1198 = tpu.matmul %1196, %1197, %cst_558 {dimension_numbers = #tpu.dot_dimension_numbers<[1], [0], [0], [1], [0, 0, 1, 1], [], []>} : vector<32x128xf32>, vector<128x128xf32>, vector<32x128xf32> -> vector<32x128xf32>
    %cst_559 = arith.constant dense<0.000000e+00> : vector<32x128xf32>
    %1199 = tpu.matmul %1198, %1, %cst_559 {dimension_numbers = #tpu.dot_dimension_numbers<[1], [0], [0], [1], [0, 0, 1, 1], [], []>} : vector<32x128xf32>, vector<128x128xf32>, vector<32x128xf32> -> vector<32x128xf32>
    %cst_560 = arith.constant dense<0.000000e+00> : vector<128xf32>
    %1200 = vector.multi_reduction <add>, %1199, %cst_560 [0] : vector<32x128xf32> to vector<128xf32>
    %1201 = vector.shape_cast %1200 : vector<128xf32> to vector<1x128xf32>
    %cst_561 = arith.constant 0.001953125 : f32
    %1202 = vector.broadcast %cst_561 : f32 to vector<1x128xf32>
    %1203 = arith.mulf %1201, %1202 : vector<1x128xf32>
    %1204 = vector.broadcast %1203 : vector<1x128xf32> to vector<32x128xf32>
    %1205 = arith.subf %1198, %1204 : vector<32x128xf32>
    %1206 = arith.mulf %1205, %1205 : vector<32x128xf32>
    %cst_562 = arith.constant dense<0.000000e+00> : vector<32x128xf32>
    %1207 = tpu.matmul %1206, %1, %cst_562 {dimension_numbers = #tpu.dot_dimension_numbers<[1], [0], [0], [1], [0, 0, 1, 1], [], []>} : vector<32x128xf32>, vector<128x128xf32>, vector<32x128xf32> -> vector<32x128xf32>
    %cst_563 = arith.constant dense<0.000000e+00> : vector<128xf32>
    %1208 = vector.multi_reduction <add>, %1207, %cst_563 [0] : vector<32x128xf32> to vector<128xf32>
    %1209 = vector.shape_cast %1208 : vector<128xf32> to vector<1x128xf32>
    %cst_564 = arith.constant 0.001953125 : f32
    %1210 = vector.broadcast %cst_564 : f32 to vector<1x128xf32>
    %1211 = arith.mulf %1209, %1210 : vector<1x128xf32>
    %cst_565 = arith.constant 9.99999974E-6 : f32
    %1212 = vector.broadcast %cst_565 : f32 to vector<1x128xf32>
    %1213 = arith.addf %1211, %1212 : vector<1x128xf32>
    %1214 = math.rsqrt %1213 : vector<1x128xf32>
    %1215 = vector.broadcast %1214 : vector<1x128xf32> to vector<32x128xf32>
    %1216 = arith.mulf %1205, %1215 : vector<32x128xf32>
    %1217 = vector.broadcast %628 : vector<1x128xf32> to vector<32x128xf32>
    %1218 = arith.mulf %1217, %1216 : vector<32x128xf32>
    %1219 = arith.addf %627, %1218 : vector<32x128xf32>
    %c7_566 = arith.constant 7 : index
    %c0_567 = arith.constant 0 : index
    %1220 = vector.load %arg1[%c7_566, %c0_567] : memref<9x128xf32, #tpu.memory_space<vmem>>, vector<1x128xf32>
    %cst_568 = arith.constant 0.000000e+00 : f32
    %1221 = vector.broadcast %cst_568 : f32 to vector<2x128xf32>
    %1222 = vector.extract_strided_slice %3 {offsets = [0, 0], sizes = [16, 128], strides = [1, 1]} : vector<32x128xf32> to vector<16x128xf32>
    %1223 = vector.extract_strided_slice %1222 {offsets = [0, 0], sizes = [14, 128], strides = [1, 1]} : vector<16x128xf32> to vector<14x128xf32>
    %1224 = vector.extract_strided_slice %3 {offsets = [16, 0], sizes = [16, 128], strides = [1, 1]} : vector<32x128xf32> to vector<16x128xf32>
    %1225 = vector.extract_strided_slice %1224 {offsets = [0, 0], sizes = [14, 128], strides = [1, 1]} : vector<16x128xf32> to vector<14x128xf32>
    %1226 = tpu.concatenate %1221, %1223, %1221, %1225 in 0 : vector<2x128xf32>, vector<14x128xf32>, vector<2x128xf32>, vector<14x128xf32> -> vector<32x128xf32>
    %c16_i32_569 = arith.constant 16 : i32
    %1227 = tpu.dynamic_rotate %1226 by %c16_i32_569 dim 1 : vector<32x128xf32>, i32 -> vector<32x128xf32>
    %c0_570 = arith.constant 0 : index
    %c0_571 = arith.constant 0 : index
    %1228 = vector.load %arg8[%c0_570, %c0_571] : memref<9x128xf32, #tpu.memory_space<vmem>>, vector<1x128xf32>
    %1229 = vector.broadcast %1228 : vector<1x128xf32> to vector<32x128xf32>
    %1230 = arith.mulf %1227, %1229 : vector<32x128xf32>
    %c1_572 = arith.constant 1 : index
    %c0_573 = arith.constant 0 : index
    %1231 = vector.load %arg8[%c1_572, %c0_573] : memref<9x128xf32, #tpu.memory_space<vmem>>, vector<1x128xf32>
    %1232 = vector.broadcast %1231 : vector<1x128xf32> to vector<32x128xf32>
    %1233 = arith.mulf %1226, %1232 : vector<32x128xf32>
    %1234 = arith.addf %1230, %1233 : vector<32x128xf32>
    %c112_i32_574 = arith.constant 112 : i32
    %1235 = tpu.dynamic_rotate %1226 by %c112_i32_574 dim 1 : vector<32x128xf32>, i32 -> vector<32x128xf32>
    %c2_575 = arith.constant 2 : index
    %c0_576 = arith.constant 0 : index
    %1236 = vector.load %arg8[%c2_575, %c0_576] : memref<9x128xf32, #tpu.memory_space<vmem>>, vector<1x128xf32>
    %1237 = vector.broadcast %1236 : vector<1x128xf32> to vector<32x128xf32>
    %1238 = arith.mulf %1235, %1237 : vector<32x128xf32>
    %1239 = arith.addf %1234, %1238 : vector<32x128xf32>
    %c16_i32_577 = arith.constant 16 : i32
    %1240 = tpu.dynamic_rotate %3 by %c16_i32_577 dim 1 : vector<32x128xf32>, i32 -> vector<32x128xf32>
    %c3_578 = arith.constant 3 : index
    %c0_579 = arith.constant 0 : index
    %1241 = vector.load %arg8[%c3_578, %c0_579] : memref<9x128xf32, #tpu.memory_space<vmem>>, vector<1x128xf32>
    %1242 = vector.broadcast %1241 : vector<1x128xf32> to vector<32x128xf32>
    %1243 = arith.mulf %1240, %1242 : vector<32x128xf32>
    %1244 = arith.addf %1239, %1243 : vector<32x128xf32>
    %c4_580 = arith.constant 4 : index
    %c0_581 = arith.constant 0 : index
    %1245 = vector.load %arg8[%c4_580, %c0_581] : memref<9x128xf32, #tpu.memory_space<vmem>>, vector<1x128xf32>
    %1246 = vector.broadcast %1245 : vector<1x128xf32> to vector<32x128xf32>
    %1247 = arith.mulf %3, %1246 : vector<32x128xf32>
    %1248 = arith.addf %1244, %1247 : vector<32x128xf32>
    %c112_i32_582 = arith.constant 112 : i32
    %1249 = tpu.dynamic_rotate %3 by %c112_i32_582 dim 1 : vector<32x128xf32>, i32 -> vector<32x128xf32>
    %c5_583 = arith.constant 5 : index
    %c0_584 = arith.constant 0 : index
    %1250 = vector.load %arg8[%c5_583, %c0_584] : memref<9x128xf32, #tpu.memory_space<vmem>>, vector<1x128xf32>
    %1251 = vector.broadcast %1250 : vector<1x128xf32> to vector<32x128xf32>
    %1252 = arith.mulf %1249, %1251 : vector<32x128xf32>
    %1253 = arith.addf %1248, %1252 : vector<32x128xf32>
    %cst_585 = arith.constant 0.000000e+00 : f32
    %1254 = vector.broadcast %cst_585 : f32 to vector<2x128xf32>
    %1255 = vector.extract_strided_slice %3 {offsets = [0, 0], sizes = [16, 128], strides = [1, 1]} : vector<32x128xf32> to vector<16x128xf32>
    %1256 = vector.extract_strided_slice %1255 {offsets = [2, 0], sizes = [14, 128], strides = [1, 1]} : vector<16x128xf32> to vector<14x128xf32>
    %1257 = vector.extract_strided_slice %3 {offsets = [16, 0], sizes = [16, 128], strides = [1, 1]} : vector<32x128xf32> to vector<16x128xf32>
    %1258 = vector.extract_strided_slice %1257 {offsets = [2, 0], sizes = [14, 128], strides = [1, 1]} : vector<16x128xf32> to vector<14x128xf32>
    %1259 = tpu.concatenate %1256, %1254, %1258, %1254 in 0 : vector<14x128xf32>, vector<2x128xf32>, vector<14x128xf32>, vector<2x128xf32> -> vector<32x128xf32>
    %c16_i32_586 = arith.constant 16 : i32
    %1260 = tpu.dynamic_rotate %1259 by %c16_i32_586 dim 1 : vector<32x128xf32>, i32 -> vector<32x128xf32>
    %c6_587 = arith.constant 6 : index
    %c0_588 = arith.constant 0 : index
    %1261 = vector.load %arg8[%c6_587, %c0_588] : memref<9x128xf32, #tpu.memory_space<vmem>>, vector<1x128xf32>
    %1262 = vector.broadcast %1261 : vector<1x128xf32> to vector<32x128xf32>
    %1263 = arith.mulf %1260, %1262 : vector<32x128xf32>
    %1264 = arith.addf %1253, %1263 : vector<32x128xf32>
    %c7_589 = arith.constant 7 : index
    %c0_590 = arith.constant 0 : index
    %1265 = vector.load %arg8[%c7_589, %c0_590] : memref<9x128xf32, #tpu.memory_space<vmem>>, vector<1x128xf32>
    %1266 = vector.broadcast %1265 : vector<1x128xf32> to vector<32x128xf32>
    %1267 = arith.mulf %1259, %1266 : vector<32x128xf32>
    %1268 = arith.addf %1264, %1267 : vector<32x128xf32>
    %c112_i32_591 = arith.constant 112 : i32
    %1269 = tpu.dynamic_rotate %1259 by %c112_i32_591 dim 1 : vector<32x128xf32>, i32 -> vector<32x128xf32>
    %c8_592 = arith.constant 8 : index
    %c0_593 = arith.constant 0 : index
    %1270 = vector.load %arg8[%c8_592, %c0_593] : memref<9x128xf32, #tpu.memory_space<vmem>>, vector<1x128xf32>
    %1271 = vector.broadcast %1270 : vector<1x128xf32> to vector<32x128xf32>
    %1272 = arith.mulf %1269, %1271 : vector<32x128xf32>
    %1273 = arith.addf %1268, %1272 : vector<32x128xf32>
    %c0_594 = arith.constant 0 : index
    %c0_595 = arith.constant 0 : index
    %1274 = vector.load %arg16[%c0_594, %c0_595] : memref<128x128xf32, #tpu.memory_space<vmem>>, vector<128x128xf32>
    %cst_596 = arith.constant dense<0.000000e+00> : vector<32x128xf32>
    %1275 = tpu.matmul %1273, %1274, %cst_596 {dimension_numbers = #tpu.dot_dimension_numbers<[1], [0], [0], [1], [0, 0, 1, 1], [], []>} : vector<32x128xf32>, vector<128x128xf32>, vector<32x128xf32> -> vector<32x128xf32>
    %cst_597 = arith.constant dense<0.000000e+00> : vector<32x128xf32>
    %1276 = tpu.matmul %1275, %1, %cst_597 {dimension_numbers = #tpu.dot_dimension_numbers<[1], [0], [0], [1], [0, 0, 1, 1], [], []>} : vector<32x128xf32>, vector<128x128xf32>, vector<32x128xf32> -> vector<32x128xf32>
    %cst_598 = arith.constant dense<0.000000e+00> : vector<128xf32>
    %1277 = vector.multi_reduction <add>, %1276, %cst_598 [0] : vector<32x128xf32> to vector<128xf32>
    %1278 = vector.shape_cast %1277 : vector<128xf32> to vector<1x128xf32>
    %cst_599 = arith.constant 0.001953125 : f32
    %1279 = vector.broadcast %cst_599 : f32 to vector<1x128xf32>
    %1280 = arith.mulf %1278, %1279 : vector<1x128xf32>
    %1281 = vector.broadcast %1280 : vector<1x128xf32> to vector<32x128xf32>
    %1282 = arith.subf %1275, %1281 : vector<32x128xf32>
    %1283 = arith.mulf %1282, %1282 : vector<32x128xf32>
    %cst_600 = arith.constant dense<0.000000e+00> : vector<32x128xf32>
    %1284 = tpu.matmul %1283, %1, %cst_600 {dimension_numbers = #tpu.dot_dimension_numbers<[1], [0], [0], [1], [0, 0, 1, 1], [], []>} : vector<32x128xf32>, vector<128x128xf32>, vector<32x128xf32> -> vector<32x128xf32>
    %cst_601 = arith.constant dense<0.000000e+00> : vector<128xf32>
    %1285 = vector.multi_reduction <add>, %1284, %cst_601 [0] : vector<32x128xf32> to vector<128xf32>
    %1286 = vector.shape_cast %1285 : vector<128xf32> to vector<1x128xf32>
    %cst_602 = arith.constant 0.001953125 : f32
    %1287 = vector.broadcast %cst_602 : f32 to vector<1x128xf32>
    %1288 = arith.mulf %1286, %1287 : vector<1x128xf32>
    %cst_603 = arith.constant 9.99999974E-6 : f32
    %1289 = vector.broadcast %cst_603 : f32 to vector<1x128xf32>
    %1290 = arith.addf %1288, %1289 : vector<1x128xf32>
    %1291 = math.rsqrt %1290 : vector<1x128xf32>
    %1292 = vector.broadcast %1291 : vector<1x128xf32> to vector<32x128xf32>
    %1293 = arith.mulf %1282, %1292 : vector<32x128xf32>
    %1294 = vector.broadcast %1220 : vector<1x128xf32> to vector<32x128xf32>
    %1295 = arith.mulf %1294, %1293 : vector<32x128xf32>
    %1296 = arith.addf %1219, %1295 : vector<32x128xf32>
    %c8_604 = arith.constant 8 : index
    %c0_605 = arith.constant 0 : index
    %1297 = vector.load %arg1[%c8_604, %c0_605] : memref<9x128xf32, #tpu.memory_space<vmem>>, vector<1x128xf32>
    %cst_606 = arith.constant 0.000000e+00 : f32
    %1298 = vector.broadcast %cst_606 : f32 to vector<4x128xf32>
    %1299 = vector.extract_strided_slice %3 {offsets = [0, 0], sizes = [16, 128], strides = [1, 1]} : vector<32x128xf32> to vector<16x128xf32>
    %1300 = vector.extract_strided_slice %1299 {offsets = [0, 0], sizes = [12, 128], strides = [1, 1]} : vector<16x128xf32> to vector<12x128xf32>
    %1301 = vector.extract_strided_slice %3 {offsets = [16, 0], sizes = [16, 128], strides = [1, 1]} : vector<32x128xf32> to vector<16x128xf32>
    %1302 = vector.extract_strided_slice %1301 {offsets = [0, 0], sizes = [12, 128], strides = [1, 1]} : vector<16x128xf32> to vector<12x128xf32>
    %1303 = tpu.concatenate %1298, %1300, %1298, %1302 in 0 : vector<4x128xf32>, vector<12x128xf32>, vector<4x128xf32>, vector<12x128xf32> -> vector<32x128xf32>
    %c32_i32 = arith.constant 32 : i32
    %1304 = tpu.dynamic_rotate %1303 by %c32_i32 dim 1 : vector<32x128xf32>, i32 -> vector<32x128xf32>
    %c0_607 = arith.constant 0 : index
    %c0_608 = arith.constant 0 : index
    %1305 = vector.load %arg9[%c0_607, %c0_608] : memref<25x128xf32, #tpu.memory_space<vmem>>, vector<1x128xf32>
    %1306 = vector.broadcast %1305 : vector<1x128xf32> to vector<32x128xf32>
    %1307 = arith.mulf %1304, %1306 : vector<32x128xf32>
    %c16_i32_609 = arith.constant 16 : i32
    %1308 = tpu.dynamic_rotate %1303 by %c16_i32_609 dim 1 : vector<32x128xf32>, i32 -> vector<32x128xf32>
    %c1_610 = arith.constant 1 : index
    %c0_611 = arith.constant 0 : index
    %1309 = vector.load %arg9[%c1_610, %c0_611] : memref<25x128xf32, #tpu.memory_space<vmem>>, vector<1x128xf32>
    %1310 = vector.broadcast %1309 : vector<1x128xf32> to vector<32x128xf32>
    %1311 = arith.mulf %1308, %1310 : vector<32x128xf32>
    %1312 = arith.addf %1307, %1311 : vector<32x128xf32>
    %c2_612 = arith.constant 2 : index
    %c0_613 = arith.constant 0 : index
    %1313 = vector.load %arg9[%c2_612, %c0_613] : memref<25x128xf32, #tpu.memory_space<vmem>>, vector<1x128xf32>
    %1314 = vector.broadcast %1313 : vector<1x128xf32> to vector<32x128xf32>
    %1315 = arith.mulf %1303, %1314 : vector<32x128xf32>
    %1316 = arith.addf %1312, %1315 : vector<32x128xf32>
    %c112_i32_614 = arith.constant 112 : i32
    %1317 = tpu.dynamic_rotate %1303 by %c112_i32_614 dim 1 : vector<32x128xf32>, i32 -> vector<32x128xf32>
    %c3_615 = arith.constant 3 : index
    %c0_616 = arith.constant 0 : index
    %1318 = vector.load %arg9[%c3_615, %c0_616] : memref<25x128xf32, #tpu.memory_space<vmem>>, vector<1x128xf32>
    %1319 = vector.broadcast %1318 : vector<1x128xf32> to vector<32x128xf32>
    %1320 = arith.mulf %1317, %1319 : vector<32x128xf32>
    %1321 = arith.addf %1316, %1320 : vector<32x128xf32>
    %c96_i32 = arith.constant 96 : i32
    %1322 = tpu.dynamic_rotate %1303 by %c96_i32 dim 1 : vector<32x128xf32>, i32 -> vector<32x128xf32>
    %c4_617 = arith.constant 4 : index
    %c0_618 = arith.constant 0 : index
    %1323 = vector.load %arg9[%c4_617, %c0_618] : memref<25x128xf32, #tpu.memory_space<vmem>>, vector<1x128xf32>
    %1324 = vector.broadcast %1323 : vector<1x128xf32> to vector<32x128xf32>
    %1325 = arith.mulf %1322, %1324 : vector<32x128xf32>
    %1326 = arith.addf %1321, %1325 : vector<32x128xf32>
    %cst_619 = arith.constant 0.000000e+00 : f32
    %1327 = vector.broadcast %cst_619 : f32 to vector<2x128xf32>
    %1328 = vector.extract_strided_slice %3 {offsets = [0, 0], sizes = [16, 128], strides = [1, 1]} : vector<32x128xf32> to vector<16x128xf32>
    %1329 = vector.extract_strided_slice %1328 {offsets = [0, 0], sizes = [14, 128], strides = [1, 1]} : vector<16x128xf32> to vector<14x128xf32>
    %1330 = vector.extract_strided_slice %3 {offsets = [16, 0], sizes = [16, 128], strides = [1, 1]} : vector<32x128xf32> to vector<16x128xf32>
    %1331 = vector.extract_strided_slice %1330 {offsets = [0, 0], sizes = [14, 128], strides = [1, 1]} : vector<16x128xf32> to vector<14x128xf32>
    %1332 = tpu.concatenate %1327, %1329, %1327, %1331 in 0 : vector<2x128xf32>, vector<14x128xf32>, vector<2x128xf32>, vector<14x128xf32> -> vector<32x128xf32>
    %c32_i32_620 = arith.constant 32 : i32
    %1333 = tpu.dynamic_rotate %1332 by %c32_i32_620 dim 1 : vector<32x128xf32>, i32 -> vector<32x128xf32>
    %c5_621 = arith.constant 5 : index
    %c0_622 = arith.constant 0 : index
    %1334 = vector.load %arg9[%c5_621, %c0_622] : memref<25x128xf32, #tpu.memory_space<vmem>>, vector<1x128xf32>
    %1335 = vector.broadcast %1334 : vector<1x128xf32> to vector<32x128xf32>
    %1336 = arith.mulf %1333, %1335 : vector<32x128xf32>
    %1337 = arith.addf %1326, %1336 : vector<32x128xf32>
    %c16_i32_623 = arith.constant 16 : i32
    %1338 = tpu.dynamic_rotate %1332 by %c16_i32_623 dim 1 : vector<32x128xf32>, i32 -> vector<32x128xf32>
    %c6_624 = arith.constant 6 : index
    %c0_625 = arith.constant 0 : index
    %1339 = vector.load %arg9[%c6_624, %c0_625] : memref<25x128xf32, #tpu.memory_space<vmem>>, vector<1x128xf32>
    %1340 = vector.broadcast %1339 : vector<1x128xf32> to vector<32x128xf32>
    %1341 = arith.mulf %1338, %1340 : vector<32x128xf32>
    %1342 = arith.addf %1337, %1341 : vector<32x128xf32>
    %c7_626 = arith.constant 7 : index
    %c0_627 = arith.constant 0 : index
    %1343 = vector.load %arg9[%c7_626, %c0_627] : memref<25x128xf32, #tpu.memory_space<vmem>>, vector<1x128xf32>
    %1344 = vector.broadcast %1343 : vector<1x128xf32> to vector<32x128xf32>
    %1345 = arith.mulf %1332, %1344 : vector<32x128xf32>
    %1346 = arith.addf %1342, %1345 : vector<32x128xf32>
    %c112_i32_628 = arith.constant 112 : i32
    %1347 = tpu.dynamic_rotate %1332 by %c112_i32_628 dim 1 : vector<32x128xf32>, i32 -> vector<32x128xf32>
    %c8_629 = arith.constant 8 : index
    %c0_630 = arith.constant 0 : index
    %1348 = vector.load %arg9[%c8_629, %c0_630] : memref<25x128xf32, #tpu.memory_space<vmem>>, vector<1x128xf32>
    %1349 = vector.broadcast %1348 : vector<1x128xf32> to vector<32x128xf32>
    %1350 = arith.mulf %1347, %1349 : vector<32x128xf32>
    %1351 = arith.addf %1346, %1350 : vector<32x128xf32>
    %c96_i32_631 = arith.constant 96 : i32
    %1352 = tpu.dynamic_rotate %1332 by %c96_i32_631 dim 1 : vector<32x128xf32>, i32 -> vector<32x128xf32>
    %c9_632 = arith.constant 9 : index
    %c0_633 = arith.constant 0 : index
    %1353 = vector.load %arg9[%c9_632, %c0_633] : memref<25x128xf32, #tpu.memory_space<vmem>>, vector<1x128xf32>
    %1354 = vector.broadcast %1353 : vector<1x128xf32> to vector<32x128xf32>
    %1355 = arith.mulf %1352, %1354 : vector<32x128xf32>
    %1356 = arith.addf %1351, %1355 : vector<32x128xf32>
    %c32_i32_634 = arith.constant 32 : i32
    %1357 = tpu.dynamic_rotate %3 by %c32_i32_634 dim 1 : vector<32x128xf32>, i32 -> vector<32x128xf32>
    %c10_635 = arith.constant 10 : index
    %c0_636 = arith.constant 0 : index
    %1358 = vector.load %arg9[%c10_635, %c0_636] : memref<25x128xf32, #tpu.memory_space<vmem>>, vector<1x128xf32>
    %1359 = vector.broadcast %1358 : vector<1x128xf32> to vector<32x128xf32>
    %1360 = arith.mulf %1357, %1359 : vector<32x128xf32>
    %1361 = arith.addf %1356, %1360 : vector<32x128xf32>
    %c16_i32_637 = arith.constant 16 : i32
    %1362 = tpu.dynamic_rotate %3 by %c16_i32_637 dim 1 : vector<32x128xf32>, i32 -> vector<32x128xf32>
    %c11_638 = arith.constant 11 : index
    %c0_639 = arith.constant 0 : index
    %1363 = vector.load %arg9[%c11_638, %c0_639] : memref<25x128xf32, #tpu.memory_space<vmem>>, vector<1x128xf32>
    %1364 = vector.broadcast %1363 : vector<1x128xf32> to vector<32x128xf32>
    %1365 = arith.mulf %1362, %1364 : vector<32x128xf32>
    %1366 = arith.addf %1361, %1365 : vector<32x128xf32>
    %c12_640 = arith.constant 12 : index
    %c0_641 = arith.constant 0 : index
    %1367 = vector.load %arg9[%c12_640, %c0_641] : memref<25x128xf32, #tpu.memory_space<vmem>>, vector<1x128xf32>
    %1368 = vector.broadcast %1367 : vector<1x128xf32> to vector<32x128xf32>
    %1369 = arith.mulf %3, %1368 : vector<32x128xf32>
    %1370 = arith.addf %1366, %1369 : vector<32x128xf32>
    %c112_i32_642 = arith.constant 112 : i32
    %1371 = tpu.dynamic_rotate %3 by %c112_i32_642 dim 1 : vector<32x128xf32>, i32 -> vector<32x128xf32>
    %c13_643 = arith.constant 13 : index
    %c0_644 = arith.constant 0 : index
    %1372 = vector.load %arg9[%c13_643, %c0_644] : memref<25x128xf32, #tpu.memory_space<vmem>>, vector<1x128xf32>
    %1373 = vector.broadcast %1372 : vector<1x128xf32> to vector<32x128xf32>
    %1374 = arith.mulf %1371, %1373 : vector<32x128xf32>
    %1375 = arith.addf %1370, %1374 : vector<32x128xf32>
    %c96_i32_645 = arith.constant 96 : i32
    %1376 = tpu.dynamic_rotate %3 by %c96_i32_645 dim 1 : vector<32x128xf32>, i32 -> vector<32x128xf32>
    %c14_646 = arith.constant 14 : index
    %c0_647 = arith.constant 0 : index
    %1377 = vector.load %arg9[%c14_646, %c0_647] : memref<25x128xf32, #tpu.memory_space<vmem>>, vector<1x128xf32>
    %1378 = vector.broadcast %1377 : vector<1x128xf32> to vector<32x128xf32>
    %1379 = arith.mulf %1376, %1378 : vector<32x128xf32>
    %1380 = arith.addf %1375, %1379 : vector<32x128xf32>
    %cst_648 = arith.constant 0.000000e+00 : f32
    %1381 = vector.broadcast %cst_648 : f32 to vector<2x128xf32>
    %1382 = vector.extract_strided_slice %3 {offsets = [0, 0], sizes = [16, 128], strides = [1, 1]} : vector<32x128xf32> to vector<16x128xf32>
    %1383 = vector.extract_strided_slice %1382 {offsets = [2, 0], sizes = [14, 128], strides = [1, 1]} : vector<16x128xf32> to vector<14x128xf32>
    %1384 = vector.extract_strided_slice %3 {offsets = [16, 0], sizes = [16, 128], strides = [1, 1]} : vector<32x128xf32> to vector<16x128xf32>
    %1385 = vector.extract_strided_slice %1384 {offsets = [2, 0], sizes = [14, 128], strides = [1, 1]} : vector<16x128xf32> to vector<14x128xf32>
    %1386 = tpu.concatenate %1383, %1381, %1385, %1381 in 0 : vector<14x128xf32>, vector<2x128xf32>, vector<14x128xf32>, vector<2x128xf32> -> vector<32x128xf32>
    %c32_i32_649 = arith.constant 32 : i32
    %1387 = tpu.dynamic_rotate %1386 by %c32_i32_649 dim 1 : vector<32x128xf32>, i32 -> vector<32x128xf32>
    %c15_650 = arith.constant 15 : index
    %c0_651 = arith.constant 0 : index
    %1388 = vector.load %arg9[%c15_650, %c0_651] : memref<25x128xf32, #tpu.memory_space<vmem>>, vector<1x128xf32>
    %1389 = vector.broadcast %1388 : vector<1x128xf32> to vector<32x128xf32>
    %1390 = arith.mulf %1387, %1389 : vector<32x128xf32>
    %1391 = arith.addf %1380, %1390 : vector<32x128xf32>
    %c16_i32_652 = arith.constant 16 : i32
    %1392 = tpu.dynamic_rotate %1386 by %c16_i32_652 dim 1 : vector<32x128xf32>, i32 -> vector<32x128xf32>
    %c16_653 = arith.constant 16 : index
    %c0_654 = arith.constant 0 : index
    %1393 = vector.load %arg9[%c16_653, %c0_654] : memref<25x128xf32, #tpu.memory_space<vmem>>, vector<1x128xf32>
    %1394 = vector.broadcast %1393 : vector<1x128xf32> to vector<32x128xf32>
    %1395 = arith.mulf %1392, %1394 : vector<32x128xf32>
    %1396 = arith.addf %1391, %1395 : vector<32x128xf32>
    %c17_655 = arith.constant 17 : index
    %c0_656 = arith.constant 0 : index
    %1397 = vector.load %arg9[%c17_655, %c0_656] : memref<25x128xf32, #tpu.memory_space<vmem>>, vector<1x128xf32>
    %1398 = vector.broadcast %1397 : vector<1x128xf32> to vector<32x128xf32>
    %1399 = arith.mulf %1386, %1398 : vector<32x128xf32>
    %1400 = arith.addf %1396, %1399 : vector<32x128xf32>
    %c112_i32_657 = arith.constant 112 : i32
    %1401 = tpu.dynamic_rotate %1386 by %c112_i32_657 dim 1 : vector<32x128xf32>, i32 -> vector<32x128xf32>
    %c18_658 = arith.constant 18 : index
    %c0_659 = arith.constant 0 : index
    %1402 = vector.load %arg9[%c18_658, %c0_659] : memref<25x128xf32, #tpu.memory_space<vmem>>, vector<1x128xf32>
    %1403 = vector.broadcast %1402 : vector<1x128xf32> to vector<32x128xf32>
    %1404 = arith.mulf %1401, %1403 : vector<32x128xf32>
    %1405 = arith.addf %1400, %1404 : vector<32x128xf32>
    %c96_i32_660 = arith.constant 96 : i32
    %1406 = tpu.dynamic_rotate %1386 by %c96_i32_660 dim 1 : vector<32x128xf32>, i32 -> vector<32x128xf32>
    %c19_661 = arith.constant 19 : index
    %c0_662 = arith.constant 0 : index
    %1407 = vector.load %arg9[%c19_661, %c0_662] : memref<25x128xf32, #tpu.memory_space<vmem>>, vector<1x128xf32>
    %1408 = vector.broadcast %1407 : vector<1x128xf32> to vector<32x128xf32>
    %1409 = arith.mulf %1406, %1408 : vector<32x128xf32>
    %1410 = arith.addf %1405, %1409 : vector<32x128xf32>
    %cst_663 = arith.constant 0.000000e+00 : f32
    %1411 = vector.broadcast %cst_663 : f32 to vector<4x128xf32>
    %1412 = vector.extract_strided_slice %3 {offsets = [0, 0], sizes = [16, 128], strides = [1, 1]} : vector<32x128xf32> to vector<16x128xf32>
    %1413 = vector.extract_strided_slice %1412 {offsets = [4, 0], sizes = [12, 128], strides = [1, 1]} : vector<16x128xf32> to vector<12x128xf32>
    %1414 = vector.extract_strided_slice %3 {offsets = [16, 0], sizes = [16, 128], strides = [1, 1]} : vector<32x128xf32> to vector<16x128xf32>
    %1415 = vector.extract_strided_slice %1414 {offsets = [4, 0], sizes = [12, 128], strides = [1, 1]} : vector<16x128xf32> to vector<12x128xf32>
    %1416 = tpu.concatenate %1413, %1411, %1415, %1411 in 0 : vector<12x128xf32>, vector<4x128xf32>, vector<12x128xf32>, vector<4x128xf32> -> vector<32x128xf32>
    %c32_i32_664 = arith.constant 32 : i32
    %1417 = tpu.dynamic_rotate %1416 by %c32_i32_664 dim 1 : vector<32x128xf32>, i32 -> vector<32x128xf32>
    %c20_665 = arith.constant 20 : index
    %c0_666 = arith.constant 0 : index
    %1418 = vector.load %arg9[%c20_665, %c0_666] : memref<25x128xf32, #tpu.memory_space<vmem>>, vector<1x128xf32>
    %1419 = vector.broadcast %1418 : vector<1x128xf32> to vector<32x128xf32>
    %1420 = arith.mulf %1417, %1419 : vector<32x128xf32>
    %1421 = arith.addf %1410, %1420 : vector<32x128xf32>
    %c16_i32_667 = arith.constant 16 : i32
    %1422 = tpu.dynamic_rotate %1416 by %c16_i32_667 dim 1 : vector<32x128xf32>, i32 -> vector<32x128xf32>
    %c21_668 = arith.constant 21 : index
    %c0_669 = arith.constant 0 : index
    %1423 = vector.load %arg9[%c21_668, %c0_669] : memref<25x128xf32, #tpu.memory_space<vmem>>, vector<1x128xf32>
    %1424 = vector.broadcast %1423 : vector<1x128xf32> to vector<32x128xf32>
    %1425 = arith.mulf %1422, %1424 : vector<32x128xf32>
    %1426 = arith.addf %1421, %1425 : vector<32x128xf32>
    %c22_670 = arith.constant 22 : index
    %c0_671 = arith.constant 0 : index
    %1427 = vector.load %arg9[%c22_670, %c0_671] : memref<25x128xf32, #tpu.memory_space<vmem>>, vector<1x128xf32>
    %1428 = vector.broadcast %1427 : vector<1x128xf32> to vector<32x128xf32>
    %1429 = arith.mulf %1416, %1428 : vector<32x128xf32>
    %1430 = arith.addf %1426, %1429 : vector<32x128xf32>
    %c112_i32_672 = arith.constant 112 : i32
    %1431 = tpu.dynamic_rotate %1416 by %c112_i32_672 dim 1 : vector<32x128xf32>, i32 -> vector<32x128xf32>
    %c23_673 = arith.constant 23 : index
    %c0_674 = arith.constant 0 : index
    %1432 = vector.load %arg9[%c23_673, %c0_674] : memref<25x128xf32, #tpu.memory_space<vmem>>, vector<1x128xf32>
    %1433 = vector.broadcast %1432 : vector<1x128xf32> to vector<32x128xf32>
    %1434 = arith.mulf %1431, %1433 : vector<32x128xf32>
    %1435 = arith.addf %1430, %1434 : vector<32x128xf32>
    %c96_i32_675 = arith.constant 96 : i32
    %1436 = tpu.dynamic_rotate %1416 by %c96_i32_675 dim 1 : vector<32x128xf32>, i32 -> vector<32x128xf32>
    %c24_676 = arith.constant 24 : index
    %c0_677 = arith.constant 0 : index
    %1437 = vector.load %arg9[%c24_676, %c0_677] : memref<25x128xf32, #tpu.memory_space<vmem>>, vector<1x128xf32>
    %1438 = vector.broadcast %1437 : vector<1x128xf32> to vector<32x128xf32>
    %1439 = arith.mulf %1436, %1438 : vector<32x128xf32>
    %1440 = arith.addf %1435, %1439 : vector<32x128xf32>
    %c0_678 = arith.constant 0 : index
    %c0_679 = arith.constant 0 : index
    %1441 = vector.load %arg17[%c0_678, %c0_679] : memref<128x128xf32, #tpu.memory_space<vmem>>, vector<128x128xf32>
    %cst_680 = arith.constant dense<0.000000e+00> : vector<32x128xf32>
    %1442 = tpu.matmul %1440, %1441, %cst_680 {dimension_numbers = #tpu.dot_dimension_numbers<[1], [0], [0], [1], [0, 0, 1, 1], [], []>} : vector<32x128xf32>, vector<128x128xf32>, vector<32x128xf32> -> vector<32x128xf32>
    %cst_681 = arith.constant dense<0.000000e+00> : vector<32x128xf32>
    %1443 = tpu.matmul %1442, %1, %cst_681 {dimension_numbers = #tpu.dot_dimension_numbers<[1], [0], [0], [1], [0, 0, 1, 1], [], []>} : vector<32x128xf32>, vector<128x128xf32>, vector<32x128xf32> -> vector<32x128xf32>
    %cst_682 = arith.constant dense<0.000000e+00> : vector<128xf32>
    %1444 = vector.multi_reduction <add>, %1443, %cst_682 [0] : vector<32x128xf32> to vector<128xf32>
    %1445 = vector.shape_cast %1444 : vector<128xf32> to vector<1x128xf32>
    %cst_683 = arith.constant 0.001953125 : f32
    %1446 = vector.broadcast %cst_683 : f32 to vector<1x128xf32>
    %1447 = arith.mulf %1445, %1446 : vector<1x128xf32>
    %1448 = vector.broadcast %1447 : vector<1x128xf32> to vector<32x128xf32>
    %1449 = arith.subf %1442, %1448 : vector<32x128xf32>
    %1450 = arith.mulf %1449, %1449 : vector<32x128xf32>
    %cst_684 = arith.constant dense<0.000000e+00> : vector<32x128xf32>
    %1451 = tpu.matmul %1450, %1, %cst_684 {dimension_numbers = #tpu.dot_dimension_numbers<[1], [0], [0], [1], [0, 0, 1, 1], [], []>} : vector<32x128xf32>, vector<128x128xf32>, vector<32x128xf32> -> vector<32x128xf32>
    %cst_685 = arith.constant dense<0.000000e+00> : vector<128xf32>
    %1452 = vector.multi_reduction <add>, %1451, %cst_685 [0] : vector<32x128xf32> to vector<128xf32>
    %1453 = vector.shape_cast %1452 : vector<128xf32> to vector<1x128xf32>
    %cst_686 = arith.constant 0.001953125 : f32
    %1454 = vector.broadcast %cst_686 : f32 to vector<1x128xf32>
    %1455 = arith.mulf %1453, %1454 : vector<1x128xf32>
    %cst_687 = arith.constant 9.99999974E-6 : f32
    %1456 = vector.broadcast %cst_687 : f32 to vector<1x128xf32>
    %1457 = arith.addf %1455, %1456 : vector<1x128xf32>
    %1458 = math.rsqrt %1457 : vector<1x128xf32>
    %1459 = vector.broadcast %1458 : vector<1x128xf32> to vector<32x128xf32>
    %1460 = arith.mulf %1449, %1459 : vector<32x128xf32>
    %1461 = vector.broadcast %1297 : vector<1x128xf32> to vector<32x128xf32>
    %1462 = arith.mulf %1461, %1460 : vector<32x128xf32>
    %1463 = arith.addf %1296, %1462 : vector<32x128xf32>
    %c0_688 = arith.constant 0 : index
    %c0_689 = arith.constant 0 : index
    %1464 = vector.load %arg21[%c0_688, %c0_689] : memref<32x128xf32, #tpu.memory_space<vmem>>, vector<32x128xf32>
    tpu.vector_store %arg21[%c0_688, %c0_689], %1463 {strides = array<i32>} : memref<32x128xf32, #tpu.memory_space<vmem>>, vector<32x128xf32>,
    return
  }
}

</mosaic_0001>

<llo_original>
// kernel: mixed_op_forward.1
$region0: #{mixed_op_forward.1}
  #allocation0 [shape = 'u32[]', space=smem, size = 0x4, offset = 0x4, fixed_abs, tag = 'smem constant byte address 0x4 - core index']
  #allocation1 [shape = 'u32[72,128]{1,0:T(1,128)}', space=vmem, size = 0x9000, scoped, tag = 'internal scratch']
  %s0 = inlined_call_operand.vmem [shape: f32[32,128], index: 0, kind: input, shape index: {}]
  %s1 = inlined_call_operand.vmem [shape: f32[9,128], index: 1, kind: input, shape index: {}]
  %s2 = inlined_call_operand.vmem [shape: f32[9,128], index: 2, kind: input, shape index: {}]
  %s3 = inlined_call_operand.vmem [shape: f32[9,128], index: 3, kind: input, shape index: {}]
  %s4 = inlined_call_operand.vmem [shape: f32[25,128], index: 4, kind: input, shape index: {}]
  %s5 = inlined_call_operand.vmem [shape: f32[25,128], index: 5, kind: input, shape index: {}]
  %s6 = inlined_call_operand.vmem [shape: f32[49,128], index: 6, kind: input, shape index: {}]
  %s7 = inlined_call_operand.vmem [shape: f32[49,128], index: 7, kind: input, shape index: {}]
  %s8 = inlined_call_operand.vmem [shape: f32[9,128], index: 8, kind: input, shape index: {}]
  %s9 = inlined_call_operand.vmem [shape: f32[25,128], index: 9, kind: input, shape index: {}]
  %s10 = inlined_call_operand.vmem [shape: f32[128,128], index: 10, kind: input, shape index: {}]
  %s11 = inlined_call_operand.vmem [shape: f32[128,128], index: 11, kind: input, shape index: {}]
  %s12 = inlined_call_operand.vmem [shape: f32[128,128], index: 12, kind: input, shape index: {}]
  %s13 = inlined_call_operand.vmem [shape: f32[128,128], index: 13, kind: input, shape index: {}]
  %s14 = inlined_call_operand.vmem [shape: f32[128,128], index: 14, kind: input, shape index: {}]
  %s15 = inlined_call_operand.vmem [shape: f32[128,128], index: 15, kind: input, shape index: {}]
  %s16 = inlined_call_operand.vmem [shape: f32[128,128], index: 16, kind: input, shape index: {}]
  %s17 = inlined_call_operand.vmem [shape: f32[128,128], index: 17, kind: input, shape index: {}]
  %s18 = inlined_call_operand.vmem [shape: f32[128,128], index: 18, kind: input, shape index: {}]
  %s19 = inlined_call_operand.vmem [shape: f32[9,128], index: 19, kind: input, shape index: {}]
  %s20 = inlined_call_operand.vmem [shape: f32[32,128], index: 20, kind: input, shape index: {}]
  %s21 = inlined_call_operand.vmem [shape: f32[32,128], index: 21, kind: output, shape index: {}]
  %s22 = sld [smem:[#allocation0]]
  $region94: #{mixed_op_forward.1} parent=0
    _
  %s24 = ssub.s32 1, %s22
  %s25 = scalar_select 0, %s24, %s22
  // Predicated region
  $region2: #{mixed_op_forward.1} parent=0 // pred_check
    _
  $region3: #{mixed_op_forward.1} parent=0 // pred_check_branch
    %27 = sbr.rel (0) target = $region5
  $region4: #{mixed_op_forward.1} parent=0 // pred_region
    _
  $region5: #{mixed_op_forward.1} parent=0 // pred_fallthru
    _
  // Predicated region
  $region6: #{mixed_op_forward.1} parent=0 // pred_check
    _
  $region7: #{mixed_op_forward.1} parent=0 // pred_check_branch
    %29 = sbr.rel (0) target = $region9
  $region8: #{mixed_op_forward.1} parent=0 // pred_region
    _
  $region9: #{mixed_op_forward.1} parent=0 // pred_fallthru
    _
  // Predicated region
  $region10: #{mixed_op_forward.1} parent=0 // pred_check
    _
  $region11: #{mixed_op_forward.1} parent=0 // pred_check_branch
    %31 = sbr.rel (0) target = $region13
  $region12: #{mixed_op_forward.1} parent=0 // pred_region
    _
  $region13: #{mixed_op_forward.1} parent=0 // pred_fallthru
    _
  // Predicated region
  $region14: #{mixed_op_forward.1} parent=0 // pred_check
    _
  $region15: #{mixed_op_forward.1} parent=0 // pred_check_branch
    %33 = sbr.rel (0) target = $region17
  $region16: #{mixed_op_forward.1} parent=0 // pred_region
    _
  $region17: #{mixed_op_forward.1} parent=0 // pred_fallthru
    _
  // Predicated region
  $region18: #{mixed_op_forward.1} parent=0 // pred_check
    _
  $region19: #{mixed_op_forward.1} parent=0 // pred_check_branch
    %35 = sbr.rel (0) target = $region21
  $region20: #{mixed_op_forward.1} parent=0 // pred_region
    _
  $region21: #{mixed_op_forward.1} parent=0 // pred_fallthru
    _
  // Predicated region
  $region22: #{mixed_op_forward.1} parent=0 // pred_check
    _
  $region23: #{mixed_op_forward.1} parent=0 // pred_check_branch
    %37 = sbr.rel (0) target = $region25
  $region24: #{mixed_op_forward.1} parent=0 // pred_region
    _
  $region25: #{mixed_op_forward.1} parent=0 // pred_fallthru
    _
  // Predicated region
  $region26: #{mixed_op_forward.1} parent=0 // pred_check
    _
  $region27: #{mixed_op_forward.1} parent=0 // pred_check_branch
    %39 = sbr.rel (0) target = $region29
  $region28: #{mixed_op_forward.1} parent=0 // pred_region
    _
  $region29: #{mixed_op_forward.1} parent=0 // pred_fallthru
    _
  // Predicated region
  $region30: #{mixed_op_forward.1} parent=0 // pred_check
    _
  $region31: #{mixed_op_forward.1} parent=0 // pred_check_branch
    %41 = sbr.rel (0) target = $region33
  $region32: #{mixed_op_forward.1} parent=0 // pred_region
    _
  $region33: #{mixed_op_forward.1} parent=0 // pred_fallthru
    _
  // Predicated region
  $region34: #{mixed_op_forward.1} parent=0 // pred_check
    _
  $region35: #{mixed_op_forward.1} parent=0 // pred_check_branch
    %43 = sbr.rel (0) target = $region37
  $region36: #{mixed_op_forward.1} parent=0 // pred_region
    _
  $region37: #{mixed_op_forward.1} parent=0 // pred_fallthru
    _
  // Predicated region
  $region38: #{mixed_op_forward.1} parent=0 // pred_check
    _
  $region39: #{mixed_op_forward.1} parent=0 // pred_check_branch
    %45 = sbr.rel (0) target = $region41
  $region40: #{mixed_op_forward.1} parent=0 // pred_region
    _
  $region41: #{mixed_op_forward.1} parent=0 // pred_fallthru
    _
  // Predicated region
  $region42: #{mixed_op_forward.1} parent=0 // pred_check
    _
  $region43: #{mixed_op_forward.1} parent=0 // pred_check_branch
    %47 = sbr.rel (0) target = $region45
  $region44: #{mixed_op_forward.1} parent=0 // pred_region
    _
  $region45: #{mixed_op_forward.1} parent=0 // pred_fallthru
    _
  // Predicated region
  $region46: #{mixed_op_forward.1} parent=0 // pred_check
    _
  $region47: #{mixed_op_forward.1} parent=0 // pred_check_branch
    %49 = sbr.rel (0) target = $region49
  $region48: #{mixed_op_forward.1} parent=0 // pred_region
    _
  $region49: #{mixed_op_forward.1} parent=0 // pred_fallthru
    _
  // Predicated region
  $region50: #{mixed_op_forward.1} parent=0 // pred_check
    _
  $region51: #{mixed_op_forward.1} parent=0 // pred_check_branch
    %51 = sbr.rel (0) target = $region53
  $region52: #{mixed_op_forward.1} parent=0 // pred_region
    _
  $region53: #{mixed_op_forward.1} parent=0 // pred_fallthru
    _
  // Predicated region
  $region54: #{mixed_op_forward.1} parent=0 // pred_check
    _
  $region55: #{mixed_op_forward.1} parent=0 // pred_check_branch
    %53 = sbr.rel (0) target = $region57
  $region56: #{mixed_op_forward.1} parent=0 // pred_region
    _
  $region57: #{mixed_op_forward.1} parent=0 // pred_fallthru
    _
  // Predicated region
  $region58: #{mixed_op_forward.1} parent=0 // pred_check
    _
  $region59: #{mixed_op_forward.1} parent=0 // pred_check_branch
    %55 = sbr.rel (0) target = $region61
  $region60: #{mixed_op_forward.1} parent=0 // pred_region
    _
  $region61: #{mixed_op_forward.1} parent=0 // pred_fallthru
    _
  // Predicated region
  $region62: #{mixed_op_forward.1} parent=0 // pred_check
    _
  $region63: #{mixed_op_forward.1} parent=0 // pred_check_branch
    %57 = sbr.rel (0) target = $region65
  $region64: #{mixed_op_forward.1} parent=0 // pred_region
    _
  $region65: #{mixed_op_forward.1} parent=0 // pred_fallthru
    _
  // Predicated region
  $region66: #{mixed_op_forward.1} parent=0 // pred_check
    _
  $region67: #{mixed_op_forward.1} parent=0 // pred_check_branch
    %59 = sbr.rel (0) target = $region69
  $region68: #{mixed_op_forward.1} parent=0 // pred_region
    _
  $region69: #{mixed_op_forward.1} parent=0 // pred_fallthru
    _
  // Predicated region
  $region70: #{mixed_op_forward.1} parent=0 // pred_check
    _
  $region71: #{mixed_op_forward.1} parent=0 // pred_check_branch
    %61 = sbr.rel (0) target = $region73
  $region72: #{mixed_op_forward.1} parent=0 // pred_region
    _
  $region73: #{mixed_op_forward.1} parent=0 // pred_fallthru
    _
  // Predicated region
  $region74: #{mixed_op_forward.1} parent=0 // pred_check
    _
  $region75: #{mixed_op_forward.1} parent=0 // pred_check_branch
    %63 = sbr.rel (0) target = $region77
  $region76: #{mixed_op_forward.1} parent=0 // pred_region
    _
  $region77: #{mixed_op_forward.1} parent=0 // pred_fallthru
    _
  // Predicated region
  $region78: #{mixed_op_forward.1} parent=0 // pred_check
    _
  $region79: #{mixed_op_forward.1} parent=0 // pred_check_branch
    %65 = sbr.rel (0) target = $region81
  $region80: #{mixed_op_forward.1} parent=0 // pred_region
    _
  $region81: #{mixed_op_forward.1} parent=0 // pred_fallthru
    _
  // Predicated region
  $region82: #{mixed_op_forward.1} parent=0 // pred_check
    _
  $region83: #{mixed_op_forward.1} parent=0 // pred_check_branch
    %67 = sbr.rel (0) target = $region85
  $region84: #{mixed_op_forward.1} parent=0 // pred_region
    _
  $region85: #{mixed_op_forward.1} parent=0 // pred_fallthru
    _
  %v68 = vld [vmem:[%s0] sm:$0xff]
  %v69 = vld [vmem:[%s0 + $0x8] sm:$0xff]
  %v70 = vld [vmem:[%s0 + $0x10] sm:$0xff]
  %v71 = vld [vmem:[%s0 + $0x18] sm:$0xff]
  %v72 = vld [vmem:[%s18] sm:$0xff]
  %v73 = vld [vmem:[%s18 + $0x8] sm:$0xff]
  %v74 = vld [vmem:[%s18 + $0x10] sm:$0xff]
  %v75 = vld [vmem:[%s18 + $0x18] sm:$0xff]
  %v76 = vld [vmem:[%s18 + $0x20] sm:$0xff]
  %v77 = vld [vmem:[%s18 + $0x28] sm:$0xff]
  %v78 = vld [vmem:[%s18 + $0x30] sm:$0xff]
  %v79 = vld [vmem:[%s18 + $0x38] sm:$0xff]
  %v80 = vld [vmem:[%s18 + $0x40] sm:$0xff]
  %v81 = vld [vmem:[%s18 + $0x48] sm:$0xff]
  %v82 = vld [vmem:[%s18 + $0x50] sm:$0xff]
  %v83 = vld [vmem:[%s18 + $0x58] sm:$0xff]
  %v84 = vld [vmem:[%s18 + $0x60] sm:$0xff]
  %v85 = vld [vmem:[%s18 + $0x68] sm:$0xff]
  %v86 = vld [vmem:[%s18 + $0x70] sm:$0xff]
  %v87 = vld [vmem:[%s18 + $0x78] sm:$0xff]
  %v88 = vmax.f32 %v68, 0.0
  %v89 = vmax.f32 %v69, 0.0
  %v90 = vmax.f32 %v70, 0.0
  %v91 = vmax.f32 %v71, 0.0
  %v92 = vld [vmem:[%s1 + $0x3] sm:$0x1]
  %v93 = vperm.slane %v92, 0
  %v94 = vmul.f32 %v93, %v68
  %v95 = vmul.f32 %v93, %v69
  %v96 = vmul.f32 %v93, %v70
  %v97 = vmul.f32 %v93, %v71
  %v98 = vld [vmem:[%s1 + $0x1] sm:$0x1]
  %vm101 = vcmask 1040384
  %v102 = vrot.slane %v68, 7
  %v103 = vrot.slane %v69, 7
  %v104 = vsel %vm101, %v102, %v103
  %v109 = vrot.slane %v70, 7
  %v110 = vrot.slane %v71, 7
  %v111 = vsel %vm101, %v109, %v110
  %v114 = vsel %vm101, 0.0, %v102
  %v115 = vsel %vm101, 0.0, %v109
  %116 = vrot.lane.b32.xlu0 %v114, 8
  %v117 = vpop.permute.xlu0 %116
  %118 = vrot.lane.b32.xlu0 %v104, 8
  %v119 = vpop.permute.xlu0 %118
  %120 = vrot.lane.b32.xlu0 %v115, 8
  %v121 = vpop.permute.xlu0 %120
  %122 = vrot.lane.b32.xlu0 %v111, 8
  %v123 = vpop.permute.xlu0 %122
  %v124 = vld [vmem:[%s19] sm:$0x1]
  %v125 = vperm.slane %v124, 0
  %v126 = vmul.f32 %v117, %v125
  %v127 = vmul.f32 %v119, %v125
  %v128 = vmul.f32 %v121, %v125
  %v129 = vmul.f32 %v123, %v125
  %v130 = vld [vmem:[%s19 + $0x1] sm:$0x1]
  %v131 = vperm.slane %v130, 0
  %v132 = vmul.f32 %v114, %v131
  %v133 = vmul.f32 %v104, %v131
  %v134 = vmul.f32 %v115, %v131
  %v135 = vmul.f32 %v111, %v131
  %v136 = vadd.f32 %v126, %v132
  %v137 = vadd.f32 %v127, %v133
  %v138 = vadd.f32 %v128, %v134
  %v139 = vadd.f32 %v129, %v135
  %140 = vrot.lane.b32.xlu0 %v114, 120
  %v141 = vpop.permute.xlu0 %140
  %142 = vrot.lane.b32.xlu0 %v104, 120
  %v143 = vpop.permute.xlu0 %142
  %144 = vrot.lane.b32.xlu0 %v115, 120
  %v145 = vpop.permute.xlu0 %144
  %146 = vrot.lane.b32.xlu0 %v111, 120
  %v147 = vpop.permute.xlu0 %146
  %v148 = vld [vmem:[%s19 + $0x2] sm:$0x1]
  %v149 = vperm.slane %v148, 0
  %v150 = vmul.f32 %v141, %v149
  %v151 = vmul.f32 %v143, %v149
  %v152 = vmul.f32 %v145, %v149
  %v153 = vmul.f32 %v147, %v149
  %v154 = vadd.f32 %v136, %v150
  %v155 = vadd.f32 %v137, %v151
  %v156 = vadd.f32 %v138, %v152
  %v157 = vadd.f32 %v139, %v153
  %158 = vrot.lane.b32.xlu0 %v68, 8
  %v159 = vpop.permute.xlu0 %158
  %160 = vrot.lane.b32.xlu0 %v69, 8
  %v161 = vpop.permute.xlu0 %160
  %162 = vrot.lane.b32.xlu0 %v70, 8
  %v163 = vpop.permute.xlu0 %162
  %164 = vrot.lane.b32.xlu0 %v71, 8
  %v165 = vpop.permute.xlu0 %164
  %v166 = vld [vmem:[%s19 + $0x3] sm:$0x1]
  %v167 = vperm.slane %v166, 0
  %v168 = vmul.f32 %v159, %v167
  %v169 = vmul.f32 %v161, %v167
  %v170 = vmul.f32 %v163, %v167
  %v171 = vmul.f32 %v165, %v167
  %v172 = vadd.f32 %v154, %v168
  %v173 = vadd.f32 %v155, %v169
  %v174 = vadd.f32 %v156, %v170
  %v175 = vadd.f32 %v157, %v171
  %v176 = vld [vmem:[%s19 + $0x4] sm:$0x1]
  %v177 = vperm.slane %v176, 0
  %v178 = vmul.f32 %v68, %v177
  %v179 = vmul.f32 %v69, %v177
  %v180 = vmul.f32 %v70, %v177
  %v181 = vmul.f32 %v71, %v177
  %v182 = vadd.f32 %v172, %v178
  %v183 = vadd.f32 %v173, %v179
  %v184 = vadd.f32 %v174, %v180
  %v185 = vadd.f32 %v175, %v181
  %186 = vrot.lane.b32.xlu0 %v68, 120
  %v187 = vpop.permute.xlu0 %186
  %188 = vrot.lane.b32.xlu0 %v69, 120
  %v189 = vpop.permute.xlu0 %188
  %190 = vrot.lane.b32.xlu0 %v70, 120
  %v191 = vpop.permute.xlu0 %190
  %192 = vrot.lane.b32.xlu0 %v71, 120
  %v193 = vpop.permute.xlu0 %192
  %v194 = vld [vmem:[%s19 + $0x5] sm:$0x1]
  %v195 = vperm.slane %v194, 0
  %v196 = vmul.f32 %v187, %v195
  %v197 = vmul.f32 %v189, %v195
  %v198 = vmul.f32 %v191, %v195
  %v199 = vmul.f32 %v193, %v195
  %v200 = vadd.f32 %v182, %v196
  %v201 = vadd.f32 %v183, %v197
  %v202 = vadd.f32 %v184, %v198
  %v203 = vadd.f32 %v185, %v199
  %vm204 = vcmask 1046528
  %v205 = vrot.slane %v68, 1
  %v206 = vrot.slane %v69, 1
  %v207 = vsel %vm204, %v205, %v206
  %v210 = vrot.slane %v70, 1
  %v211 = vrot.slane %v71, 1
  %v212 = vsel %vm204, %v210, %v211
  %v215 = vsel %vm204, %v206, 0.0
  %v216 = vsel %vm204, %v211, 0.0
  %217 = vrot.lane.b32.xlu0 %v207, 8
  %v218 = vpop.permute.xlu0 %217
  %219 = vrot.lane.b32.xlu0 %v215, 8
  %v220 = vpop.permute.xlu0 %219
  %221 = vrot.lane.b32.xlu0 %v212, 8
  %v222 = vpop.permute.xlu0 %221
  %223 = vrot.lane.b32.xlu0 %v216, 8
  %v224 = vpop.permute.xlu0 %223
  %v225 = vld [vmem:[%s19 + $0x6] sm:$0x1]
  %v226 = vperm.slane %v225, 0
  %v227 = vmul.f32 %v218, %v226
  %v228 = vmul.f32 %v220, %v226
  %v229 = vmul.f32 %v222, %v226
  %v230 = vmul.f32 %v224, %v226
  %v231 = vadd.f32 %v200, %v227
  %v232 = vadd.f32 %v201, %v228
  %v233 = vadd.f32 %v202, %v229
  %v234 = vadd.f32 %v203, %v230
  %v235 = vld [vmem:[%s19 + $0x7] sm:$0x1]
  %v236 = vperm.slane %v235, 0
  %v237 = vmul.f32 %v207, %v236
  %v238 = vmul.f32 %v215, %v236
  %v239 = vmul.f32 %v212, %v236
  %v240 = vmul.f32 %v216, %v236
  %v241 = vadd.f32 %v231, %v237
  %v242 = vadd.f32 %v232, %v238
  %v243 = vadd.f32 %v233, %v239
  %v244 = vadd.f32 %v234, %v240
  %245 = vrot.lane.b32.xlu0 %v207, 120
  %v246 = vpop.permute.xlu0 %245
  %247 = vrot.lane.b32.xlu0 %v215, 120
  %v248 = vpop.permute.xlu0 %247
  %249 = vrot.lane.b32.xlu0 %v212, 120
  %v250 = vpop.permute.xlu0 %249
  %251 = vrot.lane.b32.xlu0 %v216, 120
  %v252 = vpop.permute.xlu0 %251
  %v253 = vld [vmem:[%s19 + $0x8] sm:$0x1]
  %v254 = vperm.slane %v253, 0
  %v255 = vmul.f32 %v246, %v254
  %v256 = vmul.f32 %v248, %v254
  %v257 = vmul.f32 %v250, %v254
  %v258 = vmul.f32 %v252, %v254
  %v259 = vadd.f32 %v241, %v255
  %v260 = vadd.f32 %v242, %v256
  %v261 = vadd.f32 %v243, %v257
  %v262 = vadd.f32 %v244, %v258
  %v263 = vld [vmem:[%s20] sm:$0xff]
  %v264 = vld [vmem:[%s20 + $0x8] sm:$0xff]
  %v265 = vld [vmem:[%s20 + $0x10] sm:$0xff]
  %v266 = vld [vmem:[%s20 + $0x18] sm:$0xff]
  %v267 = vmul.f32 %v259, %v263
  %v268 = vmul.f32 %v260, %v264
  %v269 = vmul.f32 %v261, %v265
  %v270 = vmul.f32 %v262, %v266
  %271 = vmatpush.msra.mxu0 %v87
  %272 = vmatpush.msra.mxu0 %v86
  %273 = vmatpush.msra.mxu0 %v85
  %274 = vmatpush.msra.mxu0 %v84
  %275 = vmatpush.msra.mxu0 %v83
  %276 = vmatpush.msra.mxu0 %v82
  %277 = vmatpush.msra.mxu0 %v81
  %278 = vmatpush.msra.mxu0 %v80
  %279 = vmatpush.msra.mxu0 %v79
  %280 = vmatpush.msra.mxu0 %v78
  %281 = vmatpush.msra.mxu0 %v77
  %282 = vmatpush.msra.mxu0 %v76
  %283 = vmatpush.msra.mxu0 %v75
  %284 = vmatpush.msra.mxu0 %v74
  %285 = vmatpush.msra.mxu0 %v73
  %286 = vmatpush.msra.mxu0 %v72
  %287 = vmatmul.f32.gmra.mxu0 %v267
  %v288 = vpop.f32.mrf.mxu0
  %v289 = vadd.f32 0.0, %v288
  %290 = vmatmul.f32.gmra.mxu0 %v268
  %v291 = vpop.f32.mrf.mxu0
  %v292 = vadd.f32 0.0, %v291
  %293 = vmatmul.f32.gmra.mxu0 %v269
  %v294 = vpop.f32.mrf.mxu0
  %v295 = vadd.f32 0.0, %v294
  %296 = vmatmul.f32.gmra.mxu0 %v270
  %v297 = vpop.f32.mrf.mxu0
  %v298 = vadd.f32 0.0, %v297
  %299 = vdwg.mxu0
  %v300 = vadd.f32 %v289, %v292
  %v301 = vadd.f32 %v300, %v295
  %v302 = vadd.f32 %v301, %v298
  %v303 = vrot.slane %v302, 4
  %v304 = vadd.f32 %v302, %v303
  %v305 = vrot.slane %v304, 2
  %v306 = vadd.f32 %v304, %v305
  %v307 = vrot.slane %v306, 1
  %v308 = vadd.f32 %v306, %v307
  %v309 = vmul.f32 %v308, 0.001953125
  %v310 = vsub.f32 %v267, %v309
  %v311 = vsub.f32 %v268, %v309
  %v312 = vsub.f32 %v269, %v309
  %v313 = vsub.f32 %v270, %v309
  %v314 = vmul.f32 %v310, %v310
  %v315 = vmul.f32 %v311, %v311
  %v316 = vmul.f32 %v312, %v312
  %v317 = vmul.f32 %v313, %v313
  %318 = vmatpush.msra.mxu0 %v87
  %319 = vmatpush.msra.mxu0 %v86
  %320 = vmatpush.msra.mxu0 %v85
  %321 = vmatpush.msra.mxu0 %v84
  %322 = vmatpush.msra.mxu0 %v83
  %323 = vmatpush.msra.mxu0 %v82
  %324 = vmatpush.msra.mxu0 %v81
  %325 = vmatpush.msra.mxu0 %v80
  %326 = vmatpush.msra.mxu0 %v79
  %327 = vmatpush.msra.mxu0 %v78
  %328 = vmatpush.msra.mxu0 %v77
  %329 = vmatpush.msra.mxu0 %v76
  %330 = vmatpush.msra.mxu0 %v75
  %331 = vmatpush.msra.mxu0 %v74
  %332 = vmatpush.msra.mxu0 %v73
  %333 = vmatpush.msra.mxu0 %v72
  %334 = vmatmul.f32.gmra.mxu0 %v314
  %v335 = vpop.f32.mrf.mxu0
  %v336 = vadd.f32 0.0, %v335
  %337 = vmatmul.f32.gmra.mxu0 %v315
  %v338 = vpop.f32.mrf.mxu0
  %v339 = vadd.f32 0.0, %v338
  %340 = vmatmul.f32.gmra.mxu0 %v316
  %v341 = vpop.f32.mrf.mxu0
  %v342 = vadd.f32 0.0, %v341
  %343 = vmatmul.f32.gmra.mxu0 %v317
  %v344 = vpop.f32.mrf.mxu0
  %v345 = vadd.f32 0.0, %v344
  %346 = vdwg.mxu0
  %v347 = vadd.f32 %v336, %v339
  %v348 = vadd.f32 %v347, %v342
  %v349 = vadd.f32 %v348, %v345
  %v350 = vrot.slane %v349, 4
  %v351 = vadd.f32 %v349, %v350
  %v352 = vrot.slane %v351, 2
  %v353 = vadd.f32 %v351, %v352
  %v354 = vrot.slane %v353, 1
  %v355 = vadd.f32 %v353, %v354
  %v356 = vmul.f32 %v355, 0.001953125
  %v357 = vadd.f32 %v356, 1e-05
  %v358 = vrsqrt.pop %v357
  %v359 = vmul.f32 %v358, %v357
  %v360 = vmul.f32 %v359, %v358
  %v361 = vmul.f32 0.5, %v360
  %v362 = vsub.f32 1.5, %v361
  %v363 = vmul.f32 %v358, %v362
  %vm364 = vweird.f32 %v357
  %vm365 = vweird.f32 %v358
  %vm366 = vmor %vm364, %vm365
  %v367 = vsel %vm366, %v358, %v363
  %v368 = vmul.f32 %v310, %v367
  %v369 = vmul.f32 %v311, %v367
  %v370 = vmul.f32 %v312, %v367
  %v371 = vmul.f32 %v313, %v367
  %v372 = vperm.slane %v98, 0
  %v373 = vmul.f32 %v372, %v368
  %v374 = vmul.f32 %v372, %v369
  %v375 = vmul.f32 %v372, %v370
  %v376 = vmul.f32 %v372, %v371
  %v377 = vadd.f32 %v94, %v373
  %v378 = vadd.f32 %v95, %v374
  %v379 = vadd.f32 %v96, %v375
  %v380 = vadd.f32 %v97, %v376
  %v381 = vld [vmem:[%s1 + $0x2] sm:$0x1]
  %v382 = vsel %vm101, -inf, %v102
  %v383 = vsel %vm101, -inf, %v109
  %386 = vrot.lane.b32.xlu0 %v382, 8
  %v387 = vpop.permute.xlu0 %386
  %388 = vrot.lane.b32.xlu0 %v104, 8
  %v389 = vpop.permute.xlu0 %388
  %390 = vrot.lane.b32.xlu0 %v383, 8
  %v391 = vpop.permute.xlu0 %390
  %392 = vrot.lane.b32.xlu0 %v111, 8
  %v393 = vpop.permute.xlu0 %392
  %vm398 = vcmask 64512
  %v399 = vsel %vm398, -inf, %v387
  %v400 = vsel %vm398, -inf, %v389
  %v401 = vsel %vm398, -inf, %v391
  %v402 = vsel %vm398, -inf, %v393
  %v403 = vmax.f32 %v68, %v399
  %v404 = vmax.f32 %v69, %v400
  %v405 = vmax.f32 %v70, %v401
  %v406 = vmax.f32 %v71, %v402
  %v407 = vmax.f32 %v403, %v382
  %v408 = vmax.f32 %v404, %v104
  %v409 = vmax.f32 %v405, %v383
  %v410 = vmax.f32 %v406, %v111
  %411 = vrot.lane.b32.xlu0 %v382, 120
  %v412 = vpop.permute.xlu0 %411
  %413 = vrot.lane.b32.xlu0 %v104, 120
  %v414 = vpop.permute.xlu0 %413
  %415 = vrot.lane.b32.xlu0 %v383, 120
  %v416 = vpop.permute.xlu0 %415
  %417 = vrot.lane.b32.xlu0 %v111, 120
  %v418 = vpop.permute.xlu0 %417
  %vm423 = vcmask 982016
  %v424 = vsel %vm423, %v412, -inf
  %v425 = vsel %vm423, %v414, -inf
  %v426 = vsel %vm423, %v416, -inf
  %v427 = vsel %vm423, %v418, -inf
  %v428 = vmax.f32 %v407, %v424
  %v429 = vmax.f32 %v408, %v425
  %v430 = vmax.f32 %v409, %v426
  %v431 = vmax.f32 %v410, %v427
  %432 = vrot.lane.b32.xlu0 %v68, 8
  %v433 = vpop.permute.xlu0 %432
  %434 = vrot.lane.b32.xlu0 %v69, 8
  %v435 = vpop.permute.xlu0 %434
  %436 = vrot.lane.b32.xlu0 %v70, 8
  %v437 = vpop.permute.xlu0 %436
  %438 = vrot.lane.b32.xlu0 %v71, 8
  %v439 = vpop.permute.xlu0 %438
  %v444 = vsel %vm398, -inf, %v433
  %v445 = vsel %vm398, -inf, %v435
  %v446 = vsel %vm398, -inf, %v437
  %v447 = vsel %vm398, -inf, %v439
  %v448 = vmax.f32 %v428, %v444
  %v449 = vmax.f32 %v429, %v445
  %v450 = vmax.f32 %v430, %v446
  %v451 = vmax.f32 %v431, %v447
  %452 = vrot.lane.b32.xlu0 %v68, 120
  %v453 = vpop.permute.xlu0 %452
  %454 = vrot.lane.b32.xlu0 %v69, 120
  %v455 = vpop.permute.xlu0 %454
  %456 = vrot.lane.b32.xlu0 %v70, 120
  %v457 = vpop.permute.xlu0 %456
  %458 = vrot.lane.b32.xlu0 %v71, 120
  %v459 = vpop.permute.xlu0 %458
  %v464 = vsel %vm423, %v453, -inf
  %v465 = vsel %vm423, %v455, -inf
  %v466 = vsel %vm423, %v457, -inf
  %v467 = vsel %vm423, %v459, -inf
  %v468 = vmax.f32 %v448, %v464
  %v469 = vmax.f32 %v449, %v465
  %v470 = vmax.f32 %v450, %v466
  %v471 = vmax.f32 %v451, %v467
  %v472 = vsel %vm204, %v206, -inf
  %v473 = vsel %vm204, %v211, -inf
  %476 = vrot.lane.b32.xlu0 %v207, 8
  %v477 = vpop.permute.xlu0 %476
  %478 = vrot.lane.b32.xlu0 %v472, 8
  %v479 = vpop.permute.xlu0 %478
  %480 = vrot.lane.b32.xlu0 %v212, 8
  %v481 = vpop.permute.xlu0 %480
  %482 = vrot.lane.b32.xlu0 %v473, 8
  %v483 = vpop.permute.xlu0 %482
  %v488 = vsel %vm398, -inf, %v477
  %v489 = vsel %vm398, -inf, %v479
  %v490 = vsel %vm398, -inf, %v481
  %v491 = vsel %vm398, -inf, %v483
  %v492 = vmax.f32 %v468, %v488
  %v493 = vmax.f32 %v469, %v489
  %v494 = vmax.f32 %v470, %v490
  %v495 = vmax.f32 %v471, %v491
  %v496 = vmax.f32 %v492, %v207
  %v497 = vmax.f32 %v493, %v472
  %v498 = vmax.f32 %v494, %v212
  %v499 = vmax.f32 %v495, %v473
  %500 = vrot.lane.b32.xlu0 %v207, 120
  %v501 = vpop.permute.xlu0 %500
  %502 = vrot.lane.b32.xlu0 %v472, 120
  %v503 = vpop.permute.xlu0 %502
  %504 = vrot.lane.b32.xlu0 %v212, 120
  %v505 = vpop.permute.xlu0 %504
  %506 = vrot.lane.b32.xlu0 %v473, 120
  %v507 = vpop.permute.xlu0 %506
  %v512 = vsel %vm423, %v501, -inf
  %v513 = vsel %vm423, %v503, -inf
  %v514 = vsel %vm423, %v505, -inf
  %v515 = vsel %vm423, %v507, -inf
  %v516 = vmax.f32 %v496, %v512
  %v517 = vmax.f32 %v497, %v513
  %v518 = vmax.f32 %v498, %v514
  %v519 = vmax.f32 %v499, %v515
  %520 = vmatpush.msra.mxu0 %v87
  %521 = vmatpush.msra.mxu0 %v86
  %522 = vmatpush.msra.mxu0 %v85
  %523 = vmatpush.msra.mxu0 %v84
  %524 = vmatpush.msra.mxu0 %v83
  %525 = vmatpush.msra.mxu0 %v82
  %526 = vmatpush.msra.mxu0 %v81
  %527 = vmatpush.msra.mxu0 %v80
  %528 = vmatpush.msra.mxu0 %v79
  %529 = vmatpush.msra.mxu0 %v78
  %530 = vmatpush.msra.mxu0 %v77
  %531 = vmatpush.msra.mxu0 %v76
  %532 = vmatpush.msra.mxu0 %v75
  %533 = vmatpush.msra.mxu0 %v74
  %534 = vmatpush.msra.mxu0 %v73
  %535 = vmatpush.msra.mxu0 %v72
  %536 = vmatmul.f32.gmra.mxu0 %v516
  %v537 = vpop.f32.mrf.mxu0
  %v538 = vadd.f32 0.0, %v537
  %539 = vmatmul.f32.gmra.mxu0 %v517
  %v540 = vpop.f32.mrf.mxu0
  %v541 = vadd.f32 0.0, %v540
  %542 = vmatmul.f32.gmra.mxu0 %v518
  %v543 = vpop.f32.mrf.mxu0
  %v544 = vadd.f32 0.0, %v543
  %545 = vmatmul.f32.gmra.mxu0 %v519
  %v546 = vpop.f32.mrf.mxu0
  %v547 = vadd.f32 0.0, %v546
  %548 = vdwg.mxu0
  %v549 = vadd.f32 %v538, %v541
  %v550 = vadd.f32 %v549, %v544
  %v551 = vadd.f32 %v550, %v547
  %v552 = vrot.slane %v551, 4
  %v553 = vadd.f32 %v551, %v552
  %v554 = vrot.slane %v553, 2
  %v555 = vadd.f32 %v553, %v554
  %v556 = vrot.slane %v555, 1
  %v557 = vadd.f32 %v555, %v556
  %v558 = vmul.f32 %v557, 0.001953125
  %v559 = vsub.f32 %v516, %v558
  %v560 = vsub.f32 %v517, %v558
  %v561 = vsub.f32 %v518, %v558
  %v562 = vsub.f32 %v519, %v558
  %v563 = vmul.f32 %v559, %v559
  %v564 = vmul.f32 %v560, %v560
  %v565 = vmul.f32 %v561, %v561
  %v566 = vmul.f32 %v562, %v562
  %567 = vmatpush.msra.mxu0 %v87
  %568 = vmatpush.msra.mxu0 %v86
  %569 = vmatpush.msra.mxu0 %v85
  %570 = vmatpush.msra.mxu0 %v84
  %571 = vmatpush.msra.mxu0 %v83
  %572 = vmatpush.msra.mxu0 %v82
  %573 = vmatpush.msra.mxu0 %v81
  %574 = vmatpush.msra.mxu0 %v80
  %575 = vmatpush.msra.mxu0 %v79
  %576 = vmatpush.msra.mxu0 %v78
  %577 = vmatpush.msra.mxu0 %v77
  %578 = vmatpush.msra.mxu0 %v76
  %579 = vmatpush.msra.mxu0 %v75
  %580 = vmatpush.msra.mxu0 %v74
  %581 = vmatpush.msra.mxu0 %v73
  %582 = vmatpush.msra.mxu0 %v72
  %583 = vmatmul.f32.gmra.mxu0 %v563
  %v584 = vpop.f32.mrf.mxu0
  %v585 = vadd.f32 0.0, %v584
  %586 = vmatmul.f32.gmra.mxu0 %v564
  %v587 = vpop.f32.mrf.mxu0
  %v588 = vadd.f32 0.0, %v587
  %589 = vmatmul.f32.gmra.mxu0 %v565
  %v590 = vpop.f32.mrf.mxu0
  %v591 = vadd.f32 0.0, %v590
  %592 = vmatmul.f32.gmra.mxu0 %v566
  %v593 = vpop.f32.mrf.mxu0
  %v594 = vadd.f32 0.0, %v593
  %595 = vdwg.mxu0
  %v596 = vadd.f32 %v585, %v588
  %v597 = vadd.f32 %v596, %v591
  %v598 = vadd.f32 %v597, %v594
  %v599 = vrot.slane %v598, 4
  %v600 = vadd.f32 %v598, %v599
  %v601 = vrot.slane %v600, 2
  %v602 = vadd.f32 %v600, %v601
  %v603 = vrot.slane %v602, 1
  %v604 = vadd.f32 %v602, %v603
  %v605 = vmul.f32 %v604, 0.001953125
  %v606 = vadd.f32 %v605, 1e-05
  %v607 = vrsqrt.pop %v606
  %v608 = vmul.f32 %v607, %v606
  %v609 = vmul.f32 %v608, %v607
  %v610 = vmul.f32 0.5, %v609
  %v611 = vsub.f32 1.5, %v610
  %v612 = vmul.f32 %v607, %v611
  %vm613 = vweird.f32 %v606
  %vm614 = vweird.f32 %v607
  %vm615 = vmor %vm613, %vm614
  %v616 = vsel %vm615, %v607, %v612
  %v617 = vmul.f32 %v559, %v616
  %v618 = vmul.f32 %v560, %v616
  %v619 = vmul.f32 %v561, %v616
  %v620 = vmul.f32 %v562, %v616
  %v621 = vperm.slane %v381, 0
  %v622 = vmul.f32 %v621, %v617
  %v623 = vmul.f32 %v621, %v618
  %v624 = vmul.f32 %v621, %v619
  %v625 = vmul.f32 %v621, %v620
  %v626 = vadd.f32 %v377, %v622
  %v627 = vadd.f32 %v378, %v623
  %v628 = vadd.f32 %v379, %v624
  %v629 = vadd.f32 %v380, %v625
  %v630 = vld [vmem:[%s1 + $0x4] sm:$0x1]
  %v633 = vrot.slane %v88, 7
  %v634 = vrot.slane %v89, 7
  %v635 = vsel %vm101, %v633, %v634
  %v640 = vrot.slane %v90, 7
  %v641 = vrot.slane %v91, 7
  %v642 = vsel %vm101, %v640, %v641
  %v645 = vsel %vm101, 0.0, %v633
  %v646 = vsel %vm101, 0.0, %v640
  %647 = vrot.lane.b32.xlu0 %v645, 8
  %v648 = vpop.permute.xlu0 %647
  %649 = vrot.lane.b32.xlu0 %v635, 8
  %v650 = vpop.permute.xlu0 %649
  %651 = vrot.lane.b32.xlu0 %v646, 8
  %v652 = vpop.permute.xlu0 %651
  %653 = vrot.lane.b32.xlu0 %v642, 8
  %v654 = vpop.permute.xlu0 %653
  %v655 = vld [vmem:[%s2] sm:$0x1]
  %v656 = vperm.slane %v655, 0
  %v657 = vmul.f32 %v648, %v656
  %v658 = vmul.f32 %v650, %v656
  %v659 = vmul.f32 %v652, %v656
  %v660 = vmul.f32 %v654, %v656
  %v661 = vld [vmem:[%s2 + $0x1] sm:$0x1]
  %v662 = vperm.slane %v661, 0
  %v663 = vmul.f32 %v645, %v662
  %v664 = vmul.f32 %v635, %v662
  %v665 = vmul.f32 %v646, %v662
  %v666 = vmul.f32 %v642, %v662
  %v667 = vadd.f32 %v657, %v663
  %v668 = vadd.f32 %v658, %v664
  %v669 = vadd.f32 %v659, %v665
  %v670 = vadd.f32 %v660, %v666
  %671 = vrot.lane.b32.xlu0 %v645, 120
  %v672 = vpop.permute.xlu0 %671
  %673 = vrot.lane.b32.xlu0 %v635, 120
  %v674 = vpop.permute.xlu0 %673
  %675 = vrot.lane.b32.xlu0 %v646, 120
  %v676 = vpop.permute.xlu0 %675
  %677 = vrot.lane.b32.xlu0 %v642, 120
  %v678 = vpop.permute.xlu0 %677
  %v679 = vld [vmem:[%s2 + $0x2] sm:$0x1]
  %v680 = vperm.slane %v679, 0
  %v681 = vmul.f32 %v672, %v680
  %v682 = vmul.f32 %v674, %v680
  %v683 = vmul.f32 %v676, %v680
  %v684 = vmul.f32 %v678, %v680
  %v685 = vadd.f32 %v667, %v681
  %v686 = vadd.f32 %v668, %v682
  %v687 = vadd.f32 %v669, %v683
  %v688 = vadd.f32 %v670, %v684
  %689 = vrot.lane.b32.xlu0 %v88, 8
  %v690 = vpop.permute.xlu0 %689
  %691 = vrot.lane.b32.xlu0 %v89, 8
  %v692 = vpop.permute.xlu0 %691
  %693 = vrot.lane.b32.xlu0 %v90, 8
  %v694 = vpop.permute.xlu0 %693
  %695 = vrot.lane.b32.xlu0 %v91, 8
  %v696 = vpop.permute.xlu0 %695
  %v697 = vld [vmem:[%s2 + $0x3] sm:$0x1]
  %v698 = vperm.slane %v697, 0
  %v699 = vmul.f32 %v690, %v698
  %v700 = vmul.f32 %v692, %v698
  %v701 = vmul.f32 %v694, %v698
  %v702 = vmul.f32 %v696, %v698
  %v703 = vadd.f32 %v685, %v699
  %v704 = vadd.f32 %v686, %v700
  %v705 = vadd.f32 %v687, %v701
  %v706 = vadd.f32 %v688, %v702
  %v707 = vld [vmem:[%s2 + $0x4] sm:$0x1]
  %v708 = vperm.slane %v707, 0
  %v709 = vmul.f32 %v88, %v708
  %v710 = vmul.f32 %v89, %v708
  %v711 = vmul.f32 %v90, %v708
  %v712 = vmul.f32 %v91, %v708
  %v713 = vadd.f32 %v703, %v709
  %v714 = vadd.f32 %v704, %v710
  %v715 = vadd.f32 %v705, %v711
  %v716 = vadd.f32 %v706, %v712
  %717 = vrot.lane.b32.xlu0 %v88, 120
  %v718 = vpop.permute.xlu0 %717
  %719 = vrot.lane.b32.xlu0 %v89, 120
  %v720 = vpop.permute.xlu0 %719
  %721 = vrot.lane.b32.xlu0 %v90, 120
  %v722 = vpop.permute.xlu0 %721
  %723 = vrot.lane.b32.xlu0 %v91, 120
  %v724 = vpop.permute.xlu0 %723
  %v725 = vld [vmem:[%s2 + $0x5] sm:$0x1]
  %v726 = vperm.slane %v725, 0
  %v727 = vmul.f32 %v718, %v726
  %v728 = vmul.f32 %v720, %v726
  %v729 = vmul.f32 %v722, %v726
  %v730 = vmul.f32 %v724, %v726
  %v731 = vadd.f32 %v713, %v727
  %v732 = vadd.f32 %v714, %v728
  %v733 = vadd.f32 %v715, %v729
  %v734 = vadd.f32 %v716, %v730
  %v735 = vrot.slane %v88, 1
  %v736 = vrot.slane %v89, 1
  %v737 = vsel %vm204, %v735, %v736
  %v740 = vrot.slane %v90, 1
  %v741 = vrot.slane %v91, 1
  %v742 = vsel %vm204, %v740, %v741
  %v745 = vsel %vm204, %v736, 0.0
  %v746 = vsel %vm204, %v741, 0.0
  %747 = vrot.lane.b32.xlu0 %v737, 8
  %v748 = vpop.permute.xlu0 %747
  %749 = vrot.lane.b32.xlu0 %v745, 8
  %v750 = vpop.permute.xlu0 %749
  %751 = vrot.lane.b32.xlu0 %v742, 8
  %v752 = vpop.permute.xlu0 %751
  %753 = vrot.lane.b32.xlu0 %v746, 8
  %v754 = vpop.permute.xlu0 %753
  %v755 = vld [vmem:[%s2 + $0x6] sm:$0x1]
  %v756 = vperm.slane %v755, 0
  %v757 = vmul.f32 %v748, %v756
  %v758 = vmul.f32 %v750, %v756
  %v759 = vmul.f32 %v752, %v756
  %v760 = vmul.f32 %v754, %v756
  %v761 = vadd.f32 %v731, %v757
  %v762 = vadd.f32 %v732, %v758
  %v763 = vadd.f32 %v733, %v759
  %v764 = vadd.f32 %v734, %v760
  %v765 = vld [vmem:[%s2 + $0x7] sm:$0x1]
  %v766 = vperm.slane %v765, 0
  %v767 = vmul.f32 %v737, %v766
  %v768 = vmul.f32 %v745, %v766
  %v769 = vmul.f32 %v742, %v766
  %v770 = vmul.f32 %v746, %v766
  %v771 = vadd.f32 %v761, %v767
  %v772 = vadd.f32 %v762, %v768
  %v773 = vadd.f32 %v763, %v769
  %v774 = vadd.f32 %v764, %v770
  %775 = vrot.lane.b32.xlu0 %v737, 120
  %v776 = vpop.permute.xlu0 %775
  %777 = vrot.lane.b32.xlu0 %v745, 120
  %v778 = vpop.permute.xlu0 %777
  %779 = vrot.lane.b32.xlu0 %v742, 120
  %v780 = vpop.permute.xlu0 %779
  %781 = vrot.lane.b32.xlu0 %v746, 120
  %v782 = vpop.permute.xlu0 %781
  %v783 = vld [vmem:[%s2 + $0x8] sm:$0x1]
  %v784 = vperm.slane %v783, 0
  %v785 = vmul.f32 %v776, %v784
  %v786 = vmul.f32 %v778, %v784
  %v787 = vmul.f32 %v780, %v784
  %v788 = vmul.f32 %v782, %v784
  %v789 = vadd.f32 %v771, %v785
  %v790 = vadd.f32 %v772, %v786
  %v791 = vadd.f32 %v773, %v787
  %v792 = vadd.f32 %v774, %v788
  %v793 = vld [vmem:[%s10] sm:$0xff]
  %v794 = vld [vmem:[%s10 + $0x8] sm:$0xff]
  %v795 = vld [vmem:[%s10 + $0x10] sm:$0xff]
  %v796 = vld [vmem:[%s10 + $0x18] sm:$0xff]
  %v797 = vld [vmem:[%s10 + $0x20] sm:$0xff]
  %v798 = vld [vmem:[%s10 + $0x28] sm:$0xff]
  %v799 = vld [vmem:[%s10 + $0x30] sm:$0xff]
  %v800 = vld [vmem:[%s10 + $0x38] sm:$0xff]
  %v801 = vld [vmem:[%s10 + $0x40] sm:$0xff]
  %v802 = vld [vmem:[%s10 + $0x48] sm:$0xff]
  %v803 = vld [vmem:[%s10 + $0x50] sm:$0xff]
  %v804 = vld [vmem:[%s10 + $0x58] sm:$0xff]
  %v805 = vld [vmem:[%s10 + $0x60] sm:$0xff]
  %v806 = vld [vmem:[%s10 + $0x68] sm:$0xff]
  %v807 = vld [vmem:[%s10 + $0x70] sm:$0xff]
  %v808 = vld [vmem:[%s10 + $0x78] sm:$0xff]
  %809 = vmatpush.msra.mxu0 %v808
  %810 = vmatpush.msra.mxu0 %v807
  %811 = vmatpush.msra.mxu0 %v806
  %812 = vmatpush.msra.mxu0 %v805
  %813 = vmatpush.msra.mxu0 %v804
  %814 = vmatpush.msra.mxu0 %v803
  %815 = vmatpush.msra.mxu0 %v802
  %816 = vmatpush.msra.mxu0 %v801
  %817 = vmatpush.msra.mxu0 %v800
  %818 = vmatpush.msra.mxu0 %v799
  %819 = vmatpush.msra.mxu0 %v798
  %820 = vmatpush.msra.mxu0 %v797
  %821 = vmatpush.msra.mxu0 %v796
  %822 = vmatpush.msra.mxu0 %v795
  %823 = vmatpush.msra.mxu0 %v794
  %824 = vmatpush.msra.mxu0 %v793
  %825 = vmatmul.f32.gmra.mxu0 %v789
  %v826 = vpop.f32.mrf.mxu0
  %v827 = vadd.f32 0.0, %v826
  %828 = vmatmul.f32.gmra.mxu0 %v790
  %v829 = vpop.f32.mrf.mxu0
  %v830 = vadd.f32 0.0, %v829
  %831 = vmatmul.f32.gmra.mxu0 %v791
  %v832 = vpop.f32.mrf.mxu0
  %v833 = vadd.f32 0.0, %v832
  %834 = vmatmul.f32.gmra.mxu0 %v792
  %v835 = vpop.f32.mrf.mxu0
  %v836 = vadd.f32 0.0, %v835
  %837 = vdwg.mxu0
  %838 = vmatpush.msra.mxu0 %v87
  %839 = vmatpush.msra.mxu0 %v86
  %840 = vmatpush.msra.mxu0 %v85
  %841 = vmatpush.msra.mxu0 %v84
  %842 = vmatpush.msra.mxu0 %v83
  %843 = vmatpush.msra.mxu0 %v82
  %844 = vmatpush.msra.mxu0 %v81
  %845 = vmatpush.msra.mxu0 %v80
  %846 = vmatpush.msra.mxu0 %v79
  %847 = vmatpush.msra.mxu0 %v78
  %848 = vmatpush.msra.mxu0 %v77
  %849 = vmatpush.msra.mxu0 %v76
  %850 = vmatpush.msra.mxu0 %v75
  %851 = vmatpush.msra.mxu0 %v74
  %852 = vmatpush.msra.mxu0 %v73
  %853 = vmatpush.msra.mxu0 %v72
  %854 = vmatmul.f32.gmra.mxu0 %v827
  %v855 = vpop.f32.mrf.mxu0
  %v856 = vadd.f32 0.0, %v855
  %857 = vmatmul.f32.gmra.mxu0 %v830
  %v858 = vpop.f32.mrf.mxu0
  %v859 = vadd.f32 0.0, %v858
  %860 = vmatmul.f32.gmra.mxu0 %v833
  %v861 = vpop.f32.mrf.mxu0
  %v862 = vadd.f32 0.0, %v861
  %863 = vmatmul.f32.gmra.mxu0 %v836
  %v864 = vpop.f32.mrf.mxu0
  %v865 = vadd.f32 0.0, %v864
  %866 = vdwg.mxu0
  %v867 = vadd.f32 %v856, %v859
  %v868 = vadd.f32 %v867, %v862
  %v869 = vadd.f32 %v868, %v865
  %v870 = vrot.slane %v869, 4
  %v871 = vadd.f32 %v869, %v870
  %v872 = vrot.slane %v871, 2
  %v873 = vadd.f32 %v871, %v872
  %v874 = vrot.slane %v873, 1
  %v875 = vadd.f32 %v873, %v874
  %v876 = vmul.f32 %v875, 0.001953125
  %v877 = vsub.f32 %v827, %v876
  %v878 = vsub.f32 %v830, %v876
  %v879 = vsub.f32 %v833, %v876
  %v880 = vsub.f32 %v836, %v876
  %v881 = vmul.f32 %v877, %v877
  %v882 = vmul.f32 %v878, %v878
  %v883 = vmul.f32 %v879, %v879
  %v884 = vmul.f32 %v880, %v880
  %885 = vmatpush.msra.mxu0 %v87
  %886 = vmatpush.msra.mxu0 %v86
  %887 = vmatpush.msra.mxu0 %v85
  %888 = vmatpush.msra.mxu0 %v84
  %889 = vmatpush.msra.mxu0 %v83
  %890 = vmatpush.msra.mxu0 %v82
  %891 = vmatpush.msra.mxu0 %v81
  %892 = vmatpush.msra.mxu0 %v80
  %893 = vmatpush.msra.mxu0 %v79
  %894 = vmatpush.msra.mxu0 %v78
  %895 = vmatpush.msra.mxu0 %v77
  %896 = vmatpush.msra.mxu0 %v76
  %897 = vmatpush.msra.mxu0 %v75
  %898 = vmatpush.msra.mxu0 %v74
  %899 = vmatpush.msra.mxu0 %v73
  %900 = vmatpush.msra.mxu0 %v72
  %901 = vmatmul.f32.gmra.mxu0 %v881
  %v902 = vpop.f32.mrf.mxu0
  %v903 = vadd.f32 0.0, %v902
  %904 = vmatmul.f32.gmra.mxu0 %v882
  %v905 = vpop.f32.mrf.mxu0
  %v906 = vadd.f32 0.0, %v905
  %907 = vmatmul.f32.gmra.mxu0 %v883
  %v908 = vpop.f32.mrf.mxu0
  %v909 = vadd.f32 0.0, %v908
  %910 = vmatmul.f32.gmra.mxu0 %v884
  %v911 = vpop.f32.mrf.mxu0
  %v912 = vadd.f32 0.0, %v911
  %913 = vdwg.mxu0
  %v914 = vadd.f32 %v903, %v906
  %v915 = vadd.f32 %v914, %v909
  %v916 = vadd.f32 %v915, %v912
  %v917 = vrot.slane %v916, 4
  %v918 = vadd.f32 %v916, %v917
  %v919 = vrot.slane %v918, 2
  %v920 = vadd.f32 %v918, %v919
  %v921 = vrot.slane %v920, 1
  %v922 = vadd.f32 %v920, %v921
  %v923 = vmul.f32 %v922, 0.001953125
  %v924 = vadd.f32 %v923, 1e-05
  %v925 = vrsqrt.pop %v924
  %v926 = vmul.f32 %v925, %v924
  %v927 = vmul.f32 %v926, %v925
  %v928 = vmul.f32 0.5, %v927
  %v929 = vsub.f32 1.5, %v928
  %v930 = vmul.f32 %v925, %v929
  %vm931 = vweird.f32 %v924
  %vm932 = vweird.f32 %v925
  %vm933 = vmor %vm931, %vm932
  %v934 = vsel %vm933, %v925, %v930
  %v935 = vmul.f32 %v877, %v934
  %v936 = vmul.f32 %v878, %v934
  %v937 = vmul.f32 %v879, %v934
  %v938 = vmul.f32 %v880, %v934
  %v939 = vmax.f32 %v935, 0.0
  %v940 = vmax.f32 %v936, 0.0
  %v941 = vmax.f32 %v937, 0.0
  %v942 = vmax.f32 %v938, 0.0
  %v945 = vrot.slane %v939, 7
  %v946 = vrot.slane %v940, 7
  %v947 = vsel %vm101, %v945, %v946
  %v952 = vrot.slane %v941, 7
  %v953 = vrot.slane %v942, 7
  %v954 = vsel %vm101, %v952, %v953
  %v957 = vsel %vm101, 0.0, %v945
  %v958 = vsel %vm101, 0.0, %v952
  %959 = vrot.lane.b32.xlu0 %v957, 8
  %v960 = vpop.permute.xlu0 %959
  %961 = vrot.lane.b32.xlu0 %v947, 8
  %v962 = vpop.permute.xlu0 %961
  %963 = vrot.lane.b32.xlu0 %v958, 8
  %v964 = vpop.permute.xlu0 %963
  %965 = vrot.lane.b32.xlu0 %v954, 8
  %v966 = vpop.permute.xlu0 %965
  %v967 = vld [vmem:[%s3] sm:$0x1]
  %v968 = vperm.slane %v967, 0
  %v969 = vmul.f32 %v960, %v968
  %v970 = vmul.f32 %v962, %v968
  %v971 = vmul.f32 %v964, %v968
  %v972 = vmul.f32 %v966, %v968
  %v973 = vld [vmem:[%s3 + $0x1] sm:$0x1]
  %v974 = vperm.slane %v973, 0
  %v975 = vmul.f32 %v957, %v974
  %v976 = vmul.f32 %v947, %v974
  %v977 = vmul.f32 %v958, %v974
  %v978 = vmul.f32 %v954, %v974
  %v979 = vadd.f32 %v969, %v975
  %v980 = vadd.f32 %v970, %v976
  %v981 = vadd.f32 %v971, %v977
  %v982 = vadd.f32 %v972, %v978
  %983 = vrot.lane.b32.xlu0 %v957, 120
  %v984 = vpop.permute.xlu0 %983
  %985 = vrot.lane.b32.xlu0 %v947, 120
  %v986 = vpop.permute.xlu0 %985
  %987 = vrot.lane.b32.xlu0 %v958, 120
  %v988 = vpop.permute.xlu0 %987
  %989 = vrot.lane.b32.xlu0 %v954, 120
  %v990 = vpop.permute.xlu0 %989
  %v991 = vld [vmem:[%s3 + $0x2] sm:$0x1]
  %v992 = vperm.slane %v991, 0
  %v993 = vmul.f32 %v984, %v992
  %v994 = vmul.f32 %v986, %v992
  %v995 = vmul.f32 %v988, %v992
  %v996 = vmul.f32 %v990, %v992
  %v997 = vadd.f32 %v979, %v993
  %v998 = vadd.f32 %v980, %v994
  %v999 = vadd.f32 %v981, %v995
  %v1000 = vadd.f32 %v982, %v996
  %1001 = vrot.lane.b32.xlu0 %v939, 8
  %v1002 = vpop.permute.xlu0 %1001
  %1003 = vrot.lane.b32.xlu0 %v940, 8
  %v1004 = vpop.permute.xlu0 %1003
  %1005 = vrot.lane.b32.xlu0 %v941, 8
  %v1006 = vpop.permute.xlu0 %1005
  %1007 = vrot.lane.b32.xlu0 %v942, 8
  %v1008 = vpop.permute.xlu0 %1007
  %v1009 = vld [vmem:[%s3 + $0x3] sm:$0x1]
  %v1010 = vperm.slane %v1009, 0
  %v1011 = vmul.f32 %v1002, %v1010
  %v1012 = vmul.f32 %v1004, %v1010
  %v1013 = vmul.f32 %v1006, %v1010
  %v1014 = vmul.f32 %v1008, %v1010
  %v1015 = vadd.f32 %v997, %v1011
  %v1016 = vadd.f32 %v998, %v1012
  %v1017 = vadd.f32 %v999, %v1013
  %v1018 = vadd.f32 %v1000, %v1014
  %v1019 = vld [vmem:[%s3 + $0x4] sm:$0x1]
  %v1020 = vperm.slane %v1019, 0
  %v1021 = vmul.f32 %v939, %v1020
  %v1022 = vmul.f32 %v940, %v1020
  %v1023 = vmul.f32 %v941, %v1020
  %v1024 = vmul.f32 %v942, %v1020
  %v1025 = vadd.f32 %v1015, %v1021
  %v1026 = vadd.f32 %v1016, %v1022
  %v1027 = vadd.f32 %v1017, %v1023
  %v1028 = vadd.f32 %v1018, %v1024
  %1029 = vrot.lane.b32.xlu0 %v939, 120
  %v1030 = vpop.permute.xlu0 %1029
  %1031 = vrot.lane.b32.xlu0 %v940, 120
  %v1032 = vpop.permute.xlu0 %1031
  %1033 = vrot.lane.b32.xlu0 %v941, 120
  %v1034 = vpop.permute.xlu0 %1033
  %1035 = vrot.lane.b32.xlu0 %v942, 120
  %v1036 = vpop.permute.xlu0 %1035
  %v1037 = vld [vmem:[%s3 + $0x5] sm:$0x1]
  %v1038 = vperm.slane %v1037, 0
  %v1039 = vmul.f32 %v1030, %v1038
  %v1040 = vmul.f32 %v1032, %v1038
  %v1041 = vmul.f32 %v1034, %v1038
  %v1042 = vmul.f32 %v1036, %v1038
  %v1043 = vadd.f32 %v1025, %v1039
  %v1044 = vadd.f32 %v1026, %v1040
  %v1045 = vadd.f32 %v1027, %v1041
  %v1046 = vadd.f32 %v1028, %v1042
  %v1047 = vrot.slane %v939, 1
  %v1048 = vrot.slane %v940, 1
  %v1049 = vsel %vm204, %v1047, %v1048
  %v1052 = vrot.slane %v941, 1
  %v1053 = vrot.slane %v942, 1
  %v1054 = vsel %vm204, %v1052, %v1053
  %v1057 = vsel %vm204, %v1048, 0.0
  %v1058 = vsel %vm204, %v1053, 0.0
  %1059 = vrot.lane.b32.xlu0 %v1049, 8
  %v1060 = vpop.permute.xlu0 %1059
  %1061 = vrot.lane.b32.xlu0 %v1057, 8
  %v1062 = vpop.permute.xlu0 %1061
  %1063 = vrot.lane.b32.xlu0 %v1054, 8
  %v1064 = vpop.permute.xlu0 %1063
  %1065 = vrot.lane.b32.xlu0 %v1058, 8
  %v1066 = vpop.permute.xlu0 %1065
  %v1067 = vld [vmem:[%s3 + $0x6] sm:$0x1]
  %v1068 = vperm.slane %v1067, 0
  %v1069 = vmul.f32 %v1060, %v1068
  %v1070 = vmul.f32 %v1062, %v1068
  %v1071 = vmul.f32 %v1064, %v1068
  %v1072 = vmul.f32 %v1066, %v1068
  %v1073 = vadd.f32 %v1043, %v1069
  %v1074 = vadd.f32 %v1044, %v1070
  %v1075 = vadd.f32 %v1045, %v1071
  %v1076 = vadd.f32 %v1046, %v1072
  %v1077 = vld [vmem:[%s3 + $0x7] sm:$0x1]
  %v1078 = vperm.slane %v1077, 0
  %v1079 = vmul.f32 %v1049, %v1078
  %v1080 = vmul.f32 %v1057, %v1078
  %v1081 = vmul.f32 %v1054, %v1078
  %v1082 = vmul.f32 %v1058, %v1078
  %v1083 = vadd.f32 %v1073, %v1079
  %v1084 = vadd.f32 %v1074, %v1080
  %v1085 = vadd.f32 %v1075, %v1081
  %v1086 = vadd.f32 %v1076, %v1082
  %1087 = vrot.lane.b32.xlu0 %v1049, 120
  %v1088 = vpop.permute.xlu0 %1087
  %1089 = vrot.lane.b32.xlu0 %v1057, 120
  %v1090 = vpop.permute.xlu0 %1089
  %1091 = vrot.lane.b32.xlu0 %v1054, 120
  %v1092 = vpop.permute.xlu0 %1091
  %1093 = vrot.lane.b32.xlu0 %v1058, 120
  %v1094 = vpop.permute.xlu0 %1093
  %v1095 = vld [vmem:[%s3 + $0x8] sm:$0x1]
  %v1096 = vperm.slane %v1095, 0
  %v1097 = vmul.f32 %v1088, %v1096
  %v1098 = vmul.f32 %v1090, %v1096
  %v1099 = vmul.f32 %v1092, %v1096
  %v1100 = vmul.f32 %v1094, %v1096
  %v1101 = vadd.f32 %v1083, %v1097
  %v1102 = vadd.f32 %v1084, %v1098
  %v1103 = vadd.f32 %v1085, %v1099
  %v1104 = vadd.f32 %v1086, %v1100
  %v1105 = vld [vmem:[%s11] sm:$0xff]
  %v1106 = vld [vmem:[%s11 + $0x8] sm:$0xff]
  %v1107 = vld [vmem:[%s11 + $0x10] sm:$0xff]
  %v1108 = vld [vmem:[%s11 + $0x18] sm:$0xff]
  %v1109 = vld [vmem:[%s11 + $0x20] sm:$0xff]
  %v1110 = vld [vmem:[%s11 + $0x28] sm:$0xff]
  %v1111 = vld [vmem:[%s11 + $0x30] sm:$0xff]
  %v1112 = vld [vmem:[%s11 + $0x38] sm:$0xff]
  %v1113 = vld [vmem:[%s11 + $0x40] sm:$0xff]
  %v1114 = vld [vmem:[%s11 + $0x48] sm:$0xff]
  %v1115 = vld [vmem:[%s11 + $0x50] sm:$0xff]
  %v1116 = vld [vmem:[%s11 + $0x58] sm:$0xff]
  %v1117 = vld [vmem:[%s11 + $0x60] sm:$0xff]
  %v1118 = vld [vmem:[%s11 + $0x68] sm:$0xff]
  %v1119 = vld [vmem:[%s11 + $0x70] sm:$0xff]
  %v1120 = vld [vmem:[%s11 + $0x78] sm:$0xff]
  %1121 = vmatpush.msra.mxu0 %v1120
  %1122 = vmatpush.msra.mxu0 %v1119
  %1123 = vmatpush.msra.mxu0 %v1118
  %1124 = vmatpush.msra.mxu0 %v1117
  %1125 = vmatpush.msra.mxu0 %v1116
  %1126 = vmatpush.msra.mxu0 %v1115
  %1127 = vmatpush.msra.mxu0 %v1114
  %1128 = vmatpush.msra.mxu0 %v1113
  %1129 = vmatpush.msra.mxu0 %v1112
  %1130 = vmatpush.msra.mxu0 %v1111
  %1131 = vmatpush.msra.mxu0 %v1110
  %1132 = vmatpush.msra.mxu0 %v1109
  %1133 = vmatpush.msra.mxu0 %v1108
  %1134 = vmatpush.msra.mxu0 %v1107
  %1135 = vmatpush.msra.mxu0 %v1106
  %1136 = vmatpush.msra.mxu0 %v1105
  %1137 = vmatmul.f32.gmra.mxu0 %v1101
  %v1138 = vpop.f32.mrf.mxu0
  %v1139 = vadd.f32 0.0, %v1138
  %1140 = vmatmul.f32.gmra.mxu0 %v1102
  %v1141 = vpop.f32.mrf.mxu0
  %v1142 = vadd.f32 0.0, %v1141
  %1143 = vmatmul.f32.gmra.mxu0 %v1103
  %v1144 = vpop.f32.mrf.mxu0
  %v1145 = vadd.f32 0.0, %v1144
  %1146 = vmatmul.f32.gmra.mxu0 %v1104
  %v1147 = vpop.f32.mrf.mxu0
  %v1148 = vadd.f32 0.0, %v1147
  %1149 = vdwg.mxu0
  %1150 = vmatpush.msra.mxu0 %v87
  %1151 = vmatpush.msra.mxu0 %v86
  %1152 = vmatpush.msra.mxu0 %v85
  %1153 = vmatpush.msra.mxu0 %v84
  %1154 = vmatpush.msra.mxu0 %v83
  %1155 = vmatpush.msra.mxu0 %v82
  %1156 = vmatpush.msra.mxu0 %v81
  %1157 = vmatpush.msra.mxu0 %v80
  %1158 = vmatpush.msra.mxu0 %v79
  %1159 = vmatpush.msra.mxu0 %v78
  %1160 = vmatpush.msra.mxu0 %v77
  %1161 = vmatpush.msra.mxu0 %v76
  %1162 = vmatpush.msra.mxu0 %v75
  %1163 = vmatpush.msra.mxu0 %v74
  %1164 = vmatpush.msra.mxu0 %v73
  %1165 = vmatpush.msra.mxu0 %v72
  %1166 = vmatmul.f32.gmra.mxu0 %v1139
  %v1167 = vpop.f32.mrf.mxu0
  %v1168 = vadd.f32 0.0, %v1167
  %1169 = vmatmul.f32.gmra.mxu0 %v1142
  %v1170 = vpop.f32.mrf.mxu0
  %v1171 = vadd.f32 0.0, %v1170
  %1172 = vmatmul.f32.gmra.mxu0 %v1145
  %v1173 = vpop.f32.mrf.mxu0
  %v1174 = vadd.f32 0.0, %v1173
  %1175 = vmatmul.f32.gmra.mxu0 %v1148
  %v1176 = vpop.f32.mrf.mxu0
  %v1177 = vadd.f32 0.0, %v1176
  %1178 = vdwg.mxu0
  %v1179 = vadd.f32 %v1168, %v1171
  %v1180 = vadd.f32 %v1179, %v1174
  %v1181 = vadd.f32 %v1180, %v1177
  %v1182 = vrot.slane %v1181, 4
  %v1183 = vadd.f32 %v1181, %v1182
  %v1184 = vrot.slane %v1183, 2
  %v1185 = vadd.f32 %v1183, %v1184
  %v1186 = vrot.slane %v1185, 1
  %v1187 = vadd.f32 %v1185, %v1186
  %v1188 = vmul.f32 %v1187, 0.001953125
  %v1189 = vsub.f32 %v1139, %v1188
  %v1190 = vsub.f32 %v1142, %v1188
  %v1191 = vsub.f32 %v1145, %v1188
  %v1192 = vsub.f32 %v1148, %v1188
  %v1193 = vmul.f32 %v1189, %v1189
  %v1194 = vmul.f32 %v1190, %v1190
  %v1195 = vmul.f32 %v1191, %v1191
  %v1196 = vmul.f32 %v1192, %v1192
  %1197 = vmatpush.msra.mxu0 %v87
  %1198 = vmatpush.msra.mxu0 %v86
  %1199 = vmatpush.msra.mxu0 %v85
  %1200 = vmatpush.msra.mxu0 %v84
  %1201 = vmatpush.msra.mxu0 %v83
  %1202 = vmatpush.msra.mxu0 %v82
  %1203 = vmatpush.msra.mxu0 %v81
  %1204 = vmatpush.msra.mxu0 %v80
  %1205 = vmatpush.msra.mxu0 %v79
  %1206 = vmatpush.msra.mxu0 %v78
  %1207 = vmatpush.msra.mxu0 %v77
  %1208 = vmatpush.msra.mxu0 %v76
  %1209 = vmatpush.msra.mxu0 %v75
  %1210 = vmatpush.msra.mxu0 %v74
  %1211 = vmatpush.msra.mxu0 %v73
  %1212 = vmatpush.msra.mxu0 %v72
  %1213 = vmatmul.f32.gmra.mxu0 %v1193
  %v1214 = vpop.f32.mrf.mxu0
  %v1215 = vadd.f32 0.0, %v1214
  %1216 = vmatmul.f32.gmra.mxu0 %v1194
  %v1217 = vpop.f32.mrf.mxu0
  %v1218 = vadd.f32 0.0, %v1217
  %1219 = vmatmul.f32.gmra.mxu0 %v1195
  %v1220 = vpop.f32.mrf.mxu0
  %v1221 = vadd.f32 0.0, %v1220
  %1222 = vmatmul.f32.gmra.mxu0 %v1196
  %v1223 = vpop.f32.mrf.mxu0
  %v1224 = vadd.f32 0.0, %v1223
  %1225 = vdwg.mxu0
  %v1226 = vadd.f32 %v1215, %v1218
  %v1227 = vadd.f32 %v1226, %v1221
  %v1228 = vadd.f32 %v1227, %v1224
  %v1229 = vrot.slane %v1228, 4
  %v1230 = vadd.f32 %v1228, %v1229
  %v1231 = vrot.slane %v1230, 2
  %v1232 = vadd.f32 %v1230, %v1231
  %v1233 = vrot.slane %v1232, 1
  %v1234 = vadd.f32 %v1232, %v1233
  %v1235 = vmul.f32 %v1234, 0.001953125
  %v1236 = vadd.f32 %v1235, 1e-05
  %v1237 = vrsqrt.pop %v1236
  %v1238 = vmul.f32 %v1237, %v1236
  %v1239 = vmul.f32 %v1238, %v1237
  %v1240 = vmul.f32 0.5, %v1239
  %v1241 = vsub.f32 1.5, %v1240
  %v1242 = vmul.f32 %v1237, %v1241
  %vm1243 = vweird.f32 %v1236
  %vm1244 = vweird.f32 %v1237
  %vm1245 = vmor %vm1243, %vm1244
  %v1246 = vsel %vm1245, %v1237, %v1242
  %v1247 = vmul.f32 %v1189, %v1246
  %v1248 = vmul.f32 %v1190, %v1246
  %v1249 = vmul.f32 %v1191, %v1246
  %v1250 = vmul.f32 %v1192, %v1246
  %v1251 = vperm.slane %v630, 0
  %v1252 = vmul.f32 %v1251, %v1247
  %v1253 = vmul.f32 %v1251, %v1248
  %v1254 = vmul.f32 %v1251, %v1249
  %v1255 = vmul.f32 %v1251, %v1250
  %v1256 = vadd.f32 %v626, %v1252
  %v1257 = vadd.f32 %v627, %v1253
  %v1258 = vadd.f32 %v628, %v1254
  %v1259 = vadd.f32 %v629, %v1255
  %v1260 = vld [vmem:[%s1 + $0x5] sm:$0x1]
  %vm1261 = vcmask 1041408
  %v1262 = vrot.slane %v88, 6
  %v1263 = vrot.slane %v89, 6
  %v1264 = vsel %vm1261, %v1262, %v1263
  %v1267 = vrot.slane %v90, 6
  %v1268 = vrot.slane %v91, 6
  %v1269 = vsel %vm1261, %v1267, %v1268
  %v1272 = vsel %vm1261, 0.0, %v1262
  %v1273 = vsel %vm1261, 0.0, %v1267
  %1274 = vrot.lane.b32.xlu0 %v1272, 16
  %v1275 = vpop.permute.xlu0 %1274
  %1276 = vrot.lane.b32.xlu0 %v1264, 16
  %v1277 = vpop.permute.xlu0 %1276
  %1278 = vrot.lane.b32.xlu0 %v1273, 16
  %v1279 = vpop.permute.xlu0 %1278
  %1280 = vrot.lane.b32.xlu0 %v1269, 16
  %v1281 = vpop.permute.xlu0 %1280
  %v1282 = vld [vmem:[%s4] sm:$0x1]
  %v1283 = vperm.slane %v1282, 0
  %v1284 = vmul.f32 %v1275, %v1283
  %v1285 = vmul.f32 %v1277, %v1283
  %v1286 = vmul.f32 %v1279, %v1283
  %v1287 = vmul.f32 %v1281, %v1283
  %1288 = vrot.lane.b32.xlu0 %v1272, 8
  %v1289 = vpop.permute.xlu0 %1288
  %1290 = vrot.lane.b32.xlu0 %v1264, 8
  %v1291 = vpop.permute.xlu0 %1290
  %1292 = vrot.lane.b32.xlu0 %v1273, 8
  %v1293 = vpop.permute.xlu0 %1292
  %1294 = vrot.lane.b32.xlu0 %v1269, 8
  %v1295 = vpop.permute.xlu0 %1294
  %v1296 = vld [vmem:[%s4 + $0x1] sm:$0x1]
  %v1297 = vperm.slane %v1296, 0
  %v1298 = vmul.f32 %v1289, %v1297
  %v1299 = vmul.f32 %v1291, %v1297
  %v1300 = vmul.f32 %v1293, %v1297
  %v1301 = vmul.f32 %v1295, %v1297
  %v1302 = vadd.f32 %v1284, %v1298
  %v1303 = vadd.f32 %v1285, %v1299
  %v1304 = vadd.f32 %v1286, %v1300
  %v1305 = vadd.f32 %v1287, %v1301
  %v1306 = vld [vmem:[%s4 + $0x2] sm:$0x1]
  %v1307 = vperm.slane %v1306, 0
  %v1308 = vmul.f32 %v1272, %v1307
  %v1309 = vmul.f32 %v1264, %v1307
  %v1310 = vmul.f32 %v1273, %v1307
  %v1311 = vmul.f32 %v1269, %v1307
  %v1312 = vadd.f32 %v1302, %v1308
  %v1313 = vadd.f32 %v1303, %v1309
  %v1314 = vadd.f32 %v1304, %v1310
  %v1315 = vadd.f32 %v1305, %v1311
  %1316 = vrot.lane.b32.xlu0 %v1272, 120
  %v1317 = vpop.permute.xlu0 %1316
  %1318 = vrot.lane.b32.xlu0 %v1264, 120
  %v1319 = vpop.permute.xlu0 %1318
  %1320 = vrot.lane.b32.xlu0 %v1273, 120
  %v1321 = vpop.permute.xlu0 %1320
  %1322 = vrot.lane.b32.xlu0 %v1269, 120
  %v1323 = vpop.permute.xlu0 %1322
  %v1324 = vld [vmem:[%s4 + $0x3] sm:$0x1]
  %v1325 = vperm.slane %v1324, 0
  %v1326 = vmul.f32 %v1317, %v1325
  %v1327 = vmul.f32 %v1319, %v1325
  %v1328 = vmul.f32 %v1321, %v1325
  %v1329 = vmul.f32 %v1323, %v1325
  %v1330 = vadd.f32 %v1312, %v1326
  %v1331 = vadd.f32 %v1313, %v1327
  %v1332 = vadd.f32 %v1314, %v1328
  %v1333 = vadd.f32 %v1315, %v1329
  %1334 = vrot.lane.b32.xlu0 %v1272, 112
  %v1335 = vpop.permute.xlu0 %1334
  %1336 = vrot.lane.b32.xlu0 %v1264, 112
  %v1337 = vpop.permute.xlu0 %1336
  %1338 = vrot.lane.b32.xlu0 %v1273, 112
  %v1339 = vpop.permute.xlu0 %1338
  %1340 = vrot.lane.b32.xlu0 %v1269, 112
  %v1341 = vpop.permute.xlu0 %1340
  %v1342 = vld [vmem:[%s4 + $0x4] sm:$0x1]
  %v1343 = vperm.slane %v1342, 0
  %v1344 = vmul.f32 %v1335, %v1343
  %v1345 = vmul.f32 %v1337, %v1343
  %v1346 = vmul.f32 %v1339, %v1343
  %v1347 = vmul.f32 %v1341, %v1343
  %v1348 = vadd.f32 %v1330, %v1344
  %v1349 = vadd.f32 %v1331, %v1345
  %v1350 = vadd.f32 %v1332, %v1346
  %v1351 = vadd.f32 %v1333, %v1347
  %1352 = vrot.lane.b32.xlu0 %v645, 16
  %v1353 = vpop.permute.xlu0 %1352
  %1354 = vrot.lane.b32.xlu0 %v635, 16
  %v1355 = vpop.permute.xlu0 %1354
  %1356 = vrot.lane.b32.xlu0 %v646, 16
  %v1357 = vpop.permute.xlu0 %1356
  %1358 = vrot.lane.b32.xlu0 %v642, 16
  %v1359 = vpop.permute.xlu0 %1358
  %v1360 = vld [vmem:[%s4 + $0x5] sm:$0x1]
  %v1361 = vperm.slane %v1360, 0
  %v1362 = vmul.f32 %v1353, %v1361
  %v1363 = vmul.f32 %v1355, %v1361
  %v1364 = vmul.f32 %v1357, %v1361
  %v1365 = vmul.f32 %v1359, %v1361
  %v1366 = vadd.f32 %v1348, %v1362
  %v1367 = vadd.f32 %v1349, %v1363
  %v1368 = vadd.f32 %v1350, %v1364
  %v1369 = vadd.f32 %v1351, %v1365
  %v1370 = vld [vmem:[%s4 + $0x6] sm:$0x1]
  %v1371 = vperm.slane %v1370, 0
  %v1372 = vmul.f32 %v648, %v1371
  %v1373 = vmul.f32 %v650, %v1371
  %v1374 = vmul.f32 %v652, %v1371
  %v1375 = vmul.f32 %v654, %v1371
  %v1376 = vadd.f32 %v1366, %v1372
  %v1377 = vadd.f32 %v1367, %v1373
  %v1378 = vadd.f32 %v1368, %v1374
  %v1379 = vadd.f32 %v1369, %v1375
  %v1380 = vld [vmem:[%s4 + $0x7] sm:$0x1]
  %v1381 = vperm.slane %v1380, 0
  %v1382 = vmul.f32 %v645, %v1381
  %v1383 = vmul.f32 %v635, %v1381
  %v1384 = vmul.f32 %v646, %v1381
  %v1385 = vmul.f32 %v642, %v1381
  %v1386 = vadd.f32 %v1376, %v1382
  %v1387 = vadd.f32 %v1377, %v1383
  %v1388 = vadd.f32 %v1378, %v1384
  %v1389 = vadd.f32 %v1379, %v1385
  %v1390 = vld [vmem:[%s4 + $0x8] sm:$0x1]
  %v1391 = vperm.slane %v1390, 0
  %v1392 = vmul.f32 %v672, %v1391
  %v1393 = vmul.f32 %v674, %v1391
  %v1394 = vmul.f32 %v676, %v1391
  %v1395 = vmul.f32 %v678, %v1391
  %v1396 = vadd.f32 %v1386, %v1392
  %v1397 = vadd.f32 %v1387, %v1393
  %v1398 = vadd.f32 %v1388, %v1394
  %v1399 = vadd.f32 %v1389, %v1395
  %1400 = vrot.lane.b32.xlu0 %v645, 112
  %v1401 = vpop.permute.xlu0 %1400
  %1402 = vrot.lane.b32.xlu0 %v635, 112
  %v1403 = vpop.permute.xlu0 %1402
  %1404 = vrot.lane.b32.xlu0 %v646, 112
  %v1405 = vpop.permute.xlu0 %1404
  %1406 = vrot.lane.b32.xlu0 %v642, 112
  %v1407 = vpop.permute.xlu0 %1406
  %v1408 = vld [vmem:[%s4 + $0x9] sm:$0x1]
  %v1409 = vperm.slane %v1408, 0
  %v1410 = vmul.f32 %v1401, %v1409
  %v1411 = vmul.f32 %v1403, %v1409
  %v1412 = vmul.f32 %v1405, %v1409
  %v1413 = vmul.f32 %v1407, %v1409
  %v1414 = vadd.f32 %v1396, %v1410
  %v1415 = vadd.f32 %v1397, %v1411
  %v1416 = vadd.f32 %v1398, %v1412
  %v1417 = vadd.f32 %v1399, %v1413
  %1418 = vrot.lane.b32.xlu0 %v88, 16
  %v1419 = vpop.permute.xlu0 %1418
  %1420 = vrot.lane.b32.xlu0 %v89, 16
  %v1421 = vpop.permute.xlu0 %1420
  %1422 = vrot.lane.b32.xlu0 %v90, 16
  %v1423 = vpop.permute.xlu0 %1422
  %1424 = vrot.lane.b32.xlu0 %v91, 16
  %v1425 = vpop.permute.xlu0 %1424
  %v1426 = vld [vmem:[%s4 + $0xa] sm:$0x1]
  %v1427 = vperm.slane %v1426, 0
  %v1428 = vmul.f32 %v1419, %v1427
  %v1429 = vmul.f32 %v1421, %v1427
  %v1430 = vmul.f32 %v1423, %v1427
  %v1431 = vmul.f32 %v1425, %v1427
  %v1432 = vadd.f32 %v1414, %v1428
  %v1433 = vadd.f32 %v1415, %v1429
  %v1434 = vadd.f32 %v1416, %v1430
  %v1435 = vadd.f32 %v1417, %v1431
  %v1436 = vld [vmem:[%s4 + $0xb] sm:$0x1]
  %v1437 = vperm.slane %v1436, 0
  %v1438 = vmul.f32 %v690, %v1437
  %v1439 = vmul.f32 %v692, %v1437
  %v1440 = vmul.f32 %v694, %v1437
  %v1441 = vmul.f32 %v696, %v1437
  %v1442 = vadd.f32 %v1432, %v1438
  %v1443 = vadd.f32 %v1433, %v1439
  %v1444 = vadd.f32 %v1434, %v1440
  %v1445 = vadd.f32 %v1435, %v1441
  %v1446 = vld [vmem:[%s4 + $0xc] sm:$0x1]
  %v1447 = vperm.slane %v1446, 0
  %v1448 = vmul.f32 %v88, %v1447
  %v1449 = vmul.f32 %v89, %v1447
  %v1450 = vmul.f32 %v90, %v1447
  %v1451 = vmul.f32 %v91, %v1447
  %v1452 = vadd.f32 %v1442, %v1448
  %v1453 = vadd.f32 %v1443, %v1449
  %v1454 = vadd.f32 %v1444, %v1450
  %v1455 = vadd.f32 %v1445, %v1451
  %v1456 = vld [vmem:[%s4 + $0xd] sm:$0x1]
  %v1457 = vperm.slane %v1456, 0
  %v1458 = vmul.f32 %v718, %v1457
  %v1459 = vmul.f32 %v720, %v1457
  %v1460 = vmul.f32 %v722, %v1457
  %v1461 = vmul.f32 %v724, %v1457
  %v1462 = vadd.f32 %v1452, %v1458
  %v1463 = vadd.f32 %v1453, %v1459
  %v1464 = vadd.f32 %v1454, %v1460
  %v1465 = vadd.f32 %v1455, %v1461
  %1466 = vrot.lane.b32.xlu0 %v88, 112
  %v1467 = vpop.permute.xlu0 %1466
  %1468 = vrot.lane.b32.xlu0 %v89, 112
  %v1469 = vpop.permute.xlu0 %1468
  %1470 = vrot.lane.b32.xlu0 %v90, 112
  %v1471 = vpop.permute.xlu0 %1470
  %1472 = vrot.lane.b32.xlu0 %v91, 112
  %v1473 = vpop.permute.xlu0 %1472
  %v1474 = vld [vmem:[%s4 + $0xe] sm:$0x1]
  %v1475 = vperm.slane %v1474, 0
  %v1476 = vmul.f32 %v1467, %v1475
  %v1477 = vmul.f32 %v1469, %v1475
  %v1478 = vmul.f32 %v1471, %v1475
  %v1479 = vmul.f32 %v1473, %v1475
  %v1480 = vadd.f32 %v1462, %v1476
  %v1481 = vadd.f32 %v1463, %v1477
  %v1482 = vadd.f32 %v1464, %v1478
  %v1483 = vadd.f32 %v1465, %v1479
  %1484 = vrot.lane.b32.xlu0 %v737, 16
  %v1485 = vpop.permute.xlu0 %1484
  %1486 = vrot.lane.b32.xlu0 %v745, 16
  %v1487 = vpop.permute.xlu0 %1486
  %1488 = vrot.lane.b32.xlu0 %v742, 16
  %v1489 = vpop.permute.xlu0 %1488
  %1490 = vrot.lane.b32.xlu0 %v746, 16
  %v1491 = vpop.permute.xlu0 %1490
  %v1492 = vld [vmem:[%s4 + $0xf] sm:$0x1]
  %v1493 = vperm.slane %v1492, 0
  %v1494 = vmul.f32 %v1485, %v1493
  %v1495 = vmul.f32 %v1487, %v1493
  %v1496 = vmul.f32 %v1489, %v1493
  %v1497 = vmul.f32 %v1491, %v1493
  %v1498 = vadd.f32 %v1480, %v1494
  %v1499 = vadd.f32 %v1481, %v1495
  %v1500 = vadd.f32 %v1482, %v1496
  %v1501 = vadd.f32 %v1483, %v1497
  %v1502 = vld [vmem:[%s4 + $0x10] sm:$0x1]
  %v1503 = vperm.slane %v1502, 0
  %v1504 = vmul.f32 %v748, %v1503
  %v1505 = vmul.f32 %v750, %v1503
  %v1506 = vmul.f32 %v752, %v1503
  %v1507 = vmul.f32 %v754, %v1503
  %v1508 = vadd.f32 %v1498, %v1504
  %v1509 = vadd.f32 %v1499, %v1505
  %v1510 = vadd.f32 %v1500, %v1506
  %v1511 = vadd.f32 %v1501, %v1507
  %v1512 = vld [vmem:[%s4 + $0x11] sm:$0x1]
  %v1513 = vperm.slane %v1512, 0
  %v1514 = vmul.f32 %v737, %v1513
  %v1515 = vmul.f32 %v745, %v1513
  %v1516 = vmul.f32 %v742, %v1513
  %v1517 = vmul.f32 %v746, %v1513
  %v1518 = vadd.f32 %v1508, %v1514
  %v1519 = vadd.f32 %v1509, %v1515
  %v1520 = vadd.f32 %v1510, %v1516
  %v1521 = vadd.f32 %v1511, %v1517
  %v1522 = vld [vmem:[%s4 + $0x12] sm:$0x1]
  %v1523 = vperm.slane %v1522, 0
  %v1524 = vmul.f32 %v776, %v1523
  %v1525 = vmul.f32 %v778, %v1523
  %v1526 = vmul.f32 %v780, %v1523
  %v1527 = vmul.f32 %v782, %v1523
  %v1528 = vadd.f32 %v1518, %v1524
  %v1529 = vadd.f32 %v1519, %v1525
  %v1530 = vadd.f32 %v1520, %v1526
  %v1531 = vadd.f32 %v1521, %v1527
  %1532 = vrot.lane.b32.xlu0 %v737, 112
  %v1533 = vpop.permute.xlu0 %1532
  %1534 = vrot.lane.b32.xlu0 %v745, 112
  %v1535 = vpop.permute.xlu0 %1534
  %1536 = vrot.lane.b32.xlu0 %v742, 112
  %v1537 = vpop.permute.xlu0 %1536
  %1538 = vrot.lane.b32.xlu0 %v746, 112
  %v1539 = vpop.permute.xlu0 %1538
  %v1540 = vld [vmem:[%s4 + $0x13] sm:$0x1]
  %v1541 = vperm.slane %v1540, 0
  %v1542 = vmul.f32 %v1533, %v1541
  %v1543 = vmul.f32 %v1535, %v1541
  %v1544 = vmul.f32 %v1537, %v1541
  %v1545 = vmul.f32 %v1539, %v1541
  %v1546 = vadd.f32 %v1528, %v1542
  %v1547 = vadd.f32 %v1529, %v1543
  %v1548 = vadd.f32 %v1530, %v1544
  %v1549 = vadd.f32 %v1531, %v1545
  %vm1550 = vcmask 1045504
  %v1551 = vrot.slane %v88, 2
  %v1552 = vrot.slane %v89, 2
  %v1553 = vsel %vm1550, %v1551, %v1552
  %v1556 = vrot.slane %v90, 2
  %v1557 = vrot.slane %v91, 2
  %v1558 = vsel %vm1550, %v1556, %v1557
  %v1561 = vsel %vm1550, %v1552, 0.0
  %v1562 = vsel %vm1550, %v1557, 0.0
  %1563 = vrot.lane.b32.xlu0 %v1553, 16
  %v1564 = vpop.permute.xlu0 %1563
  %1565 = vrot.lane.b32.xlu0 %v1561, 16
  %v1566 = vpop.permute.xlu0 %1565
  %1567 = vrot.lane.b32.xlu0 %v1558, 16
  %v1568 = vpop.permute.xlu0 %1567
  %1569 = vrot.lane.b32.xlu0 %v1562, 16
  %v1570 = vpop.permute.xlu0 %1569
  %v1571 = vld [vmem:[%s4 + $0x14] sm:$0x1]
  %v1572 = vperm.slane %v1571, 0
  %v1573 = vmul.f32 %v1564, %v1572
  %v1574 = vmul.f32 %v1566, %v1572
  %v1575 = vmul.f32 %v1568, %v1572
  %v1576 = vmul.f32 %v1570, %v1572
  %v1577 = vadd.f32 %v1546, %v1573
  %v1578 = vadd.f32 %v1547, %v1574
  %v1579 = vadd.f32 %v1548, %v1575
  %v1580 = vadd.f32 %v1549, %v1576
  %1581 = vrot.lane.b32.xlu0 %v1553, 8
  %v1582 = vpop.permute.xlu0 %1581
  %1583 = vrot.lane.b32.xlu0 %v1561, 8
  %v1584 = vpop.permute.xlu0 %1583
  %1585 = vrot.lane.b32.xlu0 %v1558, 8
  %v1586 = vpop.permute.xlu0 %1585
  %1587 = vrot.lane.b32.xlu0 %v1562, 8
  %v1588 = vpop.permute.xlu0 %1587
  %v1589 = vld [vmem:[%s4 + $0x15] sm:$0x1]
  %v1590 = vperm.slane %v1589, 0
  %v1591 = vmul.f32 %v1582, %v1590
  %v1592 = vmul.f32 %v1584, %v1590
  %v1593 = vmul.f32 %v1586, %v1590
  %v1594 = vmul.f32 %v1588, %v1590
  %v1595 = vadd.f32 %v1577, %v1591
  %v1596 = vadd.f32 %v1578, %v1592
  %v1597 = vadd.f32 %v1579, %v1593
  %v1598 = vadd.f32 %v1580, %v1594
  %v1599 = vld [vmem:[%s4 + $0x16] sm:$0x1]
  %v1600 = vperm.slane %v1599, 0
  %v1601 = vmul.f32 %v1553, %v1600
  %v1602 = vmul.f32 %v1561, %v1600
  %v1603 = vmul.f32 %v1558, %v1600
  %v1604 = vmul.f32 %v1562, %v1600
  %v1605 = vadd.f32 %v1595, %v1601
  %v1606 = vadd.f32 %v1596, %v1602
  %v1607 = vadd.f32 %v1597, %v1603
  %v1608 = vadd.f32 %v1598, %v1604
  %1609 = vrot.lane.b32.xlu0 %v1553, 120
  %v1610 = vpop.permute.xlu0 %1609
  %1611 = vrot.lane.b32.xlu0 %v1561, 120
  %v1612 = vpop.permute.xlu0 %1611
  %1613 = vrot.lane.b32.xlu0 %v1558, 120
  %v1614 = vpop.permute.xlu0 %1613
  %1615 = vrot.lane.b32.xlu0 %v1562, 120
  %v1616 = vpop.permute.xlu0 %1615
  %v1617 = vld [vmem:[%s4 + $0x17] sm:$0x1]
  %v1618 = vperm.slane %v1617, 0
  %v1619 = vmul.f32 %v1610, %v1618
  %v1620 = vmul.f32 %v1612, %v1618
  %v1621 = vmul.f32 %v1614, %v1618
  %v1622 = vmul.f32 %v1616, %v1618
  %v1623 = vadd.f32 %v1605, %v1619
  %v1624 = vadd.f32 %v1606, %v1620
  %v1625 = vadd.f32 %v1607, %v1621
  %v1626 = vadd.f32 %v1608, %v1622
  %1627 = vrot.lane.b32.xlu0 %v1553, 112
  %v1628 = vpop.permute.xlu0 %1627
  %1629 = vrot.lane.b32.xlu0 %v1561, 112
  %v1630 = vpop.permute.xlu0 %1629
  %1631 = vrot.lane.b32.xlu0 %v1558, 112
  %v1632 = vpop.permute.xlu0 %1631
  %1633 = vrot.lane.b32.xlu0 %v1562, 112
  %v1634 = vpop.permute.xlu0 %1633
  %v1635 = vld [vmem:[%s4 + $0x18] sm:$0x1]
  %v1636 = vperm.slane %v1635, 0
  %v1637 = vmul.f32 %v1628, %v1636
  %v1638 = vmul.f32 %v1630, %v1636
  %v1639 = vmul.f32 %v1632, %v1636
  %v1640 = vmul.f32 %v1634, %v1636
  %v1641 = vadd.f32 %v1623, %v1637
  %v1642 = vadd.f32 %v1624, %v1638
  %v1643 = vadd.f32 %v1625, %v1639
  %v1644 = vadd.f32 %v1626, %v1640
  %v1645 = vld [vmem:[%s12] sm:$0xff]
  %v1646 = vld [vmem:[%s12 + $0x8] sm:$0xff]
  %v1647 = vld [vmem:[%s12 + $0x10] sm:$0xff]
  %v1648 = vld [vmem:[%s12 + $0x18] sm:$0xff]
  %v1649 = vld [vmem:[%s12 + $0x20] sm:$0xff]
  %v1650 = vld [vmem:[%s12 + $0x28] sm:$0xff]
  %v1651 = vld [vmem:[%s12 + $0x30] sm:$0xff]
  %v1652 = vld [vmem:[%s12 + $0x38] sm:$0xff]
  %v1653 = vld [vmem:[%s12 + $0x40] sm:$0xff]
  %v1654 = vld [vmem:[%s12 + $0x48] sm:$0xff]
  %v1655 = vld [vmem:[%s12 + $0x50] sm:$0xff]
  %v1656 = vld [vmem:[%s12 + $0x58] sm:$0xff]
  %v1657 = vld [vmem:[%s12 + $0x60] sm:$0xff]
  %v1658 = vld [vmem:[%s12 + $0x68] sm:$0xff]
  %v1659 = vld [vmem:[%s12 + $0x70] sm:$0xff]
  %v1660 = vld [vmem:[%s12 + $0x78] sm:$0xff]
  %1661 = vmatpush.msra.mxu0 %v1660
  %1662 = vmatpush.msra.mxu0 %v1659
  %1663 = vmatpush.msra.mxu0 %v1658
  %1664 = vmatpush.msra.mxu0 %v1657
  %1665 = vmatpush.msra.mxu0 %v1656
  %1666 = vmatpush.msra.mxu0 %v1655
  %1667 = vmatpush.msra.mxu0 %v1654
  %1668 = vmatpush.msra.mxu0 %v1653
  %1669 = vmatpush.msra.mxu0 %v1652
  %1670 = vmatpush.msra.mxu0 %v1651
  %1671 = vmatpush.msra.mxu0 %v1650
  %1672 = vmatpush.msra.mxu0 %v1649
  %1673 = vmatpush.msra.mxu0 %v1648
  %1674 = vmatpush.msra.mxu0 %v1647
  %1675 = vmatpush.msra.mxu0 %v1646
  %1676 = vmatpush.msra.mxu0 %v1645
  %1677 = vmatmul.f32.gmra.mxu0 %v1641
  %v1678 = vpop.f32.mrf.mxu0
  %v1679 = vadd.f32 0.0, %v1678
  %1680 = vmatmul.f32.gmra.mxu0 %v1642
  %v1681 = vpop.f32.mrf.mxu0
  %v1682 = vadd.f32 0.0, %v1681
  %1683 = vmatmul.f32.gmra.mxu0 %v1643
  %v1684 = vpop.f32.mrf.mxu0
  %v1685 = vadd.f32 0.0, %v1684
  %1686 = vmatmul.f32.gmra.mxu0 %v1644
  %v1687 = vpop.f32.mrf.mxu0
  %v1688 = vadd.f32 0.0, %v1687
  %1689 = vdwg.mxu0
  %1690 = vmatpush.msra.mxu0 %v87
  %1691 = vmatpush.msra.mxu0 %v86
  %1692 = vmatpush.msra.mxu0 %v85
  %1693 = vmatpush.msra.mxu0 %v84
  %1694 = vmatpush.msra.mxu0 %v83
  %1695 = vmatpush.msra.mxu0 %v82
  %1696 = vmatpush.msra.mxu0 %v81
  %1697 = vmatpush.msra.mxu0 %v80
  %1698 = vmatpush.msra.mxu0 %v79
  %1699 = vmatpush.msra.mxu0 %v78
  %1700 = vmatpush.msra.mxu0 %v77
  %1701 = vmatpush.msra.mxu0 %v76
  %1702 = vmatpush.msra.mxu0 %v75
  %1703 = vmatpush.msra.mxu0 %v74
  %1704 = vmatpush.msra.mxu0 %v73
  %1705 = vmatpush.msra.mxu0 %v72
  %1706 = vmatmul.f32.gmra.mxu0 %v1679
  %v1707 = vpop.f32.mrf.mxu0
  %v1708 = vadd.f32 0.0, %v1707
  %1709 = vmatmul.f32.gmra.mxu0 %v1682
  %v1710 = vpop.f32.mrf.mxu0
  %v1711 = vadd.f32 0.0, %v1710
  %1712 = vmatmul.f32.gmra.mxu0 %v1685
  %v1713 = vpop.f32.mrf.mxu0
  %v1714 = vadd.f32 0.0, %v1713
  %1715 = vmatmul.f32.gmra.mxu0 %v1688
  %v1716 = vpop.f32.mrf.mxu0
  %v1717 = vadd.f32 0.0, %v1716
  %1718 = vdwg.mxu0
  %v1719 = vadd.f32 %v1708, %v1711
  %v1720 = vadd.f32 %v1719, %v1714
  %v1721 = vadd.f32 %v1720, %v1717
  %v1722 = vrot.slane %v1721, 4
  %v1723 = vadd.f32 %v1721, %v1722
  %v1724 = vrot.slane %v1723, 2
  %v1725 = vadd.f32 %v1723, %v1724
  %v1726 = vrot.slane %v1725, 1
  %v1727 = vadd.f32 %v1725, %v1726
  %v1728 = vmul.f32 %v1727, 0.001953125
  %v1729 = vsub.f32 %v1679, %v1728
  %v1730 = vsub.f32 %v1682, %v1728
  %v1731 = vsub.f32 %v1685, %v1728
  %v1732 = vsub.f32 %v1688, %v1728
  %v1733 = vmul.f32 %v1729, %v1729
  %v1734 = vmul.f32 %v1730, %v1730
  %v1735 = vmul.f32 %v1731, %v1731
  %v1736 = vmul.f32 %v1732, %v1732
  %1737 = vmatpush.msra.mxu0 %v87
  %1738 = vmatpush.msra.mxu0 %v86
  %1739 = vmatpush.msra.mxu0 %v85
  %1740 = vmatpush.msra.mxu0 %v84
  %1741 = vmatpush.msra.mxu0 %v83
  %1742 = vmatpush.msra.mxu0 %v82
  %1743 = vmatpush.msra.mxu0 %v81
  %1744 = vmatpush.msra.mxu0 %v80
  %1745 = vmatpush.msra.mxu0 %v79
  %1746 = vmatpush.msra.mxu0 %v78
  %1747 = vmatpush.msra.mxu0 %v77
  %1748 = vmatpush.msra.mxu0 %v76
  %1749 = vmatpush.msra.mxu0 %v75
  %1750 = vmatpush.msra.mxu0 %v74
  %1751 = vmatpush.msra.mxu0 %v73
  %1752 = vmatpush.msra.mxu0 %v72
  %1753 = vmatmul.f32.gmra.mxu0 %v1733
  %v1754 = vpop.f32.mrf.mxu0
  %v1755 = vadd.f32 0.0, %v1754
  %1756 = vmatmul.f32.gmra.mxu0 %v1734
  %v1757 = vpop.f32.mrf.mxu0
  %v1758 = vadd.f32 0.0, %v1757
  %1759 = vmatmul.f32.gmra.mxu0 %v1735
  %v1760 = vpop.f32.mrf.mxu0
  %v1761 = vadd.f32 0.0, %v1760
  %1762 = vmatmul.f32.gmra.mxu0 %v1736
  %v1763 = vpop.f32.mrf.mxu0
  %v1764 = vadd.f32 0.0, %v1763
  %1765 = vdwg.mxu0
  %v1766 = vadd.f32 %v1755, %v1758
  %v1767 = vadd.f32 %v1766, %v1761
  %v1768 = vadd.f32 %v1767, %v1764
  %v1769 = vrot.slane %v1768, 4
  %v1770 = vadd.f32 %v1768, %v1769
  %v1771 = vrot.slane %v1770, 2
  %v1772 = vadd.f32 %v1770, %v1771
  %v1773 = vrot.slane %v1772, 1
  %v1774 = vadd.f32 %v1772, %v1773
  %v1775 = vmul.f32 %v1774, 0.001953125
  %v1776 = vadd.f32 %v1775, 1e-05
  %v1777 = vrsqrt.pop %v1776
  %v1778 = vmul.f32 %v1777, %v1776
  %v1779 = vmul.f32 %v1778, %v1777
  %v1780 = vmul.f32 0.5, %v1779
  %v1781 = vsub.f32 1.5, %v1780
  %v1782 = vmul.f32 %v1777, %v1781
  %vm1783 = vweird.f32 %v1776
  %vm1784 = vweird.f32 %v1777
  %vm1785 = vmor %vm1783, %vm1784
  %v1786 = vsel %vm1785, %v1777, %v1782
  %v1787 = vmul.f32 %v1729, %v1786
  %v1788 = vmul.f32 %v1730, %v1786
  %v1789 = vmul.f32 %v1731, %v1786
  %v1790 = vmul.f32 %v1732, %v1786
  %v1791 = vmax.f32 %v1787, 0.0
  %v1792 = vmax.f32 %v1788, 0.0
  %v1793 = vmax.f32 %v1789, 0.0
  %v1794 = vmax.f32 %v1790, 0.0
  %v1797 = vrot.slane %v1791, 6
  %v1798 = vrot.slane %v1792, 6
  %v1799 = vsel %vm1261, %v1797, %v1798
  %v1804 = vrot.slane %v1793, 6
  %v1805 = vrot.slane %v1794, 6
  %v1806 = vsel %vm1261, %v1804, %v1805
  %v1809 = vsel %vm1261, 0.0, %v1797
  %v1810 = vsel %vm1261, 0.0, %v1804
  %1811 = vrot.lane.b32.xlu0 %v1809, 16
  %v1812 = vpop.permute.xlu0 %1811
  %1813 = vrot.lane.b32.xlu0 %v1799, 16
  %v1814 = vpop.permute.xlu0 %1813
  %1815 = vrot.lane.b32.xlu0 %v1810, 16
  %v1816 = vpop.permute.xlu0 %1815
  %1817 = vrot.lane.b32.xlu0 %v1806, 16
  %v1818 = vpop.permute.xlu0 %1817
  %v1819 = vld [vmem:[%s5] sm:$0x1]
  %v1820 = vperm.slane %v1819, 0
  %v1821 = vmul.f32 %v1812, %v1820
  %v1822 = vmul.f32 %v1814, %v1820
  %v1823 = vmul.f32 %v1816, %v1820
  %v1824 = vmul.f32 %v1818, %v1820
  %1825 = vrot.lane.b32.xlu0 %v1809, 8
  %v1826 = vpop.permute.xlu0 %1825
  %1827 = vrot.lane.b32.xlu0 %v1799, 8
  %v1828 = vpop.permute.xlu0 %1827
  %1829 = vrot.lane.b32.xlu0 %v1810, 8
  %v1830 = vpop.permute.xlu0 %1829
  %1831 = vrot.lane.b32.xlu0 %v1806, 8
  %v1832 = vpop.permute.xlu0 %1831
  %v1833 = vld [vmem:[%s5 + $0x1] sm:$0x1]
  %v1834 = vperm.slane %v1833, 0
  %v1835 = vmul.f32 %v1826, %v1834
  %v1836 = vmul.f32 %v1828, %v1834
  %v1837 = vmul.f32 %v1830, %v1834
  %v1838 = vmul.f32 %v1832, %v1834
  %v1839 = vadd.f32 %v1821, %v1835
  %v1840 = vadd.f32 %v1822, %v1836
  %v1841 = vadd.f32 %v1823, %v1837
  %v1842 = vadd.f32 %v1824, %v1838
  %v1843 = vld [vmem:[%s5 + $0x2] sm:$0x1]
  %v1844 = vperm.slane %v1843, 0
  %v1845 = vmul.f32 %v1809, %v1844
  %v1846 = vmul.f32 %v1799, %v1844
  %v1847 = vmul.f32 %v1810, %v1844
  %v1848 = vmul.f32 %v1806, %v1844
  %v1849 = vadd.f32 %v1839, %v1845
  %v1850 = vadd.f32 %v1840, %v1846
  %v1851 = vadd.f32 %v1841, %v1847
  %v1852 = vadd.f32 %v1842, %v1848
  %1853 = vrot.lane.b32.xlu0 %v1809, 120
  %v1854 = vpop.permute.xlu0 %1853
  %1855 = vrot.lane.b32.xlu0 %v1799, 120
  %v1856 = vpop.permute.xlu0 %1855
  %1857 = vrot.lane.b32.xlu0 %v1810, 120
  %v1858 = vpop.permute.xlu0 %1857
  %1859 = vrot.lane.b32.xlu0 %v1806, 120
  %v1860 = vpop.permute.xlu0 %1859
  %v1861 = vld [vmem:[%s5 + $0x3] sm:$0x1]
  %v1862 = vperm.slane %v1861, 0
  %v1863 = vmul.f32 %v1854, %v1862
  %v1864 = vmul.f32 %v1856, %v1862
  %v1865 = vmul.f32 %v1858, %v1862
  %v1866 = vmul.f32 %v1860, %v1862
  %v1867 = vadd.f32 %v1849, %v1863
  %v1868 = vadd.f32 %v1850, %v1864
  %v1869 = vadd.f32 %v1851, %v1865
  %v1870 = vadd.f32 %v1852, %v1866
  %1871 = vrot.lane.b32.xlu0 %v1809, 112
  %v1872 = vpop.permute.xlu0 %1871
  %1873 = vrot.lane.b32.xlu0 %v1799, 112
  %v1874 = vpop.permute.xlu0 %1873
  %1875 = vrot.lane.b32.xlu0 %v1810, 112
  %v1876 = vpop.permute.xlu0 %1875
  %1877 = vrot.lane.b32.xlu0 %v1806, 112
  %v1878 = vpop.permute.xlu0 %1877
  %v1879 = vld [vmem:[%s5 + $0x4] sm:$0x1]
  %v1880 = vperm.slane %v1879, 0
  %v1881 = vmul.f32 %v1872, %v1880
  %v1882 = vmul.f32 %v1874, %v1880
  %v1883 = vmul.f32 %v1876, %v1880
  %v1884 = vmul.f32 %v1878, %v1880
  %v1885 = vadd.f32 %v1867, %v1881
  %v1886 = vadd.f32 %v1868, %v1882
  %v1887 = vadd.f32 %v1869, %v1883
  %v1888 = vadd.f32 %v1870, %v1884
  %v1889 = vrot.slane %v1791, 7
  %v1890 = vrot.slane %v1792, 7
  %v1891 = vsel %vm101, %v1889, %v1890
  %v1894 = vrot.slane %v1793, 7
  %v1895 = vrot.slane %v1794, 7
  %v1896 = vsel %vm101, %v1894, %v1895
  %v1899 = vsel %vm101, 0.0, %v1889
  %v1900 = vsel %vm101, 0.0, %v1894
  %1901 = vrot.lane.b32.xlu0 %v1899, 16
  %v1902 = vpop.permute.xlu0 %1901
  %1903 = vrot.lane.b32.xlu0 %v1891, 16
  %v1904 = vpop.permute.xlu0 %1903
  %1905 = vrot.lane.b32.xlu0 %v1900, 16
  %v1906 = vpop.permute.xlu0 %1905
  %1907 = vrot.lane.b32.xlu0 %v1896, 16
  %v1908 = vpop.permute.xlu0 %1907
  %v1909 = vld [vmem:[%s5 + $0x5] sm:$0x1]
  %v1910 = vperm.slane %v1909, 0
  %v1911 = vmul.f32 %v1902, %v1910
  %v1912 = vmul.f32 %v1904, %v1910
  %v1913 = vmul.f32 %v1906, %v1910
  %v1914 = vmul.f32 %v1908, %v1910
  %v1915 = vadd.f32 %v1885, %v1911
  %v1916 = vadd.f32 %v1886, %v1912
  %v1917 = vadd.f32 %v1887, %v1913
  %v1918 = vadd.f32 %v1888, %v1914
  %1919 = vrot.lane.b32.xlu0 %v1899, 8
  %v1920 = vpop.permute.xlu0 %1919
  %1921 = vrot.lane.b32.xlu0 %v1891, 8
  %v1922 = vpop.permute.xlu0 %1921
  %1923 = vrot.lane.b32.xlu0 %v1900, 8
  %v1924 = vpop.permute.xlu0 %1923
  %1925 = vrot.lane.b32.xlu0 %v1896, 8
  %v1926 = vpop.permute.xlu0 %1925
  %v1927 = vld [vmem:[%s5 + $0x6] sm:$0x1]
  %v1928 = vperm.slane %v1927, 0
  %v1929 = vmul.f32 %v1920, %v1928
  %v1930 = vmul.f32 %v1922, %v1928
  %v1931 = vmul.f32 %v1924, %v1928
  %v1932 = vmul.f32 %v1926, %v1928
  %v1933 = vadd.f32 %v1915, %v1929
  %v1934 = vadd.f32 %v1916, %v1930
  %v1935 = vadd.f32 %v1917, %v1931
  %v1936 = vadd.f32 %v1918, %v1932
  %v1937 = vld [vmem:[%s5 + $0x7] sm:$0x1]
  %v1938 = vperm.slane %v1937, 0
  %v1939 = vmul.f32 %v1899, %v1938
  %v1940 = vmul.f32 %v1891, %v1938
  %v1941 = vmul.f32 %v1900, %v1938
  %v1942 = vmul.f32 %v1896, %v1938
  %v1943 = vadd.f32 %v1933, %v1939
  %v1944 = vadd.f32 %v1934, %v1940
  %v1945 = vadd.f32 %v1935, %v1941
  %v1946 = vadd.f32 %v1936, %v1942
  %1947 = vrot.lane.b32.xlu0 %v1899, 120
  %v1948 = vpop.permute.xlu0 %1947
  %1949 = vrot.lane.b32.xlu0 %v1891, 120
  %v1950 = vpop.permute.xlu0 %1949
  %1951 = vrot.lane.b32.xlu0 %v1900, 120
  %v1952 = vpop.permute.xlu0 %1951
  %1953 = vrot.lane.b32.xlu0 %v1896, 120
  %v1954 = vpop.permute.xlu0 %1953
  %v1955 = vld [vmem:[%s5 + $0x8] sm:$0x1]
  %v1956 = vperm.slane %v1955, 0
  %v1957 = vmul.f32 %v1948, %v1956
  %v1958 = vmul.f32 %v1950, %v1956
  %v1959 = vmul.f32 %v1952, %v1956
  %v1960 = vmul.f32 %v1954, %v1956
  %v1961 = vadd.f32 %v1943, %v1957
  %v1962 = vadd.f32 %v1944, %v1958
  %v1963 = vadd.f32 %v1945, %v1959
  %v1964 = vadd.f32 %v1946, %v1960
  %1965 = vrot.lane.b32.xlu0 %v1899, 112
  %v1966 = vpop.permute.xlu0 %1965
  %1967 = vrot.lane.b32.xlu0 %v1891, 112
  %v1968 = vpop.permute.xlu0 %1967
  %1969 = vrot.lane.b32.xlu0 %v1900, 112
  %v1970 = vpop.permute.xlu0 %1969
  %1971 = vrot.lane.b32.xlu0 %v1896, 112
  %v1972 = vpop.permute.xlu0 %1971
  %v1973 = vld [vmem:[%s5 + $0x9] sm:$0x1]
  %v1974 = vperm.slane %v1973, 0
  %v1975 = vmul.f32 %v1966, %v1974
  %v1976 = vmul.f32 %v1968, %v1974
  %v1977 = vmul.f32 %v1970, %v1974
  %v1978 = vmul.f32 %v1972, %v1974
  %v1979 = vadd.f32 %v1961, %v1975
  %v1980 = vadd.f32 %v1962, %v1976
  %v1981 = vadd.f32 %v1963, %v1977
  %v1982 = vadd.f32 %v1964, %v1978
  %1983 = vrot.lane.b32.xlu0 %v1791, 16
  %v1984 = vpop.permute.xlu0 %1983
  %1985 = vrot.lane.b32.xlu0 %v1792, 16
  %v1986 = vpop.permute.xlu0 %1985
  %1987 = vrot.lane.b32.xlu0 %v1793, 16
  %v1988 = vpop.permute.xlu0 %1987
  %1989 = vrot.lane.b32.xlu0 %v1794, 16
  %v1990 = vpop.permute.xlu0 %1989
  %v1991 = vld [vmem:[%s5 + $0xa] sm:$0x1]
  %v1992 = vperm.slane %v1991, 0
  %v1993 = vmul.f32 %v1984, %v1992
  %v1994 = vmul.f32 %v1986, %v1992
  %v1995 = vmul.f32 %v1988, %v1992
  %v1996 = vmul.f32 %v1990, %v1992
  %v1997 = vadd.f32 %v1979, %v1993
  %v1998 = vadd.f32 %v1980, %v1994
  %v1999 = vadd.f32 %v1981, %v1995
  %v2000 = vadd.f32 %v1982, %v1996
  %2001 = vrot.lane.b32.xlu0 %v1791, 8
  %v2002 = vpop.permute.xlu0 %2001
  %2003 = vrot.lane.b32.xlu0 %v1792, 8
  %v2004 = vpop.permute.xlu0 %2003
  %2005 = vrot.lane.b32.xlu0 %v1793, 8
  %v2006 = vpop.permute.xlu0 %2005
  %2007 = vrot.lane.b32.xlu0 %v1794, 8
  %v2008 = vpop.permute.xlu0 %2007
  %v2009 = vld [vmem:[%s5 + $0xb] sm:$0x1]
  %v2010 = vperm.slane %v2009, 0
  %v2011 = vmul.f32 %v2002, %v2010
  %v2012 = vmul.f32 %v2004, %v2010
  %v2013 = vmul.f32 %v2006, %v2010
  %v2014 = vmul.f32 %v2008, %v2010
  %v2015 = vadd.f32 %v1997, %v2011
  %v2016 = vadd.f32 %v1998, %v2012
  %v2017 = vadd.f32 %v1999, %v2013
  %v2018 = vadd.f32 %v2000, %v2014
  %v2019 = vld [vmem:[%s5 + $0xc] sm:$0x1]
  %v2020 = vperm.slane %v2019, 0
  %v2021 = vmul.f32 %v1791, %v2020
  %v2022 = vmul.f32 %v1792, %v2020
  %v2023 = vmul.f32 %v1793, %v2020
  %v2024 = vmul.f32 %v1794, %v2020
  %v2025 = vadd.f32 %v2015, %v2021
  %v2026 = vadd.f32 %v2016, %v2022
  %v2027 = vadd.f32 %v2017, %v2023
  %v2028 = vadd.f32 %v2018, %v2024
  %2029 = vrot.lane.b32.xlu0 %v1791, 120
  %v2030 = vpop.permute.xlu0 %2029
  %2031 = vrot.lane.b32.xlu0 %v1792, 120
  %v2032 = vpop.permute.xlu0 %2031
  %2033 = vrot.lane.b32.xlu0 %v1793, 120
  %v2034 = vpop.permute.xlu0 %2033
  %2035 = vrot.lane.b32.xlu0 %v1794, 120
  %v2036 = vpop.permute.xlu0 %2035
  %v2037 = vld [vmem:[%s5 + $0xd] sm:$0x1]
  %v2038 = vperm.slane %v2037, 0
  %v2039 = vmul.f32 %v2030, %v2038
  %v2040 = vmul.f32 %v2032, %v2038
  %v2041 = vmul.f32 %v2034, %v2038
  %v2042 = vmul.f32 %v2036, %v2038
  %v2043 = vadd.f32 %v2025, %v2039
  %v2044 = vadd.f32 %v2026, %v2040
  %v2045 = vadd.f32 %v2027, %v2041
  %v2046 = vadd.f32 %v2028, %v2042
  %2047 = vrot.lane.b32.xlu0 %v1791, 112
  %v2048 = vpop.permute.xlu0 %2047
  %2049 = vrot.lane.b32.xlu0 %v1792, 112
  %v2050 = vpop.permute.xlu0 %2049
  %2051 = vrot.lane.b32.xlu0 %v1793, 112
  %v2052 = vpop.permute.xlu0 %2051
  %2053 = vrot.lane.b32.xlu0 %v1794, 112
  %v2054 = vpop.permute.xlu0 %2053
  %v2055 = vld [vmem:[%s5 + $0xe] sm:$0x1]
  %v2056 = vperm.slane %v2055, 0
  %v2057 = vmul.f32 %v2048, %v2056
  %v2058 = vmul.f32 %v2050, %v2056
  %v2059 = vmul.f32 %v2052, %v2056
  %v2060 = vmul.f32 %v2054, %v2056
  %v2061 = vadd.f32 %v2043, %v2057
  %v2062 = vadd.f32 %v2044, %v2058
  %v2063 = vadd.f32 %v2045, %v2059
  %v2064 = vadd.f32 %v2046, %v2060
  %v2065 = vrot.slane %v1791, 1
  %v2066 = vrot.slane %v1792, 1
  %v2067 = vsel %vm204, %v2065, %v2066
  %v2070 = vrot.slane %v1793, 1
  %v2071 = vrot.slane %v1794, 1
  %v2072 = vsel %vm204, %v2070, %v2071
  %v2075 = vsel %vm204, %v2066, 0.0
  %v2076 = vsel %vm204, %v2071, 0.0
  %2077 = vrot.lane.b32.xlu0 %v2067, 16
  %v2078 = vpop.permute.xlu0 %2077
  %2079 = vrot.lane.b32.xlu0 %v2075, 16
  %v2080 = vpop.permute.xlu0 %2079
  %2081 = vrot.lane.b32.xlu0 %v2072, 16
  %v2082 = vpop.permute.xlu0 %2081
  %2083 = vrot.lane.b32.xlu0 %v2076, 16
  %v2084 = vpop.permute.xlu0 %2083
  %v2085 = vld [vmem:[%s5 + $0xf] sm:$0x1]
  %v2086 = vperm.slane %v2085, 0
  %v2087 = vmul.f32 %v2078, %v2086
  %v2088 = vmul.f32 %v2080, %v2086
  %v2089 = vmul.f32 %v2082, %v2086
  %v2090 = vmul.f32 %v2084, %v2086
  %v2091 = vadd.f32 %v2061, %v2087
  %v2092 = vadd.f32 %v2062, %v2088
  %v2093 = vadd.f32 %v2063, %v2089
  %v2094 = vadd.f32 %v2064, %v2090
  %2095 = vrot.lane.b32.xlu0 %v2067, 8
  %v2096 = vpop.permute.xlu0 %2095
  %2097 = vrot.lane.b32.xlu0 %v2075, 8
  %v2098 = vpop.permute.xlu0 %2097
  %2099 = vrot.lane.b32.xlu0 %v2072, 8
  %v2100 = vpop.permute.xlu0 %2099
  %2101 = vrot.lane.b32.xlu0 %v2076, 8
  %v2102 = vpop.permute.xlu0 %2101
  %v2103 = vld [vmem:[%s5 + $0x10] sm:$0x1]
  %v2104 = vperm.slane %v2103, 0
  %v2105 = vmul.f32 %v2096, %v2104
  %v2106 = vmul.f32 %v2098, %v2104
  %v2107 = vmul.f32 %v2100, %v2104
  %v2108 = vmul.f32 %v2102, %v2104
  %v2109 = vadd.f32 %v2091, %v2105
  %v2110 = vadd.f32 %v2092, %v2106
  %v2111 = vadd.f32 %v2093, %v2107
  %v2112 = vadd.f32 %v2094, %v2108
  %v2113 = vld [vmem:[%s5 + $0x11] sm:$0x1]
  %v2114 = vperm.slane %v2113, 0
  %v2115 = vmul.f32 %v2067, %v2114
  %v2116 = vmul.f32 %v2075, %v2114
  %v2117 = vmul.f32 %v2072, %v2114
  %v2118 = vmul.f32 %v2076, %v2114
  %v2119 = vadd.f32 %v2109, %v2115
  %v2120 = vadd.f32 %v2110, %v2116
  %v2121 = vadd.f32 %v2111, %v2117
  %v2122 = vadd.f32 %v2112, %v2118
  %2123 = vrot.lane.b32.xlu0 %v2067, 120
  %v2124 = vpop.permute.xlu0 %2123
  %2125 = vrot.lane.b32.xlu0 %v2075, 120
  %v2126 = vpop.permute.xlu0 %2125
  %2127 = vrot.lane.b32.xlu0 %v2072, 120
  %v2128 = vpop.permute.xlu0 %2127
  %2129 = vrot.lane.b32.xlu0 %v2076, 120
  %v2130 = vpop.permute.xlu0 %2129
  %v2131 = vld [vmem:[%s5 + $0x12] sm:$0x1]
  %v2132 = vperm.slane %v2131, 0
  %v2133 = vmul.f32 %v2124, %v2132
  %v2134 = vmul.f32 %v2126, %v2132
  %v2135 = vmul.f32 %v2128, %v2132
  %v2136 = vmul.f32 %v2130, %v2132
  %v2137 = vadd.f32 %v2119, %v2133
  %v2138 = vadd.f32 %v2120, %v2134
  %v2139 = vadd.f32 %v2121, %v2135
  %v2140 = vadd.f32 %v2122, %v2136
  %2141 = vrot.lane.b32.xlu0 %v2067, 112
  %v2142 = vpop.permute.xlu0 %2141
  %2143 = vrot.lane.b32.xlu0 %v2075, 112
  %v2144 = vpop.permute.xlu0 %2143
  %2145 = vrot.lane.b32.xlu0 %v2072, 112
  %v2146 = vpop.permute.xlu0 %2145
  %2147 = vrot.lane.b32.xlu0 %v2076, 112
  %v2148 = vpop.permute.xlu0 %2147
  %v2149 = vld [vmem:[%s5 + $0x13] sm:$0x1]
  %v2150 = vperm.slane %v2149, 0
  %v2151 = vmul.f32 %v2142, %v2150
  %v2152 = vmul.f32 %v2144, %v2150
  %v2153 = vmul.f32 %v2146, %v2150
  %v2154 = vmul.f32 %v2148, %v2150
  %v2155 = vadd.f32 %v2137, %v2151
  %v2156 = vadd.f32 %v2138, %v2152
  %v2157 = vadd.f32 %v2139, %v2153
  %v2158 = vadd.f32 %v2140, %v2154
  %v2159 = vrot.slane %v1791, 2
  %v2160 = vrot.slane %v1792, 2
  %v2161 = vsel %vm1550, %v2159, %v2160
  %v2164 = vrot.slane %v1793, 2
  %v2165 = vrot.slane %v1794, 2
  %v2166 = vsel %vm1550, %v2164, %v2165
  %v2169 = vsel %vm1550, %v2160, 0.0
  %v2170 = vsel %vm1550, %v2165, 0.0
  %2171 = vrot.lane.b32.xlu0 %v2161, 16
  %v2172 = vpop.permute.xlu0 %2171
  %2173 = vrot.lane.b32.xlu0 %v2169, 16
  %v2174 = vpop.permute.xlu0 %2173
  %2175 = vrot.lane.b32.xlu0 %v2166, 16
  %v2176 = vpop.permute.xlu0 %2175
  %2177 = vrot.lane.b32.xlu0 %v2170, 16
  %v2178 = vpop.permute.xlu0 %2177
  %v2179 = vld [vmem:[%s5 + $0x14] sm:$0x1]
  %v2180 = vperm.slane %v2179, 0
  %v2181 = vmul.f32 %v2172, %v2180
  %v2182 = vmul.f32 %v2174, %v2180
  %v2183 = vmul.f32 %v2176, %v2180
  %v2184 = vmul.f32 %v2178, %v2180
  %v2185 = vadd.f32 %v2155, %v2181
  %v2186 = vadd.f32 %v2156, %v2182
  %v2187 = vadd.f32 %v2157, %v2183
  %v2188 = vadd.f32 %v2158, %v2184
  %2189 = vrot.lane.b32.xlu0 %v2161, 8
  %v2190 = vpop.permute.xlu0 %2189
  %2191 = vrot.lane.b32.xlu0 %v2169, 8
  %v2192 = vpop.permute.xlu0 %2191
  %2193 = vrot.lane.b32.xlu0 %v2166, 8
  %v2194 = vpop.permute.xlu0 %2193
  %2195 = vrot.lane.b32.xlu0 %v2170, 8
  %v2196 = vpop.permute.xlu0 %2195
  %v2197 = vld [vmem:[%s5 + $0x15] sm:$0x1]
  %v2198 = vperm.slane %v2197, 0
  %v2199 = vmul.f32 %v2190, %v2198
  %v2200 = vmul.f32 %v2192, %v2198
  %v2201 = vmul.f32 %v2194, %v2198
  %v2202 = vmul.f32 %v2196, %v2198
  %v2203 = vadd.f32 %v2185, %v2199
  %v2204 = vadd.f32 %v2186, %v2200
  %v2205 = vadd.f32 %v2187, %v2201
  %v2206 = vadd.f32 %v2188, %v2202
  %v2207 = vld [vmem:[%s5 + $0x16] sm:$0x1]
  %v2208 = vperm.slane %v2207, 0
  %v2209 = vmul.f32 %v2161, %v2208
  %v2210 = vmul.f32 %v2169, %v2208
  %v2211 = vmul.f32 %v2166, %v2208
  %v2212 = vmul.f32 %v2170, %v2208
  %v2213 = vadd.f32 %v2203, %v2209
  %v2214 = vadd.f32 %v2204, %v2210
  %v2215 = vadd.f32 %v2205, %v2211
  %v2216 = vadd.f32 %v2206, %v2212
  %2217 = vrot.lane.b32.xlu0 %v2161, 120
  %v2218 = vpop.permute.xlu0 %2217
  %2219 = vrot.lane.b32.xlu0 %v2169, 120
  %v2220 = vpop.permute.xlu0 %2219
  %2221 = vrot.lane.b32.xlu0 %v2166, 120
  %v2222 = vpop.permute.xlu0 %2221
  %2223 = vrot.lane.b32.xlu0 %v2170, 120
  %v2224 = vpop.permute.xlu0 %2223
  %v2225 = vld [vmem:[%s5 + $0x17] sm:$0x1]
  %v2226 = vperm.slane %v2225, 0
  %v2227 = vmul.f32 %v2218, %v2226
  %v2228 = vmul.f32 %v2220, %v2226
  %v2229 = vmul.f32 %v2222, %v2226
  %v2230 = vmul.f32 %v2224, %v2226
  %v2231 = vadd.f32 %v2213, %v2227
  %v2232 = vadd.f32 %v2214, %v2228
  %v2233 = vadd.f32 %v2215, %v2229
  %v2234 = vadd.f32 %v2216, %v2230
  %2235 = vrot.lane.b32.xlu0 %v2161, 112
  %v2236 = vpop.permute.xlu0 %2235
  %2237 = vrot.lane.b32.xlu0 %v2169, 112
  %v2238 = vpop.permute.xlu0 %2237
  %2239 = vrot.lane.b32.xlu0 %v2166, 112
  %v2240 = vpop.permute.xlu0 %2239
  %2241 = vrot.lane.b32.xlu0 %v2170, 112
  %v2242 = vpop.permute.xlu0 %2241
  %v2243 = vld [vmem:[%s5 + $0x18] sm:$0x1]
  %v2244 = vperm.slane %v2243, 0
  %v2245 = vmul.f32 %v2236, %v2244
  %v2246 = vmul.f32 %v2238, %v2244
  %v2247 = vmul.f32 %v2240, %v2244
  %v2248 = vmul.f32 %v2242, %v2244
  %v2249 = vadd.f32 %v2231, %v2245
  %v2250 = vadd.f32 %v2232, %v2246
  %v2251 = vadd.f32 %v2233, %v2247
  %v2252 = vadd.f32 %v2234, %v2248
  %v2253 = vld [vmem:[%s13] sm:$0xff]
  %v2254 = vld [vmem:[%s13 + $0x8] sm:$0xff]
  %v2255 = vld [vmem:[%s13 + $0x10] sm:$0xff]
  %v2256 = vld [vmem:[%s13 + $0x18] sm:$0xff]
  %v2257 = vld [vmem:[%s13 + $0x20] sm:$0xff]
  %v2258 = vld [vmem:[%s13 + $0x28] sm:$0xff]
  %v2259 = vld [vmem:[%s13 + $0x30] sm:$0xff]
  %v2260 = vld [vmem:[%s13 + $0x38] sm:$0xff]
  %v2261 = vld [vmem:[%s13 + $0x40] sm:$0xff]
  %v2262 = vld [vmem:[%s13 + $0x48] sm:$0xff]
  %v2263 = vld [vmem:[%s13 + $0x50] sm:$0xff]
  %v2264 = vld [vmem:[%s13 + $0x58] sm:$0xff]
  %v2265 = vld [vmem:[%s13 + $0x60] sm:$0xff]
  %v2266 = vld [vmem:[%s13 + $0x68] sm:$0xff]
  %v2267 = vld [vmem:[%s13 + $0x70] sm:$0xff]
  %v2268 = vld [vmem:[%s13 + $0x78] sm:$0xff]
  %2269 = vmatpush.msra.mxu0 %v2268
  %2270 = vmatpush.msra.mxu0 %v2267
  %2271 = vmatpush.msra.mxu0 %v2266
  %2272 = vmatpush.msra.mxu0 %v2265
  %2273 = vmatpush.msra.mxu0 %v2264
  %2274 = vmatpush.msra.mxu0 %v2263
  %2275 = vmatpush.msra.mxu0 %v2262
  %2276 = vmatpush.msra.mxu0 %v2261
  %2277 = vmatpush.msra.mxu0 %v2260
  %2278 = vmatpush.msra.mxu0 %v2259
  %2279 = vmatpush.msra.mxu0 %v2258
  %2280 = vmatpush.msra.mxu0 %v2257
  %2281 = vmatpush.msra.mxu0 %v2256
  %2282 = vmatpush.msra.mxu0 %v2255
  %2283 = vmatpush.msra.mxu0 %v2254
  %2284 = vmatpush.msra.mxu0 %v2253
  %2285 = vmatmul.f32.gmra.mxu0 %v2249
  %v2286 = vpop.f32.mrf.mxu0
  %v2287 = vadd.f32 0.0, %v2286
  %2288 = vmatmul.f32.gmra.mxu0 %v2250
  %v2289 = vpop.f32.mrf.mxu0
  %v2290 = vadd.f32 0.0, %v2289
  %2291 = vmatmul.f32.gmra.mxu0 %v2251
  %v2292 = vpop.f32.mrf.mxu0
  %v2293 = vadd.f32 0.0, %v2292
  %2294 = vmatmul.f32.gmra.mxu0 %v2252
  %v2295 = vpop.f32.mrf.mxu0
  %v2296 = vadd.f32 0.0, %v2295
  %2297 = vdwg.mxu0
  %2298 = vmatpush.msra.mxu0 %v87
  %2299 = vmatpush.msra.mxu0 %v86
  %2300 = vmatpush.msra.mxu0 %v85
  %2301 = vmatpush.msra.mxu0 %v84
  %2302 = vmatpush.msra.mxu0 %v83
  %2303 = vmatpush.msra.mxu0 %v82
  %2304 = vmatpush.msra.mxu0 %v81
  %2305 = vmatpush.msra.mxu0 %v80
  %2306 = vmatpush.msra.mxu0 %v79
  %2307 = vmatpush.msra.mxu0 %v78
  %2308 = vmatpush.msra.mxu0 %v77
  %2309 = vmatpush.msra.mxu0 %v76
  %2310 = vmatpush.msra.mxu0 %v75
  %2311 = vmatpush.msra.mxu0 %v74
  %2312 = vmatpush.msra.mxu0 %v73
  %2313 = vmatpush.msra.mxu0 %v72
  %2314 = vmatmul.f32.gmra.mxu0 %v2287
  %v2315 = vpop.f32.mrf.mxu0
  %v2316 = vadd.f32 0.0, %v2315
  %2317 = vmatmul.f32.gmra.mxu0 %v2290
  %v2318 = vpop.f32.mrf.mxu0
  %v2319 = vadd.f32 0.0, %v2318
  %2320 = vmatmul.f32.gmra.mxu0 %v2293
  %v2321 = vpop.f32.mrf.mxu0
  %v2322 = vadd.f32 0.0, %v2321
  %2323 = vmatmul.f32.gmra.mxu0 %v2296
  %v2324 = vpop.f32.mrf.mxu0
  %v2325 = vadd.f32 0.0, %v2324
  %2326 = vdwg.mxu0
  %v2327 = vadd.f32 %v2316, %v2319
  %v2328 = vadd.f32 %v2327, %v2322
  %v2329 = vadd.f32 %v2328, %v2325
  %v2330 = vrot.slane %v2329, 4
  %v2331 = vadd.f32 %v2329, %v2330
  %v2332 = vrot.slane %v2331, 2
  %v2333 = vadd.f32 %v2331, %v2332
  %v2334 = vrot.slane %v2333, 1
  %v2335 = vadd.f32 %v2333, %v2334
  %v2336 = vmul.f32 %v2335, 0.001953125
  %v2337 = vsub.f32 %v2287, %v2336
  %v2338 = vsub.f32 %v2290, %v2336
  %v2339 = vsub.f32 %v2293, %v2336
  %v2340 = vsub.f32 %v2296, %v2336
  %v2341 = vmul.f32 %v2337, %v2337
  %v2342 = vmul.f32 %v2338, %v2338
  %v2343 = vmul.f32 %v2339, %v2339
  %v2344 = vmul.f32 %v2340, %v2340
  %2345 = vmatpush.msra.mxu0 %v87
  %2346 = vmatpush.msra.mxu0 %v86
  %2347 = vmatpush.msra.mxu0 %v85
  %2348 = vmatpush.msra.mxu0 %v84
  %2349 = vmatpush.msra.mxu0 %v83
  %2350 = vmatpush.msra.mxu0 %v82
  %2351 = vmatpush.msra.mxu0 %v81
  %2352 = vmatpush.msra.mxu0 %v80
  %2353 = vmatpush.msra.mxu0 %v79
  %2354 = vmatpush.msra.mxu0 %v78
  %2355 = vmatpush.msra.mxu0 %v77
  %2356 = vmatpush.msra.mxu0 %v76
  %2357 = vmatpush.msra.mxu0 %v75
  %2358 = vmatpush.msra.mxu0 %v74
  %2359 = vmatpush.msra.mxu0 %v73
  %2360 = vmatpush.msra.mxu0 %v72
  %2361 = vmatmul.f32.gmra.mxu0 %v2341
  %v2362 = vpop.f32.mrf.mxu0
  %v2363 = vadd.f32 0.0, %v2362
  %2364 = vmatmul.f32.gmra.mxu0 %v2342
  %v2365 = vpop.f32.mrf.mxu0
  %v2366 = vadd.f32 0.0, %v2365
  %2367 = vmatmul.f32.gmra.mxu0 %v2343
  %v2368 = vpop.f32.mrf.mxu0
  %v2369 = vadd.f32 0.0, %v2368
  %2370 = vmatmul.f32.gmra.mxu0 %v2344
  %v2371 = vpop.f32.mrf.mxu0
  %v2372 = vadd.f32 0.0, %v2371
  %2373 = vdwg.mxu0
  %v2374 = vadd.f32 %v2363, %v2366
  %v2375 = vadd.f32 %v2374, %v2369
  %v2376 = vadd.f32 %v2375, %v2372
  %v2377 = vrot.slane %v2376, 4
  %v2378 = vadd.f32 %v2376, %v2377
  %v2379 = vrot.slane %v2378, 2
  %v2380 = vadd.f32 %v2378, %v2379
  %v2381 = vrot.slane %v2380, 1
  %v2382 = vadd.f32 %v2380, %v2381
  %v2383 = vmul.f32 %v2382, 0.001953125
  %v2384 = vadd.f32 %v2383, 1e-05
  %v2385 = vrsqrt.pop %v2384
  %v2386 = vmul.f32 %v2385, %v2384
  %v2387 = vmul.f32 %v2386, %v2385
  %v2388 = vmul.f32 0.5, %v2387
  %v2389 = vsub.f32 1.5, %v2388
  %v2390 = vmul.f32 %v2385, %v2389
  %vm2391 = vweird.f32 %v2384
  %vm2392 = vweird.f32 %v2385
  %vm2393 = vmor %vm2391, %vm2392
  %v2394 = vsel %vm2393, %v2385, %v2390
  %v2395 = vmul.f32 %v2337, %v2394
  %v2396 = vmul.f32 %v2338, %v2394
  %v2397 = vmul.f32 %v2339, %v2394
  %v2398 = vmul.f32 %v2340, %v2394
  %v2399 = vperm.slane %v1260, 0
  %v2400 = vmul.f32 %v2399, %v2395
  %v2401 = vmul.f32 %v2399, %v2396
  %v2402 = vmul.f32 %v2399, %v2397
  %v2403 = vmul.f32 %v2399, %v2398
  %v2404 = vadd.f32 %v1256, %v2400
  %v2405 = vadd.f32 %v1257, %v2401
  %v2406 = vadd.f32 %v1258, %v2402
  %v2407 = vadd.f32 %v1259, %v2403
  %v2408 = vld [vmem:[%s1 + $0x6] sm:$0x1]
  %vm2409 = vcmask 1042432
  %v2410 = vrot.slane %v88, 5
  %v2411 = vrot.slane %v89, 5
  %v2412 = vsel %vm2409, %v2410, %v2411
  %v2415 = vrot.slane %v90, 5
  %v2416 = vrot.slane %v91, 5
  %v2417 = vsel %vm2409, %v2415, %v2416
  %v2420 = vsel %vm2409, 0.0, %v2410
  %v2421 = vsel %vm2409, 0.0, %v2415
  %2422 = vrot.lane.b32.xlu0 %v2420, 24
  %v2423 = vpop.permute.xlu0 %2422
  %2424 = vrot.lane.b32.xlu0 %v2412, 24
  %v2425 = vpop.permute.xlu0 %2424
  %2426 = vrot.lane.b32.xlu0 %v2421, 24
  %v2427 = vpop.permute.xlu0 %2426
  %2428 = vrot.lane.b32.xlu0 %v2417, 24
  %v2429 = vpop.permute.xlu0 %2428
  %v2430 = vld [vmem:[%s6] sm:$0x1]
  %v2431 = vperm.slane %v2430, 0
  %v2432 = vmul.f32 %v2423, %v2431
  %v2433 = vmul.f32 %v2425, %v2431
  %v2434 = vmul.f32 %v2427, %v2431
  %v2435 = vmul.f32 %v2429, %v2431
  %2436 = vrot.lane.b32.xlu0 %v2420, 16
  %v2437 = vpop.permute.xlu0 %2436
  %2438 = vrot.lane.b32.xlu0 %v2412, 16
  %v2439 = vpop.permute.xlu0 %2438
  %2440 = vrot.lane.b32.xlu0 %v2421, 16
  %v2441 = vpop.permute.xlu0 %2440
  %2442 = vrot.lane.b32.xlu0 %v2417, 16
  %v2443 = vpop.permute.xlu0 %2442
  %v2444 = vld [vmem:[%s6 + $0x1] sm:$0x1]
  %v2445 = vperm.slane %v2444, 0
  %v2446 = vmul.f32 %v2437, %v2445
  %v2447 = vmul.f32 %v2439, %v2445
  %v2448 = vmul.f32 %v2441, %v2445
  %v2449 = vmul.f32 %v2443, %v2445
  %v2450 = vadd.f32 %v2432, %v2446
  %v2451 = vadd.f32 %v2433, %v2447
  %v2452 = vadd.f32 %v2434, %v2448
  %v2453 = vadd.f32 %v2435, %v2449
  %2454 = vrot.lane.b32.xlu0 %v2420, 8
  %v2455 = vpop.permute.xlu0 %2454
  %2456 = vrot.lane.b32.xlu0 %v2412, 8
  %v2457 = vpop.permute.xlu0 %2456
  %2458 = vrot.lane.b32.xlu0 %v2421, 8
  %v2459 = vpop.permute.xlu0 %2458
  %2460 = vrot.lane.b32.xlu0 %v2417, 8
  %v2461 = vpop.permute.xlu0 %2460
  %v2462 = vld [vmem:[%s6 + $0x2] sm:$0x1]
  %v2463 = vperm.slane %v2462, 0
  %v2464 = vmul.f32 %v2455, %v2463
  %v2465 = vmul.f32 %v2457, %v2463
  %v2466 = vmul.f32 %v2459, %v2463
  %v2467 = vmul.f32 %v2461, %v2463
  %v2468 = vadd.f32 %v2450, %v2464
  %v2469 = vadd.f32 %v2451, %v2465
  %v2470 = vadd.f32 %v2452, %v2466
  %v2471 = vadd.f32 %v2453, %v2467
  %v2472 = vld [vmem:[%s6 + $0x3] sm:$0x1]
  %v2473 = vperm.slane %v2472, 0
  %v2474 = vmul.f32 %v2420, %v2473
  %v2475 = vmul.f32 %v2412, %v2473
  %v2476 = vmul.f32 %v2421, %v2473
  %v2477 = vmul.f32 %v2417, %v2473
  %v2478 = vadd.f32 %v2468, %v2474
  %v2479 = vadd.f32 %v2469, %v2475
  %v2480 = vadd.f32 %v2470, %v2476
  %v2481 = vadd.f32 %v2471, %v2477
  %2482 = vrot.lane.b32.xlu0 %v2420, 120
  %v2483 = vpop.permute.xlu0 %2482
  %2484 = vrot.lane.b32.xlu0 %v2412, 120
  %v2485 = vpop.permute.xlu0 %2484
  %2486 = vrot.lane.b32.xlu0 %v2421, 120
  %v2487 = vpop.permute.xlu0 %2486
  %2488 = vrot.lane.b32.xlu0 %v2417, 120
  %v2489 = vpop.permute.xlu0 %2488
  %v2490 = vld [vmem:[%s6 + $0x4] sm:$0x1]
  %v2491 = vperm.slane %v2490, 0
  %v2492 = vmul.f32 %v2483, %v2491
  %v2493 = vmul.f32 %v2485, %v2491
  %v2494 = vmul.f32 %v2487, %v2491
  %v2495 = vmul.f32 %v2489, %v2491
  %v2496 = vadd.f32 %v2478, %v2492
  %v2497 = vadd.f32 %v2479, %v2493
  %v2498 = vadd.f32 %v2480, %v2494
  %v2499 = vadd.f32 %v2481, %v2495
  %2500 = vrot.lane.b32.xlu0 %v2420, 112
  %v2501 = vpop.permute.xlu0 %2500
  %2502 = vrot.lane.b32.xlu0 %v2412, 112
  %v2503 = vpop.permute.xlu0 %2502
  %2504 = vrot.lane.b32.xlu0 %v2421, 112
  %v2505 = vpop.permute.xlu0 %2504
  %2506 = vrot.lane.b32.xlu0 %v2417, 112
  %v2507 = vpop.permute.xlu0 %2506
  %v2508 = vld [vmem:[%s6 + $0x5] sm:$0x1]
  %v2509 = vperm.slane %v2508, 0
  %v2510 = vmul.f32 %v2501, %v2509
  %v2511 = vmul.f32 %v2503, %v2509
  %v2512 = vmul.f32 %v2505, %v2509
  %v2513 = vmul.f32 %v2507, %v2509
  %v2514 = vadd.f32 %v2496, %v2510
  %v2515 = vadd.f32 %v2497, %v2511
  %v2516 = vadd.f32 %v2498, %v2512
  %v2517 = vadd.f32 %v2499, %v2513
  %2518 = vrot.lane.b32.xlu0 %v2420, 104
  %v2519 = vpop.permute.xlu0 %2518
  %2520 = vrot.lane.b32.xlu0 %v2412, 104
  %v2521 = vpop.permute.xlu0 %2520
  %2522 = vrot.lane.b32.xlu0 %v2421, 104
  %v2523 = vpop.permute.xlu0 %2522
  %2524 = vrot.lane.b32.xlu0 %v2417, 104
  %v2525 = vpop.permute.xlu0 %2524
  %v2526 = vld [vmem:[%s6 + $0x6] sm:$0x1]
  %v2527 = vperm.slane %v2526, 0
  %v2528 = vmul.f32 %v2519, %v2527
  %v2529 = vmul.f32 %v2521, %v2527
  %v2530 = vmul.f32 %v2523, %v2527
  %v2531 = vmul.f32 %v2525, %v2527
  %v2532 = vadd.f32 %v2514, %v2528
  %v2533 = vadd.f32 %v2515, %v2529
  %v2534 = vadd.f32 %v2516, %v2530
  %v2535 = vadd.f32 %v2517, %v2531
  %2536 = vrot.lane.b32.xlu0 %v1272, 24
  %v2537 = vpop.permute.xlu0 %2536
  %2538 = vrot.lane.b32.xlu0 %v1264, 24
  %v2539 = vpop.permute.xlu0 %2538
  %2540 = vrot.lane.b32.xlu0 %v1273, 24
  %v2541 = vpop.permute.xlu0 %2540
  %2542 = vrot.lane.b32.xlu0 %v1269, 24
  %v2543 = vpop.permute.xlu0 %2542
  %v2544 = vld [vmem:[%s6 + $0x7] sm:$0x1]
  %v2545 = vperm.slane %v2544, 0
  %v2546 = vmul.f32 %v2537, %v2545
  %v2547 = vmul.f32 %v2539, %v2545
  %v2548 = vmul.f32 %v2541, %v2545
  %v2549 = vmul.f32 %v2543, %v2545
  %v2550 = vadd.f32 %v2532, %v2546
  %v2551 = vadd.f32 %v2533, %v2547
  %v2552 = vadd.f32 %v2534, %v2548
  %v2553 = vadd.f32 %v2535, %v2549
  %v2554 = vld [vmem:[%s6 + $0x8] sm:$0x1]
  %v2555 = vperm.slane %v2554, 0
  %v2556 = vmul.f32 %v1275, %v2555
  %v2557 = vmul.f32 %v1277, %v2555
  %v2558 = vmul.f32 %v1279, %v2555
  %v2559 = vmul.f32 %v1281, %v2555
  %v2560 = vadd.f32 %v2550, %v2556
  %v2561 = vadd.f32 %v2551, %v2557
  %v2562 = vadd.f32 %v2552, %v2558
  %v2563 = vadd.f32 %v2553, %v2559
  %v2564 = vld [vmem:[%s6 + $0x9] sm:$0x1]
  %v2565 = vperm.slane %v2564, 0
  %v2566 = vmul.f32 %v1289, %v2565
  %v2567 = vmul.f32 %v1291, %v2565
  %v2568 = vmul.f32 %v1293, %v2565
  %v2569 = vmul.f32 %v1295, %v2565
  %v2570 = vadd.f32 %v2560, %v2566
  %v2571 = vadd.f32 %v2561, %v2567
  %v2572 = vadd.f32 %v2562, %v2568
  %v2573 = vadd.f32 %v2563, %v2569
  %v2574 = vld [vmem:[%s6 + $0xa] sm:$0x1]
  %v2575 = vperm.slane %v2574, 0
  %v2576 = vmul.f32 %v1272, %v2575
  %v2577 = vmul.f32 %v1264, %v2575
  %v2578 = vmul.f32 %v1273, %v2575
  %v2579 = vmul.f32 %v1269, %v2575
  %v2580 = vadd.f32 %v2570, %v2576
  %v2581 = vadd.f32 %v2571, %v2577
  %v2582 = vadd.f32 %v2572, %v2578
  %v2583 = vadd.f32 %v2573, %v2579
  %v2584 = vld [vmem:[%s6 + $0xb] sm:$0x1]
  %v2585 = vperm.slane %v2584, 0
  %v2586 = vmul.f32 %v1317, %v2585
  %v2587 = vmul.f32 %v1319, %v2585
  %v2588 = vmul.f32 %v1321, %v2585
  %v2589 = vmul.f32 %v1323, %v2585
  %v2590 = vadd.f32 %v2580, %v2586
  %v2591 = vadd.f32 %v2581, %v2587
  %v2592 = vadd.f32 %v2582, %v2588
  %v2593 = vadd.f32 %v2583, %v2589
  %v2594 = vld [vmem:[%s6 + $0xc] sm:$0x1]
  %v2595 = vperm.slane %v2594, 0
  %v2596 = vmul.f32 %v1335, %v2595
  %v2597 = vmul.f32 %v1337, %v2595
  %v2598 = vmul.f32 %v1339, %v2595
  %v2599 = vmul.f32 %v1341, %v2595
  %v2600 = vadd.f32 %v2590, %v2596
  %v2601 = vadd.f32 %v2591, %v2597
  %v2602 = vadd.f32 %v2592, %v2598
  %v2603 = vadd.f32 %v2593, %v2599
  %2604 = vrot.lane.b32.xlu0 %v1272, 104
  %v2605 = vpop.permute.xlu0 %2604
  %2606 = vrot.lane.b32.xlu0 %v1264, 104
  %v2607 = vpop.permute.xlu0 %2606
  %2608 = vrot.lane.b32.xlu0 %v1273, 104
  %v2609 = vpop.permute.xlu0 %2608
  %2610 = vrot.lane.b32.xlu0 %v1269, 104
  %v2611 = vpop.permute.xlu0 %2610
  %v2612 = vld [vmem:[%s6 + $0xd] sm:$0x1]
  %v2613 = vperm.slane %v2612, 0
  %v2614 = vmul.f32 %v2605, %v2613
  %v2615 = vmul.f32 %v2607, %v2613
  %v2616 = vmul.f32 %v2609, %v2613
  %v2617 = vmul.f32 %v2611, %v2613
  %v2618 = vadd.f32 %v2600, %v2614
  %v2619 = vadd.f32 %v2601, %v2615
  %v2620 = vadd.f32 %v2602, %v2616
  %v2621 = vadd.f32 %v2603, %v2617
  %2622 = vrot.lane.b32.xlu0 %v645, 24
  %v2623 = vpop.permute.xlu0 %2622
  %2624 = vrot.lane.b32.xlu0 %v635, 24
  %v2625 = vpop.permute.xlu0 %2624
  %2626 = vrot.lane.b32.xlu0 %v646, 24
  %v2627 = vpop.permute.xlu0 %2626
  %2628 = vrot.lane.b32.xlu0 %v642, 24
  %v2629 = vpop.permute.xlu0 %2628
  %v2630 = vld [vmem:[%s6 + $0xe] sm:$0x1]
  %v2631 = vperm.slane %v2630, 0
  %v2632 = vmul.f32 %v2623, %v2631
  %v2633 = vmul.f32 %v2625, %v2631
  %v2634 = vmul.f32 %v2627, %v2631
  %v2635 = vmul.f32 %v2629, %v2631
  %v2636 = vadd.f32 %v2618, %v2632
  %v2637 = vadd.f32 %v2619, %v2633
  %v2638 = vadd.f32 %v2620, %v2634
  %v2639 = vadd.f32 %v2621, %v2635
  %v2640 = vld [vmem:[%s6 + $0xf] sm:$0x1]
  %v2641 = vperm.slane %v2640, 0
  %v2642 = vmul.f32 %v1353, %v2641
  %v2643 = vmul.f32 %v1355, %v2641
  %v2644 = vmul.f32 %v1357, %v2641
  %v2645 = vmul.f32 %v1359, %v2641
  %v2646 = vadd.f32 %v2636, %v2642
  %v2647 = vadd.f32 %v2637, %v2643
  %v2648 = vadd.f32 %v2638, %v2644
  %v2649 = vadd.f32 %v2639, %v2645
  %v2650 = vld [vmem:[%s6 + $0x10] sm:$0x1]
  %v2651 = vperm.slane %v2650, 0
  %v2652 = vmul.f32 %v648, %v2651
  %v2653 = vmul.f32 %v650, %v2651
  %v2654 = vmul.f32 %v652, %v2651
  %v2655 = vmul.f32 %v654, %v2651
  %v2656 = vadd.f32 %v2646, %v2652
  %v2657 = vadd.f32 %v2647, %v2653
  %v2658 = vadd.f32 %v2648, %v2654
  %v2659 = vadd.f32 %v2649, %v2655
  %v2660 = vld [vmem:[%s6 + $0x11] sm:$0x1]
  %v2661 = vperm.slane %v2660, 0
  %v2662 = vmul.f32 %v645, %v2661
  %v2663 = vmul.f32 %v635, %v2661
  %v2664 = vmul.f32 %v646, %v2661
  %v2665 = vmul.f32 %v642, %v2661
  %v2666 = vadd.f32 %v2656, %v2662
  %v2667 = vadd.f32 %v2657, %v2663
  %v2668 = vadd.f32 %v2658, %v2664
  %v2669 = vadd.f32 %v2659, %v2665
  %v2670 = vld [vmem:[%s6 + $0x12] sm:$0x1]
  %v2671 = vperm.slane %v2670, 0
  %v2672 = vmul.f32 %v672, %v2671
  %v2673 = vmul.f32 %v674, %v2671
  %v2674 = vmul.f32 %v676, %v2671
  %v2675 = vmul.f32 %v678, %v2671
  %v2676 = vadd.f32 %v2666, %v2672
  %v2677 = vadd.f32 %v2667, %v2673
  %v2678 = vadd.f32 %v2668, %v2674
  %v2679 = vadd.f32 %v2669, %v2675
  %v2680 = vld [vmem:[%s6 + $0x13] sm:$0x1]
  %v2681 = vperm.slane %v2680, 0
  %v2682 = vmul.f32 %v1401, %v2681
  %v2683 = vmul.f32 %v1403, %v2681
  %v2684 = vmul.f32 %v1405, %v2681
  %v2685 = vmul.f32 %v1407, %v2681
  %v2686 = vadd.f32 %v2676, %v2682
  %v2687 = vadd.f32 %v2677, %v2683
  %v2688 = vadd.f32 %v2678, %v2684
  %v2689 = vadd.f32 %v2679, %v2685
  %2690 = vrot.lane.b32.xlu0 %v645, 104
  %v2691 = vpop.permute.xlu0 %2690
  %2692 = vrot.lane.b32.xlu0 %v635, 104
  %v2693 = vpop.permute.xlu0 %2692
  %2694 = vrot.lane.b32.xlu0 %v646, 104
  %v2695 = vpop.permute.xlu0 %2694
  %2696 = vrot.lane.b32.xlu0 %v642, 104
  %v2697 = vpop.permute.xlu0 %2696
  %v2698 = vld [vmem:[%s6 + $0x14] sm:$0x1]
  %v2699 = vperm.slane %v2698, 0
  %v2700 = vmul.f32 %v2691, %v2699
  %v2701 = vmul.f32 %v2693, %v2699
  %v2702 = vmul.f32 %v2695, %v2699
  %v2703 = vmul.f32 %v2697, %v2699
  %v2704 = vadd.f32 %v2686, %v2700
  %v2705 = vadd.f32 %v2687, %v2701
  %v2706 = vadd.f32 %v2688, %v2702
  %v2707 = vadd.f32 %v2689, %v2703
  %2708 = vrot.lane.b32.xlu0 %v88, 24
  %v2709 = vpop.permute.xlu0 %2708
  %2710 = vrot.lane.b32.xlu0 %v89, 24
  %v2711 = vpop.permute.xlu0 %2710
  %2712 = vrot.lane.b32.xlu0 %v90, 24
  %v2713 = vpop.permute.xlu0 %2712
  %2714 = vrot.lane.b32.xlu0 %v91, 24
  %v2715 = vpop.permute.xlu0 %2714
  %v2716 = vld [vmem:[%s6 + $0x15] sm:$0x1]
  %v2717 = vperm.slane %v2716, 0
  %v2718 = vmul.f32 %v2709, %v2717
  %v2719 = vmul.f32 %v2711, %v2717
  %v2720 = vmul.f32 %v2713, %v2717
  %v2721 = vmul.f32 %v2715, %v2717
  %v2722 = vadd.f32 %v2704, %v2718
  %v2723 = vadd.f32 %v2705, %v2719
  %v2724 = vadd.f32 %v2706, %v2720
  %v2725 = vadd.f32 %v2707, %v2721
  %v2726 = vld [vmem:[%s6 + $0x16] sm:$0x1]
  %v2727 = vperm.slane %v2726, 0
  %v2728 = vmul.f32 %v1419, %v2727
  %v2729 = vmul.f32 %v1421, %v2727
  %v2730 = vmul.f32 %v1423, %v2727
  %v2731 = vmul.f32 %v1425, %v2727
  %v2732 = vadd.f32 %v2722, %v2728
  %v2733 = vadd.f32 %v2723, %v2729
  %v2734 = vadd.f32 %v2724, %v2730
  %v2735 = vadd.f32 %v2725, %v2731
  %v2736 = vld [vmem:[%s6 + $0x17] sm:$0x1]
  %v2737 = vperm.slane %v2736, 0
  %v2738 = vmul.f32 %v690, %v2737
  %v2739 = vmul.f32 %v692, %v2737
  %v2740 = vmul.f32 %v694, %v2737
  %v2741 = vmul.f32 %v696, %v2737
  %v2742 = vadd.f32 %v2732, %v2738
  %v2743 = vadd.f32 %v2733, %v2739
  %v2744 = vadd.f32 %v2734, %v2740
  %v2745 = vadd.f32 %v2735, %v2741
  %v2746 = vld [vmem:[%s6 + $0x18] sm:$0x1]
  %v2747 = vperm.slane %v2746, 0
  %v2748 = vmul.f32 %v88, %v2747
  %v2749 = vmul.f32 %v89, %v2747
  %v2750 = vmul.f32 %v90, %v2747
  %v2751 = vmul.f32 %v91, %v2747
  %v2752 = vadd.f32 %v2742, %v2748
  %v2753 = vadd.f32 %v2743, %v2749
  %v2754 = vadd.f32 %v2744, %v2750
  %v2755 = vadd.f32 %v2745, %v2751
  %v2756 = vld [vmem:[%s6 + $0x19] sm:$0x1]
  %v2757 = vperm.slane %v2756, 0
  %v2758 = vmul.f32 %v718, %v2757
  %v2759 = vmul.f32 %v720, %v2757
  %v2760 = vmul.f32 %v722, %v2757
  %v2761 = vmul.f32 %v724, %v2757
  %v2762 = vadd.f32 %v2752, %v2758
  %v2763 = vadd.f32 %v2753, %v2759
  %v2764 = vadd.f32 %v2754, %v2760
  %v2765 = vadd.f32 %v2755, %v2761
  %v2766 = vld [vmem:[%s6 + $0x1a] sm:$0x1]
  %v2767 = vperm.slane %v2766, 0
  %v2768 = vmul.f32 %v1467, %v2767
  %v2769 = vmul.f32 %v1469, %v2767
  %v2770 = vmul.f32 %v1471, %v2767
  %v2771 = vmul.f32 %v1473, %v2767
  %v2772 = vadd.f32 %v2762, %v2768
  %v2773 = vadd.f32 %v2763, %v2769
  %v2774 = vadd.f32 %v2764, %v2770
  %v2775 = vadd.f32 %v2765, %v2771
  %2776 = vrot.lane.b32.xlu0 %v88, 104
  %v2777 = vpop.permute.xlu0 %2776
  %2778 = vrot.lane.b32.xlu0 %v89, 104
  %v2779 = vpop.permute.xlu0 %2778
  %2780 = vrot.lane.b32.xlu0 %v90, 104
  %v2781 = vpop.permute.xlu0 %2780
  %2782 = vrot.lane.b32.xlu0 %v91, 104
  %v2783 = vpop.permute.xlu0 %2782
  %v2784 = vld [vmem:[%s6 + $0x1b] sm:$0x1]
  %v2785 = vperm.slane %v2784, 0
  %v2786 = vmul.f32 %v2777, %v2785
  %v2787 = vmul.f32 %v2779, %v2785
  %v2788 = vmul.f32 %v2781, %v2785
  %v2789 = vmul.f32 %v2783, %v2785
  %v2790 = vadd.f32 %v2772, %v2786
  %v2791 = vadd.f32 %v2773, %v2787
  %v2792 = vadd.f32 %v2774, %v2788
  %v2793 = vadd.f32 %v2775, %v2789
  %2794 = vrot.lane.b32.xlu0 %v737, 24
  %v2795 = vpop.permute.xlu0 %2794
  %2796 = vrot.lane.b32.xlu0 %v745, 24
  %v2797 = vpop.permute.xlu0 %2796
  %2798 = vrot.lane.b32.xlu0 %v742, 24
  %v2799 = vpop.permute.xlu0 %2798
  %2800 = vrot.lane.b32.xlu0 %v746, 24
  %v2801 = vpop.permute.xlu0 %2800
  %v2802 = vld [vmem:[%s6 + $0x1c] sm:$0x1]
  %v2803 = vperm.slane %v2802, 0
  %v2804 = vmul.f32 %v2795, %v2803
  %v2805 = vmul.f32 %v2797, %v2803
  %v2806 = vmul.f32 %v2799, %v2803
  %v2807 = vmul.f32 %v2801, %v2803
  %v2808 = vadd.f32 %v2790, %v2804
  %v2809 = vadd.f32 %v2791, %v2805
  %v2810 = vadd.f32 %v2792, %v2806
  %v2811 = vadd.f32 %v2793, %v2807
  %v2812 = vld [vmem:[%s6 + $0x1d] sm:$0x1]
  %v2813 = vperm.slane %v2812, 0
  %v2814 = vmul.f32 %v1485, %v2813
  %v2815 = vmul.f32 %v1487, %v2813
  %v2816 = vmul.f32 %v1489, %v2813
  %v2817 = vmul.f32 %v1491, %v2813
  %v2818 = vadd.f32 %v2808, %v2814
  %v2819 = vadd.f32 %v2809, %v2815
  %v2820 = vadd.f32 %v2810, %v2816
  %v2821 = vadd.f32 %v2811, %v2817
  %v2822 = vld [vmem:[%s6 + $0x1e] sm:$0x1]
  %v2823 = vperm.slane %v2822, 0
  %v2824 = vmul.f32 %v748, %v2823
  %v2825 = vmul.f32 %v750, %v2823
  %v2826 = vmul.f32 %v752, %v2823
  %v2827 = vmul.f32 %v754, %v2823
  %v2828 = vadd.f32 %v2818, %v2824
  %v2829 = vadd.f32 %v2819, %v2825
  %v2830 = vadd.f32 %v2820, %v2826
  %v2831 = vadd.f32 %v2821, %v2827
  %v2832 = vld [vmem:[%s6 + $0x1f] sm:$0x1]
  %v2833 = vperm.slane %v2832, 0
  %v2834 = vmul.f32 %v737, %v2833
  %v2835 = vmul.f32 %v745, %v2833
  %v2836 = vmul.f32 %v742, %v2833
  %v2837 = vmul.f32 %v746, %v2833
  %v2838 = vadd.f32 %v2828, %v2834
  %v2839 = vadd.f32 %v2829, %v2835
  %v2840 = vadd.f32 %v2830, %v2836
  %v2841 = vadd.f32 %v2831, %v2837
  %v2842 = vld [vmem:[%s6 + $0x20] sm:$0x1]
  %v2843 = vperm.slane %v2842, 0
  %v2844 = vmul.f32 %v776, %v2843
  %v2845 = vmul.f32 %v778, %v2843
  %v2846 = vmul.f32 %v780, %v2843
  %v2847 = vmul.f32 %v782, %v2843
  %v2848 = vadd.f32 %v2838, %v2844
  %v2849 = vadd.f32 %v2839, %v2845
  %v2850 = vadd.f32 %v2840, %v2846
  %v2851 = vadd.f32 %v2841, %v2847
  %v2852 = vld [vmem:[%s6 + $0x21] sm:$0x1]
  %v2853 = vperm.slane %v2852, 0
  %v2854 = vmul.f32 %v1533, %v2853
  %v2855 = vmul.f32 %v1535, %v2853
  %v2856 = vmul.f32 %v1537, %v2853
  %v2857 = vmul.f32 %v1539, %v2853
  %v2858 = vadd.f32 %v2848, %v2854
  %v2859 = vadd.f32 %v2849, %v2855
  %v2860 = vadd.f32 %v2850, %v2856
  %v2861 = vadd.f32 %v2851, %v2857
  %2862 = vrot.lane.b32.xlu0 %v737, 104
  %v2863 = vpop.permute.xlu0 %2862
  %2864 = vrot.lane.b32.xlu0 %v745, 104
  %v2865 = vpop.permute.xlu0 %2864
  %2866 = vrot.lane.b32.xlu0 %v742, 104
  %v2867 = vpop.permute.xlu0 %2866
  %2868 = vrot.lane.b32.xlu0 %v746, 104
  %v2869 = vpop.permute.xlu0 %2868
  %v2870 = vld [vmem:[%s6 + $0x22] sm:$0x1]
  %v2871 = vperm.slane %v2870, 0
  %v2872 = vmul.f32 %v2863, %v2871
  %v2873 = vmul.f32 %v2865, %v2871
  %v2874 = vmul.f32 %v2867, %v2871
  %v2875 = vmul.f32 %v2869, %v2871
  %v2876 = vadd.f32 %v2858, %v2872
  %v2877 = vadd.f32 %v2859, %v2873
  %v2878 = vadd.f32 %v2860, %v2874
  %v2879 = vadd.f32 %v2861, %v2875
  %2880 = vrot.lane.b32.xlu0 %v1553, 24
  %v2881 = vpop.permute.xlu0 %2880
  %2882 = vrot.lane.b32.xlu0 %v1561, 24
  %v2883 = vpop.permute.xlu0 %2882
  %2884 = vrot.lane.b32.xlu0 %v1558, 24
  %v2885 = vpop.permute.xlu0 %2884
  %2886 = vrot.lane.b32.xlu0 %v1562, 24
  %v2887 = vpop.permute.xlu0 %2886
  %v2888 = vld [vmem:[%s6 + $0x23] sm:$0x1]
  %v2889 = vperm.slane %v2888, 0
  %v2890 = vmul.f32 %v2881, %v2889
  %v2891 = vmul.f32 %v2883, %v2889
  %v2892 = vmul.f32 %v2885, %v2889
  %v2893 = vmul.f32 %v2887, %v2889
  %v2894 = vadd.f32 %v2876, %v2890
  %v2895 = vadd.f32 %v2877, %v2891
  %v2896 = vadd.f32 %v2878, %v2892
  %v2897 = vadd.f32 %v2879, %v2893
  %v2898 = vld [vmem:[%s6 + $0x24] sm:$0x1]
  %v2899 = vperm.slane %v2898, 0
  %v2900 = vmul.f32 %v1564, %v2899
  %v2901 = vmul.f32 %v1566, %v2899
  %v2902 = vmul.f32 %v1568, %v2899
  %v2903 = vmul.f32 %v1570, %v2899
  %v2904 = vadd.f32 %v2894, %v2900
  %v2905 = vadd.f32 %v2895, %v2901
  %v2906 = vadd.f32 %v2896, %v2902
  %v2907 = vadd.f32 %v2897, %v2903
  %v2908 = vld [vmem:[%s6 + $0x25] sm:$0x1]
  %v2909 = vperm.slane %v2908, 0
  %v2910 = vmul.f32 %v1582, %v2909
  %v2911 = vmul.f32 %v1584, %v2909
  %v2912 = vmul.f32 %v1586, %v2909
  %v2913 = vmul.f32 %v1588, %v2909
  %v2914 = vadd.f32 %v2904, %v2910
  %v2915 = vadd.f32 %v2905, %v2911
  %v2916 = vadd.f32 %v2906, %v2912
  %v2917 = vadd.f32 %v2907, %v2913
  %v2918 = vld [vmem:[%s6 + $0x26] sm:$0x1]
  %v2919 = vperm.slane %v2918, 0
  %v2920 = vmul.f32 %v1553, %v2919
  %v2921 = vmul.f32 %v1561, %v2919
  %v2922 = vmul.f32 %v1558, %v2919
  %v2923 = vmul.f32 %v1562, %v2919
  %v2924 = vadd.f32 %v2914, %v2920
  %v2925 = vadd.f32 %v2915, %v2921
  %v2926 = vadd.f32 %v2916, %v2922
  %v2927 = vadd.f32 %v2917, %v2923
  %v2928 = vld [vmem:[%s6 + $0x27] sm:$0x1]
  %v2929 = vperm.slane %v2928, 0
  %v2930 = vmul.f32 %v1610, %v2929
  %v2931 = vmul.f32 %v1612, %v2929
  %v2932 = vmul.f32 %v1614, %v2929
  %v2933 = vmul.f32 %v1616, %v2929
  %v2934 = vadd.f32 %v2924, %v2930
  %v2935 = vadd.f32 %v2925, %v2931
  %v2936 = vadd.f32 %v2926, %v2932
  %v2937 = vadd.f32 %v2927, %v2933
  %v2938 = vld [vmem:[%s6 + $0x28] sm:$0x1]
  %v2939 = vperm.slane %v2938, 0
  %v2940 = vmul.f32 %v1628, %v2939
  %v2941 = vmul.f32 %v1630, %v2939
  %v2942 = vmul.f32 %v1632, %v2939
  %v2943 = vmul.f32 %v1634, %v2939
  %v2944 = vadd.f32 %v2934, %v2940
  %v2945 = vadd.f32 %v2935, %v2941
  %v2946 = vadd.f32 %v2936, %v2942
  %v2947 = vadd.f32 %v2937, %v2943
  %2948 = vrot.lane.b32.xlu0 %v1553, 104
  %v2949 = vpop.permute.xlu0 %2948
  %2950 = vrot.lane.b32.xlu0 %v1561, 104
  %v2951 = vpop.permute.xlu0 %2950
  %2952 = vrot.lane.b32.xlu0 %v1558, 104
  %v2953 = vpop.permute.xlu0 %2952
  %2954 = vrot.lane.b32.xlu0 %v1562, 104
  %v2955 = vpop.permute.xlu0 %2954
  %v2956 = vld [vmem:[%s6 + $0x29] sm:$0x1]
  %v2957 = vperm.slane %v2956, 0
  %v2958 = vmul.f32 %v2949, %v2957
  %v2959 = vmul.f32 %v2951, %v2957
  %v2960 = vmul.f32 %v2953, %v2957
  %v2961 = vmul.f32 %v2955, %v2957
  %v2962 = vadd.f32 %v2944, %v2958
  %v2963 = vadd.f32 %v2945, %v2959
  %v2964 = vadd.f32 %v2946, %v2960
  %v2965 = vadd.f32 %v2947, %v2961
  %vm2966 = vcmask 1044480
  %v2967 = vrot.slane %v88, 3
  %v2968 = vrot.slane %v89, 3
  %v2969 = vsel %vm2966, %v2967, %v2968
  %v2972 = vrot.slane %v90, 3
  %v2973 = vrot.slane %v91, 3
  %v2974 = vsel %vm2966, %v2972, %v2973
  %v2977 = vsel %vm2966, %v2968, 0.0
  %v2978 = vsel %vm2966, %v2973, 0.0
  %2979 = vrot.lane.b32.xlu0 %v2969, 24
  %v2980 = vpop.permute.xlu0 %2979
  %2981 = vrot.lane.b32.xlu0 %v2977, 24
  %v2982 = vpop.permute.xlu0 %2981
  %2983 = vrot.lane.b32.xlu0 %v2974, 24
  %v2984 = vpop.permute.xlu0 %2983
  %2985 = vrot.lane.b32.xlu0 %v2978, 24
  %v2986 = vpop.permute.xlu0 %2985
  %v2987 = vld [vmem:[%s6 + $0x2a] sm:$0x1]
  %v2988 = vperm.slane %v2987, 0
  %v2989 = vmul.f32 %v2980, %v2988
  %v2990 = vmul.f32 %v2982, %v2988
  %v2991 = vmul.f32 %v2984, %v2988
  %v2992 = vmul.f32 %v2986, %v2988
  %v2993 = vadd.f32 %v2962, %v2989
  %v2994 = vadd.f32 %v2963, %v2990
  %v2995 = vadd.f32 %v2964, %v2991
  %v2996 = vadd.f32 %v2965, %v2992
  %2997 = vrot.lane.b32.xlu0 %v2969, 16
  %v2998 = vpop.permute.xlu0 %2997
  %2999 = vrot.lane.b32.xlu0 %v2977, 16
  %v3000 = vpop.permute.xlu0 %2999
  %3001 = vrot.lane.b32.xlu0 %v2974, 16
  %v3002 = vpop.permute.xlu0 %3001
  %3003 = vrot.lane.b32.xlu0 %v2978, 16
  %v3004 = vpop.permute.xlu0 %3003
  %v3005 = vld [vmem:[%s6 + $0x2b] sm:$0x1]
  %v3006 = vperm.slane %v3005, 0
  %v3007 = vmul.f32 %v2998, %v3006
  %v3008 = vmul.f32 %v3000, %v3006
  %v3009 = vmul.f32 %v3002, %v3006
  %v3010 = vmul.f32 %v3004, %v3006
  %v3011 = vadd.f32 %v2993, %v3007
  %v3012 = vadd.f32 %v2994, %v3008
  %v3013 = vadd.f32 %v2995, %v3009
  %v3014 = vadd.f32 %v2996, %v3010
  %3015 = vrot.lane.b32.xlu0 %v2969, 8
  %v3016 = vpop.permute.xlu0 %3015
  %3017 = vrot.lane.b32.xlu0 %v2977, 8
  %v3018 = vpop.permute.xlu0 %3017
  %3019 = vrot.lane.b32.xlu0 %v2974, 8
  %v3020 = vpop.permute.xlu0 %3019
  %3021 = vrot.lane.b32.xlu0 %v2978, 8
  %v3022 = vpop.permute.xlu0 %3021
  %v3023 = vld [vmem:[%s6 + $0x2c] sm:$0x1]
  %v3024 = vperm.slane %v3023, 0
  %v3025 = vmul.f32 %v3016, %v3024
  %v3026 = vmul.f32 %v3018, %v3024
  %v3027 = vmul.f32 %v3020, %v3024
  %v3028 = vmul.f32 %v3022, %v3024
  %v3029 = vadd.f32 %v3011, %v3025
  %v3030 = vadd.f32 %v3012, %v3026
  %v3031 = vadd.f32 %v3013, %v3027
  %v3032 = vadd.f32 %v3014, %v3028
  %v3033 = vld [vmem:[%s6 + $0x2d] sm:$0x1]
  %v3034 = vperm.slane %v3033, 0
  %v3035 = vmul.f32 %v2969, %v3034
  %v3036 = vmul.f32 %v2977, %v3034
  %v3037 = vmul.f32 %v2974, %v3034
  %v3038 = vmul.f32 %v2978, %v3034
  %v3039 = vadd.f32 %v3029, %v3035
  %v3040 = vadd.f32 %v3030, %v3036
  %v3041 = vadd.f32 %v3031, %v3037
  %v3042 = vadd.f32 %v3032, %v3038
  %3043 = vrot.lane.b32.xlu0 %v2969, 120
  %v3044 = vpop.permute.xlu0 %3043
  %3045 = vrot.lane.b32.xlu0 %v2977, 120
  %v3046 = vpop.permute.xlu0 %3045
  %3047 = vrot.lane.b32.xlu0 %v2974, 120
  %v3048 = vpop.permute.xlu0 %3047
  %3049 = vrot.lane.b32.xlu0 %v2978, 120
  %v3050 = vpop.permute.xlu0 %3049
  %v3051 = vld [vmem:[%s6 + $0x2e] sm:$0x1]
  %v3052 = vperm.slane %v3051, 0
  %v3053 = vmul.f32 %v3044, %v3052
  %v3054 = vmul.f32 %v3046, %v3052
  %v3055 = vmul.f32 %v3048, %v3052
  %v3056 = vmul.f32 %v3050, %v3052
  %v3057 = vadd.f32 %v3039, %v3053
  %v3058 = vadd.f32 %v3040, %v3054
  %v3059 = vadd.f32 %v3041, %v3055
  %v3060 = vadd.f32 %v3042, %v3056
  %3061 = vrot.lane.b32.xlu0 %v2969, 112
  %v3062 = vpop.permute.xlu0 %3061
  %3063 = vrot.lane.b32.xlu0 %v2977, 112
  %v3064 = vpop.permute.xlu0 %3063
  %3065 = vrot.lane.b32.xlu0 %v2974, 112
  %v3066 = vpop.permute.xlu0 %3065
  %3067 = vrot.lane.b32.xlu0 %v2978, 112
  %v3068 = vpop.permute.xlu0 %3067
  %v3069 = vld [vmem:[%s6 + $0x2f] sm:$0x1]
  %v3070 = vperm.slane %v3069, 0
  %v3071 = vmul.f32 %v3062, %v3070
  %v3072 = vmul.f32 %v3064, %v3070
  %v3073 = vmul.f32 %v3066, %v3070
  %v3074 = vmul.f32 %v3068, %v3070
  %v3075 = vadd.f32 %v3057, %v3071
  %v3076 = vadd.f32 %v3058, %v3072
  %v3077 = vadd.f32 %v3059, %v3073
  %v3078 = vadd.f32 %v3060, %v3074
  %3079 = vrot.lane.b32.xlu0 %v2969, 104
  %v3080 = vpop.permute.xlu0 %3079
  %3081 = vrot.lane.b32.xlu0 %v2977, 104
  %v3082 = vpop.permute.xlu0 %3081
  %3083 = vrot.lane.b32.xlu0 %v2974, 104
  %v3084 = vpop.permute.xlu0 %3083
  %3085 = vrot.lane.b32.xlu0 %v2978, 104
  %v3086 = vpop.permute.xlu0 %3085
  %v3087 = vld [vmem:[%s6 + $0x30] sm:$0x1]
  %v3088 = vperm.slane %v3087, 0
  %v3089 = vmul.f32 %v3080, %v3088
  %v3090 = vmul.f32 %v3082, %v3088
  %v3091 = vmul.f32 %v3084, %v3088
  %v3092 = vmul.f32 %v3086, %v3088
  %v3093 = vadd.f32 %v3075, %v3089
  %v3094 = vadd.f32 %v3076, %v3090
  %v3095 = vadd.f32 %v3077, %v3091
  %v3096 = vadd.f32 %v3078, %v3092
  %v3097 = vld [vmem:[%s14] sm:$0xff]
  %v3098 = vld [vmem:[%s14 + $0x8] sm:$0xff]
  %v3099 = vld [vmem:[%s14 + $0x10] sm:$0xff]
  %v3100 = vld [vmem:[%s14 + $0x18] sm:$0xff]
  %v3101 = vld [vmem:[%s14 + $0x20] sm:$0xff]
  %v3102 = vld [vmem:[%s14 + $0x28] sm:$0xff]
  %v3103 = vld [vmem:[%s14 + $0x30] sm:$0xff]
  %v3104 = vld [vmem:[%s14 + $0x38] sm:$0xff]
  %v3105 = vld [vmem:[%s14 + $0x40] sm:$0xff]
  %v3106 = vld [vmem:[%s14 + $0x48] sm:$0xff]
  %v3107 = vld [vmem:[%s14 + $0x50] sm:$0xff]
  %v3108 = vld [vmem:[%s14 + $0x58] sm:$0xff]
  %v3109 = vld [vmem:[%s14 + $0x60] sm:$0xff]
  %v3110 = vld [vmem:[%s14 + $0x68] sm:$0xff]
  %v3111 = vld [vmem:[%s14 + $0x70] sm:$0xff]
  %v3112 = vld [vmem:[%s14 + $0x78] sm:$0xff]
  %3113 = vmatpush.msra.mxu0 %v3112
  %3114 = vmatpush.msra.mxu0 %v3111
  %3115 = vmatpush.msra.mxu0 %v3110
  %3116 = vmatpush.msra.mxu0 %v3109
  %3117 = vmatpush.msra.mxu0 %v3108
  %3118 = vmatpush.msra.mxu0 %v3107
  %3119 = vmatpush.msra.mxu0 %v3106
  %3120 = vmatpush.msra.mxu0 %v3105
  %3121 = vmatpush.msra.mxu0 %v3104
  %3122 = vmatpush.msra.mxu0 %v3103
  %3123 = vmatpush.msra.mxu0 %v3102
  %3124 = vmatpush.msra.mxu0 %v3101
  %3125 = vmatpush.msra.mxu0 %v3100
  %3126 = vmatpush.msra.mxu0 %v3099
  %3127 = vmatpush.msra.mxu0 %v3098
  %3128 = vmatpush.msra.mxu0 %v3097
  %3129 = vmatmul.f32.gmra.mxu0 %v3093
  %v3130 = vpop.f32.mrf.mxu0
  %v3131 = vadd.f32 0.0, %v3130
  %3132 = vmatmul.f32.gmra.mxu0 %v3094
  %v3133 = vpop.f32.mrf.mxu0
  %v3134 = vadd.f32 0.0, %v3133
  %3135 = vmatmul.f32.gmra.mxu0 %v3095
  %v3136 = vpop.f32.mrf.mxu0
  %v3137 = vadd.f32 0.0, %v3136
  %3138 = vmatmul.f32.gmra.mxu0 %v3096
  %v3139 = vpop.f32.mrf.mxu0
  %v3140 = vadd.f32 0.0, %v3139
  %3141 = vdwg.mxu0
  %3142 = vmatpush.msra.mxu0 %v87
  %3143 = vmatpush.msra.mxu0 %v86
  %3144 = vmatpush.msra.mxu0 %v85
  %3145 = vmatpush.msra.mxu0 %v84
  %3146 = vmatpush.msra.mxu0 %v83
  %3147 = vmatpush.msra.mxu0 %v82
  %3148 = vmatpush.msra.mxu0 %v81
  %3149 = vmatpush.msra.mxu0 %v80
  %3150 = vmatpush.msra.mxu0 %v79
  %3151 = vmatpush.msra.mxu0 %v78
  %3152 = vmatpush.msra.mxu0 %v77
  %3153 = vmatpush.msra.mxu0 %v76
  %3154 = vmatpush.msra.mxu0 %v75
  %3155 = vmatpush.msra.mxu0 %v74
  %3156 = vmatpush.msra.mxu0 %v73
  %3157 = vmatpush.msra.mxu0 %v72
  %3158 = vmatmul.f32.gmra.mxu0 %v3131
  %v3159 = vpop.f32.mrf.mxu0
  %v3160 = vadd.f32 0.0, %v3159
  %3161 = vmatmul.f32.gmra.mxu0 %v3134
  %v3162 = vpop.f32.mrf.mxu0
  %v3163 = vadd.f32 0.0, %v3162
  %3164 = vmatmul.f32.gmra.mxu0 %v3137
  %v3165 = vpop.f32.mrf.mxu0
  %v3166 = vadd.f32 0.0, %v3165
  %3167 = vmatmul.f32.gmra.mxu0 %v3140
  %v3168 = vpop.f32.mrf.mxu0
  %v3169 = vadd.f32 0.0, %v3168
  %3170 = vdwg.mxu0
  %v3171 = vadd.f32 %v3160, %v3163
  %v3172 = vadd.f32 %v3171, %v3166
  %v3173 = vadd.f32 %v3172, %v3169
  %v3174 = vrot.slane %v3173, 4
  %v3175 = vadd.f32 %v3173, %v3174
  %v3176 = vrot.slane %v3175, 2
  %v3177 = vadd.f32 %v3175, %v3176
  %v3178 = vrot.slane %v3177, 1
  %v3179 = vadd.f32 %v3177, %v3178
  %v3180 = vmul.f32 %v3179, 0.001953125
  %v3181 = vsub.f32 %v3131, %v3180
  %v3182 = vsub.f32 %v3134, %v3180
  %v3183 = vsub.f32 %v3137, %v3180
  %v3184 = vsub.f32 %v3140, %v3180
  %v3185 = vmul.f32 %v3181, %v3181
  %v3186 = vmul.f32 %v3182, %v3182
  %v3187 = vmul.f32 %v3183, %v3183
  %v3188 = vmul.f32 %v3184, %v3184
  %3189 = vmatpush.msra.mxu0 %v87
  %3190 = vmatpush.msra.mxu0 %v86
  %3191 = vmatpush.msra.mxu0 %v85
  %3192 = vmatpush.msra.mxu0 %v84
  %3193 = vmatpush.msra.mxu0 %v83
  %3194 = vmatpush.msra.mxu0 %v82
  %3195 = vmatpush.msra.mxu0 %v81
  %3196 = vmatpush.msra.mxu0 %v80
  %3197 = vmatpush.msra.mxu0 %v79
  %3198 = vmatpush.msra.mxu0 %v78
  %3199 = vmatpush.msra.mxu0 %v77
  %3200 = vmatpush.msra.mxu0 %v76
  %3201 = vmatpush.msra.mxu0 %v75
  %3202 = vmatpush.msra.mxu0 %v74
  %3203 = vmatpush.msra.mxu0 %v73
  %3204 = vmatpush.msra.mxu0 %v72
  %3205 = vmatmul.f32.gmra.mxu0 %v3185
  %v3206 = vpop.f32.mrf.mxu0
  %v3207 = vadd.f32 0.0, %v3206
  %3208 = vmatmul.f32.gmra.mxu0 %v3186
  %v3209 = vpop.f32.mrf.mxu0
  %v3210 = vadd.f32 0.0, %v3209
  %3211 = vmatmul.f32.gmra.mxu0 %v3187
  %v3212 = vpop.f32.mrf.mxu0
  %v3213 = vadd.f32 0.0, %v3212
  %3214 = vmatmul.f32.gmra.mxu0 %v3188
  %v3215 = vpop.f32.mrf.mxu0
  %v3216 = vadd.f32 0.0, %v3215
  %3217 = vdwg.mxu0
  %v3218 = vadd.f32 %v3207, %v3210
  %v3219 = vadd.f32 %v3218, %v3213
  %v3220 = vadd.f32 %v3219, %v3216
  %v3221 = vrot.slane %v3220, 4
  %v3222 = vadd.f32 %v3220, %v3221
  %v3223 = vrot.slane %v3222, 2
  %v3224 = vadd.f32 %v3222, %v3223
  %v3225 = vrot.slane %v3224, 1
  %v3226 = vadd.f32 %v3224, %v3225
  %v3227 = vmul.f32 %v3226, 0.001953125
  %v3228 = vadd.f32 %v3227, 1e-05
  %v3229 = vrsqrt.pop %v3228
  %v3230 = vmul.f32 %v3229, %v3228
  %v3231 = vmul.f32 %v3230, %v3229
  %v3232 = vmul.f32 0.5, %v3231
  %v3233 = vsub.f32 1.5, %v3232
  %v3234 = vmul.f32 %v3229, %v3233
  %vm3235 = vweird.f32 %v3228
  %vm3236 = vweird.f32 %v3229
  %vm3237 = vmor %vm3235, %vm3236
  %v3238 = vsel %vm3237, %v3229, %v3234
  %v3239 = vmul.f32 %v3181, %v3238
  %v3240 = vmul.f32 %v3182, %v3238
  %v3241 = vmul.f32 %v3183, %v3238
  %v3242 = vmul.f32 %v3184, %v3238
  %v3243 = vmax.f32 %v3239, 0.0
  %v3244 = vmax.f32 %v3240, 0.0
  %v3245 = vmax.f32 %v3241, 0.0
  %v3246 = vmax.f32 %v3242, 0.0
  %v3249 = vrot.slane %v3243, 5
  %v3250 = vrot.slane %v3244, 5
  %v3251 = vsel %vm2409, %v3249, %v3250
  %v3256 = vrot.slane %v3245, 5
  %v3257 = vrot.slane %v3246, 5
  %v3258 = vsel %vm2409, %v3256, %v3257
  %v3261 = vsel %vm2409, 0.0, %v3249
  %v3262 = vsel %vm2409, 0.0, %v3256
  %3263 = vrot.lane.b32.xlu0 %v3261, 24
  %v3264 = vpop.permute.xlu0 %3263
  %3265 = vrot.lane.b32.xlu0 %v3251, 24
  %v3266 = vpop.permute.xlu0 %3265
  %3267 = vrot.lane.b32.xlu0 %v3262, 24
  %v3268 = vpop.permute.xlu0 %3267
  %3269 = vrot.lane.b32.xlu0 %v3258, 24
  %v3270 = vpop.permute.xlu0 %3269
  %v3271 = vld [vmem:[%s7] sm:$0x1]
  %v3272 = vperm.slane %v3271, 0
  %v3273 = vmul.f32 %v3264, %v3272
  %v3274 = vmul.f32 %v3266, %v3272
  %v3275 = vmul.f32 %v3268, %v3272
  %v3276 = vmul.f32 %v3270, %v3272
  %3277 = vrot.lane.b32.xlu0 %v3261, 16
  %v3278 = vpop.permute.xlu0 %3277
  %3279 = vrot.lane.b32.xlu0 %v3251, 16
  %v3280 = vpop.permute.xlu0 %3279
  %3281 = vrot.lane.b32.xlu0 %v3262, 16
  %v3282 = vpop.permute.xlu0 %3281
  %3283 = vrot.lane.b32.xlu0 %v3258, 16
  %v3284 = vpop.permute.xlu0 %3283
  %v3285 = vld [vmem:[%s7 + $0x1] sm:$0x1]
  %v3286 = vperm.slane %v3285, 0
  %v3287 = vmul.f32 %v3278, %v3286
  %v3288 = vmul.f32 %v3280, %v3286
  %v3289 = vmul.f32 %v3282, %v3286
  %v3290 = vmul.f32 %v3284, %v3286
  %v3291 = vadd.f32 %v3273, %v3287
  %v3292 = vadd.f32 %v3274, %v3288
  %v3293 = vadd.f32 %v3275, %v3289
  %v3294 = vadd.f32 %v3276, %v3290
  %3295 = vrot.lane.b32.xlu0 %v3261, 8
  %v3296 = vpop.permute.xlu0 %3295
  %3297 = vrot.lane.b32.xlu0 %v3251, 8
  %v3298 = vpop.permute.xlu0 %3297
  %3299 = vrot.lane.b32.xlu0 %v3262, 8
  %v3300 = vpop.permute.xlu0 %3299
  %3301 = vrot.lane.b32.xlu0 %v3258, 8
  %v3302 = vpop.permute.xlu0 %3301
  %v3303 = vld [vmem:[%s7 + $0x2] sm:$0x1]
  %v3304 = vperm.slane %v3303, 0
  %v3305 = vmul.f32 %v3296, %v3304
  %v3306 = vmul.f32 %v3298, %v3304
  %v3307 = vmul.f32 %v3300, %v3304
  %v3308 = vmul.f32 %v3302, %v3304
  %v3309 = vadd.f32 %v3291, %v3305
  %v3310 = vadd.f32 %v3292, %v3306
  %v3311 = vadd.f32 %v3293, %v3307
  %v3312 = vadd.f32 %v3294, %v3308
  %v3313 = vld [vmem:[%s7 + $0x3] sm:$0x1]
  %v3314 = vperm.slane %v3313, 0
  %v3315 = vmul.f32 %v3261, %v3314
  %v3316 = vmul.f32 %v3251, %v3314
  %v3317 = vmul.f32 %v3262, %v3314
  %v3318 = vmul.f32 %v3258, %v3314
  %v3319 = vadd.f32 %v3309, %v3315
  %v3320 = vadd.f32 %v3310, %v3316
  %v3321 = vadd.f32 %v3311, %v3317
  %v3322 = vadd.f32 %v3312, %v3318
  %3323 = vrot.lane.b32.xlu0 %v3261, 120
  %v3324 = vpop.permute.xlu0 %3323
  %3325 = vrot.lane.b32.xlu0 %v3251, 120
  %v3326 = vpop.permute.xlu0 %3325
  %3327 = vrot.lane.b32.xlu0 %v3262, 120
  %v3328 = vpop.permute.xlu0 %3327
  %3329 = vrot.lane.b32.xlu0 %v3258, 120
  %v3330 = vpop.permute.xlu0 %3329
  %v3331 = vld [vmem:[%s7 + $0x4] sm:$0x1]
  %v3332 = vperm.slane %v3331, 0
  %v3333 = vmul.f32 %v3324, %v3332
  %v3334 = vmul.f32 %v3326, %v3332
  %v3335 = vmul.f32 %v3328, %v3332
  %v3336 = vmul.f32 %v3330, %v3332
  %v3337 = vadd.f32 %v3319, %v3333
  %v3338 = vadd.f32 %v3320, %v3334
  %v3339 = vadd.f32 %v3321, %v3335
  %v3340 = vadd.f32 %v3322, %v3336
  %3341 = vrot.lane.b32.xlu0 %v3261, 112
  %v3342 = vpop.permute.xlu0 %3341
  %3343 = vrot.lane.b32.xlu0 %v3251, 112
  %v3344 = vpop.permute.xlu0 %3343
  %3345 = vrot.lane.b32.xlu0 %v3262, 112
  %v3346 = vpop.permute.xlu0 %3345
  %3347 = vrot.lane.b32.xlu0 %v3258, 112
  %v3348 = vpop.permute.xlu0 %3347
  %v3349 = vld [vmem:[%s7 + $0x5] sm:$0x1]
  %v3350 = vperm.slane %v3349, 0
  %v3351 = vmul.f32 %v3342, %v3350
  %v3352 = vmul.f32 %v3344, %v3350
  %v3353 = vmul.f32 %v3346, %v3350
  %v3354 = vmul.f32 %v3348, %v3350
  %v3355 = vadd.f32 %v3337, %v3351
  %v3356 = vadd.f32 %v3338, %v3352
  %v3357 = vadd.f32 %v3339, %v3353
  %v3358 = vadd.f32 %v3340, %v3354
  %3359 = vrot.lane.b32.xlu0 %v3261, 104
  %v3360 = vpop.permute.xlu0 %3359
  %3361 = vrot.lane.b32.xlu0 %v3251, 104
  %v3362 = vpop.permute.xlu0 %3361
  %3363 = vrot.lane.b32.xlu0 %v3262, 104
  %v3364 = vpop.permute.xlu0 %3363
  %3365 = vrot.lane.b32.xlu0 %v3258, 104
  %v3366 = vpop.permute.xlu0 %3365
  %v3367 = vld [vmem:[%s7 + $0x6] sm:$0x1]
  %v3368 = vperm.slane %v3367, 0
  %v3369 = vmul.f32 %v3360, %v3368
  %v3370 = vmul.f32 %v3362, %v3368
  %v3371 = vmul.f32 %v3364, %v3368
  %v3372 = vmul.f32 %v3366, %v3368
  %v3373 = vadd.f32 %v3355, %v3369
  %v3374 = vadd.f32 %v3356, %v3370
  %v3375 = vadd.f32 %v3357, %v3371
  %v3376 = vadd.f32 %v3358, %v3372
  %v3377 = vrot.slane %v3243, 6
  %v3378 = vrot.slane %v3244, 6
  %v3379 = vsel %vm1261, %v3377, %v3378
  %v3382 = vrot.slane %v3245, 6
  %v3383 = vrot.slane %v3246, 6
  %v3384 = vsel %vm1261, %v3382, %v3383
  %v3387 = vsel %vm1261, 0.0, %v3377
  %v3388 = vsel %vm1261, 0.0, %v3382
  %3389 = vrot.lane.b32.xlu0 %v3387, 24
  %v3390 = vpop.permute.xlu0 %3389
  %3391 = vrot.lane.b32.xlu0 %v3379, 24
  %v3392 = vpop.permute.xlu0 %3391
  %3393 = vrot.lane.b32.xlu0 %v3388, 24
  %v3394 = vpop.permute.xlu0 %3393
  %3395 = vrot.lane.b32.xlu0 %v3384, 24
  %v3396 = vpop.permute.xlu0 %3395
  %v3397 = vld [vmem:[%s7 + $0x7] sm:$0x1]
  %v3398 = vperm.slane %v3397, 0
  %v3399 = vmul.f32 %v3390, %v3398
  %v3400 = vmul.f32 %v3392, %v3398
  %v3401 = vmul.f32 %v3394, %v3398
  %v3402 = vmul.f32 %v3396, %v3398
  %v3403 = vadd.f32 %v3373, %v3399
  %v3404 = vadd.f32 %v3374, %v3400
  %v3405 = vadd.f32 %v3375, %v3401
  %v3406 = vadd.f32 %v3376, %v3402
  %3407 = vrot.lane.b32.xlu0 %v3387, 16
  %v3408 = vpop.permute.xlu0 %3407
  %3409 = vrot.lane.b32.xlu0 %v3379, 16
  %v3410 = vpop.permute.xlu0 %3409
  %3411 = vrot.lane.b32.xlu0 %v3388, 16
  %v3412 = vpop.permute.xlu0 %3411
  %3413 = vrot.lane.b32.xlu0 %v3384, 16
  %v3414 = vpop.permute.xlu0 %3413
  %v3415 = vld [vmem:[%s7 + $0x8] sm:$0x1]
  %v3416 = vperm.slane %v3415, 0
  %v3417 = vmul.f32 %v3408, %v3416
  %v3418 = vmul.f32 %v3410, %v3416
  %v3419 = vmul.f32 %v3412, %v3416
  %v3420 = vmul.f32 %v3414, %v3416
  %v3421 = vadd.f32 %v3403, %v3417
  %v3422 = vadd.f32 %v3404, %v3418
  %v3423 = vadd.f32 %v3405, %v3419
  %v3424 = vadd.f32 %v3406, %v3420
  %3425 = vrot.lane.b32.xlu0 %v3387, 8
  %v3426 = vpop.permute.xlu0 %3425
  %3427 = vrot.lane.b32.xlu0 %v3379, 8
  %v3428 = vpop.permute.xlu0 %3427
  %3429 = vrot.lane.b32.xlu0 %v3388, 8
  %v3430 = vpop.permute.xlu0 %3429
  %3431 = vrot.lane.b32.xlu0 %v3384, 8
  %v3432 = vpop.permute.xlu0 %3431
  %v3433 = vld [vmem:[%s7 + $0x9] sm:$0x1]
  %v3434 = vperm.slane %v3433, 0
  %v3435 = vmul.f32 %v3426, %v3434
  %v3436 = vmul.f32 %v3428, %v3434
  %v3437 = vmul.f32 %v3430, %v3434
  %v3438 = vmul.f32 %v3432, %v3434
  %v3439 = vadd.f32 %v3421, %v3435
  %v3440 = vadd.f32 %v3422, %v3436
  %v3441 = vadd.f32 %v3423, %v3437
  %v3442 = vadd.f32 %v3424, %v3438
  %v3443 = vld [vmem:[%s7 + $0xa] sm:$0x1]
  %v3444 = vperm.slane %v3443, 0
  %v3445 = vmul.f32 %v3387, %v3444
  %v3446 = vmul.f32 %v3379, %v3444
  %v3447 = vmul.f32 %v3388, %v3444
  %v3448 = vmul.f32 %v3384, %v3444
  %v3449 = vadd.f32 %v3439, %v3445
  %v3450 = vadd.f32 %v3440, %v3446
  %v3451 = vadd.f32 %v3441, %v3447
  %v3452 = vadd.f32 %v3442, %v3448
  %3453 = vrot.lane.b32.xlu0 %v3387, 120
  %v3454 = vpop.permute.xlu0 %3453
  %3455 = vrot.lane.b32.xlu0 %v3379, 120
  %v3456 = vpop.permute.xlu0 %3455
  %3457 = vrot.lane.b32.xlu0 %v3388, 120
  %v3458 = vpop.permute.xlu0 %3457
  %3459 = vrot.lane.b32.xlu0 %v3384, 120
  %v3460 = vpop.permute.xlu0 %3459
  %v3461 = vld [vmem:[%s7 + $0xb] sm:$0x1]
  %v3462 = vperm.slane %v3461, 0
  %v3463 = vmul.f32 %v3454, %v3462
  %v3464 = vmul.f32 %v3456, %v3462
  %v3465 = vmul.f32 %v3458, %v3462
  %v3466 = vmul.f32 %v3460, %v3462
  %v3467 = vadd.f32 %v3449, %v3463
  %v3468 = vadd.f32 %v3450, %v3464
  %v3469 = vadd.f32 %v3451, %v3465
  %v3470 = vadd.f32 %v3452, %v3466
  %3471 = vrot.lane.b32.xlu0 %v3387, 112
  %v3472 = vpop.permute.xlu0 %3471
  %3473 = vrot.lane.b32.xlu0 %v3379, 112
  %v3474 = vpop.permute.xlu0 %3473
  %3475 = vrot.lane.b32.xlu0 %v3388, 112
  %v3476 = vpop.permute.xlu0 %3475
  %3477 = vrot.lane.b32.xlu0 %v3384, 112
  %v3478 = vpop.permute.xlu0 %3477
  %v3479 = vld [vmem:[%s7 + $0xc] sm:$0x1]
  %v3480 = vperm.slane %v3479, 0
  %v3481 = vmul.f32 %v3472, %v3480
  %v3482 = vmul.f32 %v3474, %v3480
  %v3483 = vmul.f32 %v3476, %v3480
  %v3484 = vmul.f32 %v3478, %v3480
  %v3485 = vadd.f32 %v3467, %v3481
  %v3486 = vadd.f32 %v3468, %v3482
  %v3487 = vadd.f32 %v3469, %v3483
  %v3488 = vadd.f32 %v3470, %v3484
  %3489 = vrot.lane.b32.xlu0 %v3387, 104
  %v3490 = vpop.permute.xlu0 %3489
  %3491 = vrot.lane.b32.xlu0 %v3379, 104
  %v3492 = vpop.permute.xlu0 %3491
  %3493 = vrot.lane.b32.xlu0 %v3388, 104
  %v3494 = vpop.permute.xlu0 %3493
  %3495 = vrot.lane.b32.xlu0 %v3384, 104
  %v3496 = vpop.permute.xlu0 %3495
  %v3497 = vld [vmem:[%s7 + $0xd] sm:$0x1]
  %v3498 = vperm.slane %v3497, 0
  %v3499 = vmul.f32 %v3490, %v3498
  %v3500 = vmul.f32 %v3492, %v3498
  %v3501 = vmul.f32 %v3494, %v3498
  %v3502 = vmul.f32 %v3496, %v3498
  %v3503 = vadd.f32 %v3485, %v3499
  %v3504 = vadd.f32 %v3486, %v3500
  %v3505 = vadd.f32 %v3487, %v3501
  %v3506 = vadd.f32 %v3488, %v3502
  %v3507 = vrot.slane %v3243, 7
  %v3508 = vrot.slane %v3244, 7
  %v3509 = vsel %vm101, %v3507, %v3508
  %v3512 = vrot.slane %v3245, 7
  %v3513 = vrot.slane %v3246, 7
  %v3514 = vsel %vm101, %v3512, %v3513
  %v3517 = vsel %vm101, 0.0, %v3507
  %v3518 = vsel %vm101, 0.0, %v3512
  %3519 = vrot.lane.b32.xlu0 %v3517, 24
  %v3520 = vpop.permute.xlu0 %3519
  %3521 = vrot.lane.b32.xlu0 %v3509, 24
  %v3522 = vpop.permute.xlu0 %3521
  %3523 = vrot.lane.b32.xlu0 %v3518, 24
  %v3524 = vpop.permute.xlu0 %3523
  %3525 = vrot.lane.b32.xlu0 %v3514, 24
  %v3526 = vpop.permute.xlu0 %3525
  %v3527 = vld [vmem:[%s7 + $0xe] sm:$0x1]
  %v3528 = vperm.slane %v3527, 0
  %v3529 = vmul.f32 %v3520, %v3528
  %v3530 = vmul.f32 %v3522, %v3528
  %v3531 = vmul.f32 %v3524, %v3528
  %v3532 = vmul.f32 %v3526, %v3528
  %v3533 = vadd.f32 %v3503, %v3529
  %v3534 = vadd.f32 %v3504, %v3530
  %v3535 = vadd.f32 %v3505, %v3531
  %v3536 = vadd.f32 %v3506, %v3532
  %3537 = vrot.lane.b32.xlu0 %v3517, 16
  %v3538 = vpop.permute.xlu0 %3537
  %3539 = vrot.lane.b32.xlu0 %v3509, 16
  %v3540 = vpop.permute.xlu0 %3539
  %3541 = vrot.lane.b32.xlu0 %v3518, 16
  %v3542 = vpop.permute.xlu0 %3541
  %3543 = vrot.lane.b32.xlu0 %v3514, 16
  %v3544 = vpop.permute.xlu0 %3543
  %v3545 = vld [vmem:[%s7 + $0xf] sm:$0x1]
  %v3546 = vperm.slane %v3545, 0
  %v3547 = vmul.f32 %v3538, %v3546
  %v3548 = vmul.f32 %v3540, %v3546
  %v3549 = vmul.f32 %v3542, %v3546
  %v3550 = vmul.f32 %v3544, %v3546
  %v3551 = vadd.f32 %v3533, %v3547
  %v3552 = vadd.f32 %v3534, %v3548
  %v3553 = vadd.f32 %v3535, %v3549
  %v3554 = vadd.f32 %v3536, %v3550
  %3555 = vrot.lane.b32.xlu0 %v3517, 8
  %v3556 = vpop.permute.xlu0 %3555
  %3557 = vrot.lane.b32.xlu0 %v3509, 8
  %v3558 = vpop.permute.xlu0 %3557
  %3559 = vrot.lane.b32.xlu0 %v3518, 8
  %v3560 = vpop.permute.xlu0 %3559
  %3561 = vrot.lane.b32.xlu0 %v3514, 8
  %v3562 = vpop.permute.xlu0 %3561
  %v3563 = vld [vmem:[%s7 + $0x10] sm:$0x1]
  %v3564 = vperm.slane %v3563, 0
  %v3565 = vmul.f32 %v3556, %v3564
  %v3566 = vmul.f32 %v3558, %v3564
  %v3567 = vmul.f32 %v3560, %v3564
  %v3568 = vmul.f32 %v3562, %v3564
  %v3569 = vadd.f32 %v3551, %v3565
  %v3570 = vadd.f32 %v3552, %v3566
  %v3571 = vadd.f32 %v3553, %v3567
  %v3572 = vadd.f32 %v3554, %v3568
  %v3573 = vld [vmem:[%s7 + $0x11] sm:$0x1]
  %v3574 = vperm.slane %v3573, 0
  %v3575 = vmul.f32 %v3517, %v3574
  %v3576 = vmul.f32 %v3509, %v3574
  %v3577 = vmul.f32 %v3518, %v3574
  %v3578 = vmul.f32 %v3514, %v3574
  %v3579 = vadd.f32 %v3569, %v3575
  %v3580 = vadd.f32 %v3570, %v3576
  %v3581 = vadd.f32 %v3571, %v3577
  %v3582 = vadd.f32 %v3572, %v3578
  %3583 = vrot.lane.b32.xlu0 %v3517, 120
  %v3584 = vpop.permute.xlu0 %3583
  %3585 = vrot.lane.b32.xlu0 %v3509, 120
  %v3586 = vpop.permute.xlu0 %3585
  %3587 = vrot.lane.b32.xlu0 %v3518, 120
  %v3588 = vpop.permute.xlu0 %3587
  %3589 = vrot.lane.b32.xlu0 %v3514, 120
  %v3590 = vpop.permute.xlu0 %3589
  %v3591 = vld [vmem:[%s7 + $0x12] sm:$0x1]
  %v3592 = vperm.slane %v3591, 0
  %v3593 = vmul.f32 %v3584, %v3592
  %v3594 = vmul.f32 %v3586, %v3592
  %v3595 = vmul.f32 %v3588, %v3592
  %v3596 = vmul.f32 %v3590, %v3592
  %v3597 = vadd.f32 %v3579, %v3593
  %v3598 = vadd.f32 %v3580, %v3594
  %v3599 = vadd.f32 %v3581, %v3595
  %v3600 = vadd.f32 %v3582, %v3596
  %3601 = vrot.lane.b32.xlu0 %v3517, 112
  %v3602 = vpop.permute.xlu0 %3601
  %3603 = vrot.lane.b32.xlu0 %v3509, 112
  %v3604 = vpop.permute.xlu0 %3603
  %3605 = vrot.lane.b32.xlu0 %v3518, 112
  %v3606 = vpop.permute.xlu0 %3605
  %3607 = vrot.lane.b32.xlu0 %v3514, 112
  %v3608 = vpop.permute.xlu0 %3607
  %v3609 = vld [vmem:[%s7 + $0x13] sm:$0x1]
  %v3610 = vperm.slane %v3609, 0
  %v3611 = vmul.f32 %v3602, %v3610
  %v3612 = vmul.f32 %v3604, %v3610
  %v3613 = vmul.f32 %v3606, %v3610
  %v3614 = vmul.f32 %v3608, %v3610
  %v3615 = vadd.f32 %v3597, %v3611
  %v3616 = vadd.f32 %v3598, %v3612
  %v3617 = vadd.f32 %v3599, %v3613
  %v3618 = vadd.f32 %v3600, %v3614
  %3619 = vrot.lane.b32.xlu0 %v3517, 104
  %v3620 = vpop.permute.xlu0 %3619
  %3621 = vrot.lane.b32.xlu0 %v3509, 104
  %v3622 = vpop.permute.xlu0 %3621
  %3623 = vrot.lane.b32.xlu0 %v3518, 104
  %v3624 = vpop.permute.xlu0 %3623
  %3625 = vrot.lane.b32.xlu0 %v3514, 104
  %v3626 = vpop.permute.xlu0 %3625
  %v3627 = vld [vmem:[%s7 + $0x14] sm:$0x1]
  %v3628 = vperm.slane %v3627, 0
  %v3629 = vmul.f32 %v3620, %v3628
  %v3630 = vmul.f32 %v3622, %v3628
  %v3631 = vmul.f32 %v3624, %v3628
  %v3632 = vmul.f32 %v3626, %v3628
  %v3633 = vadd.f32 %v3615, %v3629
  %v3634 = vadd.f32 %v3616, %v3630
  %v3635 = vadd.f32 %v3617, %v3631
  %v3636 = vadd.f32 %v3618, %v3632
  %3637 = vrot.lane.b32.xlu0 %v3243, 24
  %v3638 = vpop.permute.xlu0 %3637
  %3639 = vrot.lane.b32.xlu0 %v3244, 24
  %v3640 = vpop.permute.xlu0 %3639
  %3641 = vrot.lane.b32.xlu0 %v3245, 24
  %v3642 = vpop.permute.xlu0 %3641
  %3643 = vrot.lane.b32.xlu0 %v3246, 24
  %v3644 = vpop.permute.xlu0 %3643
  %v3645 = vld [vmem:[%s7 + $0x15] sm:$0x1]
  %v3646 = vperm.slane %v3645, 0
  %v3647 = vmul.f32 %v3638, %v3646
  %v3648 = vmul.f32 %v3640, %v3646
  %v3649 = vmul.f32 %v3642, %v3646
  %v3650 = vmul.f32 %v3644, %v3646
  %v3651 = vadd.f32 %v3633, %v3647
  %v3652 = vadd.f32 %v3634, %v3648
  %v3653 = vadd.f32 %v3635, %v3649
  %v3654 = vadd.f32 %v3636, %v3650
  %3655 = vrot.lane.b32.xlu0 %v3243, 16
  %v3656 = vpop.permute.xlu0 %3655
  %3657 = vrot.lane.b32.xlu0 %v3244, 16
  %v3658 = vpop.permute.xlu0 %3657
  %3659 = vrot.lane.b32.xlu0 %v3245, 16
  %v3660 = vpop.permute.xlu0 %3659
  %3661 = vrot.lane.b32.xlu0 %v3246, 16
  %v3662 = vpop.permute.xlu0 %3661
  %v3663 = vld [vmem:[%s7 + $0x16] sm:$0x1]
  %v3664 = vperm.slane %v3663, 0
  %v3665 = vmul.f32 %v3656, %v3664
  %v3666 = vmul.f32 %v3658, %v3664
  %v3667 = vmul.f32 %v3660, %v3664
  %v3668 = vmul.f32 %v3662, %v3664
  %v3669 = vadd.f32 %v3651, %v3665
  %v3670 = vadd.f32 %v3652, %v3666
  %v3671 = vadd.f32 %v3653, %v3667
  %v3672 = vadd.f32 %v3654, %v3668
  %3673 = vrot.lane.b32.xlu0 %v3243, 8
  %v3674 = vpop.permute.xlu0 %3673
  %3675 = vrot.lane.b32.xlu0 %v3244, 8
  %v3676 = vpop.permute.xlu0 %3675
  %3677 = vrot.lane.b32.xlu0 %v3245, 8
  %v3678 = vpop.permute.xlu0 %3677
  %3679 = vrot.lane.b32.xlu0 %v3246, 8
  %v3680 = vpop.permute.xlu0 %3679
  %v3681 = vld [vmem:[%s7 + $0x17] sm:$0x1]
  %v3682 = vperm.slane %v3681, 0
  %v3683 = vmul.f32 %v3674, %v3682
  %v3684 = vmul.f32 %v3676, %v3682
  %v3685 = vmul.f32 %v3678, %v3682
  %v3686 = vmul.f32 %v3680, %v3682
  %v3687 = vadd.f32 %v3669, %v3683
  %v3688 = vadd.f32 %v3670, %v3684
  %v3689 = vadd.f32 %v3671, %v3685
  %v3690 = vadd.f32 %v3672, %v3686
  %v3691 = vld [vmem:[%s7 + $0x18] sm:$0x1]
  %v3692 = vperm.slane %v3691, 0
  %v3693 = vmul.f32 %v3243, %v3692
  %v3694 = vmul.f32 %v3244, %v3692
  %v3695 = vmul.f32 %v3245, %v3692
  %v3696 = vmul.f32 %v3246, %v3692
  %v3697 = vadd.f32 %v3687, %v3693
  %v3698 = vadd.f32 %v3688, %v3694
  %v3699 = vadd.f32 %v3689, %v3695
  %v3700 = vadd.f32 %v3690, %v3696
  %3701 = vrot.lane.b32.xlu0 %v3243, 120
  %v3702 = vpop.permute.xlu0 %3701
  %3703 = vrot.lane.b32.xlu0 %v3244, 120
  %v3704 = vpop.permute.xlu0 %3703
  %3705 = vrot.lane.b32.xlu0 %v3245, 120
  %v3706 = vpop.permute.xlu0 %3705
  %3707 = vrot.lane.b32.xlu0 %v3246, 120
  %v3708 = vpop.permute.xlu0 %3707
  %v3709 = vld [vmem:[%s7 + $0x19] sm:$0x1]
  %v3710 = vperm.slane %v3709, 0
  %v3711 = vmul.f32 %v3702, %v3710
  %v3712 = vmul.f32 %v3704, %v3710
  %v3713 = vmul.f32 %v3706, %v3710
  %v3714 = vmul.f32 %v3708, %v3710
  %v3715 = vadd.f32 %v3697, %v3711
  %v3716 = vadd.f32 %v3698, %v3712
  %v3717 = vadd.f32 %v3699, %v3713
  %v3718 = vadd.f32 %v3700, %v3714
  %3719 = vrot.lane.b32.xlu0 %v3243, 112
  %v3720 = vpop.permute.xlu0 %3719
  %3721 = vrot.lane.b32.xlu0 %v3244, 112
  %v3722 = vpop.permute.xlu0 %3721
  %3723 = vrot.lane.b32.xlu0 %v3245, 112
  %v3724 = vpop.permute.xlu0 %3723
  %3725 = vrot.lane.b32.xlu0 %v3246, 112
  %v3726 = vpop.permute.xlu0 %3725
  %v3727 = vld [vmem:[%s7 + $0x1a] sm:$0x1]
  %v3728 = vperm.slane %v3727, 0
  %v3729 = vmul.f32 %v3720, %v3728
  %v3730 = vmul.f32 %v3722, %v3728
  %v3731 = vmul.f32 %v3724, %v3728
  %v3732 = vmul.f32 %v3726, %v3728
  %v3733 = vadd.f32 %v3715, %v3729
  %v3734 = vadd.f32 %v3716, %v3730
  %v3735 = vadd.f32 %v3717, %v3731
  %v3736 = vadd.f32 %v3718, %v3732
  %3737 = vrot.lane.b32.xlu0 %v3243, 104
  %v3738 = vpop.permute.xlu0 %3737
  %3739 = vrot.lane.b32.xlu0 %v3244, 104
  %v3740 = vpop.permute.xlu0 %3739
  %3741 = vrot.lane.b32.xlu0 %v3245, 104
  %v3742 = vpop.permute.xlu0 %3741
  %3743 = vrot.lane.b32.xlu0 %v3246, 104
  %v3744 = vpop.permute.xlu0 %3743
  %v3745 = vld [vmem:[%s7 + $0x1b] sm:$0x1]
  %v3746 = vperm.slane %v3745, 0
  %v3747 = vmul.f32 %v3738, %v3746
  %v3748 = vmul.f32 %v3740, %v3746
  %v3749 = vmul.f32 %v3742, %v3746
  %v3750 = vmul.f32 %v3744, %v3746
  %v3751 = vadd.f32 %v3733, %v3747
  %v3752 = vadd.f32 %v3734, %v3748
  %v3753 = vadd.f32 %v3735, %v3749
  %v3754 = vadd.f32 %v3736, %v3750
  %v3755 = vrot.slane %v3243, 1
  %v3756 = vrot.slane %v3244, 1
  %v3757 = vsel %vm204, %v3755, %v3756
  %v3760 = vrot.slane %v3245, 1
  %v3761 = vrot.slane %v3246, 1
  %v3762 = vsel %vm204, %v3760, %v3761
  %v3765 = vsel %vm204, %v3756, 0.0
  %v3766 = vsel %vm204, %v3761, 0.0
  %3767 = vrot.lane.b32.xlu0 %v3757, 24
  %v3768 = vpop.permute.xlu0 %3767
  %3769 = vrot.lane.b32.xlu0 %v3765, 24
  %v3770 = vpop.permute.xlu0 %3769
  %3771 = vrot.lane.b32.xlu0 %v3762, 24
  %v3772 = vpop.permute.xlu0 %3771
  %3773 = vrot.lane.b32.xlu0 %v3766, 24
  %v3774 = vpop.permute.xlu0 %3773
  %v3775 = vld [vmem:[%s7 + $0x1c] sm:$0x1]
  %v3776 = vperm.slane %v3775, 0
  %v3777 = vmul.f32 %v3768, %v3776
  %v3778 = vmul.f32 %v3770, %v3776
  %v3779 = vmul.f32 %v3772, %v3776
  %v3780 = vmul.f32 %v3774, %v3776
  %v3781 = vadd.f32 %v3751, %v3777
  %v3782 = vadd.f32 %v3752, %v3778
  %v3783 = vadd.f32 %v3753, %v3779
  %v3784 = vadd.f32 %v3754, %v3780
  %3785 = vrot.lane.b32.xlu0 %v3757, 16
  %v3786 = vpop.permute.xlu0 %3785
  %3787 = vrot.lane.b32.xlu0 %v3765, 16
  %v3788 = vpop.permute.xlu0 %3787
  %3789 = vrot.lane.b32.xlu0 %v3762, 16
  %v3790 = vpop.permute.xlu0 %3789
  %3791 = vrot.lane.b32.xlu0 %v3766, 16
  %v3792 = vpop.permute.xlu0 %3791
  %v3793 = vld [vmem:[%s7 + $0x1d] sm:$0x1]
  %v3794 = vperm.slane %v3793, 0
  %v3795 = vmul.f32 %v3786, %v3794
  %v3796 = vmul.f32 %v3788, %v3794
  %v3797 = vmul.f32 %v3790, %v3794
  %v3798 = vmul.f32 %v3792, %v3794
  %v3799 = vadd.f32 %v3781, %v3795
  %v3800 = vadd.f32 %v3782, %v3796
  %v3801 = vadd.f32 %v3783, %v3797
  %v3802 = vadd.f32 %v3784, %v3798
  %3803 = vrot.lane.b32.xlu0 %v3757, 8
  %v3804 = vpop.permute.xlu0 %3803
  %3805 = vrot.lane.b32.xlu0 %v3765, 8
  %v3806 = vpop.permute.xlu0 %3805
  %3807 = vrot.lane.b32.xlu0 %v3762, 8
  %v3808 = vpop.permute.xlu0 %3807
  %3809 = vrot.lane.b32.xlu0 %v3766, 8
  %v3810 = vpop.permute.xlu0 %3809
  %v3811 = vld [vmem:[%s7 + $0x1e] sm:$0x1]
  %v3812 = vperm.slane %v3811, 0
  %v3813 = vmul.f32 %v3804, %v3812
  %v3814 = vmul.f32 %v3806, %v3812
  %v3815 = vmul.f32 %v3808, %v3812
  %v3816 = vmul.f32 %v3810, %v3812
  %v3817 = vadd.f32 %v3799, %v3813
  %v3818 = vadd.f32 %v3800, %v3814
  %v3819 = vadd.f32 %v3801, %v3815
  %v3820 = vadd.f32 %v3802, %v3816
  %v3821 = vld [vmem:[%s7 + $0x1f] sm:$0x1]
  %v3822 = vperm.slane %v3821, 0
  %v3823 = vmul.f32 %v3757, %v3822
  %v3824 = vmul.f32 %v3765, %v3822
  %v3825 = vmul.f32 %v3762, %v3822
  %v3826 = vmul.f32 %v3766, %v3822
  %v3827 = vadd.f32 %v3817, %v3823
  %v3828 = vadd.f32 %v3818, %v3824
  %v3829 = vadd.f32 %v3819, %v3825
  %v3830 = vadd.f32 %v3820, %v3826
  %3831 = vrot.lane.b32.xlu0 %v3757, 120
  %v3832 = vpop.permute.xlu0 %3831
  %3833 = vrot.lane.b32.xlu0 %v3765, 120
  %v3834 = vpop.permute.xlu0 %3833
  %3835 = vrot.lane.b32.xlu0 %v3762, 120
  %v3836 = vpop.permute.xlu0 %3835
  %3837 = vrot.lane.b32.xlu0 %v3766, 120
  %v3838 = vpop.permute.xlu0 %3837
  %v3839 = vld [vmem:[%s7 + $0x20] sm:$0x1]
  %v3840 = vperm.slane %v3839, 0
  %v3841 = vmul.f32 %v3832, %v3840
  %v3842 = vmul.f32 %v3834, %v3840
  %v3843 = vmul.f32 %v3836, %v3840
  %v3844 = vmul.f32 %v3838, %v3840
  %v3845 = vadd.f32 %v3827, %v3841
  %v3846 = vadd.f32 %v3828, %v3842
  %v3847 = vadd.f32 %v3829, %v3843
  %v3848 = vadd.f32 %v3830, %v3844
  %3849 = vrot.lane.b32.xlu0 %v3757, 112
  %v3850 = vpop.permute.xlu0 %3849
  %3851 = vrot.lane.b32.xlu0 %v3765, 112
  %v3852 = vpop.permute.xlu0 %3851
  %3853 = vrot.lane.b32.xlu0 %v3762, 112
  %v3854 = vpop.permute.xlu0 %3853
  %3855 = vrot.lane.b32.xlu0 %v3766, 112
  %v3856 = vpop.permute.xlu0 %3855
  %v3857 = vld [vmem:[%s7 + $0x21] sm:$0x1]
  %v3858 = vperm.slane %v3857, 0
  %v3859 = vmul.f32 %v3850, %v3858
  %v3860 = vmul.f32 %v3852, %v3858
  %v3861 = vmul.f32 %v3854, %v3858
  %v3862 = vmul.f32 %v3856, %v3858
  %v3863 = vadd.f32 %v3845, %v3859
  %v3864 = vadd.f32 %v3846, %v3860
  %v3865 = vadd.f32 %v3847, %v3861
  %v3866 = vadd.f32 %v3848, %v3862
  %3867 = vrot.lane.b32.xlu0 %v3757, 104
  %v3868 = vpop.permute.xlu0 %3867
  %3869 = vrot.lane.b32.xlu0 %v3765, 104
  %v3870 = vpop.permute.xlu0 %3869
  %3871 = vrot.lane.b32.xlu0 %v3762, 104
  %v3872 = vpop.permute.xlu0 %3871
  %3873 = vrot.lane.b32.xlu0 %v3766, 104
  %v3874 = vpop.permute.xlu0 %3873
  %v3875 = vld [vmem:[%s7 + $0x22] sm:$0x1]
  %v3876 = vperm.slane %v3875, 0
  %v3877 = vmul.f32 %v3868, %v3876
  %v3878 = vmul.f32 %v3870, %v3876
  %v3879 = vmul.f32 %v3872, %v3876
  %v3880 = vmul.f32 %v3874, %v3876
  %v3881 = vadd.f32 %v3863, %v3877
  %v3882 = vadd.f32 %v3864, %v3878
  %v3883 = vadd.f32 %v3865, %v3879
  %v3884 = vadd.f32 %v3866, %v3880
  %v3885 = vrot.slane %v3243, 2
  %v3886 = vrot.slane %v3244, 2
  %v3887 = vsel %vm1550, %v3885, %v3886
  %v3890 = vrot.slane %v3245, 2
  %v3891 = vrot.slane %v3246, 2
  %v3892 = vsel %vm1550, %v3890, %v3891
  %v3895 = vsel %vm1550, %v3886, 0.0
  %v3896 = vsel %vm1550, %v3891, 0.0
  %3897 = vrot.lane.b32.xlu0 %v3887, 24
  %v3898 = vpop.permute.xlu0 %3897
  %3899 = vrot.lane.b32.xlu0 %v3895, 24
  %v3900 = vpop.permute.xlu0 %3899
  %3901 = vrot.lane.b32.xlu0 %v3892, 24
  %v3902 = vpop.permute.xlu0 %3901
  %3903 = vrot.lane.b32.xlu0 %v3896, 24
  %v3904 = vpop.permute.xlu0 %3903
  %v3905 = vld [vmem:[%s7 + $0x23] sm:$0x1]
  %v3906 = vperm.slane %v3905, 0
  %v3907 = vmul.f32 %v3898, %v3906
  %v3908 = vmul.f32 %v3900, %v3906
  %v3909 = vmul.f32 %v3902, %v3906
  %v3910 = vmul.f32 %v3904, %v3906
  %v3911 = vadd.f32 %v3881, %v3907
  %v3912 = vadd.f32 %v3882, %v3908
  %v3913 = vadd.f32 %v3883, %v3909
  %v3914 = vadd.f32 %v3884, %v3910
  %3915 = vrot.lane.b32.xlu0 %v3887, 16
  %v3916 = vpop.permute.xlu0 %3915
  %3917 = vrot.lane.b32.xlu0 %v3895, 16
  %v3918 = vpop.permute.xlu0 %3917
  %3919 = vrot.lane.b32.xlu0 %v3892, 16
  %v3920 = vpop.permute.xlu0 %3919
  %3921 = vrot.lane.b32.xlu0 %v3896, 16
  %v3922 = vpop.permute.xlu0 %3921
  %v3923 = vld [vmem:[%s7 + $0x24] sm:$0x1]
  %v3924 = vperm.slane %v3923, 0
  %v3925 = vmul.f32 %v3916, %v3924
  %v3926 = vmul.f32 %v3918, %v3924
  %v3927 = vmul.f32 %v3920, %v3924
  %v3928 = vmul.f32 %v3922, %v3924
  %v3929 = vadd.f32 %v3911, %v3925
  %v3930 = vadd.f32 %v3912, %v3926
  %v3931 = vadd.f32 %v3913, %v3927
  %v3932 = vadd.f32 %v3914, %v3928
  %3933 = vrot.lane.b32.xlu0 %v3887, 8
  %v3934 = vpop.permute.xlu0 %3933
  %3935 = vrot.lane.b32.xlu0 %v3895, 8
  %v3936 = vpop.permute.xlu0 %3935
  %3937 = vrot.lane.b32.xlu0 %v3892, 8
  %v3938 = vpop.permute.xlu0 %3937
  %3939 = vrot.lane.b32.xlu0 %v3896, 8
  %v3940 = vpop.permute.xlu0 %3939
  %v3941 = vld [vmem:[%s7 + $0x25] sm:$0x1]
  %v3942 = vperm.slane %v3941, 0
  %v3943 = vmul.f32 %v3934, %v3942
  %v3944 = vmul.f32 %v3936, %v3942
  %v3945 = vmul.f32 %v3938, %v3942
  %v3946 = vmul.f32 %v3940, %v3942
  %v3947 = vadd.f32 %v3929, %v3943
  %v3948 = vadd.f32 %v3930, %v3944
  %v3949 = vadd.f32 %v3931, %v3945
  %v3950 = vadd.f32 %v3932, %v3946
  %v3951 = vld [vmem:[%s7 + $0x26] sm:$0x1]
  %v3952 = vperm.slane %v3951, 0
  %v3953 = vmul.f32 %v3887, %v3952
  %v3954 = vmul.f32 %v3895, %v3952
  %v3955 = vmul.f32 %v3892, %v3952
  %v3956 = vmul.f32 %v3896, %v3952
  %v3957 = vadd.f32 %v3947, %v3953
  %v3958 = vadd.f32 %v3948, %v3954
  %v3959 = vadd.f32 %v3949, %v3955
  %v3960 = vadd.f32 %v3950, %v3956
  %3961 = vrot.lane.b32.xlu0 %v3887, 120
  %v3962 = vpop.permute.xlu0 %3961
  %3963 = vrot.lane.b32.xlu0 %v3895, 120
  %v3964 = vpop.permute.xlu0 %3963
  %3965 = vrot.lane.b32.xlu0 %v3892, 120
  %v3966 = vpop.permute.xlu0 %3965
  %3967 = vrot.lane.b32.xlu0 %v3896, 120
  %v3968 = vpop.permute.xlu0 %3967
  %v3969 = vld [vmem:[%s7 + $0x27] sm:$0x1]
  %v3970 = vperm.slane %v3969, 0
  %v3971 = vmul.f32 %v3962, %v3970
  %v3972 = vmul.f32 %v3964, %v3970
  %v3973 = vmul.f32 %v3966, %v3970
  %v3974 = vmul.f32 %v3968, %v3970
  %v3975 = vadd.f32 %v3957, %v3971
  %v3976 = vadd.f32 %v3958, %v3972
  %v3977 = vadd.f32 %v3959, %v3973
  %v3978 = vadd.f32 %v3960, %v3974
  %3979 = vrot.lane.b32.xlu0 %v3887, 112
  %v3980 = vpop.permute.xlu0 %3979
  %3981 = vrot.lane.b32.xlu0 %v3895, 112
  %v3982 = vpop.permute.xlu0 %3981
  %3983 = vrot.lane.b32.xlu0 %v3892, 112
  %v3984 = vpop.permute.xlu0 %3983
  %3985 = vrot.lane.b32.xlu0 %v3896, 112
  %v3986 = vpop.permute.xlu0 %3985
  %v3987 = vld [vmem:[%s7 + $0x28] sm:$0x1]
  %v3988 = vperm.slane %v3987, 0
  %v3989 = vmul.f32 %v3980, %v3988
  %v3990 = vmul.f32 %v3982, %v3988
  %v3991 = vmul.f32 %v3984, %v3988
  %v3992 = vmul.f32 %v3986, %v3988
  %v3993 = vadd.f32 %v3975, %v3989
  %v3994 = vadd.f32 %v3976, %v3990
  %v3995 = vadd.f32 %v3977, %v3991
  %v3996 = vadd.f32 %v3978, %v3992
  %3997 = vrot.lane.b32.xlu0 %v3887, 104
  %v3998 = vpop.permute.xlu0 %3997
  %3999 = vrot.lane.b32.xlu0 %v3895, 104
  %v4000 = vpop.permute.xlu0 %3999
  %4001 = vrot.lane.b32.xlu0 %v3892, 104
  %v4002 = vpop.permute.xlu0 %4001
  %4003 = vrot.lane.b32.xlu0 %v3896, 104
  %v4004 = vpop.permute.xlu0 %4003
  %v4005 = vld [vmem:[%s7 + $0x29] sm:$0x1]
  %v4006 = vperm.slane %v4005, 0
  %v4007 = vmul.f32 %v3998, %v4006
  %v4008 = vmul.f32 %v4000, %v4006
  %v4009 = vmul.f32 %v4002, %v4006
  %v4010 = vmul.f32 %v4004, %v4006
  %v4011 = vadd.f32 %v3993, %v4007
  %v4012 = vadd.f32 %v3994, %v4008
  %v4013 = vadd.f32 %v3995, %v4009
  %v4014 = vadd.f32 %v3996, %v4010
  %v4015 = vrot.slane %v3243, 3
  %v4016 = vrot.slane %v3244, 3
  %v4017 = vsel %vm2966, %v4015, %v4016
  %v4020 = vrot.slane %v3245, 3
  %v4021 = vrot.slane %v3246, 3
  %v4022 = vsel %vm2966, %v4020, %v4021
  %v4025 = vsel %vm2966, %v4016, 0.0
  %v4026 = vsel %vm2966, %v4021, 0.0
  %4027 = vrot.lane.b32.xlu0 %v4017, 24
  %v4028 = vpop.permute.xlu0 %4027
  %4029 = vrot.lane.b32.xlu0 %v4025, 24
  %v4030 = vpop.permute.xlu0 %4029
  %4031 = vrot.lane.b32.xlu0 %v4022, 24
  %v4032 = vpop.permute.xlu0 %4031
  %4033 = vrot.lane.b32.xlu0 %v4026, 24
  %v4034 = vpop.permute.xlu0 %4033
  %v4035 = vld [vmem:[%s7 + $0x2a] sm:$0x1]
  %v4036 = vperm.slane %v4035, 0
  %v4037 = vmul.f32 %v4028, %v4036
  %v4038 = vmul.f32 %v4030, %v4036
  %v4039 = vmul.f32 %v4032, %v4036
  %v4040 = vmul.f32 %v4034, %v4036
  %v4041 = vadd.f32 %v4011, %v4037
  %v4042 = vadd.f32 %v4012, %v4038
  %v4043 = vadd.f32 %v4013, %v4039
  %v4044 = vadd.f32 %v4014, %v4040
  %4045 = vrot.lane.b32.xlu0 %v4017, 16
  %v4046 = vpop.permute.xlu0 %4045
  %4047 = vrot.lane.b32.xlu0 %v4025, 16
  %v4048 = vpop.permute.xlu0 %4047
  %4049 = vrot.lane.b32.xlu0 %v4022, 16
  %v4050 = vpop.permute.xlu0 %4049
  %4051 = vrot.lane.b32.xlu0 %v4026, 16
  %v4052 = vpop.permute.xlu0 %4051
  %v4053 = vld [vmem:[%s7 + $0x2b] sm:$0x1]
  %v4054 = vperm.slane %v4053, 0
  %v4055 = vmul.f32 %v4046, %v4054
  %v4056 = vmul.f32 %v4048, %v4054
  %v4057 = vmul.f32 %v4050, %v4054
  %v4058 = vmul.f32 %v4052, %v4054
  %v4059 = vadd.f32 %v4041, %v4055
  %v4060 = vadd.f32 %v4042, %v4056
  %v4061 = vadd.f32 %v4043, %v4057
  %v4062 = vadd.f32 %v4044, %v4058
  %4063 = vrot.lane.b32.xlu0 %v4017, 8
  %v4064 = vpop.permute.xlu0 %4063
  %4065 = vrot.lane.b32.xlu0 %v4025, 8
  %v4066 = vpop.permute.xlu0 %4065
  %4067 = vrot.lane.b32.xlu0 %v4022, 8
  %v4068 = vpop.permute.xlu0 %4067
  %4069 = vrot.lane.b32.xlu0 %v4026, 8
  %v4070 = vpop.permute.xlu0 %4069
  %v4071 = vld [vmem:[%s7 + $0x2c] sm:$0x1]
  %v4072 = vperm.slane %v4071, 0
  %v4073 = vmul.f32 %v4064, %v4072
  %v4074 = vmul.f32 %v4066, %v4072
  %v4075 = vmul.f32 %v4068, %v4072
  %v4076 = vmul.f32 %v4070, %v4072
  %v4077 = vadd.f32 %v4059, %v4073
  %v4078 = vadd.f32 %v4060, %v4074
  %v4079 = vadd.f32 %v4061, %v4075
  %v4080 = vadd.f32 %v4062, %v4076
  %v4081 = vld [vmem:[%s7 + $0x2d] sm:$0x1]
  %v4082 = vperm.slane %v4081, 0
  %v4083 = vmul.f32 %v4017, %v4082
  %v4084 = vmul.f32 %v4025, %v4082
  %v4085 = vmul.f32 %v4022, %v4082
  %v4086 = vmul.f32 %v4026, %v4082
  %v4087 = vadd.f32 %v4077, %v4083
  %v4088 = vadd.f32 %v4078, %v4084
  %v4089 = vadd.f32 %v4079, %v4085
  %v4090 = vadd.f32 %v4080, %v4086
  %4091 = vrot.lane.b32.xlu0 %v4017, 120
  %v4092 = vpop.permute.xlu0 %4091
  %4093 = vrot.lane.b32.xlu0 %v4025, 120
  %v4094 = vpop.permute.xlu0 %4093
  %4095 = vrot.lane.b32.xlu0 %v4022, 120
  %v4096 = vpop.permute.xlu0 %4095
  %4097 = vrot.lane.b32.xlu0 %v4026, 120
  %v4098 = vpop.permute.xlu0 %4097
  %v4099 = vld [vmem:[%s7 + $0x2e] sm:$0x1]
  %v4100 = vperm.slane %v4099, 0
  %v4101 = vmul.f32 %v4092, %v4100
  %v4102 = vmul.f32 %v4094, %v4100
  %v4103 = vmul.f32 %v4096, %v4100
  %v4104 = vmul.f32 %v4098, %v4100
  %v4105 = vadd.f32 %v4087, %v4101
  %v4106 = vadd.f32 %v4088, %v4102
  %v4107 = vadd.f32 %v4089, %v4103
  %v4108 = vadd.f32 %v4090, %v4104
  %4109 = vrot.lane.b32.xlu0 %v4017, 112
  %v4110 = vpop.permute.xlu0 %4109
  %4111 = vrot.lane.b32.xlu0 %v4025, 112
  %v4112 = vpop.permute.xlu0 %4111
  %4113 = vrot.lane.b32.xlu0 %v4022, 112
  %v4114 = vpop.permute.xlu0 %4113
  %4115 = vrot.lane.b32.xlu0 %v4026, 112
  %v4116 = vpop.permute.xlu0 %4115
  %v4117 = vld [vmem:[%s7 + $0x2f] sm:$0x1]
  %v4118 = vperm.slane %v4117, 0
  %v4119 = vmul.f32 %v4110, %v4118
  %v4120 = vmul.f32 %v4112, %v4118
  %v4121 = vmul.f32 %v4114, %v4118
  %v4122 = vmul.f32 %v4116, %v4118
  %v4123 = vadd.f32 %v4105, %v4119
  %v4124 = vadd.f32 %v4106, %v4120
  %v4125 = vadd.f32 %v4107, %v4121
  %v4126 = vadd.f32 %v4108, %v4122
  %4127 = vrot.lane.b32.xlu0 %v4017, 104
  %v4128 = vpop.permute.xlu0 %4127
  %4129 = vrot.lane.b32.xlu0 %v4025, 104
  %v4130 = vpop.permute.xlu0 %4129
  %4131 = vrot.lane.b32.xlu0 %v4022, 104
  %v4132 = vpop.permute.xlu0 %4131
  %4133 = vrot.lane.b32.xlu0 %v4026, 104
  %v4134 = vpop.permute.xlu0 %4133
  %v4135 = vld [vmem:[%s7 + $0x30] sm:$0x1]
  %v4136 = vperm.slane %v4135, 0
  %v4137 = vmul.f32 %v4128, %v4136
  %v4138 = vmul.f32 %v4130, %v4136
  %v4139 = vmul.f32 %v4132, %v4136
  %v4140 = vmul.f32 %v4134, %v4136
  %v4141 = vadd.f32 %v4123, %v4137
  %v4142 = vadd.f32 %v4124, %v4138
  %v4143 = vadd.f32 %v4125, %v4139
  %v4144 = vadd.f32 %v4126, %v4140
  %v4145 = vld [vmem:[%s15] sm:$0xff]
  %v4146 = vld [vmem:[%s15 + $0x8] sm:$0xff]
  %v4147 = vld [vmem:[%s15 + $0x10] sm:$0xff]
  %v4148 = vld [vmem:[%s15 + $0x18] sm:$0xff]
  %v4149 = vld [vmem:[%s15 + $0x20] sm:$0xff]
  %v4150 = vld [vmem:[%s15 + $0x28] sm:$0xff]
  %v4151 = vld [vmem:[%s15 + $0x30] sm:$0xff]
  %v4152 = vld [vmem:[%s15 + $0x38] sm:$0xff]
  %v4153 = vld [vmem:[%s15 + $0x40] sm:$0xff]
  %v4154 = vld [vmem:[%s15 + $0x48] sm:$0xff]
  %v4155 = vld [vmem:[%s15 + $0x50] sm:$0xff]
  %v4156 = vld [vmem:[%s15 + $0x58] sm:$0xff]
  %v4157 = vld [vmem:[%s15 + $0x60] sm:$0xff]
  %v4158 = vld [vmem:[%s15 + $0x68] sm:$0xff]
  %v4159 = vld [vmem:[%s15 + $0x70] sm:$0xff]
  %v4160 = vld [vmem:[%s15 + $0x78] sm:$0xff]
  %4161 = vmatpush.msra.mxu0 %v4160
  %4162 = vmatpush.msra.mxu0 %v4159
  %4163 = vmatpush.msra.mxu0 %v4158
  %4164 = vmatpush.msra.mxu0 %v4157
  %4165 = vmatpush.msra.mxu0 %v4156
  %4166 = vmatpush.msra.mxu0 %v4155
  %4167 = vmatpush.msra.mxu0 %v4154
  %4168 = vmatpush.msra.mxu0 %v4153
  %4169 = vmatpush.msra.mxu0 %v4152
  %4170 = vmatpush.msra.mxu0 %v4151
  %4171 = vmatpush.msra.mxu0 %v4150
  %4172 = vmatpush.msra.mxu0 %v4149
  %4173 = vmatpush.msra.mxu0 %v4148
  %4174 = vmatpush.msra.mxu0 %v4147
  %4175 = vmatpush.msra.mxu0 %v4146
  %4176 = vmatpush.msra.mxu0 %v4145
  %4177 = vmatmul.f32.gmra.mxu0 %v4141
  %v4178 = vpop.f32.mrf.mxu0
  %v4179 = vadd.f32 0.0, %v4178
  %4180 = vmatmul.f32.gmra.mxu0 %v4142
  %v4181 = vpop.f32.mrf.mxu0
  %v4182 = vadd.f32 0.0, %v4181
  %4183 = vmatmul.f32.gmra.mxu0 %v4143
  %v4184 = vpop.f32.mrf.mxu0
  %v4185 = vadd.f32 0.0, %v4184
  %4186 = vmatmul.f32.gmra.mxu0 %v4144
  %v4187 = vpop.f32.mrf.mxu0
  %v4188 = vadd.f32 0.0, %v4187
  %4189 = vdwg.mxu0
  %4190 = vmatpush.msra.mxu0 %v87
  %4191 = vmatpush.msra.mxu0 %v86
  %4192 = vmatpush.msra.mxu0 %v85
  %4193 = vmatpush.msra.mxu0 %v84
  %4194 = vmatpush.msra.mxu0 %v83
  %4195 = vmatpush.msra.mxu0 %v82
  %4196 = vmatpush.msra.mxu0 %v81
  %4197 = vmatpush.msra.mxu0 %v80
  %4198 = vmatpush.msra.mxu0 %v79
  %4199 = vmatpush.msra.mxu0 %v78
  %4200 = vmatpush.msra.mxu0 %v77
  %4201 = vmatpush.msra.mxu0 %v76
  %4202 = vmatpush.msra.mxu0 %v75
  %4203 = vmatpush.msra.mxu0 %v74
  %4204 = vmatpush.msra.mxu0 %v73
  %4205 = vmatpush.msra.mxu0 %v72
  %4206 = vmatmul.f32.gmra.mxu0 %v4179
  %v4207 = vpop.f32.mrf.mxu0
  %v4208 = vadd.f32 0.0, %v4207
  %4209 = vmatmul.f32.gmra.mxu0 %v4182
  %v4210 = vpop.f32.mrf.mxu0
  %v4211 = vadd.f32 0.0, %v4210
  %4212 = vmatmul.f32.gmra.mxu0 %v4185
  %v4213 = vpop.f32.mrf.mxu0
  %v4214 = vadd.f32 0.0, %v4213
  %4215 = vmatmul.f32.gmra.mxu0 %v4188
  %v4216 = vpop.f32.mrf.mxu0
  %v4217 = vadd.f32 0.0, %v4216
  %4218 = vdwg.mxu0
  %v4219 = vadd.f32 %v4208, %v4211
  %v4220 = vadd.f32 %v4219, %v4214
  %v4221 = vadd.f32 %v4220, %v4217
  %v4222 = vrot.slane %v4221, 4
  %v4223 = vadd.f32 %v4221, %v4222
  %v4224 = vrot.slane %v4223, 2
  %v4225 = vadd.f32 %v4223, %v4224
  %v4226 = vrot.slane %v4225, 1
  %v4227 = vadd.f32 %v4225, %v4226
  %v4228 = vmul.f32 %v4227, 0.001953125
  %v4229 = vsub.f32 %v4179, %v4228
  %v4230 = vsub.f32 %v4182, %v4228
  %v4231 = vsub.f32 %v4185, %v4228
  %v4232 = vsub.f32 %v4188, %v4228
  %v4233 = vmul.f32 %v4229, %v4229
  %v4234 = vmul.f32 %v4230, %v4230
  %v4235 = vmul.f32 %v4231, %v4231
  %v4236 = vmul.f32 %v4232, %v4232
  %4237 = vmatpush.msra.mxu0 %v87
  %4238 = vmatpush.msra.mxu0 %v86
  %4239 = vmatpush.msra.mxu0 %v85
  %4240 = vmatpush.msra.mxu0 %v84
  %4241 = vmatpush.msra.mxu0 %v83
  %4242 = vmatpush.msra.mxu0 %v82
  %4243 = vmatpush.msra.mxu0 %v81
  %4244 = vmatpush.msra.mxu0 %v80
  %4245 = vmatpush.msra.mxu0 %v79
  %4246 = vmatpush.msra.mxu0 %v78
  %4247 = vmatpush.msra.mxu0 %v77
  %4248 = vmatpush.msra.mxu0 %v76
  %4249 = vmatpush.msra.mxu0 %v75
  %4250 = vmatpush.msra.mxu0 %v74
  %4251 = vmatpush.msra.mxu0 %v73
  %4252 = vmatpush.msra.mxu0 %v72
  %4253 = vmatmul.f32.gmra.mxu0 %v4233
  %v4254 = vpop.f32.mrf.mxu0
  %v4255 = vadd.f32 0.0, %v4254
  %4256 = vmatmul.f32.gmra.mxu0 %v4234
  %v4257 = vpop.f32.mrf.mxu0
  %v4258 = vadd.f32 0.0, %v4257
  %4259 = vmatmul.f32.gmra.mxu0 %v4235
  %v4260 = vpop.f32.mrf.mxu0
  %v4261 = vadd.f32 0.0, %v4260
  %4262 = vmatmul.f32.gmra.mxu0 %v4236
  %v4263 = vpop.f32.mrf.mxu0
  %v4264 = vadd.f32 0.0, %v4263
  %4265 = vdwg.mxu0
  %v4266 = vadd.f32 %v4255, %v4258
  %v4267 = vadd.f32 %v4266, %v4261
  %v4268 = vadd.f32 %v4267, %v4264
  %v4269 = vrot.slane %v4268, 4
  %v4270 = vadd.f32 %v4268, %v4269
  %v4271 = vrot.slane %v4270, 2
  %v4272 = vadd.f32 %v4270, %v4271
  %v4273 = vrot.slane %v4272, 1
  %v4274 = vadd.f32 %v4272, %v4273
  %v4275 = vmul.f32 %v4274, 0.001953125
  %v4276 = vadd.f32 %v4275, 1e-05
  %v4277 = vrsqrt.pop %v4276
  %v4278 = vmul.f32 %v4277, %v4276
  %v4279 = vmul.f32 %v4278, %v4277
  %v4280 = vmul.f32 0.5, %v4279
  %v4281 = vsub.f32 1.5, %v4280
  %v4282 = vmul.f32 %v4277, %v4281
  %vm4283 = vweird.f32 %v4276
  %vm4284 = vweird.f32 %v4277
  %vm4285 = vmor %vm4283, %vm4284
  %v4286 = vsel %vm4285, %v4277, %v4282
  %v4287 = vmul.f32 %v4229, %v4286
  %v4288 = vmul.f32 %v4230, %v4286
  %v4289 = vmul.f32 %v4231, %v4286
  %v4290 = vmul.f32 %v4232, %v4286
  %v4291 = vperm.slane %v2408, 0
  %v4292 = vmul.f32 %v4291, %v4287
  %v4293 = vmul.f32 %v4291, %v4288
  %v4294 = vmul.f32 %v4291, %v4289
  %v4295 = vmul.f32 %v4291, %v4290
  %v4296 = vadd.f32 %v2404, %v4292
  %v4297 = vadd.f32 %v2405, %v4293
  %v4298 = vadd.f32 %v2406, %v4294
  %v4299 = vadd.f32 %v2407, %v4295
  %v4300 = vld [vmem:[%s1 + $0x7] sm:$0x1]
  %v4301 = vld [vmem:[%s8] sm:$0x1]
  %v4302 = vperm.slane %v4301, 0
  %v4303 = vmul.f32 %v1275, %v4302
  %v4304 = vmul.f32 %v1277, %v4302
  %v4305 = vmul.f32 %v1279, %v4302
  %v4306 = vmul.f32 %v1281, %v4302
  %v4307 = vld [vmem:[%s8 + $0x1] sm:$0x1]
  %v4308 = vperm.slane %v4307, 0
  %v4309 = vmul.f32 %v1272, %v4308
  %v4310 = vmul.f32 %v1264, %v4308
  %v4311 = vmul.f32 %v1273, %v4308
  %v4312 = vmul.f32 %v1269, %v4308
  %v4313 = vadd.f32 %v4303, %v4309
  %v4314 = vadd.f32 %v4304, %v4310
  %v4315 = vadd.f32 %v4305, %v4311
  %v4316 = vadd.f32 %v4306, %v4312
  %v4317 = vld [vmem:[%s8 + $0x2] sm:$0x1]
  %v4318 = vperm.slane %v4317, 0
  %v4319 = vmul.f32 %v1335, %v4318
  %v4320 = vmul.f32 %v1337, %v4318
  %v4321 = vmul.f32 %v1339, %v4318
  %v4322 = vmul.f32 %v1341, %v4318
  %v4323 = vadd.f32 %v4313, %v4319
  %v4324 = vadd.f32 %v4314, %v4320
  %v4325 = vadd.f32 %v4315, %v4321
  %v4326 = vadd.f32 %v4316, %v4322
  %v4327 = vld [vmem:[%s8 + $0x3] sm:$0x1]
  %v4328 = vperm.slane %v4327, 0
  %v4329 = vmul.f32 %v1419, %v4328
  %v4330 = vmul.f32 %v1421, %v4328
  %v4331 = vmul.f32 %v1423, %v4328
  %v4332 = vmul.f32 %v1425, %v4328
  %v4333 = vadd.f32 %v4323, %v4329
  %v4334 = vadd.f32 %v4324, %v4330
  %v4335 = vadd.f32 %v4325, %v4331
  %v4336 = vadd.f32 %v4326, %v4332
  %v4337 = vld [vmem:[%s8 + $0x4] sm:$0x1]
  %v4338 = vperm.slane %v4337, 0
  %v4339 = vmul.f32 %v88, %v4338
  %v4340 = vmul.f32 %v89, %v4338
  %v4341 = vmul.f32 %v90, %v4338
  %v4342 = vmul.f32 %v91, %v4338
  %v4343 = vadd.f32 %v4333, %v4339
  %v4344 = vadd.f32 %v4334, %v4340
  %v4345 = vadd.f32 %v4335, %v4341
  %v4346 = vadd.f32 %v4336, %v4342
  %v4347 = vld [vmem:[%s8 + $0x5] sm:$0x1]
  %v4348 = vperm.slane %v4347, 0
  %v4349 = vmul.f32 %v1467, %v4348
  %v4350 = vmul.f32 %v1469, %v4348
  %v4351 = vmul.f32 %v1471, %v4348
  %v4352 = vmul.f32 %v1473, %v4348
  %v4353 = vadd.f32 %v4343, %v4349
  %v4354 = vadd.f32 %v4344, %v4350
  %v4355 = vadd.f32 %v4345, %v4351
  %v4356 = vadd.f32 %v4346, %v4352
  %v4357 = vld [vmem:[%s8 + $0x6] sm:$0x1]
  %v4358 = vperm.slane %v4357, 0
  %v4359 = vmul.f32 %v1564, %v4358
  %v4360 = vmul.f32 %v1566, %v4358
  %v4361 = vmul.f32 %v1568, %v4358
  %v4362 = vmul.f32 %v1570, %v4358
  %v4363 = vadd.f32 %v4353, %v4359
  %v4364 = vadd.f32 %v4354, %v4360
  %v4365 = vadd.f32 %v4355, %v4361
  %v4366 = vadd.f32 %v4356, %v4362
  %v4367 = vld [vmem:[%s8 + $0x7] sm:$0x1]
  %v4368 = vperm.slane %v4367, 0
  %v4369 = vmul.f32 %v1553, %v4368
  %v4370 = vmul.f32 %v1561, %v4368
  %v4371 = vmul.f32 %v1558, %v4368
  %v4372 = vmul.f32 %v1562, %v4368
  %v4373 = vadd.f32 %v4363, %v4369
  %v4374 = vadd.f32 %v4364, %v4370
  %v4375 = vadd.f32 %v4365, %v4371
  %v4376 = vadd.f32 %v4366, %v4372
  %v4377 = vld [vmem:[%s8 + $0x8] sm:$0x1]
  %v4378 = vperm.slane %v4377, 0
  %v4379 = vmul.f32 %v1628, %v4378
  %v4380 = vmul.f32 %v1630, %v4378
  %v4381 = vmul.f32 %v1632, %v4378
  %v4382 = vmul.f32 %v1634, %v4378
  %v4383 = vadd.f32 %v4373, %v4379
  %v4384 = vadd.f32 %v4374, %v4380
  %v4385 = vadd.f32 %v4375, %v4381
  %v4386 = vadd.f32 %v4376, %v4382
  %v4387 = vld [vmem:[%s16] sm:$0xff]
  %v4388 = vld [vmem:[%s16 + $0x8] sm:$0xff]
  %v4389 = vld [vmem:[%s16 + $0x10] sm:$0xff]
  %v4390 = vld [vmem:[%s16 + $0x18] sm:$0xff]
  %v4391 = vld [vmem:[%s16 + $0x20] sm:$0xff]
  %v4392 = vld [vmem:[%s16 + $0x28] sm:$0xff]
  %v4393 = vld [vmem:[%s16 + $0x30] sm:$0xff]
  %v4394 = vld [vmem:[%s16 + $0x38] sm:$0xff]
  %v4395 = vld [vmem:[%s16 + $0x40] sm:$0xff]
  %v4396 = vld [vmem:[%s16 + $0x48] sm:$0xff]
  %v4397 = vld [vmem:[%s16 + $0x50] sm:$0xff]
  %v4398 = vld [vmem:[%s16 + $0x58] sm:$0xff]
  %v4399 = vld [vmem:[%s16 + $0x60] sm:$0xff]
  %v4400 = vld [vmem:[%s16 + $0x68] sm:$0xff]
  %v4401 = vld [vmem:[%s16 + $0x70] sm:$0xff]
  %v4402 = vld [vmem:[%s16 + $0x78] sm:$0xff]
  %4403 = vmatpush.msra.mxu0 %v4402
  %4404 = vmatpush.msra.mxu0 %v4401
  %4405 = vmatpush.msra.mxu0 %v4400
  %4406 = vmatpush.msra.mxu0 %v4399
  %4407 = vmatpush.msra.mxu0 %v4398
  %4408 = vmatpush.msra.mxu0 %v4397
  %4409 = vmatpush.msra.mxu0 %v4396
  %4410 = vmatpush.msra.mxu0 %v4395
  %4411 = vmatpush.msra.mxu0 %v4394
  %4412 = vmatpush.msra.mxu0 %v4393
  %4413 = vmatpush.msra.mxu0 %v4392
  %4414 = vmatpush.msra.mxu0 %v4391
  %4415 = vmatpush.msra.mxu0 %v4390
  %4416 = vmatpush.msra.mxu0 %v4389
  %4417 = vmatpush.msra.mxu0 %v4388
  %4418 = vmatpush.msra.mxu0 %v4387
  %4419 = vmatmul.f32.gmra.mxu0 %v4383
  %v4420 = vpop.f32.mrf.mxu0
  %v4421 = vadd.f32 0.0, %v4420
  %4422 = vmatmul.f32.gmra.mxu0 %v4384
  %v4423 = vpop.f32.mrf.mxu0
  %v4424 = vadd.f32 0.0, %v4423
  %4425 = vmatmul.f32.gmra.mxu0 %v4385
  %v4426 = vpop.f32.mrf.mxu0
  %v4427 = vadd.f32 0.0, %v4426
  %4428 = vmatmul.f32.gmra.mxu0 %v4386
  %v4429 = vpop.f32.mrf.mxu0
  %v4430 = vadd.f32 0.0, %v4429
  %4431 = vdwg.mxu0
  %4432 = vmatpush.msra.mxu0 %v87
  %4433 = vmatpush.msra.mxu0 %v86
  %4434 = vmatpush.msra.mxu0 %v85
  %4435 = vmatpush.msra.mxu0 %v84
  %4436 = vmatpush.msra.mxu0 %v83
  %4437 = vmatpush.msra.mxu0 %v82
  %4438 = vmatpush.msra.mxu0 %v81
  %4439 = vmatpush.msra.mxu0 %v80
  %4440 = vmatpush.msra.mxu0 %v79
  %4441 = vmatpush.msra.mxu0 %v78
  %4442 = vmatpush.msra.mxu0 %v77
  %4443 = vmatpush.msra.mxu0 %v76
  %4444 = vmatpush.msra.mxu0 %v75
  %4445 = vmatpush.msra.mxu0 %v74
  %4446 = vmatpush.msra.mxu0 %v73
  %4447 = vmatpush.msra.mxu0 %v72
  %4448 = vmatmul.f32.gmra.mxu0 %v4421
  %v4449 = vpop.f32.mrf.mxu0
  %v4450 = vadd.f32 0.0, %v4449
  %4451 = vmatmul.f32.gmra.mxu0 %v4424
  %v4452 = vpop.f32.mrf.mxu0
  %v4453 = vadd.f32 0.0, %v4452
  %4454 = vmatmul.f32.gmra.mxu0 %v4427
  %v4455 = vpop.f32.mrf.mxu0
  %v4456 = vadd.f32 0.0, %v4455
  %4457 = vmatmul.f32.gmra.mxu0 %v4430
  %v4458 = vpop.f32.mrf.mxu0
  %v4459 = vadd.f32 0.0, %v4458
  %4460 = vdwg.mxu0
  %v4461 = vadd.f32 %v4450, %v4453
  %v4462 = vadd.f32 %v4461, %v4456
  %v4463 = vadd.f32 %v4462, %v4459
  %v4464 = vrot.slane %v4463, 4
  %v4465 = vadd.f32 %v4463, %v4464
  %v4466 = vrot.slane %v4465, 2
  %v4467 = vadd.f32 %v4465, %v4466
  %v4468 = vrot.slane %v4467, 1
  %v4469 = vadd.f32 %v4467, %v4468
  %v4470 = vmul.f32 %v4469, 0.001953125
  %v4471 = vsub.f32 %v4421, %v4470
  %v4472 = vsub.f32 %v4424, %v4470
  %v4473 = vsub.f32 %v4427, %v4470
  %v4474 = vsub.f32 %v4430, %v4470
  %v4475 = vmul.f32 %v4471, %v4471
  %v4476 = vmul.f32 %v4472, %v4472
  %v4477 = vmul.f32 %v4473, %v4473
  %v4478 = vmul.f32 %v4474, %v4474
  %4479 = vmatpush.msra.mxu0 %v87
  %4480 = vmatpush.msra.mxu0 %v86
  %4481 = vmatpush.msra.mxu0 %v85
  %4482 = vmatpush.msra.mxu0 %v84
  %4483 = vmatpush.msra.mxu0 %v83
  %4484 = vmatpush.msra.mxu0 %v82
  %4485 = vmatpush.msra.mxu0 %v81
  %4486 = vmatpush.msra.mxu0 %v80
  %4487 = vmatpush.msra.mxu0 %v79
  %4488 = vmatpush.msra.mxu0 %v78
  %4489 = vmatpush.msra.mxu0 %v77
  %4490 = vmatpush.msra.mxu0 %v76
  %4491 = vmatpush.msra.mxu0 %v75
  %4492 = vmatpush.msra.mxu0 %v74
  %4493 = vmatpush.msra.mxu0 %v73
  %4494 = vmatpush.msra.mxu0 %v72
  %4495 = vmatmul.f32.gmra.mxu0 %v4475
  %v4496 = vpop.f32.mrf.mxu0
  %v4497 = vadd.f32 0.0, %v4496
  %4498 = vmatmul.f32.gmra.mxu0 %v4476
  %v4499 = vpop.f32.mrf.mxu0
  %v4500 = vadd.f32 0.0, %v4499
  %4501 = vmatmul.f32.gmra.mxu0 %v4477
  %v4502 = vpop.f32.mrf.mxu0
  %v4503 = vadd.f32 0.0, %v4502
  %4504 = vmatmul.f32.gmra.mxu0 %v4478
  %v4505 = vpop.f32.mrf.mxu0
  %v4506 = vadd.f32 0.0, %v4505
  %4507 = vdwg.mxu0
  %v4508 = vadd.f32 %v4497, %v4500
  %v4509 = vadd.f32 %v4508, %v4503
  %v4510 = vadd.f32 %v4509, %v4506
  %v4511 = vrot.slane %v4510, 4
  %v4512 = vadd.f32 %v4510, %v4511
  %v4513 = vrot.slane %v4512, 2
  %v4514 = vadd.f32 %v4512, %v4513
  %v4515 = vrot.slane %v4514, 1
  %v4516 = vadd.f32 %v4514, %v4515
  %v4517 = vmul.f32 %v4516, 0.001953125
  %v4518 = vadd.f32 %v4517, 1e-05
  %v4519 = vrsqrt.pop %v4518
  %v4520 = vmul.f32 %v4519, %v4518
  %v4521 = vmul.f32 %v4520, %v4519
  %v4522 = vmul.f32 0.5, %v4521
  %v4523 = vsub.f32 1.5, %v4522
  %v4524 = vmul.f32 %v4519, %v4523
  %vm4525 = vweird.f32 %v4518
  %vm4526 = vweird.f32 %v4519
  %vm4527 = vmor %vm4525, %vm4526
  %v4528 = vsel %vm4527, %v4519, %v4524
  %v4529 = vmul.f32 %v4471, %v4528
  %v4530 = vmul.f32 %v4472, %v4528
  %v4531 = vmul.f32 %v4473, %v4528
  %v4532 = vmul.f32 %v4474, %v4528
  %v4533 = vperm.slane %v4300, 0
  %v4534 = vmul.f32 %v4533, %v4529
  %v4535 = vmul.f32 %v4533, %v4530
  %v4536 = vmul.f32 %v4533, %v4531
  %v4537 = vmul.f32 %v4533, %v4532
  %v4538 = vadd.f32 %v4296, %v4534
  %v4539 = vadd.f32 %v4297, %v4535
  %v4540 = vadd.f32 %v4298, %v4536
  %v4541 = vadd.f32 %v4299, %v4537
  %v4542 = vld [vmem:[%s1 + $0x8] sm:$0x1]
  %vm4543 = vcmask 1043456
  %v4544 = vrot.slane %v88, 4
  %v4545 = vrot.slane %v89, 4
  %v4546 = vsel %vm4543, %v4544, %v4545
  %v4549 = vrot.slane %v90, 4
  %v4550 = vrot.slane %v91, 4
  %v4551 = vsel %vm4543, %v4549, %v4550
  %v4554 = vsel %vm4543, 0.0, %v4544
  %v4555 = vsel %vm4543, 0.0, %v4549
  %4556 = vrot.lane.b32.xlu0 %v4554, 32
  %v4557 = vpop.permute.xlu0 %4556
  %4558 = vrot.lane.b32.xlu0 %v4546, 32
  %v4559 = vpop.permute.xlu0 %4558
  %4560 = vrot.lane.b32.xlu0 %v4555, 32
  %v4561 = vpop.permute.xlu0 %4560
  %4562 = vrot.lane.b32.xlu0 %v4551, 32
  %v4563 = vpop.permute.xlu0 %4562
  %v4564 = vld [vmem:[%s9] sm:$0x1]
  %v4565 = vperm.slane %v4564, 0
  %v4566 = vmul.f32 %v4557, %v4565
  %v4567 = vmul.f32 %v4559, %v4565
  %v4568 = vmul.f32 %v4561, %v4565
  %v4569 = vmul.f32 %v4563, %v4565
  %4570 = vrot.lane.b32.xlu0 %v4554, 16
  %v4571 = vpop.permute.xlu0 %4570
  %4572 = vrot.lane.b32.xlu0 %v4546, 16
  %v4573 = vpop.permute.xlu0 %4572
  %4574 = vrot.lane.b32.xlu0 %v4555, 16
  %v4575 = vpop.permute.xlu0 %4574
  %4576 = vrot.lane.b32.xlu0 %v4551, 16
  %v4577 = vpop.permute.xlu0 %4576
  %v4578 = vld [vmem:[%s9 + $0x1] sm:$0x1]
  %v4579 = vperm.slane %v4578, 0
  %v4580 = vmul.f32 %v4571, %v4579
  %v4581 = vmul.f32 %v4573, %v4579
  %v4582 = vmul.f32 %v4575, %v4579
  %v4583 = vmul.f32 %v4577, %v4579
  %v4584 = vadd.f32 %v4566, %v4580
  %v4585 = vadd.f32 %v4567, %v4581
  %v4586 = vadd.f32 %v4568, %v4582
  %v4587 = vadd.f32 %v4569, %v4583
  %v4588 = vld [vmem:[%s9 + $0x2] sm:$0x1]
  %v4589 = vperm.slane %v4588, 0
  %v4590 = vmul.f32 %v4554, %v4589
  %v4591 = vmul.f32 %v4546, %v4589
  %v4592 = vmul.f32 %v4555, %v4589
  %v4593 = vmul.f32 %v4551, %v4589
  %v4594 = vadd.f32 %v4584, %v4590
  %v4595 = vadd.f32 %v4585, %v4591
  %v4596 = vadd.f32 %v4586, %v4592
  %v4597 = vadd.f32 %v4587, %v4593
  %4598 = vrot.lane.b32.xlu0 %v4554, 112
  %v4599 = vpop.permute.xlu0 %4598
  %4600 = vrot.lane.b32.xlu0 %v4546, 112
  %v4601 = vpop.permute.xlu0 %4600
  %4602 = vrot.lane.b32.xlu0 %v4555, 112
  %v4603 = vpop.permute.xlu0 %4602
  %4604 = vrot.lane.b32.xlu0 %v4551, 112
  %v4605 = vpop.permute.xlu0 %4604
  %v4606 = vld [vmem:[%s9 + $0x3] sm:$0x1]
  %v4607 = vperm.slane %v4606, 0
  %v4608 = vmul.f32 %v4599, %v4607
  %v4609 = vmul.f32 %v4601, %v4607
  %v4610 = vmul.f32 %v4603, %v4607
  %v4611 = vmul.f32 %v4605, %v4607
  %v4612 = vadd.f32 %v4594, %v4608
  %v4613 = vadd.f32 %v4595, %v4609
  %v4614 = vadd.f32 %v4596, %v4610
  %v4615 = vadd.f32 %v4597, %v4611
  %4616 = vrot.lane.b32.xlu0 %v4554, 96
  %v4617 = vpop.permute.xlu0 %4616
  %4618 = vrot.lane.b32.xlu0 %v4546, 96
  %v4619 = vpop.permute.xlu0 %4618
  %4620 = vrot.lane.b32.xlu0 %v4555, 96
  %v4621 = vpop.permute.xlu0 %4620
  %4622 = vrot.lane.b32.xlu0 %v4551, 96
  %v4623 = vpop.permute.xlu0 %4622
  %v4624 = vld [vmem:[%s9 + $0x4] sm:$0x1]
  %v4625 = vperm.slane %v4624, 0
  %v4626 = vmul.f32 %v4617, %v4625
  %v4627 = vmul.f32 %v4619, %v4625
  %v4628 = vmul.f32 %v4621, %v4625
  %v4629 = vmul.f32 %v4623, %v4625
  %v4630 = vadd.f32 %v4612, %v4626
  %v4631 = vadd.f32 %v4613, %v4627
  %v4632 = vadd.f32 %v4614, %v4628
  %v4633 = vadd.f32 %v4615, %v4629
  %4634 = vrot.lane.b32.xlu0 %v1272, 32
  %v4635 = vpop.permute.xlu0 %4634
  %4636 = vrot.lane.b32.xlu0 %v1264, 32
  %v4637 = vpop.permute.xlu0 %4636
  %4638 = vrot.lane.b32.xlu0 %v1273, 32
  %v4639 = vpop.permute.xlu0 %4638
  %4640 = vrot.lane.b32.xlu0 %v1269, 32
  %v4641 = vpop.permute.xlu0 %4640
  %v4642 = vld [vmem:[%s9 + $0x5] sm:$0x1]
  %v4643 = vperm.slane %v4642, 0
  %v4644 = vmul.f32 %v4635, %v4643
  %v4645 = vmul.f32 %v4637, %v4643
  %v4646 = vmul.f32 %v4639, %v4643
  %v4647 = vmul.f32 %v4641, %v4643
  %v4648 = vadd.f32 %v4630, %v4644
  %v4649 = vadd.f32 %v4631, %v4645
  %v4650 = vadd.f32 %v4632, %v4646
  %v4651 = vadd.f32 %v4633, %v4647
  %v4652 = vld [vmem:[%s9 + $0x6] sm:$0x1]
  %v4653 = vperm.slane %v4652, 0
  %v4654 = vmul.f32 %v1275, %v4653
  %v4655 = vmul.f32 %v1277, %v4653
  %v4656 = vmul.f32 %v1279, %v4653
  %v4657 = vmul.f32 %v1281, %v4653
  %v4658 = vadd.f32 %v4648, %v4654
  %v4659 = vadd.f32 %v4649, %v4655
  %v4660 = vadd.f32 %v4650, %v4656
  %v4661 = vadd.f32 %v4651, %v4657
  %v4662 = vld [vmem:[%s9 + $0x7] sm:$0x1]
  %v4663 = vperm.slane %v4662, 0
  %v4664 = vmul.f32 %v1272, %v4663
  %v4665 = vmul.f32 %v1264, %v4663
  %v4666 = vmul.f32 %v1273, %v4663
  %v4667 = vmul.f32 %v1269, %v4663
  %v4668 = vadd.f32 %v4658, %v4664
  %v4669 = vadd.f32 %v4659, %v4665
  %v4670 = vadd.f32 %v4660, %v4666
  %v4671 = vadd.f32 %v4661, %v4667
  %v4672 = vld [vmem:[%s9 + $0x8] sm:$0x1]
  %v4673 = vperm.slane %v4672, 0
  %v4674 = vmul.f32 %v1335, %v4673
  %v4675 = vmul.f32 %v1337, %v4673
  %v4676 = vmul.f32 %v1339, %v4673
  %v4677 = vmul.f32 %v1341, %v4673
  %v4678 = vadd.f32 %v4668, %v4674
  %v4679 = vadd.f32 %v4669, %v4675
  %v4680 = vadd.f32 %v4670, %v4676
  %v4681 = vadd.f32 %v4671, %v4677
  %4682 = vrot.lane.b32.xlu0 %v1272, 96
  %v4683 = vpop.permute.xlu0 %4682
  %4684 = vrot.lane.b32.xlu0 %v1264, 96
  %v4685 = vpop.permute.xlu0 %4684
  %4686 = vrot.lane.b32.xlu0 %v1273, 96
  %v4687 = vpop.permute.xlu0 %4686
  %4688 = vrot.lane.b32.xlu0 %v1269, 96
  %v4689 = vpop.permute.xlu0 %4688
  %v4690 = vld [vmem:[%s9 + $0x9] sm:$0x1]
  %v4691 = vperm.slane %v4690, 0
  %v4692 = vmul.f32 %v4683, %v4691
  %v4693 = vmul.f32 %v4685, %v4691
  %v4694 = vmul.f32 %v4687, %v4691
  %v4695 = vmul.f32 %v4689, %v4691
  %v4696 = vadd.f32 %v4678, %v4692
  %v4697 = vadd.f32 %v4679, %v4693
  %v4698 = vadd.f32 %v4680, %v4694
  %v4699 = vadd.f32 %v4681, %v4695
  %4700 = vrot.lane.b32.xlu0 %v88, 32
  %v4701 = vpop.permute.xlu0 %4700
  %4702 = vrot.lane.b32.xlu0 %v89, 32
  %v4703 = vpop.permute.xlu0 %4702
  %4704 = vrot.lane.b32.xlu0 %v90, 32
  %v4705 = vpop.permute.xlu0 %4704
  %4706 = vrot.lane.b32.xlu0 %v91, 32
  %v4707 = vpop.permute.xlu0 %4706
  %v4708 = vld [vmem:[%s9 + $0xa] sm:$0x1]
  %v4709 = vperm.slane %v4708, 0
  %v4710 = vmul.f32 %v4701, %v4709
  %v4711 = vmul.f32 %v4703, %v4709
  %v4712 = vmul.f32 %v4705, %v4709
  %v4713 = vmul.f32 %v4707, %v4709
  %v4714 = vadd.f32 %v4696, %v4710
  %v4715 = vadd.f32 %v4697, %v4711
  %v4716 = vadd.f32 %v4698, %v4712
  %v4717 = vadd.f32 %v4699, %v4713
  %v4718 = vld [vmem:[%s9 + $0xb] sm:$0x1]
  %v4719 = vperm.slane %v4718, 0
  %v4720 = vmul.f32 %v1419, %v4719
  %v4721 = vmul.f32 %v1421, %v4719
  %v4722 = vmul.f32 %v1423, %v4719
  %v4723 = vmul.f32 %v1425, %v4719
  %v4724 = vadd.f32 %v4714, %v4720
  %v4725 = vadd.f32 %v4715, %v4721
  %v4726 = vadd.f32 %v4716, %v4722
  %v4727 = vadd.f32 %v4717, %v4723
  %v4728 = vld [vmem:[%s9 + $0xc] sm:$0x1]
  %v4729 = vperm.slane %v4728, 0
  %v4730 = vmul.f32 %v88, %v4729
  %v4731 = vmul.f32 %v89, %v4729
  %v4732 = vmul.f32 %v90, %v4729
  %v4733 = vmul.f32 %v91, %v4729
  %v4734 = vadd.f32 %v4724, %v4730
  %v4735 = vadd.f32 %v4725, %v4731
  %v4736 = vadd.f32 %v4726, %v4732
  %v4737 = vadd.f32 %v4727, %v4733
  %v4738 = vld [vmem:[%s9 + $0xd] sm:$0x1]
  %v4739 = vperm.slane %v4738, 0
  %v4740 = vmul.f32 %v1467, %v4739
  %v4741 = vmul.f32 %v1469, %v4739
  %v4742 = vmul.f32 %v1471, %v4739
  %v4743 = vmul.f32 %v1473, %v4739
  %v4744 = vadd.f32 %v4734, %v4740
  %v4745 = vadd.f32 %v4735, %v4741
  %v4746 = vadd.f32 %v4736, %v4742
  %v4747 = vadd.f32 %v4737, %v4743
  %4748 = vrot.lane.b32.xlu0 %v88, 96
  %v4749 = vpop.permute.xlu0 %4748
  %4750 = vrot.lane.b32.xlu0 %v89, 96
  %v4751 = vpop.permute.xlu0 %4750
  %4752 = vrot.lane.b32.xlu0 %v90, 96
  %v4753 = vpop.permute.xlu0 %4752
  %4754 = vrot.lane.b32.xlu0 %v91, 96
  %v4755 = vpop.permute.xlu0 %4754
  %v4756 = vld [vmem:[%s9 + $0xe] sm:$0x1]
  %v4757 = vperm.slane %v4756, 0
  %v4758 = vmul.f32 %v4749, %v4757
  %v4759 = vmul.f32 %v4751, %v4757
  %v4760 = vmul.f32 %v4753, %v4757
  %v4761 = vmul.f32 %v4755, %v4757
  %v4762 = vadd.f32 %v4744, %v4758
  %v4763 = vadd.f32 %v4745, %v4759
  %v4764 = vadd.f32 %v4746, %v4760
  %v4765 = vadd.f32 %v4747, %v4761
  %4766 = vrot.lane.b32.xlu0 %v1553, 32
  %v4767 = vpop.permute.xlu0 %4766
  %4768 = vrot.lane.b32.xlu0 %v1561, 32
  %v4769 = vpop.permute.xlu0 %4768
  %4770 = vrot.lane.b32.xlu0 %v1558, 32
  %v4771 = vpop.permute.xlu0 %4770
  %4772 = vrot.lane.b32.xlu0 %v1562, 32
  %v4773 = vpop.permute.xlu0 %4772
  %v4774 = vld [vmem:[%s9 + $0xf] sm:$0x1]
  %v4775 = vperm.slane %v4774, 0
  %v4776 = vmul.f32 %v4767, %v4775
  %v4777 = vmul.f32 %v4769, %v4775
  %v4778 = vmul.f32 %v4771, %v4775
  %v4779 = vmul.f32 %v4773, %v4775
  %v4780 = vadd.f32 %v4762, %v4776
  %v4781 = vadd.f32 %v4763, %v4777
  %v4782 = vadd.f32 %v4764, %v4778
  %v4783 = vadd.f32 %v4765, %v4779
  %v4784 = vld [vmem:[%s9 + $0x10] sm:$0x1]
  %v4785 = vperm.slane %v4784, 0
  %v4786 = vmul.f32 %v1564, %v4785
  %v4787 = vmul.f32 %v1566, %v4785
  %v4788 = vmul.f32 %v1568, %v4785
  %v4789 = vmul.f32 %v1570, %v4785
  %v4790 = vadd.f32 %v4780, %v4786
  %v4791 = vadd.f32 %v4781, %v4787
  %v4792 = vadd.f32 %v4782, %v4788
  %v4793 = vadd.f32 %v4783, %v4789
  %v4794 = vld [vmem:[%s9 + $0x11] sm:$0x1]
  %v4795 = vperm.slane %v4794, 0
  %v4796 = vmul.f32 %v1553, %v4795
  %v4797 = vmul.f32 %v1561, %v4795
  %v4798 = vmul.f32 %v1558, %v4795
  %v4799 = vmul.f32 %v1562, %v4795
  %v4800 = vadd.f32 %v4790, %v4796
  %v4801 = vadd.f32 %v4791, %v4797
  %v4802 = vadd.f32 %v4792, %v4798
  %v4803 = vadd.f32 %v4793, %v4799
  %v4804 = vld [vmem:[%s9 + $0x12] sm:$0x1]
  %v4805 = vperm.slane %v4804, 0
  %v4806 = vmul.f32 %v1628, %v4805
  %v4807 = vmul.f32 %v1630, %v4805
  %v4808 = vmul.f32 %v1632, %v4805
  %v4809 = vmul.f32 %v1634, %v4805
  %v4810 = vadd.f32 %v4800, %v4806
  %v4811 = vadd.f32 %v4801, %v4807
  %v4812 = vadd.f32 %v4802, %v4808
  %v4813 = vadd.f32 %v4803, %v4809
  %4814 = vrot.lane.b32.xlu0 %v1553, 96
  %v4815 = vpop.permute.xlu0 %4814
  %4816 = vrot.lane.b32.xlu0 %v1561, 96
  %v4817 = vpop.permute.xlu0 %4816
  %4818 = vrot.lane.b32.xlu0 %v1558, 96
  %v4819 = vpop.permute.xlu0 %4818
  %4820 = vrot.lane.b32.xlu0 %v1562, 96
  %v4821 = vpop.permute.xlu0 %4820
  %v4822 = vld [vmem:[%s9 + $0x13] sm:$0x1]
  %v4823 = vperm.slane %v4822, 0
  %v4824 = vmul.f32 %v4815, %v4823
  %v4825 = vmul.f32 %v4817, %v4823
  %v4826 = vmul.f32 %v4819, %v4823
  %v4827 = vmul.f32 %v4821, %v4823
  %v4828 = vadd.f32 %v4810, %v4824
  %v4829 = vadd.f32 %v4811, %v4825
  %v4830 = vadd.f32 %v4812, %v4826
  %v4831 = vadd.f32 %v4813, %v4827
  %v4834 = vsel %vm4543, %v4545, 0.0
  %v4835 = vsel %vm4543, %v4550, 0.0
  %4836 = vrot.lane.b32.xlu0 %v4834, 32
  %v4837 = vpop.permute.xlu0 %4836
  %4838 = vrot.lane.b32.xlu0 %v4835, 32
  %v4839 = vpop.permute.xlu0 %4838
  %v4840 = vld [vmem:[%s9 + $0x14] sm:$0x1]
  %v4841 = vperm.slane %v4840, 0
  %v4842 = vmul.f32 %v4559, %v4841
  %v4843 = vmul.f32 %v4837, %v4841
  %v4844 = vmul.f32 %v4563, %v4841
  %v4845 = vmul.f32 %v4839, %v4841
  %v4846 = vadd.f32 %v4828, %v4842
  %v4847 = vadd.f32 %v4829, %v4843
  %v4848 = vadd.f32 %v4830, %v4844
  %v4849 = vadd.f32 %v4831, %v4845
  %4850 = vrot.lane.b32.xlu0 %v4834, 16
  %v4851 = vpop.permute.xlu0 %4850
  %4852 = vrot.lane.b32.xlu0 %v4835, 16
  %v4853 = vpop.permute.xlu0 %4852
  %v4854 = vld [vmem:[%s9 + $0x15] sm:$0x1]
  %v4855 = vperm.slane %v4854, 0
  %v4856 = vmul.f32 %v4573, %v4855
  %v4857 = vmul.f32 %v4851, %v4855
  %v4858 = vmul.f32 %v4577, %v4855
  %v4859 = vmul.f32 %v4853, %v4855
  %v4860 = vadd.f32 %v4846, %v4856
  %v4861 = vadd.f32 %v4847, %v4857
  %v4862 = vadd.f32 %v4848, %v4858
  %v4863 = vadd.f32 %v4849, %v4859
  %v4864 = vld [vmem:[%s9 + $0x16] sm:$0x1]
  %v4865 = vperm.slane %v4864, 0
  %v4866 = vmul.f32 %v4546, %v4865
  %v4867 = vmul.f32 %v4834, %v4865
  %v4868 = vmul.f32 %v4551, %v4865
  %v4869 = vmul.f32 %v4835, %v4865
  %v4870 = vadd.f32 %v4860, %v4866
  %v4871 = vadd.f32 %v4861, %v4867
  %v4872 = vadd.f32 %v4862, %v4868
  %v4873 = vadd.f32 %v4863, %v4869
  %4874 = vrot.lane.b32.xlu0 %v4834, 112
  %v4875 = vpop.permute.xlu0 %4874
  %4876 = vrot.lane.b32.xlu0 %v4835, 112
  %v4877 = vpop.permute.xlu0 %4876
  %v4878 = vld [vmem:[%s9 + $0x17] sm:$0x1]
  %v4879 = vperm.slane %v4878, 0
  %v4880 = vmul.f32 %v4601, %v4879
  %v4881 = vmul.f32 %v4875, %v4879
  %v4882 = vmul.f32 %v4605, %v4879
  %v4883 = vmul.f32 %v4877, %v4879
  %v4884 = vadd.f32 %v4870, %v4880
  %v4885 = vadd.f32 %v4871, %v4881
  %v4886 = vadd.f32 %v4872, %v4882
  %v4887 = vadd.f32 %v4873, %v4883
  %4888 = vrot.lane.b32.xlu0 %v4834, 96
  %v4889 = vpop.permute.xlu0 %4888
  %4890 = vrot.lane.b32.xlu0 %v4835, 96
  %v4891 = vpop.permute.xlu0 %4890
  %v4892 = vld [vmem:[%s9 + $0x18] sm:$0x1]
  %v4893 = vperm.slane %v4892, 0
  %v4894 = vmul.f32 %v4619, %v4893
  %v4895 = vmul.f32 %v4889, %v4893
  %v4896 = vmul.f32 %v4623, %v4893
  %v4897 = vmul.f32 %v4891, %v4893
  %v4898 = vadd.f32 %v4884, %v4894
  %v4899 = vadd.f32 %v4885, %v4895
  %v4900 = vadd.f32 %v4886, %v4896
  %v4901 = vadd.f32 %v4887, %v4897
  %v4902 = vld [vmem:[%s17] sm:$0xff]
  %v4903 = vld [vmem:[%s17 + $0x8] sm:$0xff]
  %v4904 = vld [vmem:[%s17 + $0x10] sm:$0xff]
  %v4905 = vld [vmem:[%s17 + $0x18] sm:$0xff]
  %v4906 = vld [vmem:[%s17 + $0x20] sm:$0xff]
  %v4907 = vld [vmem:[%s17 + $0x28] sm:$0xff]
  %v4908 = vld [vmem:[%s17 + $0x30] sm:$0xff]
  %v4909 = vld [vmem:[%s17 + $0x38] sm:$0xff]
  %v4910 = vld [vmem:[%s17 + $0x40] sm:$0xff]
  %v4911 = vld [vmem:[%s17 + $0x48] sm:$0xff]
  %v4912 = vld [vmem:[%s17 + $0x50] sm:$0xff]
  %v4913 = vld [vmem:[%s17 + $0x58] sm:$0xff]
  %v4914 = vld [vmem:[%s17 + $0x60] sm:$0xff]
  %v4915 = vld [vmem:[%s17 + $0x68] sm:$0xff]
  %v4916 = vld [vmem:[%s17 + $0x70] sm:$0xff]
  %v4917 = vld [vmem:[%s17 + $0x78] sm:$0xff]
  %4918 = vmatpush.msra.mxu0 %v4917
  %4919 = vmatpush.msra.mxu0 %v4916
  %4920 = vmatpush.msra.mxu0 %v4915
  %4921 = vmatpush.msra.mxu0 %v4914
  %4922 = vmatpush.msra.mxu0 %v4913
  %4923 = vmatpush.msra.mxu0 %v4912
  %4924 = vmatpush.msra.mxu0 %v4911
  %4925 = vmatpush.msra.mxu0 %v4910
  %4926 = vmatpush.msra.mxu0 %v4909
  %4927 = vmatpush.msra.mxu0 %v4908
  %4928 = vmatpush.msra.mxu0 %v4907
  %4929 = vmatpush.msra.mxu0 %v4906
  %4930 = vmatpush.msra.mxu0 %v4905
  %4931 = vmatpush.msra.mxu0 %v4904
  %4932 = vmatpush.msra.mxu0 %v4903
  %4933 = vmatpush.msra.mxu0 %v4902
  %4934 = vmatmul.f32.gmra.mxu0 %v4898
  %v4935 = vpop.f32.mrf.mxu0
  %v4936 = vadd.f32 0.0, %v4935
  %4937 = vmatmul.f32.gmra.mxu0 %v4899
  %v4938 = vpop.f32.mrf.mxu0
  %v4939 = vadd.f32 0.0, %v4938
  %4940 = vmatmul.f32.gmra.mxu0 %v4900
  %v4941 = vpop.f32.mrf.mxu0
  %v4942 = vadd.f32 0.0, %v4941
  %4943 = vmatmul.f32.gmra.mxu0 %v4901
  %v4944 = vpop.f32.mrf.mxu0
  %v4945 = vadd.f32 0.0, %v4944
  %4946 = vdwg.mxu0
  %4947 = vmatpush.msra.mxu0 %v87
  %4948 = vmatpush.msra.mxu0 %v86
  %4949 = vmatpush.msra.mxu0 %v85
  %4950 = vmatpush.msra.mxu0 %v84
  %4951 = vmatpush.msra.mxu0 %v83
  %4952 = vmatpush.msra.mxu0 %v82
  %4953 = vmatpush.msra.mxu0 %v81
  %4954 = vmatpush.msra.mxu0 %v80
  %4955 = vmatpush.msra.mxu0 %v79
  %4956 = vmatpush.msra.mxu0 %v78
  %4957 = vmatpush.msra.mxu0 %v77
  %4958 = vmatpush.msra.mxu0 %v76
  %4959 = vmatpush.msra.mxu0 %v75
  %4960 = vmatpush.msra.mxu0 %v74
  %4961 = vmatpush.msra.mxu0 %v73
  %4962 = vmatpush.msra.mxu0 %v72
  %4963 = vmatmul.f32.gmra.mxu0 %v4936
  %v4964 = vpop.f32.mrf.mxu0
  %v4965 = vadd.f32 0.0, %v4964
  %4966 = vmatmul.f32.gmra.mxu0 %v4939
  %v4967 = vpop.f32.mrf.mxu0
  %v4968 = vadd.f32 0.0, %v4967
  %4969 = vmatmul.f32.gmra.mxu0 %v4942
  %v4970 = vpop.f32.mrf.mxu0
  %v4971 = vadd.f32 0.0, %v4970
  %4972 = vmatmul.f32.gmra.mxu0 %v4945
  %v4973 = vpop.f32.mrf.mxu0
  %v4974 = vadd.f32 0.0, %v4973
  %4975 = vdwg.mxu0
  %v4976 = vadd.f32 %v4965, %v4968
  %v4977 = vadd.f32 %v4976, %v4971
  %v4978 = vadd.f32 %v4977, %v4974
  %v4979 = vrot.slane %v4978, 4
  %v4980 = vadd.f32 %v4978, %v4979
  %v4981 = vrot.slane %v4980, 2
  %v4982 = vadd.f32 %v4980, %v4981
  %v4983 = vrot.slane %v4982, 1
  %v4984 = vadd.f32 %v4982, %v4983
  %v4985 = vmul.f32 %v4984, 0.001953125
  %v4986 = vsub.f32 %v4936, %v4985
  %v4987 = vsub.f32 %v4939, %v4985
  %v4988 = vsub.f32 %v4942, %v4985
  %v4989 = vsub.f32 %v4945, %v4985
  %v4990 = vmul.f32 %v4986, %v4986
  %v4991 = vmul.f32 %v4987, %v4987
  %v4992 = vmul.f32 %v4988, %v4988
  %v4993 = vmul.f32 %v4989, %v4989
  %4994 = vmatpush.msra.mxu0 %v87
  %4995 = vmatpush.msra.mxu0 %v86
  %4996 = vmatpush.msra.mxu0 %v85
  %4997 = vmatpush.msra.mxu0 %v84
  %4998 = vmatpush.msra.mxu0 %v83
  %4999 = vmatpush.msra.mxu0 %v82
  %5000 = vmatpush.msra.mxu0 %v81
  %5001 = vmatpush.msra.mxu0 %v80
  %5002 = vmatpush.msra.mxu0 %v79
  %5003 = vmatpush.msra.mxu0 %v78
  %5004 = vmatpush.msra.mxu0 %v77
  %5005 = vmatpush.msra.mxu0 %v76
  %5006 = vmatpush.msra.mxu0 %v75
  %5007 = vmatpush.msra.mxu0 %v74
  %5008 = vmatpush.msra.mxu0 %v73
  %5009 = vmatpush.msra.mxu0 %v72
  %5010 = vmatmul.f32.gmra.mxu0 %v4990
  %v5011 = vpop.f32.mrf.mxu0
  %v5012 = vadd.f32 0.0, %v5011
  %5013 = vmatmul.f32.gmra.mxu0 %v4991
  %v5014 = vpop.f32.mrf.mxu0
  %v5015 = vadd.f32 0.0, %v5014
  %5016 = vmatmul.f32.gmra.mxu0 %v4992
  %v5017 = vpop.f32.mrf.mxu0
  %v5018 = vadd.f32 0.0, %v5017
  %5019 = vmatmul.f32.gmra.mxu0 %v4993
  %v5020 = vpop.f32.mrf.mxu0
  %v5021 = vadd.f32 0.0, %v5020
  %5022 = vdwg.mxu0
  %v5023 = vadd.f32 %v5012, %v5015
  %v5024 = vadd.f32 %v5023, %v5018
  %v5025 = vadd.f32 %v5024, %v5021
  %v5026 = vrot.slane %v5025, 4
  %v5027 = vadd.f32 %v5025, %v5026
  %v5028 = vrot.slane %v5027, 2
  %v5029 = vadd.f32 %v5027, %v5028
  %v5030 = vrot.slane %v5029, 1
  %v5031 = vadd.f32 %v5029, %v5030
  %v5032 = vmul.f32 %v5031, 0.001953125
  %v5033 = vadd.f32 %v5032, 1e-05
  %v5034 = vrsqrt.pop %v5033
  %v5035 = vmul.f32 %v5034, %v5033
  %v5036 = vmul.f32 %v5035, %v5034
  %v5037 = vmul.f32 0.5, %v5036
  %v5038 = vsub.f32 1.5, %v5037
  %v5039 = vmul.f32 %v5034, %v5038
  %vm5040 = vweird.f32 %v5033
  %vm5041 = vweird.f32 %v5034
  %vm5042 = vmor %vm5040, %vm5041
  %v5043 = vsel %vm5042, %v5034, %v5039
  %v5044 = vmul.f32 %v4986, %v5043
  %v5045 = vmul.f32 %v4987, %v5043
  %v5046 = vmul.f32 %v4988, %v5043
  %v5047 = vmul.f32 %v4989, %v5043
  %v5048 = vperm.slane %v4542, 0
  %v5049 = vmul.f32 %v5048, %v5044
  %v5050 = vmul.f32 %v5048, %v5045
  %v5051 = vmul.f32 %v5048, %v5046
  %v5052 = vmul.f32 %v5048, %v5047
  %v5053 = vadd.f32 %v4538, %v5049
  %v5054 = vadd.f32 %v4539, %v5050
  %v5055 = vadd.f32 %v4540, %v5051
  %v5056 = vadd.f32 %v4541, %v5052
  %5057 = vst [vmem:[%s21] sm:$0xff] %v5053
  %5058 = vst [vmem:[%s21 + $0x8] sm:$0xff] %v5054
  %5059 = vst [vmem:[%s21 + $0x10] sm:$0xff] %v5055
  %5060 = vst [vmem:[%s21 + $0x18] sm:$0xff] %v5056
  // Predicated region
  $region86: #{mixed_op_forward.1} parent=0 // pred_check
    _
  $region87: #{mixed_op_forward.1} parent=0 // pred_check_branch
    %5062 = sbr.rel (0) target = $region89
  $region88: #{mixed_op_forward.1} parent=0 // pred_region
    _
  $region89: #{mixed_op_forward.1} parent=0 // pred_fallthru
    _
  // Predicated region
  $region90: #{mixed_op_forward.1} parent=0 // pred_check
    _
  $region91: #{mixed_op_forward.1} parent=0 // pred_check_branch
    %5064 = sbr.rel (0) target = $region93
  $region92: #{mixed_op_forward.1} parent=0 // pred_region
    _
  $region93: #{mixed_op_forward.1} parent=0 // pred_fallthru
    _

</llo_original>
